<compile_context>
chip_gen: v7x
topology: tpu7x:2x2x1
jax: 0.10.0
libtpu: 0.0.40
codegen_flags: <defaults>
</compile_context>

<pallas_src>
import functools

import jax
import jax.numpy as jnp
from jax import lax
from jax.experimental import pallas as pl
from jax.experimental.pallas import tpu as pltpu


def _fused_encoder_kernel(xe_ref, xo_ref, w1_ref, b1_ref, w2_ref, b2_ref,
                          o_ref, r1e_sc, r1o_sc, t_sc, r2_sc,
                          *, nb, ksize, wdt, half1, s_t, lt, m2, hp2, strip_w):
    """Fused DigitsEncoder forward for one block of `nb` images.

    Flattened "compute-and-discard" layouts (per image, row stride s_t):
      xe/xo  : (nb*s_t, kdim) bf16  im2col patches of even / odd conv1 columns,
               row = i1*(wo1//2) + q  <->  conv1 output pixel (i1, 2q [+1])
      r1e/o  : (nb*s_t, C1) f32     conv1 + bias + ReLU (even / odd columns)
      t_sc   : (lt,  C1)   bf16     2x2 max-pool of conv1; row = wo1*p + q
      r2_sc  : (m2,  C2)   f32      conv2 + bias + ReLU;   row = wo1*i2 + j2
      o_ref  : (nb, hp2, strip_w, C2) f32; columns 0,2,4,... hold the pooled
               conv2 outputs (the wrapper selects them).
    Rows with out-of-window column indices are computed and discarded; they
    never feed a valid output (asserted in the builder for this geometry).
    """
    c2 = w2_ref.shape[-1]

    # ---------- layer 1: conv 5x5 (VALID) as two big im2col matmuls ----------
    bias1 = b1_ref[...]                                          # (1, C1) f32
    r1e_sc[...] = jnp.maximum(
        jnp.dot(xe_ref[...], w1_ref[...],
                preferred_element_type=jnp.float32) + bias1, 0.0)
    r1o_sc[...] = jnp.maximum(
        jnp.dot(xo_ref[...], w1_ref[...],
                preferred_element_type=jnp.float32) + bias1, 0.0)

    # ---------- pool 1: 2x2/2 max-pool, batched over the whole block ---------
    # t[s] = max(E[s], O[s], E[s+half1], O[s+half1]); contiguous slices only.
    t_sc[...] = jnp.maximum(
        jnp.maximum(r1e_sc[pl.ds(0, lt), :], r1o_sc[pl.ds(0, lt), :]),
        jnp.maximum(r1e_sc[pl.ds(half1, lt), :], r1o_sc[pl.ds(half1, lt), :]),
    ).astype(jnp.bfloat16)

    # ---------- layer 2: conv 5x5 (VALID) as 25 batched tap matmuls ----------
    acc2 = jnp.broadcast_to(b2_ref[...], (m2, c2))       # bias init (hoisted)
    for kh in range(ksize):
        for kw in range(ksize):
            lhs = t_sc[pl.ds(kh * wdt + kw, m2), :]      # (m2, C1) bf16
            acc2 = acc2 + jnp.dot(lhs, w2_ref[kh, kw],
                                  preferred_element_type=jnp.float32)
    r2_sc[...] = jnp.maximum(acc2, 0.0)

    # ---------- pool 2: 2x2/2 max-pool -> dense-ish output strips ------------
    for img in range(nb):
        for p2 in range(hp2):
            base = img * s_t + 2 * wdt * p2
            strip = jnp.maximum(
                jnp.maximum(r2_sc[pl.ds(base, strip_w), :],
                            r2_sc[pl.ds(base + 1, strip_w), :]),
                jnp.maximum(r2_sc[pl.ds(base + wdt, strip_w), :],
                            r2_sc[pl.ds(base + wdt + 1, strip_w), :]))
            o_ref[img, p2, :, :] = strip


def _build_pallas_encoder(n_pad, h, w, cin, ksize, c1, c2, nb):
    ho1, wo1 = h - ksize + 1, w - ksize + 1
    assert ho1 % 2 == 0 and wo1 % 2 == 0, "layer-1 conv output must be even"
    hp1, wp1 = ho1 // 2, wo1 // 2
    ho2, wo2 = hp1 - ksize + 1, wp1 - ksize + 1
    assert ho2 > 0 and wo2 > 0
    assert ho2 % 2 == 0 and wo2 % 2 == 0, "layer-2 conv output must be even"
    hp2, wp2 = ho2 // 2, wo2 // 2

    kdim = ksize * ksize * cin          # 75 for the Digits geometry
    wdt = wo1                           # row "width" of the flattened layouts
    half1 = wo1 // 2
    s_t = ho1 * half1                   # per-image row stride (xe/xo/r1/t/r2)

    lt = nb * s_t - half1               # pool-1 rows computed (max in-bounds)
    m2 = lt - (ksize - 1) * (wdt + 1)   # conv-2 rows computed
    strip_w = 2 * wp2 - 1               # pooled-row output strip width

    # Compute-and-discard geometry checks: every valid row (and every tap /
    # pool read reachable from a valid row) stays inside the buffers above.
    assert m2 >= (nb - 1) * s_t + wdt * (ho2 - 1) + wo2
    assert (nb - 1) * s_t + 2 * wdt * (hp2 - 1) + wdt + 1 + strip_w - 1 <= m2 - 1
    assert lt >= (nb - 1) * s_t + wdt * (hp1 - 1) + wp1

    kernel = functools.partial(
        _fused_encoder_kernel, nb=nb, ksize=ksize, wdt=wdt, half1=half1,
        s_t=s_t, lt=lt, m2=m2, hp2=hp2, strip_w=strip_w)

    call = pl.pallas_call(
        kernel,
        out_shape=jax.ShapeDtypeStruct((n_pad, hp2, strip_w, c2), jnp.float32),
        grid_spec=pltpu.PrefetchScalarGridSpec(
            num_scalar_prefetch=0,
            grid=(n_pad // nb,),
            in_specs=[
                pl.BlockSpec((nb * s_t, kdim), lambda i: (i, 0)),   # xe
                pl.BlockSpec((nb * s_t, kdim), lambda i: (i, 0)),   # xo
                pl.BlockSpec((kdim, c1), lambda i: (0, 0)),         # w1 (flat)
                pl.BlockSpec((1, c1), lambda i: (0, 0)),            # b1
                pl.BlockSpec((ksize, ksize, c1, c2),
                             lambda i: (0, 0, 0, 0)),               # w2 (HWIO)
                pl.BlockSpec((1, c2), lambda i: (0, 0)),            # b2
            ],
            out_specs=pl.BlockSpec((nb, hp2, strip_w, c2),
                                   lambda i: (i, 0, 0, 0)),
            scratch_shapes=[
                pltpu.VMEM((nb * s_t, c1), jnp.float32),   # conv1 (even cols)
                pltpu.VMEM((nb * s_t, c1), jnp.float32),   # conv1 (odd cols)
                pltpu.VMEM((lt, c1), jnp.bfloat16),        # pool1 (conv2 lhs)
                pltpu.VMEM((m2, c2), jnp.float32),         # conv2 + ReLU
            ],
        ),
        compiler_params=pltpu.CompilerParams(
            dimension_semantics=("parallel",),
            vmem_limit_bytes=48 * 1024 * 1024),
    )
    return call, (hp2, wp2, strip_w)


def _pick_batch_block(n, nb_max=16):
    """Images per grid step.  Keep an even (>= 2) number of grid steps so the
    'parallel' batch axis can shard across both v7x TensorCores, and grow the
    block when the batch allows to amortize per-step overhead."""
    steps = max(2, -(-n // nb_max))
    steps = ((steps + 1) // 2) * 2          # even step count for 2-TC chips
    nb = -(-n // steps)
    return nb, nb * steps


@jax.jit
def digits_encoder_forward(x_nchw, w1, b1, w2, b2):
    """Matches DigitsEncoder.forward. Input NCHW, output NCHW (N, 32, 5, 5)."""
    n, cin, h, w = x_nchw.shape
    c1, _, ksize, _ = w1.shape
    c2 = w2.shape[0]
    ho1, wo1 = h - ksize + 1, w - ksize + 1
    kdim = ksize * ksize * cin

    nb, n_pad = _pick_batch_block(n)

    # im2col for conv1 (one K=75 matmul instead of 25 K=3 taps), split into
    # even / odd conv1 output columns so the in-kernel 2x2 pool compacts to
    # half density with contiguous slices only.
    x_nhwc = jnp.transpose(x_nchw, (0, 2, 3, 1))
    cols = [x_nhwc[:, kh:kh + ho1, kw:kw + wo1, :]
            for kh in range(ksize) for kw in range(ksize)]
    pat = jnp.concatenate(cols, axis=-1).astype(jnp.bfloat16)  # (n,ho1,wo1,kdim)
    if n_pad != n:
        pat = jnp.pad(pat, ((0, n_pad - n), (0, 0), (0, 0), (0, 0)))
    s_t = ho1 * (wo1 // 2)
    xe = pat[:, :, 0::2, :].reshape(n_pad * s_t, kdim)
    xo = pat[:, :, 1::2, :].reshape(n_pad * s_t, kdim)

    # OIHW weights -> flattened / HWIO bf16; biases as (1, C) f32.
    w1f = jnp.transpose(w1, (2, 3, 1, 0)).reshape(kdim, c1).astype(jnp.bfloat16)
    w2h = jnp.transpose(w2, (2, 3, 1, 0)).astype(jnp.bfloat16)
    b1r = b1.astype(jnp.float32).reshape(1, c1)
    b2r = b2.astype(jnp.float32).reshape(1, c2)

    call, (hp2, wp2, _) = _build_pallas_encoder(n_pad, h, w, cin, ksize,
                                                c1, c2, nb)
    out = call(xe, xo, w1f, b1r, w2h, b2r)   # (n_pad, hp2, strip_w, c2)
    out = out[:n, :, ::2, :]                 # keep valid pooled columns
    return jnp.transpose(out, (0, 3, 1, 2))  # (N, C2, hp2, wp2)


def reference_forward(x_nchw, w1, b1, w2, b2):
    """Pure-JAX/XLA f32 reference for correctness checking."""
    y = x_nchw
    for wgt, b in ((w1, b1), (w2, b2)):
        y = lax.conv_general_dilated(
            y, wgt, window_strides=(1, 1), padding="VALID",
            dimension_numbers=("NCHW", "OIHW", "NCHW"),
            precision=lax.Precision.HIGHEST)
        y = jnp.maximum(y + b[None, :, None, None], 0.0)
        y = lax.reduce_window(y, -jnp.inf, lax.max,
                              (1, 1, 2, 2), (1, 1, 2, 2), "VALID")
    return y


if __name__ == "__main__":
    key = jax.random.PRNGKey(0)
    k1, k2, k3, k4, kx = jax.random.split(key, 5)

    # Parameter shapes exactly as nn.Conv2d(3,32,5) / nn.Conv2d(32,32,5) (OIHW).
    w1 = jax.random.normal(k1, (32, 3, 5, 5), jnp.float32) * 0.10
    b1 = jax.random.normal(k2, (32,), jnp.float32) * 0.10
    w2 = jax.random.normal(k3, (32, 32, 5, 5), jnp.float32) * 0.05
    b2 = jax.random.normal(k4, (32,), jnp.float32) * 0.10

    # Digits-style input: 32x32 RGB -> encoder output 32 x 5 x 5 = 800.
    x = jax.random.normal(kx, (2, 3, 32, 32), jnp.float32)

    out = digits_encoder_forward(x, w1, b1, w2, b2)
    out = jax.block_until_ready(out)
    assert out.shape == (2, 32, 5, 5), out.shape

    ref = reference_forward(x, w1, b1, w2, b2)
    max_err = float(jnp.max(jnp.abs(out - ref)))
    # Two cascaded bf16-input matmul layers (K=75 and K=32x25) against an f32
    # reference: expected max abs error ~3e-2; assert with some margin.
    assert max_err < 7.5e-2, f"max abs error too large: {max_err}"

    print("KERNEL_OK")
</pallas_src>

<mosaic_0001>
module attributes {stable_mosaic.version = 11 : i64} {
  func.func @_fused_encoder_kernel(%arg0: i32, %arg1: memref<392x75xbf16, #tpu.memory_space<vmem>>, %arg2: memref<392x75xbf16, #tpu.memory_space<vmem>>, %arg3: memref<75x32xbf16, #tpu.memory_space<vmem>>, %arg4: memref<1x32xf32, #tpu.memory_space<vmem>>, %arg5: memref<5x5x32x32xbf16, #tpu.memory_space<vmem>>, %arg6: memref<1x32xf32, #tpu.memory_space<vmem>>, %arg7: memref<1x5x9x32xf32, #tpu.memory_space<vmem>>, %arg8: memref<392x32xf32, #tpu.memory_space<vmem>>, %arg9: memref<392x32xf32, #tpu.memory_space<vmem>>, %arg10: memref<378x32xbf16, #tpu.memory_space<vmem>>, %arg11: memref<262x32xf32, #tpu.memory_space<vmem>>) attributes {dimension_semantics = [#tpu.dimension_semantics<parallel>], iteration_bounds = array<i64: 2>, scalar_prefetch = 0 : i64, scratch_operands = 4 : i64, tpu.core_type = #tpu.core_type<tc>, window_params = [{transform_indices = @transform_0, window_bounds = array<i64: 392, 75>}, {transform_indices = @transform_1, window_bounds = array<i64: 392, 75>}, {pipeline_mode = #tpu.pipeline_mode<synchronous>, transform_indices = @transform_2, window_bounds = array<i64: 75, 32>}, {pipeline_mode = #tpu.pipeline_mode<synchronous>, transform_indices = @transform_3, window_bounds = array<i64: 1, 32>}, {pipeline_mode = #tpu.pipeline_mode<synchronous>, transform_indices = @transform_4, window_bounds = array<i64: 5, 5, 32, 32>}, {pipeline_mode = #tpu.pipeline_mode<synchronous>, transform_indices = @transform_5, window_bounds = array<i64: 1, 32>}, {transform_indices = @transform_6, window_bounds = array<i64: 1, 5, 9, 32>}]} {
    %c0 = arith.constant 0 : index
    %c0_0 = arith.constant 0 : index
    %0 = vector.load %arg4[%c0, %c0_0] : memref<1x32xf32, #tpu.memory_space<vmem>>, vector<1x32xf32>
    %c0_1 = arith.constant 0 : index
    %c0_2 = arith.constant 0 : index
    %1 = vector.load %arg1[%c0_1, %c0_2] : memref<392x75xbf16, #tpu.memory_space<vmem>>, vector<392x75xbf16>
    %c0_3 = arith.constant 0 : index
    %c0_4 = arith.constant 0 : index
    %2 = vector.load %arg3[%c0_3, %c0_4] : memref<75x32xbf16, #tpu.memory_space<vmem>>, vector<75x32xbf16>
    %cst = arith.constant dense<0.000000e+00> : vector<392x32xf32>
    %3 = tpu.matmul %1, %2, %cst {dimension_numbers = #tpu.dot_dimension_numbers<[1], [0], [0], [1], [0, 0, 1, 1], [], []>} : vector<392x75xbf16>, vector<75x32xbf16>, vector<392x32xf32> -> vector<392x32xf32>
    %4 = vector.broadcast %0 : vector<1x32xf32> to vector<392x32xf32>
    %5 = arith.addf %3, %4 : vector<392x32xf32>
    %cst_5 = arith.constant 0.000000e+00 : f32
    %6 = vector.broadcast %cst_5 : f32 to vector<392x32xf32>
    %7 = arith.maximumf %5, %6 : vector<392x32xf32>
    %c0_6 = arith.constant 0 : index
    %c0_7 = arith.constant 0 : index
    %8 = vector.load %arg8[%c0_6, %c0_7] : memref<392x32xf32, #tpu.memory_space<vmem>>, vector<392x32xf32>
    tpu.vector_store %arg8[%c0_6, %c0_7], %7 {strides = array<i32>} : memref<392x32xf32, #tpu.memory_space<vmem>>, vector<392x32xf32>,
    %c0_8 = arith.constant 0 : index
    %c0_9 = arith.constant 0 : index
    %9 = vector.load %arg2[%c0_8, %c0_9] : memref<392x75xbf16, #tpu.memory_space<vmem>>, vector<392x75xbf16>
    %c0_10 = arith.constant 0 : index
    %c0_11 = arith.constant 0 : index
    %10 = vector.load %arg3[%c0_10, %c0_11] : memref<75x32xbf16, #tpu.memory_space<vmem>>, vector<75x32xbf16>
    %cst_12 = arith.constant dense<0.000000e+00> : vector<392x32xf32>
    %11 = tpu.matmul %9, %10, %cst_12 {dimension_numbers = #tpu.dot_dimension_numbers<[1], [0], [0], [1], [0, 0, 1, 1], [], []>} : vector<392x75xbf16>, vector<75x32xbf16>, vector<392x32xf32> -> vector<392x32xf32>
    %12 = vector.broadcast %0 : vector<1x32xf32> to vector<392x32xf32>
    %13 = arith.addf %11, %12 : vector<392x32xf32>
    %cst_13 = arith.constant 0.000000e+00 : f32
    %14 = vector.broadcast %cst_13 : f32 to vector<392x32xf32>
    %15 = arith.maximumf %13, %14 : vector<392x32xf32>
    %c0_14 = arith.constant 0 : index
    %c0_15 = arith.constant 0 : index
    %16 = vector.load %arg9[%c0_14, %c0_15] : memref<392x32xf32, #tpu.memory_space<vmem>>, vector<392x32xf32>
    tpu.vector_store %arg9[%c0_14, %c0_15], %15 {strides = array<i32>} : memref<392x32xf32, #tpu.memory_space<vmem>>, vector<392x32xf32>,
    %c0_16 = arith.constant 0 : index
    %c0_17 = arith.constant 0 : index
    %17 = vector.load %arg8[%c0_16, %c0_17] : memref<392x32xf32, #tpu.memory_space<vmem>>, vector<378x32xf32>
    %c0_18 = arith.constant 0 : index
    %c0_19 = arith.constant 0 : index
    %18 = vector.load %arg9[%c0_18, %c0_19] : memref<392x32xf32, #tpu.memory_space<vmem>>, vector<378x32xf32>
    %19 = arith.maximumf %17, %18 : vector<378x32xf32>
    %c14 = arith.constant 14 : index
    %c0_20 = arith.constant 0 : index
    %20 = vector.load %arg8[%c14, %c0_20] : memref<392x32xf32, #tpu.memory_space<vmem>>, vector<378x32xf32>
    %c14_21 = arith.constant 14 : index
    %c0_22 = arith.constant 0 : index
    %21 = vector.load %arg9[%c14_21, %c0_22] : memref<392x32xf32, #tpu.memory_space<vmem>>, vector<378x32xf32>
    %22 = arith.maximumf %20, %21 : vector<378x32xf32>
    %23 = arith.maximumf %19, %22 : vector<378x32xf32>
    %24 = arith.truncf %23 : vector<378x32xf32> to vector<378x32xbf16>
    %c0_23 = arith.constant 0 : index
    %c0_24 = arith.constant 0 : index
    %25 = vector.load %arg10[%c0_23, %c0_24] : memref<378x32xbf16, #tpu.memory_space<vmem>>, vector<378x32xbf16>
    tpu.vector_store %arg10[%c0_23, %c0_24], %24 {strides = array<i32>} : memref<378x32xbf16, #tpu.memory_space<vmem>>, vector<378x32xbf16>,
    %c0_25 = arith.constant 0 : index
    %c0_26 = arith.constant 0 : index
    %26 = vector.load %arg6[%c0_25, %c0_26] : memref<1x32xf32, #tpu.memory_space<vmem>>, vector<1x32xf32>
    %27 = vector.shape_cast %26 : vector<1x32xf32> to vector<1x32xf32>
    %28 = vector.broadcast %27 : vector<1x32xf32> to vector<262x32xf32>
    %c0_27 = arith.constant 0 : index
    %c0_28 = arith.constant 0 : index
    %29 = vector.load %arg10[%c0_27, %c0_28] : memref<378x32xbf16, #tpu.memory_space<vmem>>, vector<262x32xbf16>
    %c0_29 = arith.constant 0 : index
    %c0_30 = arith.constant 0 : index
    %c0_31 = arith.constant 0 : index
    %c0_32 = arith.constant 0 : index
    %30 = vector.load %arg5[%c0_29, %c0_30, %c0_31, %c0_32] : memref<5x5x32x32xbf16, #tpu.memory_space<vmem>>, vector<1x1x32x32xbf16>
    %31 = vector.shape_cast %30 : vector<1x1x32x32xbf16> to vector<32x32xbf16>
    %cst_33 = arith.constant dense<0.000000e+00> : vector<262x32xf32>
    %32 = tpu.matmul %29, %31, %cst_33 {dimension_numbers = #tpu.dot_dimension_numbers<[1], [0], [0], [1], [0, 0, 1, 1], [], []>} : vector<262x32xbf16>, vector<32x32xbf16>, vector<262x32xf32> -> vector<262x32xf32>
    %33 = arith.addf %28, %32 : vector<262x32xf32>
    %c1 = arith.constant 1 : index
    %c0_34 = arith.constant 0 : index
    %34 = vector.load %arg10[%c1, %c0_34] : memref<378x32xbf16, #tpu.memory_space<vmem>>, vector<262x32xbf16>
    %c0_35 = arith.constant 0 : index
    %c1_36 = arith.constant 1 : index
    %c0_37 = arith.constant 0 : index
    %c0_38 = arith.constant 0 : index
    %35 = vector.load %arg5[%c0_35, %c1_36, %c0_37, %c0_38] : memref<5x5x32x32xbf16, #tpu.memory_space<vmem>>, vector<1x1x32x32xbf16>
    %36 = vector.shape_cast %35 : vector<1x1x32x32xbf16> to vector<32x32xbf16>
    %cst_39 = arith.constant dense<0.000000e+00> : vector<262x32xf32>
    %37 = tpu.matmul %34, %36, %cst_39 {dimension_numbers = #tpu.dot_dimension_numbers<[1], [0], [0], [1], [0, 0, 1, 1], [], []>} : vector<262x32xbf16>, vector<32x32xbf16>, vector<262x32xf32> -> vector<262x32xf32>
    %38 = arith.addf %33, %37 : vector<262x32xf32>
    %c2 = arith.constant 2 : index
    %c0_40 = arith.constant 0 : index
    %39 = vector.load %arg10[%c2, %c0_40] : memref<378x32xbf16, #tpu.memory_space<vmem>>, vector<262x32xbf16>
    %c0_41 = arith.constant 0 : index
    %c2_42 = arith.constant 2 : index
    %c0_43 = arith.constant 0 : index
    %c0_44 = arith.constant 0 : index
    %40 = vector.load %arg5[%c0_41, %c2_42, %c0_43, %c0_44] : memref<5x5x32x32xbf16, #tpu.memory_space<vmem>>, vector<1x1x32x32xbf16>
    %41 = vector.shape_cast %40 : vector<1x1x32x32xbf16> to vector<32x32xbf16>
    %cst_45 = arith.constant dense<0.000000e+00> : vector<262x32xf32>
    %42 = tpu.matmul %39, %41, %cst_45 {dimension_numbers = #tpu.dot_dimension_numbers<[1], [0], [0], [1], [0, 0, 1, 1], [], []>} : vector<262x32xbf16>, vector<32x32xbf16>, vector<262x32xf32> -> vector<262x32xf32>
    %43 = arith.addf %38, %42 : vector<262x32xf32>
    %c3 = arith.constant 3 : index
    %c0_46 = arith.constant 0 : index
    %44 = vector.load %arg10[%c3, %c0_46] : memref<378x32xbf16, #tpu.memory_space<vmem>>, vector<262x32xbf16>
    %c0_47 = arith.constant 0 : index
    %c3_48 = arith.constant 3 : index
    %c0_49 = arith.constant 0 : index
    %c0_50 = arith.constant 0 : index
    %45 = vector.load %arg5[%c0_47, %c3_48, %c0_49, %c0_50] : memref<5x5x32x32xbf16, #tpu.memory_space<vmem>>, vector<1x1x32x32xbf16>
    %46 = vector.shape_cast %45 : vector<1x1x32x32xbf16> to vector<32x32xbf16>
    %cst_51 = arith.constant dense<0.000000e+00> : vector<262x32xf32>
    %47 = tpu.matmul %44, %46, %cst_51 {dimension_numbers = #tpu.dot_dimension_numbers<[1], [0], [0], [1], [0, 0, 1, 1], [], []>} : vector<262x32xbf16>, vector<32x32xbf16>, vector<262x32xf32> -> vector<262x32xf32>
    %48 = arith.addf %43, %47 : vector<262x32xf32>
    %c4 = arith.constant 4 : index
    %c0_52 = arith.constant 0 : index
    %49 = vector.load %arg10[%c4, %c0_52] : memref<378x32xbf16, #tpu.memory_space<vmem>>, vector<262x32xbf16>
    %c0_53 = arith.constant 0 : index
    %c4_54 = arith.constant 4 : index
    %c0_55 = arith.constant 0 : index
    %c0_56 = arith.constant 0 : index
    %50 = vector.load %arg5[%c0_53, %c4_54, %c0_55, %c0_56] : memref<5x5x32x32xbf16, #tpu.memory_space<vmem>>, vector<1x1x32x32xbf16>
    %51 = vector.shape_cast %50 : vector<1x1x32x32xbf16> to vector<32x32xbf16>
    %cst_57 = arith.constant dense<0.000000e+00> : vector<262x32xf32>
    %52 = tpu.matmul %49, %51, %cst_57 {dimension_numbers = #tpu.dot_dimension_numbers<[1], [0], [0], [1], [0, 0, 1, 1], [], []>} : vector<262x32xbf16>, vector<32x32xbf16>, vector<262x32xf32> -> vector<262x32xf32>
    %53 = arith.addf %48, %52 : vector<262x32xf32>
    %c28 = arith.constant 28 : index
    %c0_58 = arith.constant 0 : index
    %54 = vector.load %arg10[%c28, %c0_58] : memref<378x32xbf16, #tpu.memory_space<vmem>>, vector<262x32xbf16>
    %c1_59 = arith.constant 1 : index
    %c0_60 = arith.constant 0 : index
    %c0_61 = arith.constant 0 : index
    %c0_62 = arith.constant 0 : index
    %55 = vector.load %arg5[%c1_59, %c0_60, %c0_61, %c0_62] : memref<5x5x32x32xbf16, #tpu.memory_space<vmem>>, vector<1x1x32x32xbf16>
    %56 = vector.shape_cast %55 : vector<1x1x32x32xbf16> to vector<32x32xbf16>
    %cst_63 = arith.constant dense<0.000000e+00> : vector<262x32xf32>
    %57 = tpu.matmul %54, %56, %cst_63 {dimension_numbers = #tpu.dot_dimension_numbers<[1], [0], [0], [1], [0, 0, 1, 1], [], []>} : vector<262x32xbf16>, vector<32x32xbf16>, vector<262x32xf32> -> vector<262x32xf32>
    %58 = arith.addf %53, %57 : vector<262x32xf32>
    %c29 = arith.constant 29 : index
    %c0_64 = arith.constant 0 : index
    %59 = vector.load %arg10[%c29, %c0_64] : memref<378x32xbf16, #tpu.memory_space<vmem>>, vector<262x32xbf16>
    %c1_65 = arith.constant 1 : index
    %c1_66 = arith.constant 1 : index
    %c0_67 = arith.constant 0 : index
    %c0_68 = arith.constant 0 : index
    %60 = vector.load %arg5[%c1_65, %c1_66, %c0_67, %c0_68] : memref<5x5x32x32xbf16, #tpu.memory_space<vmem>>, vector<1x1x32x32xbf16>
    %61 = vector.shape_cast %60 : vector<1x1x32x32xbf16> to vector<32x32xbf16>
    %cst_69 = arith.constant dense<0.000000e+00> : vector<262x32xf32>
    %62 = tpu.matmul %59, %61, %cst_69 {dimension_numbers = #tpu.dot_dimension_numbers<[1], [0], [0], [1], [0, 0, 1, 1], [], []>} : vector<262x32xbf16>, vector<32x32xbf16>, vector<262x32xf32> -> vector<262x32xf32>
    %63 = arith.addf %58, %62 : vector<262x32xf32>
    %c30 = arith.constant 30 : index
    %c0_70 = arith.constant 0 : index
    %64 = vector.load %arg10[%c30, %c0_70] : memref<378x32xbf16, #tpu.memory_space<vmem>>, vector<262x32xbf16>
    %c1_71 = arith.constant 1 : index
    %c2_72 = arith.constant 2 : index
    %c0_73 = arith.constant 0 : index
    %c0_74 = arith.constant 0 : index
    %65 = vector.load %arg5[%c1_71, %c2_72, %c0_73, %c0_74] : memref<5x5x32x32xbf16, #tpu.memory_space<vmem>>, vector<1x1x32x32xbf16>
    %66 = vector.shape_cast %65 : vector<1x1x32x32xbf16> to vector<32x32xbf16>
    %cst_75 = arith.constant dense<0.000000e+00> : vector<262x32xf32>
    %67 = tpu.matmul %64, %66, %cst_75 {dimension_numbers = #tpu.dot_dimension_numbers<[1], [0], [0], [1], [0, 0, 1, 1], [], []>} : vector<262x32xbf16>, vector<32x32xbf16>, vector<262x32xf32> -> vector<262x32xf32>
    %68 = arith.addf %63, %67 : vector<262x32xf32>
    %c31 = arith.constant 31 : index
    %c0_76 = arith.constant 0 : index
    %69 = vector.load %arg10[%c31, %c0_76] : memref<378x32xbf16, #tpu.memory_space<vmem>>, vector<262x32xbf16>
    %c1_77 = arith.constant 1 : index
    %c3_78 = arith.constant 3 : index
    %c0_79 = arith.constant 0 : index
    %c0_80 = arith.constant 0 : index
    %70 = vector.load %arg5[%c1_77, %c3_78, %c0_79, %c0_80] : memref<5x5x32x32xbf16, #tpu.memory_space<vmem>>, vector<1x1x32x32xbf16>
    %71 = vector.shape_cast %70 : vector<1x1x32x32xbf16> to vector<32x32xbf16>
    %cst_81 = arith.constant dense<0.000000e+00> : vector<262x32xf32>
    %72 = tpu.matmul %69, %71, %cst_81 {dimension_numbers = #tpu.dot_dimension_numbers<[1], [0], [0], [1], [0, 0, 1, 1], [], []>} : vector<262x32xbf16>, vector<32x32xbf16>, vector<262x32xf32> -> vector<262x32xf32>
    %73 = arith.addf %68, %72 : vector<262x32xf32>
    %c32 = arith.constant 32 : index
    %c0_82 = arith.constant 0 : index
    %74 = vector.load %arg10[%c32, %c0_82] : memref<378x32xbf16, #tpu.memory_space<vmem>>, vector<262x32xbf16>
    %c1_83 = arith.constant 1 : index
    %c4_84 = arith.constant 4 : index
    %c0_85 = arith.constant 0 : index
    %c0_86 = arith.constant 0 : index
    %75 = vector.load %arg5[%c1_83, %c4_84, %c0_85, %c0_86] : memref<5x5x32x32xbf16, #tpu.memory_space<vmem>>, vector<1x1x32x32xbf16>
    %76 = vector.shape_cast %75 : vector<1x1x32x32xbf16> to vector<32x32xbf16>
    %cst_87 = arith.constant dense<0.000000e+00> : vector<262x32xf32>
    %77 = tpu.matmul %74, %76, %cst_87 {dimension_numbers = #tpu.dot_dimension_numbers<[1], [0], [0], [1], [0, 0, 1, 1], [], []>} : vector<262x32xbf16>, vector<32x32xbf16>, vector<262x32xf32> -> vector<262x32xf32>
    %78 = arith.addf %73, %77 : vector<262x32xf32>
    %c56 = arith.constant 56 : index
    %c0_88 = arith.constant 0 : index
    %79 = vector.load %arg10[%c56, %c0_88] : memref<378x32xbf16, #tpu.memory_space<vmem>>, vector<262x32xbf16>
    %c2_89 = arith.constant 2 : index
    %c0_90 = arith.constant 0 : index
    %c0_91 = arith.constant 0 : index
    %c0_92 = arith.constant 0 : index
    %80 = vector.load %arg5[%c2_89, %c0_90, %c0_91, %c0_92] : memref<5x5x32x32xbf16, #tpu.memory_space<vmem>>, vector<1x1x32x32xbf16>
    %81 = vector.shape_cast %80 : vector<1x1x32x32xbf16> to vector<32x32xbf16>
    %cst_93 = arith.constant dense<0.000000e+00> : vector<262x32xf32>
    %82 = tpu.matmul %79, %81, %cst_93 {dimension_numbers = #tpu.dot_dimension_numbers<[1], [0], [0], [1], [0, 0, 1, 1], [], []>} : vector<262x32xbf16>, vector<32x32xbf16>, vector<262x32xf32> -> vector<262x32xf32>
    %83 = arith.addf %78, %82 : vector<262x32xf32>
    %c57 = arith.constant 57 : index
    %c0_94 = arith.constant 0 : index
    %84 = vector.load %arg10[%c57, %c0_94] : memref<378x32xbf16, #tpu.memory_space<vmem>>, vector<262x32xbf16>
    %c2_95 = arith.constant 2 : index
    %c1_96 = arith.constant 1 : index
    %c0_97 = arith.constant 0 : index
    %c0_98 = arith.constant 0 : index
    %85 = vector.load %arg5[%c2_95, %c1_96, %c0_97, %c0_98] : memref<5x5x32x32xbf16, #tpu.memory_space<vmem>>, vector<1x1x32x32xbf16>
    %86 = vector.shape_cast %85 : vector<1x1x32x32xbf16> to vector<32x32xbf16>
    %cst_99 = arith.constant dense<0.000000e+00> : vector<262x32xf32>
    %87 = tpu.matmul %84, %86, %cst_99 {dimension_numbers = #tpu.dot_dimension_numbers<[1], [0], [0], [1], [0, 0, 1, 1], [], []>} : vector<262x32xbf16>, vector<32x32xbf16>, vector<262x32xf32> -> vector<262x32xf32>
    %88 = arith.addf %83, %87 : vector<262x32xf32>
    %c58 = arith.constant 58 : index
    %c0_100 = arith.constant 0 : index
    %89 = vector.load %arg10[%c58, %c0_100] : memref<378x32xbf16, #tpu.memory_space<vmem>>, vector<262x32xbf16>
    %c2_101 = arith.constant 2 : index
    %c2_102 = arith.constant 2 : index
    %c0_103 = arith.constant 0 : index
    %c0_104 = arith.constant 0 : index
    %90 = vector.load %arg5[%c2_101, %c2_102, %c0_103, %c0_104] : memref<5x5x32x32xbf16, #tpu.memory_space<vmem>>, vector<1x1x32x32xbf16>
    %91 = vector.shape_cast %90 : vector<1x1x32x32xbf16> to vector<32x32xbf16>
    %cst_105 = arith.constant dense<0.000000e+00> : vector<262x32xf32>
    %92 = tpu.matmul %89, %91, %cst_105 {dimension_numbers = #tpu.dot_dimension_numbers<[1], [0], [0], [1], [0, 0, 1, 1], [], []>} : vector<262x32xbf16>, vector<32x32xbf16>, vector<262x32xf32> -> vector<262x32xf32>
    %93 = arith.addf %88, %92 : vector<262x32xf32>
    %c59 = arith.constant 59 : index
    %c0_106 = arith.constant 0 : index
    %94 = vector.load %arg10[%c59, %c0_106] : memref<378x32xbf16, #tpu.memory_space<vmem>>, vector<262x32xbf16>
    %c2_107 = arith.constant 2 : index
    %c3_108 = arith.constant 3 : index
    %c0_109 = arith.constant 0 : index
    %c0_110 = arith.constant 0 : index
    %95 = vector.load %arg5[%c2_107, %c3_108, %c0_109, %c0_110] : memref<5x5x32x32xbf16, #tpu.memory_space<vmem>>, vector<1x1x32x32xbf16>
    %96 = vector.shape_cast %95 : vector<1x1x32x32xbf16> to vector<32x32xbf16>
    %cst_111 = arith.constant dense<0.000000e+00> : vector<262x32xf32>
    %97 = tpu.matmul %94, %96, %cst_111 {dimension_numbers = #tpu.dot_dimension_numbers<[1], [0], [0], [1], [0, 0, 1, 1], [], []>} : vector<262x32xbf16>, vector<32x32xbf16>, vector<262x32xf32> -> vector<262x32xf32>
    %98 = arith.addf %93, %97 : vector<262x32xf32>
    %c60 = arith.constant 60 : index
    %c0_112 = arith.constant 0 : index
    %99 = vector.load %arg10[%c60, %c0_112] : memref<378x32xbf16, #tpu.memory_space<vmem>>, vector<262x32xbf16>
    %c2_113 = arith.constant 2 : index
    %c4_114 = arith.constant 4 : index
    %c0_115 = arith.constant 0 : index
    %c0_116 = arith.constant 0 : index
    %100 = vector.load %arg5[%c2_113, %c4_114, %c0_115, %c0_116] : memref<5x5x32x32xbf16, #tpu.memory_space<vmem>>, vector<1x1x32x32xbf16>
    %101 = vector.shape_cast %100 : vector<1x1x32x32xbf16> to vector<32x32xbf16>
    %cst_117 = arith.constant dense<0.000000e+00> : vector<262x32xf32>
    %102 = tpu.matmul %99, %101, %cst_117 {dimension_numbers = #tpu.dot_dimension_numbers<[1], [0], [0], [1], [0, 0, 1, 1], [], []>} : vector<262x32xbf16>, vector<32x32xbf16>, vector<262x32xf32> -> vector<262x32xf32>
    %103 = arith.addf %98, %102 : vector<262x32xf32>
    %c84 = arith.constant 84 : index
    %c0_118 = arith.constant 0 : index
    %104 = vector.load %arg10[%c84, %c0_118] : memref<378x32xbf16, #tpu.memory_space<vmem>>, vector<262x32xbf16>
    %c3_119 = arith.constant 3 : index
    %c0_120 = arith.constant 0 : index
    %c0_121 = arith.constant 0 : index
    %c0_122 = arith.constant 0 : index
    %105 = vector.load %arg5[%c3_119, %c0_120, %c0_121, %c0_122] : memref<5x5x32x32xbf16, #tpu.memory_space<vmem>>, vector<1x1x32x32xbf16>
    %106 = vector.shape_cast %105 : vector<1x1x32x32xbf16> to vector<32x32xbf16>
    %cst_123 = arith.constant dense<0.000000e+00> : vector<262x32xf32>
    %107 = tpu.matmul %104, %106, %cst_123 {dimension_numbers = #tpu.dot_dimension_numbers<[1], [0], [0], [1], [0, 0, 1, 1], [], []>} : vector<262x32xbf16>, vector<32x32xbf16>, vector<262x32xf32> -> vector<262x32xf32>
    %108 = arith.addf %103, %107 : vector<262x32xf32>
    %c85 = arith.constant 85 : index
    %c0_124 = arith.constant 0 : index
    %109 = vector.load %arg10[%c85, %c0_124] : memref<378x32xbf16, #tpu.memory_space<vmem>>, vector<262x32xbf16>
    %c3_125 = arith.constant 3 : index
    %c1_126 = arith.constant 1 : index
    %c0_127 = arith.constant 0 : index
    %c0_128 = arith.constant 0 : index
    %110 = vector.load %arg5[%c3_125, %c1_126, %c0_127, %c0_128] : memref<5x5x32x32xbf16, #tpu.memory_space<vmem>>, vector<1x1x32x32xbf16>
    %111 = vector.shape_cast %110 : vector<1x1x32x32xbf16> to vector<32x32xbf16>
    %cst_129 = arith.constant dense<0.000000e+00> : vector<262x32xf32>
    %112 = tpu.matmul %109, %111, %cst_129 {dimension_numbers = #tpu.dot_dimension_numbers<[1], [0], [0], [1], [0, 0, 1, 1], [], []>} : vector<262x32xbf16>, vector<32x32xbf16>, vector<262x32xf32> -> vector<262x32xf32>
    %113 = arith.addf %108, %112 : vector<262x32xf32>
    %c86 = arith.constant 86 : index
    %c0_130 = arith.constant 0 : index
    %114 = vector.load %arg10[%c86, %c0_130] : memref<378x32xbf16, #tpu.memory_space<vmem>>, vector<262x32xbf16>
    %c3_131 = arith.constant 3 : index
    %c2_132 = arith.constant 2 : index
    %c0_133 = arith.constant 0 : index
    %c0_134 = arith.constant 0 : index
    %115 = vector.load %arg5[%c3_131, %c2_132, %c0_133, %c0_134] : memref<5x5x32x32xbf16, #tpu.memory_space<vmem>>, vector<1x1x32x32xbf16>
    %116 = vector.shape_cast %115 : vector<1x1x32x32xbf16> to vector<32x32xbf16>
    %cst_135 = arith.constant dense<0.000000e+00> : vector<262x32xf32>
    %117 = tpu.matmul %114, %116, %cst_135 {dimension_numbers = #tpu.dot_dimension_numbers<[1], [0], [0], [1], [0, 0, 1, 1], [], []>} : vector<262x32xbf16>, vector<32x32xbf16>, vector<262x32xf32> -> vector<262x32xf32>
    %118 = arith.addf %113, %117 : vector<262x32xf32>
    %c87 = arith.constant 87 : index
    %c0_136 = arith.constant 0 : index
    %119 = vector.load %arg10[%c87, %c0_136] : memref<378x32xbf16, #tpu.memory_space<vmem>>, vector<262x32xbf16>
    %c3_137 = arith.constant 3 : index
    %c3_138 = arith.constant 3 : index
    %c0_139 = arith.constant 0 : index
    %c0_140 = arith.constant 0 : index
    %120 = vector.load %arg5[%c3_137, %c3_138, %c0_139, %c0_140] : memref<5x5x32x32xbf16, #tpu.memory_space<vmem>>, vector<1x1x32x32xbf16>
    %121 = vector.shape_cast %120 : vector<1x1x32x32xbf16> to vector<32x32xbf16>
    %cst_141 = arith.constant dense<0.000000e+00> : vector<262x32xf32>
    %122 = tpu.matmul %119, %121, %cst_141 {dimension_numbers = #tpu.dot_dimension_numbers<[1], [0], [0], [1], [0, 0, 1, 1], [], []>} : vector<262x32xbf16>, vector<32x32xbf16>, vector<262x32xf32> -> vector<262x32xf32>
    %123 = arith.addf %118, %122 : vector<262x32xf32>
    %c88 = arith.constant 88 : index
    %c0_142 = arith.constant 0 : index
    %124 = vector.load %arg10[%c88, %c0_142] : memref<378x32xbf16, #tpu.memory_space<vmem>>, vector<262x32xbf16>
    %c3_143 = arith.constant 3 : index
    %c4_144 = arith.constant 4 : index
    %c0_145 = arith.constant 0 : index
    %c0_146 = arith.constant 0 : index
    %125 = vector.load %arg5[%c3_143, %c4_144, %c0_145, %c0_146] : memref<5x5x32x32xbf16, #tpu.memory_space<vmem>>, vector<1x1x32x32xbf16>
    %126 = vector.shape_cast %125 : vector<1x1x32x32xbf16> to vector<32x32xbf16>
    %cst_147 = arith.constant dense<0.000000e+00> : vector<262x32xf32>
    %127 = tpu.matmul %124, %126, %cst_147 {dimension_numbers = #tpu.dot_dimension_numbers<[1], [0], [0], [1], [0, 0, 1, 1], [], []>} : vector<262x32xbf16>, vector<32x32xbf16>, vector<262x32xf32> -> vector<262x32xf32>
    %128 = arith.addf %123, %127 : vector<262x32xf32>
    %c112 = arith.constant 112 : index
    %c0_148 = arith.constant 0 : index
    %129 = vector.load %arg10[%c112, %c0_148] : memref<378x32xbf16, #tpu.memory_space<vmem>>, vector<262x32xbf16>
    %c4_149 = arith.constant 4 : index
    %c0_150 = arith.constant 0 : index
    %c0_151 = arith.constant 0 : index
    %c0_152 = arith.constant 0 : index
    %130 = vector.load %arg5[%c4_149, %c0_150, %c0_151, %c0_152] : memref<5x5x32x32xbf16, #tpu.memory_space<vmem>>, vector<1x1x32x32xbf16>
    %131 = vector.shape_cast %130 : vector<1x1x32x32xbf16> to vector<32x32xbf16>
    %cst_153 = arith.constant dense<0.000000e+00> : vector<262x32xf32>
    %132 = tpu.matmul %129, %131, %cst_153 {dimension_numbers = #tpu.dot_dimension_numbers<[1], [0], [0], [1], [0, 0, 1, 1], [], []>} : vector<262x32xbf16>, vector<32x32xbf16>, vector<262x32xf32> -> vector<262x32xf32>
    %133 = arith.addf %128, %132 : vector<262x32xf32>
    %c113 = arith.constant 113 : index
    %c0_154 = arith.constant 0 : index
    %134 = vector.load %arg10[%c113, %c0_154] : memref<378x32xbf16, #tpu.memory_space<vmem>>, vector<262x32xbf16>
    %c4_155 = arith.constant 4 : index
    %c1_156 = arith.constant 1 : index
    %c0_157 = arith.constant 0 : index
    %c0_158 = arith.constant 0 : index
    %135 = vector.load %arg5[%c4_155, %c1_156, %c0_157, %c0_158] : memref<5x5x32x32xbf16, #tpu.memory_space<vmem>>, vector<1x1x32x32xbf16>
    %136 = vector.shape_cast %135 : vector<1x1x32x32xbf16> to vector<32x32xbf16>
    %cst_159 = arith.constant dense<0.000000e+00> : vector<262x32xf32>
    %137 = tpu.matmul %134, %136, %cst_159 {dimension_numbers = #tpu.dot_dimension_numbers<[1], [0], [0], [1], [0, 0, 1, 1], [], []>} : vector<262x32xbf16>, vector<32x32xbf16>, vector<262x32xf32> -> vector<262x32xf32>
    %138 = arith.addf %133, %137 : vector<262x32xf32>
    %c114 = arith.constant 114 : index
    %c0_160 = arith.constant 0 : index
    %139 = vector.load %arg10[%c114, %c0_160] : memref<378x32xbf16, #tpu.memory_space<vmem>>, vector<262x32xbf16>
    %c4_161 = arith.constant 4 : index
    %c2_162 = arith.constant 2 : index
    %c0_163 = arith.constant 0 : index
    %c0_164 = arith.constant 0 : index
    %140 = vector.load %arg5[%c4_161, %c2_162, %c0_163, %c0_164] : memref<5x5x32x32xbf16, #tpu.memory_space<vmem>>, vector<1x1x32x32xbf16>
    %141 = vector.shape_cast %140 : vector<1x1x32x32xbf16> to vector<32x32xbf16>
    %cst_165 = arith.constant dense<0.000000e+00> : vector<262x32xf32>
    %142 = tpu.matmul %139, %141, %cst_165 {dimension_numbers = #tpu.dot_dimension_numbers<[1], [0], [0], [1], [0, 0, 1, 1], [], []>} : vector<262x32xbf16>, vector<32x32xbf16>, vector<262x32xf32> -> vector<262x32xf32>
    %143 = arith.addf %138, %142 : vector<262x32xf32>
    %c115 = arith.constant 115 : index
    %c0_166 = arith.constant 0 : index
    %144 = vector.load %arg10[%c115, %c0_166] : memref<378x32xbf16, #tpu.memory_space<vmem>>, vector<262x32xbf16>
    %c4_167 = arith.constant 4 : index
    %c3_168 = arith.constant 3 : index
    %c0_169 = arith.constant 0 : index
    %c0_170 = arith.constant 0 : index
    %145 = vector.load %arg5[%c4_167, %c3_168, %c0_169, %c0_170] : memref<5x5x32x32xbf16, #tpu.memory_space<vmem>>, vector<1x1x32x32xbf16>
    %146 = vector.shape_cast %145 : vector<1x1x32x32xbf16> to vector<32x32xbf16>
    %cst_171 = arith.constant dense<0.000000e+00> : vector<262x32xf32>
    %147 = tpu.matmul %144, %146, %cst_171 {dimension_numbers = #tpu.dot_dimension_numbers<[1], [0], [0], [1], [0, 0, 1, 1], [], []>} : vector<262x32xbf16>, vector<32x32xbf16>, vector<262x32xf32> -> vector<262x32xf32>
    %148 = arith.addf %143, %147 : vector<262x32xf32>
    %c116 = arith.constant 116 : index
    %c0_172 = arith.constant 0 : index
    %149 = vector.load %arg10[%c116, %c0_172] : memref<378x32xbf16, #tpu.memory_space<vmem>>, vector<262x32xbf16>
    %c4_173 = arith.constant 4 : index
    %c4_174 = arith.constant 4 : index
    %c0_175 = arith.constant 0 : index
    %c0_176 = arith.constant 0 : index
    %150 = vector.load %arg5[%c4_173, %c4_174, %c0_175, %c0_176] : memref<5x5x32x32xbf16, #tpu.memory_space<vmem>>, vector<1x1x32x32xbf16>
    %151 = vector.shape_cast %150 : vector<1x1x32x32xbf16> to vector<32x32xbf16>
    %cst_177 = arith.constant dense<0.000000e+00> : vector<262x32xf32>
    %152 = tpu.matmul %149, %151, %cst_177 {dimension_numbers = #tpu.dot_dimension_numbers<[1], [0], [0], [1], [0, 0, 1, 1], [], []>} : vector<262x32xbf16>, vector<32x32xbf16>, vector<262x32xf32> -> vector<262x32xf32>
    %153 = arith.addf %148, %152 : vector<262x32xf32>
    %cst_178 = arith.constant 0.000000e+00 : f32
    %154 = vector.broadcast %cst_178 : f32 to vector<262x32xf32>
    %155 = arith.maximumf %153, %154 : vector<262x32xf32>
    %c0_179 = arith.constant 0 : index
    %c0_180 = arith.constant 0 : index
    %156 = vector.load %arg11[%c0_179, %c0_180] : memref<262x32xf32, #tpu.memory_space<vmem>>, vector<262x32xf32>
    tpu.vector_store %arg11[%c0_179, %c0_180], %155 {strides = array<i32>} : memref<262x32xf32, #tpu.memory_space<vmem>>, vector<262x32xf32>,
    %c0_181 = arith.constant 0 : index
    %c0_182 = arith.constant 0 : index
    %157 = vector.load %arg11[%c0_181, %c0_182] : memref<262x32xf32, #tpu.memory_space<vmem>>, vector<9x32xf32>
    %c1_183 = arith.constant 1 : index
    %c0_184 = arith.constant 0 : index
    %158 = vector.load %arg11[%c1_183, %c0_184] : memref<262x32xf32, #tpu.memory_space<vmem>>, vector<9x32xf32>
    %159 = arith.maximumf %157, %158 : vector<9x32xf32>
    %c28_185 = arith.constant 28 : index
    %c0_186 = arith.constant 0 : index
    %160 = vector.load %arg11[%c28_185, %c0_186] : memref<262x32xf32, #tpu.memory_space<vmem>>, vector<9x32xf32>
    %c29_187 = arith.constant 29 : index
    %c0_188 = arith.constant 0 : index
    %161 = vector.load %arg11[%c29_187, %c0_188] : memref<262x32xf32, #tpu.memory_space<vmem>>, vector<9x32xf32>
    %162 = arith.maximumf %160, %161 : vector<9x32xf32>
    %163 = arith.maximumf %159, %162 : vector<9x32xf32>
    %c0_189 = arith.constant 0 : index
    %c0_190 = arith.constant 0 : index
    %c0_191 = arith.constant 0 : index
    %c0_192 = arith.constant 0 : index
    %164 = vector.load %arg7[%c0_189, %c0_190, %c0_191, %c0_192] : memref<1x5x9x32xf32, #tpu.memory_space<vmem>>, vector<1x1x9x32xf32>
    %165 = vector.shape_cast %164 : vector<1x1x9x32xf32> to vector<9x32xf32>
    %166 = vector.shape_cast %163 : vector<9x32xf32> to vector<1x1x9x32xf32>
    tpu.vector_store %arg7[%c0_189, %c0_190, %c0_191, %c0_192], %166 {strides = array<i32>} : memref<1x5x9x32xf32, #tpu.memory_space<vmem>>, vector<1x1x9x32xf32>,
    %c56_193 = arith.constant 56 : index
    %c0_194 = arith.constant 0 : index
    %167 = vector.load %arg11[%c56_193, %c0_194] : memref<262x32xf32, #tpu.memory_space<vmem>>, vector<9x32xf32>
    %c57_195 = arith.constant 57 : index
    %c0_196 = arith.constant 0 : index
    %168 = vector.load %arg11[%c57_195, %c0_196] : memref<262x32xf32, #tpu.memory_space<vmem>>, vector<9x32xf32>
    %169 = arith.maximumf %167, %168 : vector<9x32xf32>
    %c84_197 = arith.constant 84 : index
    %c0_198 = arith.constant 0 : index
    %170 = vector.load %arg11[%c84_197, %c0_198] : memref<262x32xf32, #tpu.memory_space<vmem>>, vector<9x32xf32>
    %c85_199 = arith.constant 85 : index
    %c0_200 = arith.constant 0 : index
    %171 = vector.load %arg11[%c85_199, %c0_200] : memref<262x32xf32, #tpu.memory_space<vmem>>, vector<9x32xf32>
    %172 = arith.maximumf %170, %171 : vector<9x32xf32>
    %173 = arith.maximumf %169, %172 : vector<9x32xf32>
    %c0_201 = arith.constant 0 : index
    %c1_202 = arith.constant 1 : index
    %c0_203 = arith.constant 0 : index
    %c0_204 = arith.constant 0 : index
    %174 = vector.load %arg7[%c0_201, %c1_202, %c0_203, %c0_204] : memref<1x5x9x32xf32, #tpu.memory_space<vmem>>, vector<1x1x9x32xf32>
    %175 = vector.shape_cast %174 : vector<1x1x9x32xf32> to vector<9x32xf32>
    %176 = vector.shape_cast %173 : vector<9x32xf32> to vector<1x1x9x32xf32>
    tpu.vector_store %arg7[%c0_201, %c1_202, %c0_203, %c0_204], %176 {strides = array<i32>} : memref<1x5x9x32xf32, #tpu.memory_space<vmem>>, vector<1x1x9x32xf32>,
    %c112_205 = arith.constant 112 : index
    %c0_206 = arith.constant 0 : index
    %177 = vector.load %arg11[%c112_205, %c0_206] : memref<262x32xf32, #tpu.memory_space<vmem>>, vector<9x32xf32>
    %c113_207 = arith.constant 113 : index
    %c0_208 = arith.constant 0 : index
    %178 = vector.load %arg11[%c113_207, %c0_208] : memref<262x32xf32, #tpu.memory_space<vmem>>, vector<9x32xf32>
    %179 = arith.maximumf %177, %178 : vector<9x32xf32>
    %c140 = arith.constant 140 : index
    %c0_209 = arith.constant 0 : index
    %180 = vector.load %arg11[%c140, %c0_209] : memref<262x32xf32, #tpu.memory_space<vmem>>, vector<9x32xf32>
    %c141 = arith.constant 141 : index
    %c0_210 = arith.constant 0 : index
    %181 = vector.load %arg11[%c141, %c0_210] : memref<262x32xf32, #tpu.memory_space<vmem>>, vector<9x32xf32>
    %182 = arith.maximumf %180, %181 : vector<9x32xf32>
    %183 = arith.maximumf %179, %182 : vector<9x32xf32>
    %c0_211 = arith.constant 0 : index
    %c2_212 = arith.constant 2 : index
    %c0_213 = arith.constant 0 : index
    %c0_214 = arith.constant 0 : index
    %184 = vector.load %arg7[%c0_211, %c2_212, %c0_213, %c0_214] : memref<1x5x9x32xf32, #tpu.memory_space<vmem>>, vector<1x1x9x32xf32>
    %185 = vector.shape_cast %184 : vector<1x1x9x32xf32> to vector<9x32xf32>
    %186 = vector.shape_cast %183 : vector<9x32xf32> to vector<1x1x9x32xf32>
    tpu.vector_store %arg7[%c0_211, %c2_212, %c0_213, %c0_214], %186 {strides = array<i32>} : memref<1x5x9x32xf32, #tpu.memory_space<vmem>>, vector<1x1x9x32xf32>,
    %c168 = arith.constant 168 : index
    %c0_215 = arith.constant 0 : index
    %187 = vector.load %arg11[%c168, %c0_215] : memref<262x32xf32, #tpu.memory_space<vmem>>, vector<9x32xf32>
    %c169 = arith.constant 169 : index
    %c0_216 = arith.constant 0 : index
    %188 = vector.load %arg11[%c169, %c0_216] : memref<262x32xf32, #tpu.memory_space<vmem>>, vector<9x32xf32>
    %189 = arith.maximumf %187, %188 : vector<9x32xf32>
    %c196 = arith.constant 196 : index
    %c0_217 = arith.constant 0 : index
    %190 = vector.load %arg11[%c196, %c0_217] : memref<262x32xf32, #tpu.memory_space<vmem>>, vector<9x32xf32>
    %c197 = arith.constant 197 : index
    %c0_218 = arith.constant 0 : index
    %191 = vector.load %arg11[%c197, %c0_218] : memref<262x32xf32, #tpu.memory_space<vmem>>, vector<9x32xf32>
    %192 = arith.maximumf %190, %191 : vector<9x32xf32>
    %193 = arith.maximumf %189, %192 : vector<9x32xf32>
    %c0_219 = arith.constant 0 : index
    %c3_220 = arith.constant 3 : index
    %c0_221 = arith.constant 0 : index
    %c0_222 = arith.constant 0 : index
    %194 = vector.load %arg7[%c0_219, %c3_220, %c0_221, %c0_222] : memref<1x5x9x32xf32, #tpu.memory_space<vmem>>, vector<1x1x9x32xf32>
    %195 = vector.shape_cast %194 : vector<1x1x9x32xf32> to vector<9x32xf32>
    %196 = vector.shape_cast %193 : vector<9x32xf32> to vector<1x1x9x32xf32>
    tpu.vector_store %arg7[%c0_219, %c3_220, %c0_221, %c0_222], %196 {strides = array<i32>} : memref<1x5x9x32xf32, #tpu.memory_space<vmem>>, vector<1x1x9x32xf32>,
    %c224 = arith.constant 224 : index
    %c0_223 = arith.constant 0 : index
    %197 = vector.load %arg11[%c224, %c0_223] : memref<262x32xf32, #tpu.memory_space<vmem>>, vector<9x32xf32>
    %c225 = arith.constant 225 : index
    %c0_224 = arith.constant 0 : index
    %198 = vector.load %arg11[%c225, %c0_224] : memref<262x32xf32, #tpu.memory_space<vmem>>, vector<9x32xf32>
    %199 = arith.maximumf %197, %198 : vector<9x32xf32>
    %c252 = arith.constant 252 : index
    %c0_225 = arith.constant 0 : index
    %200 = vector.load %arg11[%c252, %c0_225] : memref<262x32xf32, #tpu.memory_space<vmem>>, vector<9x32xf32>
    %c253 = arith.constant 253 : index
    %c0_226 = arith.constant 0 : index
    %201 = vector.load %arg11[%c253, %c0_226] : memref<262x32xf32, #tpu.memory_space<vmem>>, vector<9x32xf32>
    %202 = arith.maximumf %200, %201 : vector<9x32xf32>
    %203 = arith.maximumf %199, %202 : vector<9x32xf32>
    %c0_227 = arith.constant 0 : index
    %c4_228 = arith.constant 4 : index
    %c0_229 = arith.constant 0 : index
    %c0_230 = arith.constant 0 : index
    %204 = vector.load %arg7[%c0_227, %c4_228, %c0_229, %c0_230] : memref<1x5x9x32xf32, #tpu.memory_space<vmem>>, vector<1x1x9x32xf32>
    %205 = vector.shape_cast %204 : vector<1x1x9x32xf32> to vector<9x32xf32>
    %206 = vector.shape_cast %203 : vector<9x32xf32> to vector<1x1x9x32xf32>
    tpu.vector_store %arg7[%c0_227, %c4_228, %c0_229, %c0_230], %206 {strides = array<i32>} : memref<1x5x9x32xf32, #tpu.memory_space<vmem>>, vector<1x1x9x32xf32>,
    return
  }
  func.func @transform_0(%arg0: i32) -> (i32, i32) {
    %c0_i32 = arith.constant 0 : i32
    %c0_i32_0 = arith.constant 0 : i32
    return %arg0, %c0_i32 : i32, i32
  }
  func.func @transform_1(%arg0: i32) -> (i32, i32) {
    %c0_i32 = arith.constant 0 : i32
    %c0_i32_0 = arith.constant 0 : i32
    return %arg0, %c0_i32 : i32, i32
  }
  func.func @transform_2(%arg0: i32) -> (i32, i32) {
    %c0_i32 = arith.constant 0 : i32
    %c0_i32_0 = arith.constant 0 : i32
    %c0_i32_1 = arith.constant 0 : i32
    return %c0_i32, %c0_i32_0 : i32, i32
  }
  func.func @transform_3(%arg0: i32) -> (i32, i32) {
    %c0_i32 = arith.constant 0 : i32
    %c0_i32_0 = arith.constant 0 : i32
    %c0_i32_1 = arith.constant 0 : i32
    return %c0_i32, %c0_i32_0 : i32, i32
  }
  func.func @transform_4(%arg0: i32) -> (i32, i32, i32, i32) {
    %c0_i32 = arith.constant 0 : i32
    %c0_i32_0 = arith.constant 0 : i32
    %c0_i32_1 = arith.constant 0 : i32
    %c0_i32_2 = arith.constant 0 : i32
    %c0_i32_3 = arith.constant 0 : i32
    return %c0_i32, %c0_i32_0, %c0_i32_1, %c0_i32_2 : i32, i32, i32, i32
  }
  func.func @transform_5(%arg0: i32) -> (i32, i32) {
    %c0_i32 = arith.constant 0 : i32
    %c0_i32_0 = arith.constant 0 : i32
    %c0_i32_1 = arith.constant 0 : i32
    return %c0_i32, %c0_i32_0 : i32, i32
  }
  func.func @transform_6(%arg0: i32) -> (i32, i32, i32, i32) {
    %c0_i32 = arith.constant 0 : i32
    %c0_i32_0 = arith.constant 0 : i32
    %c0_i32_1 = arith.constant 0 : i32
    %c0_i32_2 = arith.constant 0 : i32
    return %arg0, %c0_i32, %c0_i32_0, %c0_i32_1 : i32, i32, i32, i32
  }
}

</mosaic_0001>

<llo_original>
// kernel: digits_encoder_forward.1
$region0: #{digits_encoder_forward.1}
  #allocation0 [shape = 'u32[]', space=smem, size = 0x4, offset = 0x4, fixed_abs, tag = 'smem constant byte address 0x4 - core index']
  #allocation1 [shape = 'u32[144,128]{1,0:T(1,128)}', space=vmem, size = 0x12000, scoped, tag = 'internal scratch']
  #allocation2 [shape = 'f32[392,32]{1,0:T(8,128)}', space=vmem, size = 0x31000, scoped, tag = 'scratch operand']
  #allocation3 [shape = 'f32[392,32]{1,0:T(8,128)}', space=vmem, size = 0x31000, scoped, tag = 'scratch operand']
  #allocation4 [shape = 'bf16[378,32]{1,0:T(8,128)(2,1)}', space=vmem, size = 0x18000, scoped, tag = 'scratch operand']
  #allocation5 [shape = 'f32[262,32]{1,0:T(8,128)}', space=vmem, size = 0x21000, scoped, tag = 'scratch operand']
  %s0 = inlined_call_operand.vmem [shape: bf16[784,75], index: 0, kind: input, shape index: {}]
  %s1 = inlined_call_operand.vmem [shape: bf16[784,75], index: 1, kind: input, shape index: {}]
  %s2 = inlined_call_operand.vmem [shape: bf16[75,32], index: 2, kind: input, shape index: {}]
  %s3 = inlined_call_operand.vmem [shape: f32[1,32], index: 3, kind: input, shape index: {}]
  %s4 = inlined_call_operand.vmem [shape: bf16[5,5,32,32], index: 4, kind: input, shape index: {}]
  %s5 = inlined_call_operand.vmem [shape: f32[1,32], index: 5, kind: input, shape index: {}]
  %s6 = inlined_call_operand.vmem [shape: f32[2,5,9,32], index: 6, kind: output, shape index: {}]
  %s7 = sld [smem:[#allocation0]]
  $region57: #{digits_encoder_forward.1} parent=0
    _
  %s9 = ssub.s32 1, %s7
  %s10 = scalar_select 0, %s9, %s7
  loop: start=0, step=1, limit=4
  $region2: #{digits_encoder_forward.1} parent=0 // loop_pre_header
    _
  $region3: #{digits_encoder_forward.1} parent=0 // loop_header
    %s12 = sphi 0, %s16
    %p13 = scmp.ge.s32.totalorder %s12, 4
    %s22 = sphi 0, %s24
    %s25 = sphi 0, %s22
    %s26 = sphi 0, %s25
    %s42 = sphi 0, %s26
    %s48 = sphi 0, %s50
    %s51 = sphi 0, %s48
    %s52 = sphi 0, %s51
    %s68 = sphi 0, %s52
    %s72 = sphi 0, %s72
    %s74 = sphi 0, %s72
    %s75 = sphi 0, %s74
    %s89 = sphi 0, %s75
    %s93 = sphi 0, %s93
    %s95 = sphi 0, %s93
    %s96 = sphi 0, %s95
    %s110 = sphi 0, %s96
    %s114 = sphi 0, %s114
    %s116 = sphi 0, %s114
    %s117 = sphi 0, %s116
    %s131 = sphi 0, %s117
    %s135 = sphi 0, %s135
    %s137 = sphi 0, %s135
    %s138 = sphi 0, %s137
    %s152 = sphi 0, %s138
    %s158 = sphi 0, %s160
    %s161 = sphi 0, %s158
    %s162 = sphi 0, %s161
    %s178 = sphi 0, %s162
  $region4: #{digits_encoder_forward.1} parent=0 // loop_header_branch
    %15 = sbr.rel (%p13) target = $region8
  $region5: #{digits_encoder_forward.1} parent=0 // loop_body
    %s17 = ssub.s32 %s12, 1
    %s18 = ssub.s32 %s12, 2
    %s19 = sadd.s32 %s12, 1
    %s20 = ssub.s32 %s12, %s19
    %p21 = scmp.eq.s32.totalorder %s20, 0
    %s23 = sadd.s32 %s22, 1
    %s24 = scalar_select %p21, %s22, %s23
    %p27 = pneg %p21
    %p28 = scmp.eq.s32.totalorder %s12, 1
    %p29 = por %p27, %p28
    %p30 = scmp.ne.s32.totalorder %s22, %s25
    %p31 = scmp.eq.s32.totalorder %s12, 0
    %p32 = por %p30, %p31
    %p33 = scmp.ne.s32.totalorder %s22, %s25
    %p34 = scmp.eq.s32.totalorder %s17, 1
    %p35 = por %p33, %p34
    %p36 = scmp.ne.s32.totalorder %s25, %s26
    %p37 = scmp.eq.s32.totalorder %s17, 0
    %p38 = por %p36, %p37
    %p39 = scmp.ne.s32.totalorder %s25, %s26
    %p40 = scmp.eq.s32.totalorder %s18, 1
    %p41 = por %p39, %p40
    %p43 = scmp.ne.s32.totalorder %s26, %s42
    %p44 = scmp.eq.s32.totalorder %s18, 0
    %p45 = por %p43, %p44
    %s46 = ssub.s32 %s12, %s19
    %p47 = scmp.eq.s32.totalorder %s46, 0
    %s49 = sadd.s32 %s48, 1
    %s50 = scalar_select %p47, %s48, %s49
    %p53 = pneg %p47
    %p54 = scmp.eq.s32.totalorder %s12, 1
    %p55 = por %p53, %p54
    %p56 = scmp.ne.s32.totalorder %s48, %s51
    %p57 = scmp.eq.s32.totalorder %s12, 0
    %p58 = por %p56, %p57
    %p59 = scmp.ne.s32.totalorder %s48, %s51
    %p60 = scmp.eq.s32.totalorder %s17, 1
    %p61 = por %p59, %p60
    %p62 = scmp.ne.s32.totalorder %s51, %s52
    %p63 = scmp.eq.s32.totalorder %s17, 0
    %p64 = por %p62, %p63
    %p65 = scmp.ne.s32.totalorder %s51, %s52
    %p66 = scmp.eq.s32.totalorder %s18, 1
    %p67 = por %p65, %p66
    %p69 = scmp.ne.s32.totalorder %s52, %s68
    %p70 = scmp.eq.s32.totalorder %s18, 0
    %p71 = por %p69, %p70
    %s73 = sadd.s32 %s72, 1
    %p76 = scmp.eq.s32.totalorder %s12, 1
    %p77 = scmp.ne.s32.totalorder %s72, %s74
    %p78 = scmp.eq.s32.totalorder %s12, 0
    %p79 = por %p77, %p78
    %p80 = scmp.ne.s32.totalorder %s72, %s74
    %p81 = scmp.eq.s32.totalorder %s17, 1
    %p82 = por %p80, %p81
    %p83 = scmp.ne.s32.totalorder %s74, %s75
    %p84 = scmp.eq.s32.totalorder %s17, 0
    %p85 = por %p83, %p84
    %p86 = scmp.ne.s32.totalorder %s74, %s75
    %p87 = scmp.eq.s32.totalorder %s18, 1
    %p88 = por %p86, %p87
    %p90 = scmp.ne.s32.totalorder %s75, %s89
    %p91 = scmp.eq.s32.totalorder %s18, 0
    %p92 = por %p90, %p91
    %s94 = sadd.s32 %s93, 1
    %p97 = scmp.eq.s32.totalorder %s12, 1
    %p98 = scmp.ne.s32.totalorder %s93, %s95
    %p99 = scmp.eq.s32.totalorder %s12, 0
    %p100 = por %p98, %p99
    %p101 = scmp.ne.s32.totalorder %s93, %s95
    %p102 = scmp.eq.s32.totalorder %s17, 1
    %p103 = por %p101, %p102
    %p104 = scmp.ne.s32.totalorder %s95, %s96
    %p105 = scmp.eq.s32.totalorder %s17, 0
    %p106 = por %p104, %p105
    %p107 = scmp.ne.s32.totalorder %s95, %s96
    %p108 = scmp.eq.s32.totalorder %s18, 1
    %p109 = por %p107, %p108
    %p111 = scmp.ne.s32.totalorder %s96, %s110
    %p112 = scmp.eq.s32.totalorder %s18, 0
    %p113 = por %p111, %p112
    %s115 = sadd.s32 %s114, 1
    %p118 = scmp.eq.s32.totalorder %s12, 1
    %p119 = scmp.ne.s32.totalorder %s114, %s116
    %p120 = scmp.eq.s32.totalorder %s12, 0
    %p121 = por %p119, %p120
    %p122 = scmp.ne.s32.totalorder %s114, %s116
    %p123 = scmp.eq.s32.totalorder %s17, 1
    %p124 = por %p122, %p123
    %p125 = scmp.ne.s32.totalorder %s116, %s117
    %p126 = scmp.eq.s32.totalorder %s17, 0
    %p127 = por %p125, %p126
    %p128 = scmp.ne.s32.totalorder %s116, %s117
    %p129 = scmp.eq.s32.totalorder %s18, 1
    %p130 = por %p128, %p129
    %p132 = scmp.ne.s32.totalorder %s117, %s131
    %p133 = scmp.eq.s32.totalorder %s18, 0
    %p134 = por %p132, %p133
    %s136 = sadd.s32 %s135, 1
    %p139 = scmp.eq.s32.totalorder %s12, 1
    %p140 = scmp.ne.s32.totalorder %s135, %s137
    %p141 = scmp.eq.s32.totalorder %s12, 0
    %p142 = por %p140, %p141
    %p143 = scmp.ne.s32.totalorder %s135, %s137
    %p144 = scmp.eq.s32.totalorder %s17, 1
    %p145 = por %p143, %p144
    %p146 = scmp.ne.s32.totalorder %s137, %s138
    %p147 = scmp.eq.s32.totalorder %s17, 0
    %p148 = por %p146, %p147
    %p149 = scmp.ne.s32.totalorder %s137, %s138
    %p150 = scmp.eq.s32.totalorder %s18, 1
    %p151 = por %p149, %p150
    %p153 = scmp.ne.s32.totalorder %s138, %s152
    %p154 = scmp.eq.s32.totalorder %s18, 0
    %p155 = por %p153, %p154
    %s156 = ssub.s32 %s12, %s19
    %p157 = scmp.eq.s32.totalorder %s156, 0
    %s159 = sadd.s32 %s158, 1
    %s160 = scalar_select %p157, %s158, %s159
    %p163 = pneg %p157
    %p164 = scmp.eq.s32.totalorder %s12, 1
    %p165 = por %p163, %p164
    %p166 = scmp.ne.s32.totalorder %s158, %s161
    %p167 = scmp.eq.s32.totalorder %s12, 0
    %p168 = por %p166, %p167
    %p169 = scmp.ne.s32.totalorder %s158, %s161
    %p170 = scmp.eq.s32.totalorder %s17, 1
    %p171 = por %p169, %p170
    %p172 = scmp.ne.s32.totalorder %s161, %s162
    %p173 = scmp.eq.s32.totalorder %s17, 0
    %p174 = por %p172, %p173
    %p175 = scmp.ne.s32.totalorder %s161, %s162
    %p176 = scmp.eq.s32.totalorder %s18, 1
    %p177 = por %p175, %p176
    %p179 = scmp.ne.s32.totalorder %s162, %s178
    %p180 = scmp.eq.s32.totalorder %s18, 0
    %p181 = por %p179, %p180
    %p182 = scmp.le.s32.totalorder 1, %s12
    %p183 = scmp.lt.s32.totalorder %s12, 3
    %p184 = pnand %p182, %p183
    %p185 = pneg %p184
    // Predicated region
    $region9: #{digits_encoder_forward.1} parent=5 // pred_check
      _
    $region10: #{digits_encoder_forward.1} parent=5 // pred_check_branch
      %187 = sbr.rel (%p184) target = $region12
    $region11: #{digits_encoder_forward.1} parent=5 // pred_region
      %s188 = ssub.s32 %s12, 1
      // Predicated region
      $region13: #{digits_encoder_forward.1} parent=11 // pred_check
        %p189 = pneg %p85
      $region14: #{digits_encoder_forward.1} parent=11 // pred_check_branch
        %191 = sbr.rel (%p189) target = $region16
      $region15: #{digits_encoder_forward.1} parent=11 // pred_region
        _
      $region16: #{digits_encoder_forward.1} parent=11 // pred_fallthru
        _
      // Predicated region
      $region17: #{digits_encoder_forward.1} parent=11 // pred_check
        %p192 = pneg %p106
      $region18: #{digits_encoder_forward.1} parent=11 // pred_check_branch
        %194 = sbr.rel (%p192) target = $region20
      $region19: #{digits_encoder_forward.1} parent=11 // pred_region
        _
      $region20: #{digits_encoder_forward.1} parent=11 // pred_fallthru
        _
      // Predicated region
      $region21: #{digits_encoder_forward.1} parent=11 // pred_check
        %p195 = pneg %p127
      $region22: #{digits_encoder_forward.1} parent=11 // pred_check_branch
        %197 = sbr.rel (%p195) target = $region24
      $region23: #{digits_encoder_forward.1} parent=11 // pred_region
        _
      $region24: #{digits_encoder_forward.1} parent=11 // pred_fallthru
        _
      // Predicated region
      $region25: #{digits_encoder_forward.1} parent=11 // pred_check
        %p198 = pneg %p148
      $region26: #{digits_encoder_forward.1} parent=11 // pred_check_branch
        %200 = sbr.rel (%p198) target = $region28
      $region27: #{digits_encoder_forward.1} parent=11 // pred_region
        _
      $region28: #{digits_encoder_forward.1} parent=11 // pred_fallthru
        _
    $region12: #{digits_encoder_forward.1} parent=5 // pred_fallthru
      _
    %p201 = scmp.lt.s32.totalorder %s12, 2
    // Predicated region
    $region29: #{digits_encoder_forward.1} parent=5 // pred_check
      %p202 = pneg %p201
    $region30: #{digits_encoder_forward.1} parent=5 // pred_check_branch
      %204 = sbr.rel (%p202) target = $region32
    $region31: #{digits_encoder_forward.1} parent=5 // pred_region
      // Predicated region
      $region33: #{digits_encoder_forward.1} parent=31 // pred_check
        %p205 = pneg %p32
      $region34: #{digits_encoder_forward.1} parent=31 // pred_check_branch
        %207 = sbr.rel (%p205) target = $region36
      $region35: #{digits_encoder_forward.1} parent=31 // pred_region
        %s208 = smul.u32 49, %s12
        %p209 = scmp.lt.s32.totalorder %s208, 97
        %s210 = scalar_select %p209, %s208, 97
        %s211 = smul.addr %s210, 4
        %s212 = scalar_lea.vmem %s0, %s211
        %s213 = smul.u32 49, %s12
      $region36: #{digits_encoder_forward.1} parent=31 // pred_fallthru
        _
      // Predicated region
      $region37: #{digits_encoder_forward.1} parent=31 // pred_check
        %p214 = pneg %p58
      $region38: #{digits_encoder_forward.1} parent=31 // pred_check_branch
        %216 = sbr.rel (%p214) target = $region40
      $region39: #{digits_encoder_forward.1} parent=31 // pred_region
        %s217 = smul.u32 49, %s12
        %p218 = scmp.lt.s32.totalorder %s217, 97
        %s219 = scalar_select %p218, %s217, 97
        %s220 = smul.addr %s219, 4
        %s221 = scalar_lea.vmem %s1, %s220
        %s222 = smul.u32 49, %s12
      $region40: #{digits_encoder_forward.1} parent=31 // pred_fallthru
        _
    $region32: #{digits_encoder_forward.1} parent=5 // pred_fallthru
      _
    %p223 = scmp.le.s32.totalorder 1, %s12
    %p224 = scmp.lt.s32.totalorder %s12, 3
    %p225 = pnand %p223, %p224
    %p226 = pneg %p225
    // Predicated region
    $region41: #{digits_encoder_forward.1} parent=5 // pred_check
      _
    $region42: #{digits_encoder_forward.1} parent=5 // pred_check_branch
      %228 = sbr.rel (%p225) target = $region44
    $region43: #{digits_encoder_forward.1} parent=5 // pred_region
      %s229 = ssub.s32 %s12, 1
      %s230 = smul.u32 49, %s17
      %p231 = scmp.lt.s32.totalorder %s230, 97
      %s232 = scalar_select %p231, %s230, 97
      %s233 = smul.addr %s232, 4
      %s234 = scalar_lea.vmem %s0, %s233
      %p235 = pneg %p38
      %p236 = pneg %p35
      %s237 = smul.u32 49, %s17
      %p238 = scmp.lt.s32.totalorder %s237, 97
      %s239 = scalar_select %p238, %s237, 97
      %s240 = smul.addr %s239, 4
      %s241 = scalar_lea.vmem %s1, %s240
      %p242 = pneg %p64
      %p243 = pneg %p61
      %p244 = pneg %p85
      %p245 = pneg %p82
      %p246 = pneg %p106
      %p247 = pneg %p103
      %p248 = pneg %p127
      %p249 = pneg %p124
      %p250 = pneg %p148
      %p251 = pneg %p145
      %p252 = pneg %p174
      %p253 = pneg %p171
      %p254 = scmp.lt.s32.totalorder %s17, 1
      %s255 = scalar_select %p254, %s17, 1
      %s256 = smul.addr %s255, 10
      %s257 = smul.addr %s256, 8
      %s258 = scalar_lea.vmem %s6, %s257
      %s259 = smul.u32 49, %s17
      %p260 = scmp.lt.s32.totalorder %s259, 97
      %s261 = scalar_select %p260, %s259, 97
      %s262 = smul.addr %s261, 4
      %s263 = scalar_lea.vmem %s0, %s262
      %s264 = smul.u32 49, %s17
      %s265 = smul.u32 49, %s17
      %p266 = scmp.lt.s32.totalorder %s265, 97
      %s267 = scalar_select %p266, %s265, 97
      %s268 = smul.addr %s267, 4
      %s269 = scalar_lea.vmem %s1, %s268
      %s270 = smul.u32 49, %s17
      %p271 = scmp.lt.s32.totalorder %s17, 1
      %s272 = scalar_select %p271, %s17, 1
      %s273 = smul.addr %s272, 10
      %s274 = smul.addr %s273, 8
      %s275 = scalar_lea.vmem %s6, %s274
      %v277 = vld [vmem:[%s3] sm:$0x1]
      %v278 = vld [vmem:[%s263] sm:$0xf]
      %v279 = vld [vmem:[%s263 + $0x4] sm:$0xf]
      %v280 = vld [vmem:[%s263 + $0x8] sm:$0xf]
      %v281 = vld [vmem:[%s263 + $0xc] sm:$0xf]
      %v282 = vld [vmem:[%s263 + $0x10] sm:$0xf]
      %v283 = vld [vmem:[%s263 + $0x14] sm:$0xf]
      %v284 = vld [vmem:[%s263 + $0x18] sm:$0xf]
      %v285 = vld [vmem:[%s263 + $0x1c] sm:$0xf]
      %v286 = vld [vmem:[%s263 + $0x20] sm:$0xf]
      %v287 = vld [vmem:[%s263 + $0x24] sm:$0xf]
      %v288 = vld [vmem:[%s263 + $0x28] sm:$0xf]
      %v289 = vld [vmem:[%s263 + $0x2c] sm:$0xf]
      %v290 = vld [vmem:[%s263 + $0x30] sm:$0xf]
      %v291 = vld [vmem:[%s263 + $0x34] sm:$0xf]
      %v292 = vld [vmem:[%s263 + $0x38] sm:$0xf]
      %v293 = vld [vmem:[%s263 + $0x3c] sm:$0xf]
      %v294 = vld [vmem:[%s263 + $0x40] sm:$0xf]
      %v295 = vld [vmem:[%s263 + $0x44] sm:$0xf]
      %v296 = vld [vmem:[%s263 + $0x48] sm:$0xf]
      %v297 = vld [vmem:[%s263 + $0x4c] sm:$0xf]
      %v298 = vld [vmem:[%s263 + $0x50] sm:$0xf]
      %v299 = vld [vmem:[%s263 + $0x54] sm:$0xf]
      %v300 = vld [vmem:[%s263 + $0x58] sm:$0xf]
      %v301 = vld [vmem:[%s263 + $0x5c] sm:$0xf]
      %v302 = vld [vmem:[%s263 + $0x60] sm:$0xf]
      %v303 = vld [vmem:[%s263 + $0x64] sm:$0xf]
      %v304 = vld [vmem:[%s263 + $0x68] sm:$0xf]
      %v305 = vld [vmem:[%s263 + $0x6c] sm:$0xf]
      %v306 = vld [vmem:[%s263 + $0x70] sm:$0xf]
      %v307 = vld [vmem:[%s263 + $0x74] sm:$0xf]
      %v308 = vld [vmem:[%s263 + $0x78] sm:$0xf]
      %v309 = vld [vmem:[%s263 + $0x7c] sm:$0xf]
      %v310 = vld [vmem:[%s263 + $0x80] sm:$0xf]
      %v311 = vld [vmem:[%s263 + $0x84] sm:$0xf]
      %v312 = vld [vmem:[%s263 + $0x88] sm:$0xf]
      %v313 = vld [vmem:[%s263 + $0x8c] sm:$0xf]
      %v314 = vld [vmem:[%s263 + $0x90] sm:$0xf]
      %v315 = vld [vmem:[%s263 + $0x94] sm:$0xf]
      %v316 = vld [vmem:[%s263 + $0x98] sm:$0xf]
      %v317 = vld [vmem:[%s263 + $0x9c] sm:$0xf]
      %v318 = vld [vmem:[%s263 + $0xa0] sm:$0xf]
      %v319 = vld [vmem:[%s263 + $0xa4] sm:$0xf]
      %v320 = vld [vmem:[%s263 + $0xa8] sm:$0xf]
      %v321 = vld [vmem:[%s263 + $0xac] sm:$0xf]
      %v322 = vld [vmem:[%s263 + $0xb0] sm:$0xf]
      %v323 = vld [vmem:[%s263 + $0xb4] sm:$0xf]
      %v324 = vld [vmem:[%s263 + $0xb8] sm:$0xf]
      %v325 = vld [vmem:[%s263 + $0xbc] sm:$0xf]
      %v326 = vld [vmem:[%s263 + $0xc0] sm:$0xf]
      %v327 = vld [vmem:[%s2] sm:$0xf]
      %v328 = vld [vmem:[%s2 + $0x4] sm:$0xf]
      %v329 = vld [vmem:[%s2 + $0x8] sm:$0xf]
      %v330 = vld [vmem:[%s2 + $0xc] sm:$0xf]
      %v331 = vld [vmem:[%s2 + $0x10] sm:$0xf]
      %v332 = vld [vmem:[%s2 + $0x14] sm:$0xf]
      %v333 = vld [vmem:[%s2 + $0x18] sm:$0xf]
      %v334 = vld [vmem:[%s2 + $0x1c] sm:$0xf]
      %v335 = vld [vmem:[%s2 + $0x20] sm:$0xf]
      %v336 = vld [vmem:[%s2 + $0x24] sm:$0x3]
      %v338 = vlaneseq
      %v339 = vshrl.u32 %v338, 7
      %v340 = vsub.s32 0, %v339
      %v341 = vrot.slane %v277, %v340
      %v392 = vunpack.c.l.b16 %v278
      %v393 = vunpack.c.l.b16 %v279
      %v394 = vunpack.c.l.b16 %v280
      %v395 = vunpack.c.l.b16 %v281
      %v396 = vunpack.c.l.b16 %v282
      %v397 = vunpack.c.l.b16 %v283
      %v398 = vunpack.c.l.b16 %v284
      %v399 = vunpack.c.l.b16 %v285
      %v400 = vunpack.c.l.b16 %v286
      %v401 = vunpack.c.l.b16 %v287
      %v402 = vunpack.c.l.b16 %v288
      %v403 = vunpack.c.l.b16 %v289
      %v404 = vunpack.c.l.b16 %v290
      %v405 = vunpack.c.l.b16 %v291
      %v406 = vunpack.c.l.b16 %v292
      %v407 = vunpack.c.l.b16 %v293
      %v408 = vunpack.c.l.b16 %v294
      %v409 = vunpack.c.l.b16 %v295
      %v410 = vunpack.c.l.b16 %v296
      %v411 = vunpack.c.l.b16 %v297
      %v412 = vunpack.c.l.b16 %v298
      %v413 = vunpack.c.l.b16 %v299
      %v414 = vunpack.c.l.b16 %v300
      %v415 = vunpack.c.l.b16 %v301
      %v416 = vunpack.c.l.b16 %v302
      %v417 = vunpack.c.l.b16 %v303
      %v418 = vunpack.c.l.b16 %v304
      %v419 = vunpack.c.l.b16 %v305
      %v420 = vunpack.c.l.b16 %v306
      %v421 = vunpack.c.l.b16 %v307
      %v422 = vunpack.c.l.b16 %v308
      %v423 = vunpack.c.l.b16 %v309
      %v424 = vunpack.c.l.b16 %v310
      %v425 = vunpack.c.l.b16 %v311
      %v426 = vunpack.c.l.b16 %v312
      %v427 = vunpack.c.l.b16 %v313
      %v428 = vunpack.c.l.b16 %v314
      %v429 = vunpack.c.l.b16 %v315
      %v430 = vunpack.c.l.b16 %v316
      %v431 = vunpack.c.l.b16 %v317
      %v432 = vunpack.c.l.b16 %v318
      %v433 = vunpack.c.l.b16 %v319
      %v434 = vunpack.c.l.b16 %v320
      %v435 = vunpack.c.l.b16 %v321
      %v436 = vunpack.c.l.b16 %v322
      %v437 = vunpack.c.l.b16 %v323
      %v438 = vunpack.c.l.b16 %v324
      %v439 = vunpack.c.l.b16 %v325
      %v440 = vunpack.c.l.b16 %v326
      %v441 = vpack.c.b16 %v393, %v392
      %v442 = vpack.c.b16 %v395, %v394
      %v443 = vpack.c.b16 %v397, %v396
      %v444 = vpack.c.b16 %v399, %v398
      %v445 = vpack.c.b16 %v401, %v400
      %v446 = vpack.c.b16 %v403, %v402
      %v447 = vpack.c.b16 %v405, %v404
      %v448 = vpack.c.b16 %v407, %v406
      %v449 = vpack.c.b16 %v409, %v408
      %v450 = vpack.c.b16 %v411, %v410
      %v451 = vpack.c.b16 %v413, %v412
      %v452 = vpack.c.b16 %v415, %v414
      %v453 = vpack.c.b16 %v417, %v416
      %v454 = vpack.c.b16 %v419, %v418
      %v455 = vpack.c.b16 %v421, %v420
      %v456 = vpack.c.b16 %v423, %v422
      %v457 = vpack.c.b16 %v425, %v424
      %v458 = vpack.c.b16 %v427, %v426
      %v459 = vpack.c.b16 %v429, %v428
      %v460 = vpack.c.b16 %v431, %v430
      %v461 = vpack.c.b16 %v433, %v432
      %v462 = vpack.c.b16 %v435, %v434
      %v463 = vpack.c.b16 %v437, %v436
      %v464 = vpack.c.b16 %v439, %v438
      %v465 = vpack.c.b16 %v440, %v440
      %v476 = vunpack.c.l.b16 %v327
      %v477 = vunpack.c.l.b16 %v328
      %v478 = vunpack.c.l.b16 %v329
      %v479 = vunpack.c.l.b16 %v330
      %v480 = vunpack.c.l.b16 %v331
      %v481 = vunpack.c.l.b16 %v332
      %v482 = vunpack.c.l.b16 %v333
      %v483 = vunpack.c.l.b16 %v334
      %v484 = vunpack.c.l.b16 %v335
      %v485 = vunpack.c.l.b16 %v336
      %v486 = vpack.c.b16 %v477, %v476
      %v487 = vpack.c.b16 %v479, %v478
      %v488 = vpack.c.b16 %v481, %v480
      %v489 = vpack.c.b16 %v483, %v482
      %v490 = vpack.c.b16 %v485, %v484
      %vm495 = vcmask 613376
      %v497 = vsel %vm495, %v441, 0
      %v500 = vsel %vm495, %v442, 0
      %v503 = vsel %vm495, %v443, 0
      %v506 = vsel %vm495, %v444, 0
      %v509 = vsel %vm495, %v445, 0
      %v512 = vsel %vm495, %v446, 0
      %v515 = vsel %vm495, %v447, 0
      %v518 = vsel %vm495, %v448, 0
      %v521 = vsel %vm495, %v449, 0
      %v524 = vsel %vm495, %v450, 0
      %v527 = vsel %vm495, %v451, 0
      %v530 = vsel %vm495, %v452, 0
      %v533 = vsel %vm495, %v453, 0
      %v536 = vsel %vm495, %v454, 0
      %v539 = vsel %vm495, %v455, 0
      %v542 = vsel %vm495, %v456, 0
      %v545 = vsel %vm495, %v457, 0
      %v548 = vsel %vm495, %v458, 0
      %v551 = vsel %vm495, %v459, 0
      %v554 = vsel %vm495, %v460, 0
      %v557 = vsel %vm495, %v461, 0
      %v560 = vsel %vm495, %v462, 0
      %v563 = vsel %vm495, %v463, 0
      %v566 = vsel %vm495, %v464, 0
      %v569 = vsel %vm495, %v465, 0
      %vm571 = vcmask 1044480
      %vm572 = vcmask 1045504
      %v573 = vsel %vm571, 4294967295, 65535
      %v574 = vsel %vm572, %v573, 0
      %v576 = vand.u32 %v490, %v574
      %578 = vmatprep.subr.bf16.mxu0 0
      %579 = vmatpush1.bf16.msra.mxu0 %v486
      %580 = vmatprep.subr.bf16.mxu0 0
      %581 = vmatpush1.bf16.msra.mxu0 %v487
      %582 = vmatprep.subr.bf16.mxu0 0
      %583 = vmatpush1.bf16.msra.mxu0 %v488
      %584 = vmatprep.subr.bf16.mxu0 0
      %585 = vmatpush1.bf16.msra.mxu0 %v489
      %586 = vmatprep.subr.bf16.mxu0 0
      %587 = vmatpush1.bf16.msra.mxu0 %v576
      %588 = vmatprep.subr.bf16.mxu0 0
      %589 = vmatpush1.bf16.msra.mxu0 0
      %590 = vmatprep.subr.bf16.mxu0 0
      %591 = vmatpush1.bf16.msra.mxu0 0
      %592 = vmatprep.subr.bf16.mxu0 0
      %593 = vmatpush1.bf16.msra.mxu0 0
      %594 = vmatprep.subr.bf16.mxu0 0
      %595 = vmatpush1.bf16.msra.mxu0 0
      %596 = vmatprep.subr.bf16.mxu0 0
      %597 = vmatpush1.bf16.msra.mxu0 0
      %598 = vmatprep.subr.bf16.mxu0 0
      %599 = vmatpush1.bf16.msra.mxu0 0
      %600 = vmatprep.subr.bf16.mxu0 0
      %601 = vmatpush1.bf16.msra.mxu0 0
      %602 = vmatprep.subr.bf16.mxu0 0
      %603 = vmatpush1.bf16.msra.mxu0 0
      %604 = vmatprep.subr.bf16.mxu0 0
      %605 = vmatpush1.bf16.msra.mxu0 0
      %606 = vmatprep.subr.bf16.mxu0 0
      %607 = vmatpush1.bf16.msra.mxu0 0
      %608 = vmatprep.subr.bf16.mxu0 0
      %609 = vmatpush1.bf16.msra.mxu0 0
      %610 = vmatprep.mubr.bf16.mxu0 0
      %611 = vmatmul.mubr.bf16.gmra.mrb[0].mxu0 %v497
      %v612 = vpop.f32.mrb[0].mxu0
      %v613 = vadd.f32 %v341, %v612
      %v614 = vpop.f32.mrb[0].mxu0
      %v615 = vpop.f32.mrb[0].mxu0
      %v616 = vadd.f32 %v341, %v615
      %v617 = vpop.f32.mrb[0].mxu0
      %618 = vmatprep.mubr.bf16.mxu0 0
      %619 = vmatmul.mubr.bf16.gmra.mrb[0].mxu0 %v500
      %v620 = vpop.f32.mrb[0].mxu0
      %v621 = vadd.f32 %v341, %v620
      %v622 = vpop.f32.mrb[0].mxu0
      %v623 = vpop.f32.mrb[0].mxu0
      %v624 = vadd.f32 %v341, %v623
      %v625 = vpop.f32.mrb[0].mxu0
      %626 = vmatprep.mubr.bf16.mxu0 0
      %627 = vmatmul.mubr.bf16.gmra.mrb[0].mxu0 %v503
      %v628 = vpop.f32.mrb[0].mxu0
      %v629 = vadd.f32 %v341, %v628
      %v630 = vpop.f32.mrb[0].mxu0
      %v631 = vpop.f32.mrb[0].mxu0
      %v632 = vadd.f32 %v341, %v631
      %v633 = vpop.f32.mrb[0].mxu0
      %634 = vmatprep.mubr.bf16.mxu0 0
      %635 = vmatmul.mubr.bf16.gmra.mrb[0].mxu0 %v506
      %v636 = vpop.f32.mrb[0].mxu0
      %v637 = vadd.f32 %v341, %v636
      %v638 = vpop.f32.mrb[0].mxu0
      %v639 = vpop.f32.mrb[0].mxu0
      %v640 = vadd.f32 %v341, %v639
      %v641 = vpop.f32.mrb[0].mxu0
      %642 = vmatprep.mubr.bf16.mxu0 0
      %643 = vmatmul.mubr.bf16.gmra.mrb[0].mxu0 %v509
      %v644 = vpop.f32.mrb[0].mxu0
      %v645 = vadd.f32 %v341, %v644
      %v646 = vpop.f32.mrb[0].mxu0
      %v647 = vpop.f32.mrb[0].mxu0
      %v648 = vadd.f32 %v341, %v647
      %v649 = vpop.f32.mrb[0].mxu0
      %650 = vmatprep.mubr.bf16.mxu0 0
      %651 = vmatmul.mubr.bf16.gmra.mrb[0].mxu0 %v512
      %v652 = vpop.f32.mrb[0].mxu0
      %v653 = vadd.f32 %v341, %v652
      %v654 = vpop.f32.mrb[0].mxu0
      %v655 = vpop.f32.mrb[0].mxu0
      %v656 = vadd.f32 %v341, %v655
      %v657 = vpop.f32.mrb[0].mxu0
      %658 = vmatprep.mubr.bf16.mxu0 0
      %659 = vmatmul.mubr.bf16.gmra.mrb[0].mxu0 %v515
      %v660 = vpop.f32.mrb[0].mxu0
      %v661 = vadd.f32 %v341, %v660
      %v662 = vpop.f32.mrb[0].mxu0
      %v663 = vpop.f32.mrb[0].mxu0
      %v664 = vadd.f32 %v341, %v663
      %v665 = vpop.f32.mrb[0].mxu0
      %666 = vmatprep.mubr.bf16.mxu0 0
      %667 = vmatmul.mubr.bf16.gmra.mrb[0].mxu0 %v518
      %v668 = vpop.f32.mrb[0].mxu0
      %v669 = vadd.f32 %v341, %v668
      %v670 = vpop.f32.mrb[0].mxu0
      %v671 = vpop.f32.mrb[0].mxu0
      %v672 = vadd.f32 %v341, %v671
      %v673 = vpop.f32.mrb[0].mxu0
      %674 = vmatprep.mubr.bf16.mxu0 0
      %675 = vmatmul.mubr.bf16.gmra.mrb[0].mxu0 %v521
      %v676 = vpop.f32.mrb[0].mxu0
      %v677 = vadd.f32 %v341, %v676
      %v678 = vpop.f32.mrb[0].mxu0
      %v679 = vpop.f32.mrb[0].mxu0
      %v680 = vadd.f32 %v341, %v679
      %v681 = vpop.f32.mrb[0].mxu0
      %682 = vmatprep.mubr.bf16.mxu0 0
      %683 = vmatmul.mubr.bf16.gmra.mrb[0].mxu0 %v524
      %v684 = vpop.f32.mrb[0].mxu0
      %v685 = vadd.f32 %v341, %v684
      %v686 = vpop.f32.mrb[0].mxu0
      %v687 = vpop.f32.mrb[0].mxu0
      %v688 = vadd.f32 %v341, %v687
      %v689 = vpop.f32.mrb[0].mxu0
      %690 = vmatprep.mubr.bf16.mxu0 0
      %691 = vmatmul.mubr.bf16.gmra.mrb[0].mxu0 %v527
      %v692 = vpop.f32.mrb[0].mxu0
      %v693 = vadd.f32 %v341, %v692
      %v694 = vpop.f32.mrb[0].mxu0
      %v695 = vpop.f32.mrb[0].mxu0
      %v696 = vadd.f32 %v341, %v695
      %v697 = vpop.f32.mrb[0].mxu0
      %698 = vmatprep.mubr.bf16.mxu0 0
      %699 = vmatmul.mubr.bf16.gmra.mrb[0].mxu0 %v530
      %v700 = vpop.f32.mrb[0].mxu0
      %v701 = vadd.f32 %v341, %v700
      %v702 = vpop.f32.mrb[0].mxu0
      %v703 = vpop.f32.mrb[0].mxu0
      %v704 = vadd.f32 %v341, %v703
      %v705 = vpop.f32.mrb[0].mxu0
      %706 = vmatprep.mubr.bf16.mxu0 0
      %707 = vmatmul.mubr.bf16.gmra.mrb[0].mxu0 %v533
      %v708 = vpop.f32.mrb[0].mxu0
      %v709 = vadd.f32 %v341, %v708
      %v710 = vpop.f32.mrb[0].mxu0
      %v711 = vpop.f32.mrb[0].mxu0
      %v712 = vadd.f32 %v341, %v711
      %v713 = vpop.f32.mrb[0].mxu0
      %714 = vmatprep.mubr.bf16.mxu0 0
      %715 = vmatmul.mubr.bf16.gmra.mrb[0].mxu0 %v536
      %v716 = vpop.f32.mrb[0].mxu0
      %v717 = vadd.f32 %v341, %v716
      %v718 = vpop.f32.mrb[0].mxu0
      %v719 = vpop.f32.mrb[0].mxu0
      %v720 = vadd.f32 %v341, %v719
      %v721 = vpop.f32.mrb[0].mxu0
      %722 = vmatprep.mubr.bf16.mxu0 0
      %723 = vmatmul.mubr.bf16.gmra.mrb[0].mxu0 %v539
      %v724 = vpop.f32.mrb[0].mxu0
      %v725 = vadd.f32 %v341, %v724
      %v726 = vpop.f32.mrb[0].mxu0
      %v727 = vpop.f32.mrb[0].mxu0
      %v728 = vadd.f32 %v341, %v727
      %v729 = vpop.f32.mrb[0].mxu0
      %730 = vmatprep.mubr.bf16.mxu0 0
      %731 = vmatmul.mubr.bf16.gmra.mrb[0].mxu0 %v542
      %v732 = vpop.f32.mrb[0].mxu0
      %v733 = vadd.f32 %v341, %v732
      %v734 = vpop.f32.mrb[0].mxu0
      %v735 = vpop.f32.mrb[0].mxu0
      %v736 = vadd.f32 %v341, %v735
      %v737 = vpop.f32.mrb[0].mxu0
      %738 = vmatprep.mubr.bf16.mxu0 0
      %739 = vmatmul.mubr.bf16.gmra.mrb[0].mxu0 %v545
      %v740 = vpop.f32.mrb[0].mxu0
      %v741 = vadd.f32 %v341, %v740
      %v742 = vpop.f32.mrb[0].mxu0
      %v743 = vpop.f32.mrb[0].mxu0
      %v744 = vadd.f32 %v341, %v743
      %v745 = vpop.f32.mrb[0].mxu0
      %746 = vmatprep.mubr.bf16.mxu0 0
      %747 = vmatmul.mubr.bf16.gmra.mrb[0].mxu0 %v548
      %v748 = vpop.f32.mrb[0].mxu0
      %v749 = vadd.f32 %v341, %v748
      %v750 = vpop.f32.mrb[0].mxu0
      %v751 = vpop.f32.mrb[0].mxu0
      %v752 = vadd.f32 %v341, %v751
      %v753 = vpop.f32.mrb[0].mxu0
      %754 = vmatprep.mubr.bf16.mxu0 0
      %755 = vmatmul.mubr.bf16.gmra.mrb[0].mxu0 %v551
      %v756 = vpop.f32.mrb[0].mxu0
      %v757 = vadd.f32 %v341, %v756
      %v758 = vpop.f32.mrb[0].mxu0
      %v759 = vpop.f32.mrb[0].mxu0
      %v760 = vadd.f32 %v341, %v759
      %v761 = vpop.f32.mrb[0].mxu0
      %762 = vmatprep.mubr.bf16.mxu0 0
      %763 = vmatmul.mubr.bf16.gmra.mrb[0].mxu0 %v554
      %v764 = vpop.f32.mrb[0].mxu0
      %v765 = vadd.f32 %v341, %v764
      %v766 = vpop.f32.mrb[0].mxu0
      %v767 = vpop.f32.mrb[0].mxu0
      %v768 = vadd.f32 %v341, %v767
      %v769 = vpop.f32.mrb[0].mxu0
      %770 = vmatprep.mubr.bf16.mxu0 0
      %771 = vmatmul.mubr.bf16.gmra.mrb[0].mxu0 %v557
      %v772 = vpop.f32.mrb[0].mxu0
      %v773 = vadd.f32 %v341, %v772
      %v774 = vpop.f32.mrb[0].mxu0
      %v775 = vpop.f32.mrb[0].mxu0
      %v776 = vadd.f32 %v341, %v775
      %v777 = vpop.f32.mrb[0].mxu0
      %778 = vmatprep.mubr.bf16.mxu0 0
      %779 = vmatmul.mubr.bf16.gmra.mrb[0].mxu0 %v560
      %v780 = vpop.f32.mrb[0].mxu0
      %v781 = vadd.f32 %v341, %v780
      %v782 = vpop.f32.mrb[0].mxu0
      %v783 = vpop.f32.mrb[0].mxu0
      %v784 = vadd.f32 %v341, %v783
      %v785 = vpop.f32.mrb[0].mxu0
      %786 = vmatprep.mubr.bf16.mxu0 0
      %787 = vmatmul.mubr.bf16.gmra.mrb[0].mxu0 %v563
      %v788 = vpop.f32.mrb[0].mxu0
      %v789 = vadd.f32 %v341, %v788
      %v790 = vpop.f32.mrb[0].mxu0
      %v791 = vpop.f32.mrb[0].mxu0
      %v792 = vadd.f32 %v341, %v791
      %v793 = vpop.f32.mrb[0].mxu0
      %794 = vmatprep.mubr.bf16.mxu0 0
      %795 = vmatmul.mubr.bf16.gmra.mrb[0].mxu0 %v566
      %v796 = vpop.f32.mrb[0].mxu0
      %v797 = vadd.f32 %v341, %v796
      %v798 = vpop.f32.mrb[0].mxu0
      %v799 = vpop.f32.mrb[0].mxu0
      %v800 = vadd.f32 %v341, %v799
      %v801 = vpop.f32.mrb[0].mxu0
      %802 = vmatprep.mubr.bf16.mxu0 0
      %803 = vmatmul.mubr.bf16.gmra.mrb[0].mxu0 %v569
      %v804 = vpop.f32.mrb[0].mxu0
      %v805 = vadd.f32 %v341, %v804
      %v806 = vpop.f32.mrb[0].mxu0
      %v807 = vpop.f32.mrb[0].mxu0
      %v808 = vpop.f32.mrb[0].mxu0
      %809 = vdwg.mxu0
      %v810 = vmax.f32 %v613, 0.0
      %v811 = vmax.f32 %v616, 0.0
      %v812 = vmax.f32 %v621, 0.0
      %v813 = vmax.f32 %v624, 0.0
      %v814 = vmax.f32 %v629, 0.0
      %v815 = vmax.f32 %v632, 0.0
      %v816 = vmax.f32 %v637, 0.0
      %v817 = vmax.f32 %v640, 0.0
      %v818 = vmax.f32 %v645, 0.0
      %v819 = vmax.f32 %v648, 0.0
      %v820 = vmax.f32 %v653, 0.0
      %v821 = vmax.f32 %v656, 0.0
      %v822 = vmax.f32 %v661, 0.0
      %v823 = vmax.f32 %v664, 0.0
      %v824 = vmax.f32 %v669, 0.0
      %v825 = vmax.f32 %v672, 0.0
      %v826 = vmax.f32 %v677, 0.0
      %v827 = vmax.f32 %v680, 0.0
      %v828 = vmax.f32 %v685, 0.0
      %v829 = vmax.f32 %v688, 0.0
      %v830 = vmax.f32 %v693, 0.0
      %v831 = vmax.f32 %v696, 0.0
      %v832 = vmax.f32 %v701, 0.0
      %v833 = vmax.f32 %v704, 0.0
      %v834 = vmax.f32 %v709, 0.0
      %v835 = vmax.f32 %v712, 0.0
      %v836 = vmax.f32 %v717, 0.0
      %v837 = vmax.f32 %v720, 0.0
      %v838 = vmax.f32 %v725, 0.0
      %v839 = vmax.f32 %v728, 0.0
      %v840 = vmax.f32 %v733, 0.0
      %v841 = vmax.f32 %v736, 0.0
      %v842 = vmax.f32 %v741, 0.0
      %v843 = vmax.f32 %v744, 0.0
      %v844 = vmax.f32 %v749, 0.0
      %v845 = vmax.f32 %v752, 0.0
      %v846 = vmax.f32 %v757, 0.0
      %v847 = vmax.f32 %v760, 0.0
      %v848 = vmax.f32 %v765, 0.0
      %v849 = vmax.f32 %v768, 0.0
      %v850 = vmax.f32 %v773, 0.0
      %v851 = vmax.f32 %v776, 0.0
      %v852 = vmax.f32 %v781, 0.0
      %v853 = vmax.f32 %v784, 0.0
      %v854 = vmax.f32 %v789, 0.0
      %v855 = vmax.f32 %v792, 0.0
      %v856 = vmax.f32 %v797, 0.0
      %v857 = vmax.f32 %v800, 0.0
      %v858 = vmax.f32 %v805, 0.0
      %vm859 = vcmask 261120
      %860 = vst.msk [vmem:[#allocation2] sm:$0xff] %vm859, %v810
      %861 = vst.msk [vmem:[#allocation2 + $0x8] sm:$0xff] %vm859, %v811
      %862 = vst.msk [vmem:[#allocation2 + $0x10] sm:$0xff] %vm859, %v812
      %863 = vst.msk [vmem:[#allocation2 + $0x18] sm:$0xff] %vm859, %v813
      %864 = vst.msk [vmem:[#allocation2 + $0x20] sm:$0xff] %vm859, %v814
      %865 = vst.msk [vmem:[#allocation2 + $0x28] sm:$0xff] %vm859, %v815
      %866 = vst.msk [vmem:[#allocation2 + $0x30] sm:$0xff] %vm859, %v816
      %867 = vst.msk [vmem:[#allocation2 + $0x38] sm:$0xff] %vm859, %v817
      %868 = vst.msk [vmem:[#allocation2 + $0x40] sm:$0xff] %vm859, %v818
      %869 = vst.msk [vmem:[#allocation2 + $0x48] sm:$0xff] %vm859, %v819
      %870 = vst.msk [vmem:[#allocation2 + $0x50] sm:$0xff] %vm859, %v820
      %871 = vst.msk [vmem:[#allocation2 + $0x58] sm:$0xff] %vm859, %v821
      %872 = vst.msk [vmem:[#allocation2 + $0x60] sm:$0xff] %vm859, %v822
      %873 = vst.msk [vmem:[#allocation2 + $0x68] sm:$0xff] %vm859, %v823
      %874 = vst.msk [vmem:[#allocation2 + $0x70] sm:$0xff] %vm859, %v824
      %875 = vst.msk [vmem:[#allocation2 + $0x78] sm:$0xff] %vm859, %v825
      %876 = vst.msk [vmem:[#allocation2 + $0x80] sm:$0xff] %vm859, %v826
      %877 = vst.msk [vmem:[#allocation2 + $0x88] sm:$0xff] %vm859, %v827
      %878 = vst.msk [vmem:[#allocation2 + $0x90] sm:$0xff] %vm859, %v828
      %879 = vst.msk [vmem:[#allocation2 + $0x98] sm:$0xff] %vm859, %v829
      %880 = vst.msk [vmem:[#allocation2 + $0xa0] sm:$0xff] %vm859, %v830
      %881 = vst.msk [vmem:[#allocation2 + $0xa8] sm:$0xff] %vm859, %v831
      %882 = vst.msk [vmem:[#allocation2 + $0xb0] sm:$0xff] %vm859, %v832
      %883 = vst.msk [vmem:[#allocation2 + $0xb8] sm:$0xff] %vm859, %v833
      %884 = vst.msk [vmem:[#allocation2 + $0xc0] sm:$0xff] %vm859, %v834
      %885 = vst.msk [vmem:[#allocation2 + $0xc8] sm:$0xff] %vm859, %v835
      %886 = vst.msk [vmem:[#allocation2 + $0xd0] sm:$0xff] %vm859, %v836
      %887 = vst.msk [vmem:[#allocation2 + $0xd8] sm:$0xff] %vm859, %v837
      %888 = vst.msk [vmem:[#allocation2 + $0xe0] sm:$0xff] %vm859, %v838
      %889 = vst.msk [vmem:[#allocation2 + $0xe8] sm:$0xff] %vm859, %v839
      %890 = vst.msk [vmem:[#allocation2 + $0xf0] sm:$0xff] %vm859, %v840
      %891 = vst.msk [vmem:[#allocation2 + $0xf8] sm:$0xff] %vm859, %v841
      %892 = vst.msk [vmem:[#allocation2 + $0x100] sm:$0xff] %vm859, %v842
      %893 = vst.msk [vmem:[#allocation2 + $0x108] sm:$0xff] %vm859, %v843
      %894 = vst.msk [vmem:[#allocation2 + $0x110] sm:$0xff] %vm859, %v844
      %895 = vst.msk [vmem:[#allocation2 + $0x118] sm:$0xff] %vm859, %v845
      %896 = vst.msk [vmem:[#allocation2 + $0x120] sm:$0xff] %vm859, %v846
      %897 = vst.msk [vmem:[#allocation2 + $0x128] sm:$0xff] %vm859, %v847
      %898 = vst.msk [vmem:[#allocation2 + $0x130] sm:$0xff] %vm859, %v848
      %899 = vst.msk [vmem:[#allocation2 + $0x138] sm:$0xff] %vm859, %v849
      %900 = vst.msk [vmem:[#allocation2 + $0x140] sm:$0xff] %vm859, %v850
      %901 = vst.msk [vmem:[#allocation2 + $0x148] sm:$0xff] %vm859, %v851
      %902 = vst.msk [vmem:[#allocation2 + $0x150] sm:$0xff] %vm859, %v852
      %903 = vst.msk [vmem:[#allocation2 + $0x158] sm:$0xff] %vm859, %v853
      %904 = vst.msk [vmem:[#allocation2 + $0x160] sm:$0xff] %vm859, %v854
      %905 = vst.msk [vmem:[#allocation2 + $0x168] sm:$0xff] %vm859, %v855
      %906 = vst.msk [vmem:[#allocation2 + $0x170] sm:$0xff] %vm859, %v856
      %907 = vst.msk [vmem:[#allocation2 + $0x178] sm:$0xff] %vm859, %v857
      %908 = vst.msk [vmem:[#allocation2 + $0x180] sm:$0xff] %vm859, %v858
      %v909 = vld [vmem:[%s269] sm:$0xf]
      %v910 = vld [vmem:[%s269 + $0x4] sm:$0xf]
      %v911 = vld [vmem:[%s269 + $0x8] sm:$0xf]
      %v912 = vld [vmem:[%s269 + $0xc] sm:$0xf]
      %v913 = vld [vmem:[%s269 + $0x10] sm:$0xf]
      %v914 = vld [vmem:[%s269 + $0x14] sm:$0xf]
      %v915 = vld [vmem:[%s269 + $0x18] sm:$0xf]
      %v916 = vld [vmem:[%s269 + $0x1c] sm:$0xf]
      %v917 = vld [vmem:[%s269 + $0x20] sm:$0xf]
      %v918 = vld [vmem:[%s269 + $0x24] sm:$0xf]
      %v919 = vld [vmem:[%s269 + $0x28] sm:$0xf]
      %v920 = vld [vmem:[%s269 + $0x2c] sm:$0xf]
      %v921 = vld [vmem:[%s269 + $0x30] sm:$0xf]
      %v922 = vld [vmem:[%s269 + $0x34] sm:$0xf]
      %v923 = vld [vmem:[%s269 + $0x38] sm:$0xf]
      %v924 = vld [vmem:[%s269 + $0x3c] sm:$0xf]
      %v925 = vld [vmem:[%s269 + $0x40] sm:$0xf]
      %v926 = vld [vmem:[%s269 + $0x44] sm:$0xf]
      %v927 = vld [vmem:[%s269 + $0x48] sm:$0xf]
      %v928 = vld [vmem:[%s269 + $0x4c] sm:$0xf]
      %v929 = vld [vmem:[%s269 + $0x50] sm:$0xf]
      %v930 = vld [vmem:[%s269 + $0x54] sm:$0xf]
      %v931 = vld [vmem:[%s269 + $0x58] sm:$0xf]
      %v932 = vld [vmem:[%s269 + $0x5c] sm:$0xf]
      %v933 = vld [vmem:[%s269 + $0x60] sm:$0xf]
      %v934 = vld [vmem:[%s269 + $0x64] sm:$0xf]
      %v935 = vld [vmem:[%s269 + $0x68] sm:$0xf]
      %v936 = vld [vmem:[%s269 + $0x6c] sm:$0xf]
      %v937 = vld [vmem:[%s269 + $0x70] sm:$0xf]
      %v938 = vld [vmem:[%s269 + $0x74] sm:$0xf]
      %v939 = vld [vmem:[%s269 + $0x78] sm:$0xf]
      %v940 = vld [vmem:[%s269 + $0x7c] sm:$0xf]
      %v941 = vld [vmem:[%s269 + $0x80] sm:$0xf]
      %v942 = vld [vmem:[%s269 + $0x84] sm:$0xf]
      %v943 = vld [vmem:[%s269 + $0x88] sm:$0xf]
      %v944 = vld [vmem:[%s269 + $0x8c] sm:$0xf]
      %v945 = vld [vmem:[%s269 + $0x90] sm:$0xf]
      %v946 = vld [vmem:[%s269 + $0x94] sm:$0xf]
      %v947 = vld [vmem:[%s269 + $0x98] sm:$0xf]
      %v948 = vld [vmem:[%s269 + $0x9c] sm:$0xf]
      %v949 = vld [vmem:[%s269 + $0xa0] sm:$0xf]
      %v950 = vld [vmem:[%s269 + $0xa4] sm:$0xf]
      %v951 = vld [vmem:[%s269 + $0xa8] sm:$0xf]
      %v952 = vld [vmem:[%s269 + $0xac] sm:$0xf]
      %v953 = vld [vmem:[%s269 + $0xb0] sm:$0xf]
      %v954 = vld [vmem:[%s269 + $0xb4] sm:$0xf]
      %v955 = vld [vmem:[%s269 + $0xb8] sm:$0xf]
      %v956 = vld [vmem:[%s269 + $0xbc] sm:$0xf]
      %v957 = vld [vmem:[%s269 + $0xc0] sm:$0xf]
      %v958 = vld [vmem:[%s2] sm:$0xf]
      %v959 = vld [vmem:[%s2 + $0x4] sm:$0xf]
      %v960 = vld [vmem:[%s2 + $0x8] sm:$0xf]
      %v961 = vld [vmem:[%s2 + $0xc] sm:$0xf]
      %v962 = vld [vmem:[%s2 + $0x10] sm:$0xf]
      %v963 = vld [vmem:[%s2 + $0x14] sm:$0xf]
      %v964 = vld [vmem:[%s2 + $0x18] sm:$0xf]
      %v965 = vld [vmem:[%s2 + $0x1c] sm:$0xf]
      %v966 = vld [vmem:[%s2 + $0x20] sm:$0xf]
      %v967 = vld [vmem:[%s2 + $0x24] sm:$0x3]
      %v1017 = vunpack.c.l.b16 %v909
      %v1018 = vunpack.c.l.b16 %v910
      %v1019 = vunpack.c.l.b16 %v911
      %v1020 = vunpack.c.l.b16 %v912
      %v1021 = vunpack.c.l.b16 %v913
      %v1022 = vunpack.c.l.b16 %v914
      %v1023 = vunpack.c.l.b16 %v915
      %v1024 = vunpack.c.l.b16 %v916
      %v1025 = vunpack.c.l.b16 %v917
      %v1026 = vunpack.c.l.b16 %v918
      %v1027 = vunpack.c.l.b16 %v919
      %v1028 = vunpack.c.l.b16 %v920
      %v1029 = vunpack.c.l.b16 %v921
      %v1030 = vunpack.c.l.b16 %v922
      %v1031 = vunpack.c.l.b16 %v923
      %v1032 = vunpack.c.l.b16 %v924
      %v1033 = vunpack.c.l.b16 %v925
      %v1034 = vunpack.c.l.b16 %v926
      %v1035 = vunpack.c.l.b16 %v927
      %v1036 = vunpack.c.l.b16 %v928
      %v1037 = vunpack.c.l.b16 %v929
      %v1038 = vunpack.c.l.b16 %v930
      %v1039 = vunpack.c.l.b16 %v931
      %v1040 = vunpack.c.l.b16 %v932
      %v1041 = vunpack.c.l.b16 %v933
      %v1042 = vunpack.c.l.b16 %v934
      %v1043 = vunpack.c.l.b16 %v935
      %v1044 = vunpack.c.l.b16 %v936
      %v1045 = vunpack.c.l.b16 %v937
      %v1046 = vunpack.c.l.b16 %v938
      %v1047 = vunpack.c.l.b16 %v939
      %v1048 = vunpack.c.l.b16 %v940
      %v1049 = vunpack.c.l.b16 %v941
      %v1050 = vunpack.c.l.b16 %v942
      %v1051 = vunpack.c.l.b16 %v943
      %v1052 = vunpack.c.l.b16 %v944
      %v1053 = vunpack.c.l.b16 %v945
      %v1054 = vunpack.c.l.b16 %v946
      %v1055 = vunpack.c.l.b16 %v947
      %v1056 = vunpack.c.l.b16 %v948
      %v1057 = vunpack.c.l.b16 %v949
      %v1058 = vunpack.c.l.b16 %v950
      %v1059 = vunpack.c.l.b16 %v951
      %v1060 = vunpack.c.l.b16 %v952
      %v1061 = vunpack.c.l.b16 %v953
      %v1062 = vunpack.c.l.b16 %v954
      %v1063 = vunpack.c.l.b16 %v955
      %v1064 = vunpack.c.l.b16 %v956
      %v1065 = vunpack.c.l.b16 %v957
      %v1066 = vpack.c.b16 %v1018, %v1017
      %v1067 = vpack.c.b16 %v1020, %v1019
      %v1068 = vpack.c.b16 %v1022, %v1021
      %v1069 = vpack.c.b16 %v1024, %v1023
      %v1070 = vpack.c.b16 %v1026, %v1025
      %v1071 = vpack.c.b16 %v1028, %v1027
      %v1072 = vpack.c.b16 %v1030, %v1029
      %v1073 = vpack.c.b16 %v1032, %v1031
      %v1074 = vpack.c.b16 %v1034, %v1033
      %v1075 = vpack.c.b16 %v1036, %v1035
      %v1076 = vpack.c.b16 %v1038, %v1037
      %v1077 = vpack.c.b16 %v1040, %v1039
      %v1078 = vpack.c.b16 %v1042, %v1041
      %v1079 = vpack.c.b16 %v1044, %v1043
      %v1080 = vpack.c.b16 %v1046, %v1045
      %v1081 = vpack.c.b16 %v1048, %v1047
      %v1082 = vpack.c.b16 %v1050, %v1049
      %v1083 = vpack.c.b16 %v1052, %v1051
      %v1084 = vpack.c.b16 %v1054, %v1053
      %v1085 = vpack.c.b16 %v1056, %v1055
      %v1086 = vpack.c.b16 %v1058, %v1057
      %v1087 = vpack.c.b16 %v1060, %v1059
      %v1088 = vpack.c.b16 %v1062, %v1061
      %v1089 = vpack.c.b16 %v1064, %v1063
      %v1090 = vpack.c.b16 %v1065, %v1065
      %v1101 = vunpack.c.l.b16 %v958
      %v1102 = vunpack.c.l.b16 %v959
      %v1103 = vunpack.c.l.b16 %v960
      %v1104 = vunpack.c.l.b16 %v961
      %v1105 = vunpack.c.l.b16 %v962
      %v1106 = vunpack.c.l.b16 %v963
      %v1107 = vunpack.c.l.b16 %v964
      %v1108 = vunpack.c.l.b16 %v965
      %v1109 = vunpack.c.l.b16 %v966
      %v1110 = vunpack.c.l.b16 %v967
      %v1111 = vpack.c.b16 %v1102, %v1101
      %v1112 = vpack.c.b16 %v1104, %v1103
      %v1113 = vpack.c.b16 %v1106, %v1105
      %v1114 = vpack.c.b16 %v1108, %v1107
      %v1115 = vpack.c.b16 %v1110, %v1109
      %v1121 = vsel %vm495, %v1066, 0
      %v1124 = vsel %vm495, %v1067, 0
      %v1127 = vsel %vm495, %v1068, 0
      %v1130 = vsel %vm495, %v1069, 0
      %v1133 = vsel %vm495, %v1070, 0
      %v1136 = vsel %vm495, %v1071, 0
      %v1139 = vsel %vm495, %v1072, 0
      %v1142 = vsel %vm495, %v1073, 0
      %v1145 = vsel %vm495, %v1074, 0
      %v1148 = vsel %vm495, %v1075, 0
      %v1151 = vsel %vm495, %v1076, 0
      %v1154 = vsel %vm495, %v1077, 0
      %v1157 = vsel %vm495, %v1078, 0
      %v1160 = vsel %vm495, %v1079, 0
      %v1163 = vsel %vm495, %v1080, 0
      %v1166 = vsel %vm495, %v1081, 0
      %v1169 = vsel %vm495, %v1082, 0
      %v1172 = vsel %vm495, %v1083, 0
      %v1175 = vsel %vm495, %v1084, 0
      %v1178 = vsel %vm495, %v1085, 0
      %v1181 = vsel %vm495, %v1086, 0
      %v1184 = vsel %vm495, %v1087, 0
      %v1187 = vsel %vm495, %v1088, 0
      %v1190 = vsel %vm495, %v1089, 0
      %v1193 = vsel %vm495, %v1090, 0
      %v1196 = vand.u32 %v1115, %v574
      %1198 = vmatprep.subr.bf16.mxu0 0
      %1199 = vmatpush1.bf16.msra.mxu0 %v1111
      %1200 = vmatprep.subr.bf16.mxu0 0
      %1201 = vmatpush1.bf16.msra.mxu0 %v1112
      %1202 = vmatprep.subr.bf16.mxu0 0
      %1203 = vmatpush1.bf16.msra.mxu0 %v1113
      %1204 = vmatprep.subr.bf16.mxu0 0
      %1205 = vmatpush1.bf16.msra.mxu0 %v1114
      %1206 = vmatprep.subr.bf16.mxu0 0
      %1207 = vmatpush1.bf16.msra.mxu0 %v1196
      %1208 = vmatprep.subr.bf16.mxu0 0
      %1209 = vmatpush1.bf16.msra.mxu0 0
      %1210 = vmatprep.subr.bf16.mxu0 0
      %1211 = vmatpush1.bf16.msra.mxu0 0
      %1212 = vmatprep.subr.bf16.mxu0 0
      %1213 = vmatpush1.bf16.msra.mxu0 0
      %1214 = vmatprep.subr.bf16.mxu0 0
      %1215 = vmatpush1.bf16.msra.mxu0 0
      %1216 = vmatprep.subr.bf16.mxu0 0
      %1217 = vmatpush1.bf16.msra.mxu0 0
      %1218 = vmatprep.subr.bf16.mxu0 0
      %1219 = vmatpush1.bf16.msra.mxu0 0
      %1220 = vmatprep.subr.bf16.mxu0 0
      %1221 = vmatpush1.bf16.msra.mxu0 0
      %1222 = vmatprep.subr.bf16.mxu0 0
      %1223 = vmatpush1.bf16.msra.mxu0 0
      %1224 = vmatprep.subr.bf16.mxu0 0
      %1225 = vmatpush1.bf16.msra.mxu0 0
      %1226 = vmatprep.subr.bf16.mxu0 0
      %1227 = vmatpush1.bf16.msra.mxu0 0
      %1228 = vmatprep.subr.bf16.mxu0 0
      %1229 = vmatpush1.bf16.msra.mxu0 0
      %1230 = vmatprep.mubr.bf16.mxu0 0
      %1231 = vmatmul.mubr.bf16.gmra.mrb[0].mxu0 %v1121
      %v1232 = vpop.f32.mrb[0].mxu0
      %v1233 = vadd.f32 %v341, %v1232
      %v1234 = vpop.f32.mrb[0].mxu0
      %v1235 = vpop.f32.mrb[0].mxu0
      %v1236 = vadd.f32 %v341, %v1235
      %v1237 = vpop.f32.mrb[0].mxu0
      %1238 = vmatprep.mubr.bf16.mxu0 0
      %1239 = vmatmul.mubr.bf16.gmra.mrb[0].mxu0 %v1124
      %v1240 = vpop.f32.mrb[0].mxu0
      %v1241 = vadd.f32 %v341, %v1240
      %v1242 = vpop.f32.mrb[0].mxu0
      %v1243 = vpop.f32.mrb[0].mxu0
      %v1244 = vadd.f32 %v341, %v1243
      %v1245 = vpop.f32.mrb[0].mxu0
      %1246 = vmatprep.mubr.bf16.mxu0 0
      %1247 = vmatmul.mubr.bf16.gmra.mrb[0].mxu0 %v1127
      %v1248 = vpop.f32.mrb[0].mxu0
      %v1249 = vadd.f32 %v341, %v1248
      %v1250 = vpop.f32.mrb[0].mxu0
      %v1251 = vpop.f32.mrb[0].mxu0
      %v1252 = vadd.f32 %v341, %v1251
      %v1253 = vpop.f32.mrb[0].mxu0
      %1254 = vmatprep.mubr.bf16.mxu0 0
      %1255 = vmatmul.mubr.bf16.gmra.mrb[0].mxu0 %v1130
      %v1256 = vpop.f32.mrb[0].mxu0
      %v1257 = vadd.f32 %v341, %v1256
      %v1258 = vpop.f32.mrb[0].mxu0
      %v1259 = vpop.f32.mrb[0].mxu0
      %v1260 = vadd.f32 %v341, %v1259
      %v1261 = vpop.f32.mrb[0].mxu0
      %1262 = vmatprep.mubr.bf16.mxu0 0
      %1263 = vmatmul.mubr.bf16.gmra.mrb[0].mxu0 %v1133
      %v1264 = vpop.f32.mrb[0].mxu0
      %v1265 = vadd.f32 %v341, %v1264
      %v1266 = vpop.f32.mrb[0].mxu0
      %v1267 = vpop.f32.mrb[0].mxu0
      %v1268 = vadd.f32 %v341, %v1267
      %v1269 = vpop.f32.mrb[0].mxu0
      %1270 = vmatprep.mubr.bf16.mxu0 0
      %1271 = vmatmul.mubr.bf16.gmra.mrb[0].mxu0 %v1136
      %v1272 = vpop.f32.mrb[0].mxu0
      %v1273 = vadd.f32 %v341, %v1272
      %v1274 = vpop.f32.mrb[0].mxu0
      %v1275 = vpop.f32.mrb[0].mxu0
      %v1276 = vadd.f32 %v341, %v1275
      %v1277 = vpop.f32.mrb[0].mxu0
      %1278 = vmatprep.mubr.bf16.mxu0 0
      %1279 = vmatmul.mubr.bf16.gmra.mrb[0].mxu0 %v1139
      %v1280 = vpop.f32.mrb[0].mxu0
      %v1281 = vadd.f32 %v341, %v1280
      %v1282 = vpop.f32.mrb[0].mxu0
      %v1283 = vpop.f32.mrb[0].mxu0
      %v1284 = vadd.f32 %v341, %v1283
      %v1285 = vpop.f32.mrb[0].mxu0
      %1286 = vmatprep.mubr.bf16.mxu0 0
      %1287 = vmatmul.mubr.bf16.gmra.mrb[0].mxu0 %v1142
      %v1288 = vpop.f32.mrb[0].mxu0
      %v1289 = vadd.f32 %v341, %v1288
      %v1290 = vpop.f32.mrb[0].mxu0
      %v1291 = vpop.f32.mrb[0].mxu0
      %v1292 = vadd.f32 %v341, %v1291
      %v1293 = vpop.f32.mrb[0].mxu0
      %1294 = vmatprep.mubr.bf16.mxu0 0
      %1295 = vmatmul.mubr.bf16.gmra.mrb[0].mxu0 %v1145
      %v1296 = vpop.f32.mrb[0].mxu0
      %v1297 = vadd.f32 %v341, %v1296
      %v1298 = vpop.f32.mrb[0].mxu0
      %v1299 = vpop.f32.mrb[0].mxu0
      %v1300 = vadd.f32 %v341, %v1299
      %v1301 = vpop.f32.mrb[0].mxu0
      %1302 = vmatprep.mubr.bf16.mxu0 0
      %1303 = vmatmul.mubr.bf16.gmra.mrb[0].mxu0 %v1148
      %v1304 = vpop.f32.mrb[0].mxu0
      %v1305 = vadd.f32 %v341, %v1304
      %v1306 = vpop.f32.mrb[0].mxu0
      %v1307 = vpop.f32.mrb[0].mxu0
      %v1308 = vadd.f32 %v341, %v1307
      %v1309 = vpop.f32.mrb[0].mxu0
      %1310 = vmatprep.mubr.bf16.mxu0 0
      %1311 = vmatmul.mubr.bf16.gmra.mrb[0].mxu0 %v1151
      %v1312 = vpop.f32.mrb[0].mxu0
      %v1313 = vadd.f32 %v341, %v1312
      %v1314 = vpop.f32.mrb[0].mxu0
      %v1315 = vpop.f32.mrb[0].mxu0
      %v1316 = vadd.f32 %v341, %v1315
      %v1317 = vpop.f32.mrb[0].mxu0
      %1318 = vmatprep.mubr.bf16.mxu0 0
      %1319 = vmatmul.mubr.bf16.gmra.mrb[0].mxu0 %v1154
      %v1320 = vpop.f32.mrb[0].mxu0
      %v1321 = vadd.f32 %v341, %v1320
      %v1322 = vpop.f32.mrb[0].mxu0
      %v1323 = vpop.f32.mrb[0].mxu0
      %v1324 = vadd.f32 %v341, %v1323
      %v1325 = vpop.f32.mrb[0].mxu0
      %1326 = vmatprep.mubr.bf16.mxu0 0
      %1327 = vmatmul.mubr.bf16.gmra.mrb[0].mxu0 %v1157
      %v1328 = vpop.f32.mrb[0].mxu0
      %v1329 = vadd.f32 %v341, %v1328
      %v1330 = vpop.f32.mrb[0].mxu0
      %v1331 = vpop.f32.mrb[0].mxu0
      %v1332 = vadd.f32 %v341, %v1331
      %v1333 = vpop.f32.mrb[0].mxu0
      %1334 = vmatprep.mubr.bf16.mxu0 0
      %1335 = vmatmul.mubr.bf16.gmra.mrb[0].mxu0 %v1160
      %v1336 = vpop.f32.mrb[0].mxu0
      %v1337 = vadd.f32 %v341, %v1336
      %v1338 = vpop.f32.mrb[0].mxu0
      %v1339 = vpop.f32.mrb[0].mxu0
      %v1340 = vadd.f32 %v341, %v1339
      %v1341 = vpop.f32.mrb[0].mxu0
      %1342 = vmatprep.mubr.bf16.mxu0 0
      %1343 = vmatmul.mubr.bf16.gmra.mrb[0].mxu0 %v1163
      %v1344 = vpop.f32.mrb[0].mxu0
      %v1345 = vadd.f32 %v341, %v1344
      %v1346 = vpop.f32.mrb[0].mxu0
      %v1347 = vpop.f32.mrb[0].mxu0
      %v1348 = vadd.f32 %v341, %v1347
      %v1349 = vpop.f32.mrb[0].mxu0
      %1350 = vmatprep.mubr.bf16.mxu0 0
      %1351 = vmatmul.mubr.bf16.gmra.mrb[0].mxu0 %v1166
      %v1352 = vpop.f32.mrb[0].mxu0
      %v1353 = vadd.f32 %v341, %v1352
      %v1354 = vpop.f32.mrb[0].mxu0
      %v1355 = vpop.f32.mrb[0].mxu0
      %v1356 = vadd.f32 %v341, %v1355
      %v1357 = vpop.f32.mrb[0].mxu0
      %1358 = vmatprep.mubr.bf16.mxu0 0
      %1359 = vmatmul.mubr.bf16.gmra.mrb[0].mxu0 %v1169
      %v1360 = vpop.f32.mrb[0].mxu0
      %v1361 = vadd.f32 %v341, %v1360
      %v1362 = vpop.f32.mrb[0].mxu0
      %v1363 = vpop.f32.mrb[0].mxu0
      %v1364 = vadd.f32 %v341, %v1363
      %v1365 = vpop.f32.mrb[0].mxu0
      %1366 = vmatprep.mubr.bf16.mxu0 0
      %1367 = vmatmul.mubr.bf16.gmra.mrb[0].mxu0 %v1172
      %v1368 = vpop.f32.mrb[0].mxu0
      %v1369 = vadd.f32 %v341, %v1368
      %v1370 = vpop.f32.mrb[0].mxu0
      %v1371 = vpop.f32.mrb[0].mxu0
      %v1372 = vadd.f32 %v341, %v1371
      %v1373 = vpop.f32.mrb[0].mxu0
      %1374 = vmatprep.mubr.bf16.mxu0 0
      %1375 = vmatmul.mubr.bf16.gmra.mrb[0].mxu0 %v1175
      %v1376 = vpop.f32.mrb[0].mxu0
      %v1377 = vadd.f32 %v341, %v1376
      %v1378 = vpop.f32.mrb[0].mxu0
      %v1379 = vpop.f32.mrb[0].mxu0
      %v1380 = vadd.f32 %v341, %v1379
      %v1381 = vpop.f32.mrb[0].mxu0
      %1382 = vmatprep.mubr.bf16.mxu0 0
      %1383 = vmatmul.mubr.bf16.gmra.mrb[0].mxu0 %v1178
      %v1384 = vpop.f32.mrb[0].mxu0
      %v1385 = vadd.f32 %v341, %v1384
      %v1386 = vpop.f32.mrb[0].mxu0
      %v1387 = vpop.f32.mrb[0].mxu0
      %v1388 = vadd.f32 %v341, %v1387
      %v1389 = vpop.f32.mrb[0].mxu0
      %1390 = vmatprep.mubr.bf16.mxu0 0
      %1391 = vmatmul.mubr.bf16.gmra.mrb[0].mxu0 %v1181
      %v1392 = vpop.f32.mrb[0].mxu0
      %v1393 = vadd.f32 %v341, %v1392
      %v1394 = vpop.f32.mrb[0].mxu0
      %v1395 = vpop.f32.mrb[0].mxu0
      %v1396 = vadd.f32 %v341, %v1395
      %v1397 = vpop.f32.mrb[0].mxu0
      %1398 = vmatprep.mubr.bf16.mxu0 0
      %1399 = vmatmul.mubr.bf16.gmra.mrb[0].mxu0 %v1184
      %v1400 = vpop.f32.mrb[0].mxu0
      %v1401 = vadd.f32 %v341, %v1400
      %v1402 = vpop.f32.mrb[0].mxu0
      %v1403 = vpop.f32.mrb[0].mxu0
      %v1404 = vadd.f32 %v341, %v1403
      %v1405 = vpop.f32.mrb[0].mxu0
      %1406 = vmatprep.mubr.bf16.mxu0 0
      %1407 = vmatmul.mubr.bf16.gmra.mrb[0].mxu0 %v1187
      %v1408 = vpop.f32.mrb[0].mxu0
      %v1409 = vadd.f32 %v341, %v1408
      %v1410 = vpop.f32.mrb[0].mxu0
      %v1411 = vpop.f32.mrb[0].mxu0
      %v1412 = vadd.f32 %v341, %v1411
      %v1413 = vpop.f32.mrb[0].mxu0
      %1414 = vmatprep.mubr.bf16.mxu0 0
      %1415 = vmatmul.mubr.bf16.gmra.mrb[0].mxu0 %v1190
      %v1416 = vpop.f32.mrb[0].mxu0
      %v1417 = vadd.f32 %v341, %v1416
      %v1418 = vpop.f32.mrb[0].mxu0
      %v1419 = vpop.f32.mrb[0].mxu0
      %v1420 = vadd.f32 %v341, %v1419
      %v1421 = vpop.f32.mrb[0].mxu0
      %1422 = vmatprep.mubr.bf16.mxu0 0
      %1423 = vmatmul.mubr.bf16.gmra.mrb[0].mxu0 %v1193
      %v1424 = vpop.f32.mrb[0].mxu0
      %v1425 = vadd.f32 %v341, %v1424
      %v1426 = vpop.f32.mrb[0].mxu0
      %v1427 = vpop.f32.mrb[0].mxu0
      %v1428 = vpop.f32.mrb[0].mxu0
      %1429 = vdwg.mxu0
      %v1430 = vmax.f32 %v1233, 0.0
      %v1431 = vmax.f32 %v1236, 0.0
      %v1432 = vmax.f32 %v1241, 0.0
      %v1433 = vmax.f32 %v1244, 0.0
      %v1434 = vmax.f32 %v1249, 0.0
      %v1435 = vmax.f32 %v1252, 0.0
      %v1436 = vmax.f32 %v1257, 0.0
      %v1437 = vmax.f32 %v1260, 0.0
      %v1438 = vmax.f32 %v1265, 0.0
      %v1439 = vmax.f32 %v1268, 0.0
      %v1440 = vmax.f32 %v1273, 0.0
      %v1441 = vmax.f32 %v1276, 0.0
      %v1442 = vmax.f32 %v1281, 0.0
      %v1443 = vmax.f32 %v1284, 0.0
      %v1444 = vmax.f32 %v1289, 0.0
      %v1445 = vmax.f32 %v1292, 0.0
      %v1446 = vmax.f32 %v1297, 0.0
      %v1447 = vmax.f32 %v1300, 0.0
      %v1448 = vmax.f32 %v1305, 0.0
      %v1449 = vmax.f32 %v1308, 0.0
      %v1450 = vmax.f32 %v1313, 0.0
      %v1451 = vmax.f32 %v1316, 0.0
      %v1452 = vmax.f32 %v1321, 0.0
      %v1453 = vmax.f32 %v1324, 0.0
      %v1454 = vmax.f32 %v1329, 0.0
      %v1455 = vmax.f32 %v1332, 0.0
      %v1456 = vmax.f32 %v1337, 0.0
      %v1457 = vmax.f32 %v1340, 0.0
      %v1458 = vmax.f32 %v1345, 0.0
      %v1459 = vmax.f32 %v1348, 0.0
      %v1460 = vmax.f32 %v1353, 0.0
      %v1461 = vmax.f32 %v1356, 0.0
      %v1462 = vmax.f32 %v1361, 0.0
      %v1463 = vmax.f32 %v1364, 0.0
      %v1464 = vmax.f32 %v1369, 0.0
      %v1465 = vmax.f32 %v1372, 0.0
      %v1466 = vmax.f32 %v1377, 0.0
      %v1467 = vmax.f32 %v1380, 0.0
      %v1468 = vmax.f32 %v1385, 0.0
      %v1469 = vmax.f32 %v1388, 0.0
      %v1470 = vmax.f32 %v1393, 0.0
      %v1471 = vmax.f32 %v1396, 0.0
      %v1472 = vmax.f32 %v1401, 0.0
      %v1473 = vmax.f32 %v1404, 0.0
      %v1474 = vmax.f32 %v1409, 0.0
      %v1475 = vmax.f32 %v1412, 0.0
      %v1476 = vmax.f32 %v1417, 0.0
      %v1477 = vmax.f32 %v1420, 0.0
      %v1478 = vmax.f32 %v1425, 0.0
      %1479 = vst.msk [vmem:[#allocation3] sm:$0xff] %vm859, %v1430
      %1480 = vst.msk [vmem:[#allocation3 + $0x8] sm:$0xff] %vm859, %v1431
      %1481 = vst.msk [vmem:[#allocation3 + $0x10] sm:$0xff] %vm859, %v1432
      %1482 = vst.msk [vmem:[#allocation3 + $0x18] sm:$0xff] %vm859, %v1433
      %1483 = vst.msk [vmem:[#allocation3 + $0x20] sm:$0xff] %vm859, %v1434
      %1484 = vst.msk [vmem:[#allocation3 + $0x28] sm:$0xff] %vm859, %v1435
      %1485 = vst.msk [vmem:[#allocation3 + $0x30] sm:$0xff] %vm859, %v1436
      %1486 = vst.msk [vmem:[#allocation3 + $0x38] sm:$0xff] %vm859, %v1437
      %1487 = vst.msk [vmem:[#allocation3 + $0x40] sm:$0xff] %vm859, %v1438
      %1488 = vst.msk [vmem:[#allocation3 + $0x48] sm:$0xff] %vm859, %v1439
      %1489 = vst.msk [vmem:[#allocation3 + $0x50] sm:$0xff] %vm859, %v1440
      %1490 = vst.msk [vmem:[#allocation3 + $0x58] sm:$0xff] %vm859, %v1441
      %1491 = vst.msk [vmem:[#allocation3 + $0x60] sm:$0xff] %vm859, %v1442
      %1492 = vst.msk [vmem:[#allocation3 + $0x68] sm:$0xff] %vm859, %v1443
      %1493 = vst.msk [vmem:[#allocation3 + $0x70] sm:$0xff] %vm859, %v1444
      %1494 = vst.msk [vmem:[#allocation3 + $0x78] sm:$0xff] %vm859, %v1445
      %1495 = vst.msk [vmem:[#allocation3 + $0x80] sm:$0xff] %vm859, %v1446
      %1496 = vst.msk [vmem:[#allocation3 + $0x88] sm:$0xff] %vm859, %v1447
      %1497 = vst.msk [vmem:[#allocation3 + $0x90] sm:$0xff] %vm859, %v1448
      %1498 = vst.msk [vmem:[#allocation3 + $0x98] sm:$0xff] %vm859, %v1449
      %1499 = vst.msk [vmem:[#allocation3 + $0xa0] sm:$0xff] %vm859, %v1450
      %1500 = vst.msk [vmem:[#allocation3 + $0xa8] sm:$0xff] %vm859, %v1451
      %1501 = vst.msk [vmem:[#allocation3 + $0xb0] sm:$0xff] %vm859, %v1452
      %1502 = vst.msk [vmem:[#allocation3 + $0xb8] sm:$0xff] %vm859, %v1453
      %1503 = vst.msk [vmem:[#allocation3 + $0xc0] sm:$0xff] %vm859, %v1454
      %1504 = vst.msk [vmem:[#allocation3 + $0xc8] sm:$0xff] %vm859, %v1455
      %1505 = vst.msk [vmem:[#allocation3 + $0xd0] sm:$0xff] %vm859, %v1456
      %1506 = vst.msk [vmem:[#allocation3 + $0xd8] sm:$0xff] %vm859, %v1457
      %1507 = vst.msk [vmem:[#allocation3 + $0xe0] sm:$0xff] %vm859, %v1458
      %1508 = vst.msk [vmem:[#allocation3 + $0xe8] sm:$0xff] %vm859, %v1459
      %1509 = vst.msk [vmem:[#allocation3 + $0xf0] sm:$0xff] %vm859, %v1460
      %1510 = vst.msk [vmem:[#allocation3 + $0xf8] sm:$0xff] %vm859, %v1461
      %1511 = vst.msk [vmem:[#allocation3 + $0x100] sm:$0xff] %vm859, %v1462
      %1512 = vst.msk [vmem:[#allocation3 + $0x108] sm:$0xff] %vm859, %v1463
      %1513 = vst.msk [vmem:[#allocation3 + $0x110] sm:$0xff] %vm859, %v1464
      %1514 = vst.msk [vmem:[#allocation3 + $0x118] sm:$0xff] %vm859, %v1465
      %1515 = vst.msk [vmem:[#allocation3 + $0x120] sm:$0xff] %vm859, %v1466
      %1516 = vst.msk [vmem:[#allocation3 + $0x128] sm:$0xff] %vm859, %v1467
      %1517 = vst.msk [vmem:[#allocation3 + $0x130] sm:$0xff] %vm859, %v1468
      %1518 = vst.msk [vmem:[#allocation3 + $0x138] sm:$0xff] %vm859, %v1469
      %1519 = vst.msk [vmem:[#allocation3 + $0x140] sm:$0xff] %vm859, %v1470
      %1520 = vst.msk [vmem:[#allocation3 + $0x148] sm:$0xff] %vm859, %v1471
      %1521 = vst.msk [vmem:[#allocation3 + $0x150] sm:$0xff] %vm859, %v1472
      %1522 = vst.msk [vmem:[#allocation3 + $0x158] sm:$0xff] %vm859, %v1473
      %1523 = vst.msk [vmem:[#allocation3 + $0x160] sm:$0xff] %vm859, %v1474
      %1524 = vst.msk [vmem:[#allocation3 + $0x168] sm:$0xff] %vm859, %v1475
      %1525 = vst.msk [vmem:[#allocation3 + $0x170] sm:$0xff] %vm859, %v1476
      %1526 = vst.msk [vmem:[#allocation3 + $0x178] sm:$0xff] %vm859, %v1477
      %1527 = vst.msk [vmem:[#allocation3 + $0x180] sm:$0xff] %vm859, %v1478
      %v1528 = vld [vmem:[#allocation2] sm:$0xff]
      %v1529 = vld [vmem:[#allocation2 + $0x8] sm:$0xff]
      %v1530 = vld [vmem:[#allocation2 + $0x10] sm:$0xff]
      %v1531 = vld [vmem:[#allocation2 + $0x18] sm:$0xff]
      %v1532 = vld [vmem:[#allocation2 + $0x20] sm:$0xff]
      %v1533 = vld [vmem:[#allocation2 + $0x28] sm:$0xff]
      %v1534 = vld [vmem:[#allocation2 + $0x30] sm:$0xff]
      %v1535 = vld [vmem:[#allocation2 + $0x38] sm:$0xff]
      %v1536 = vld [vmem:[#allocation2 + $0x40] sm:$0xff]
      %v1537 = vld [vmem:[#allocation2 + $0x48] sm:$0xff]
      %v1538 = vld [vmem:[#allocation2 + $0x50] sm:$0xff]
      %v1539 = vld [vmem:[#allocation2 + $0x58] sm:$0xff]
      %v1540 = vld [vmem:[#allocation2 + $0x60] sm:$0xff]
      %v1541 = vld [vmem:[#allocation2 + $0x68] sm:$0xff]
      %v1542 = vld [vmem:[#allocation2 + $0x70] sm:$0xff]
      %v1543 = vld [vmem:[#allocation2 + $0x78] sm:$0xff]
      %v1544 = vld [vmem:[#allocation2 + $0x80] sm:$0xff]
      %v1545 = vld [vmem:[#allocation2 + $0x88] sm:$0xff]
      %v1546 = vld [vmem:[#allocation2 + $0x90] sm:$0xff]
      %v1547 = vld [vmem:[#allocation2 + $0x98] sm:$0xff]
      %v1548 = vld [vmem:[#allocation2 + $0xa0] sm:$0xff]
      %v1549 = vld [vmem:[#allocation2 + $0xa8] sm:$0xff]
      %v1550 = vld [vmem:[#allocation2 + $0xb0] sm:$0xff]
      %v1551 = vld [vmem:[#allocation2 + $0xb8] sm:$0xff]
      %v1552 = vld [vmem:[#allocation2 + $0xc0] sm:$0xff]
      %v1553 = vld [vmem:[#allocation2 + $0xc8] sm:$0xff]
      %v1554 = vld [vmem:[#allocation2 + $0xd0] sm:$0xff]
      %v1555 = vld [vmem:[#allocation2 + $0xd8] sm:$0xff]
      %v1556 = vld [vmem:[#allocation2 + $0xe0] sm:$0xff]
      %v1557 = vld [vmem:[#allocation2 + $0xe8] sm:$0xff]
      %v1558 = vld [vmem:[#allocation2 + $0xf0] sm:$0xff]
      %v1559 = vld [vmem:[#allocation2 + $0xf8] sm:$0xff]
      %v1560 = vld [vmem:[#allocation2 + $0x100] sm:$0xff]
      %v1561 = vld [vmem:[#allocation2 + $0x108] sm:$0xff]
      %v1562 = vld [vmem:[#allocation2 + $0x110] sm:$0xff]
      %v1563 = vld [vmem:[#allocation2 + $0x118] sm:$0xff]
      %v1564 = vld [vmem:[#allocation2 + $0x120] sm:$0xff]
      %v1565 = vld [vmem:[#allocation2 + $0x128] sm:$0xff]
      %v1566 = vld [vmem:[#allocation2 + $0x130] sm:$0xff]
      %v1567 = vld [vmem:[#allocation2 + $0x138] sm:$0xff]
      %v1568 = vld [vmem:[#allocation2 + $0x140] sm:$0xff]
      %v1569 = vld [vmem:[#allocation2 + $0x148] sm:$0xff]
      %v1570 = vld [vmem:[#allocation2 + $0x150] sm:$0xff]
      %v1571 = vld [vmem:[#allocation2 + $0x158] sm:$0xff]
      %v1572 = vld [vmem:[#allocation2 + $0x160] sm:$0xff]
      %v1573 = vld [vmem:[#allocation2 + $0x168] sm:$0xff]
      %v1574 = vld [vmem:[#allocation2 + $0x170] sm:$0xff]
      %v1575 = vld [vmem:[#allocation2 + $0x178] sm:$0x3]
      %v1576 = vld [vmem:[#allocation3] sm:$0xff]
      %v1577 = vld [vmem:[#allocation3 + $0x8] sm:$0xff]
      %v1578 = vld [vmem:[#allocation3 + $0x10] sm:$0xff]
      %v1579 = vld [vmem:[#allocation3 + $0x18] sm:$0xff]
      %v1580 = vld [vmem:[#allocation3 + $0x20] sm:$0xff]
      %v1581 = vld [vmem:[#allocation3 + $0x28] sm:$0xff]
      %v1582 = vld [vmem:[#allocation3 + $0x30] sm:$0xff]
      %v1583 = vld [vmem:[#allocation3 + $0x38] sm:$0xff]
      %v1584 = vld [vmem:[#allocation3 + $0x40] sm:$0xff]
      %v1585 = vld [vmem:[#allocation3 + $0x48] sm:$0xff]
      %v1586 = vld [vmem:[#allocation3 + $0x50] sm:$0xff]
      %v1587 = vld [vmem:[#allocation3 + $0x58] sm:$0xff]
      %v1588 = vld [vmem:[#allocation3 + $0x60] sm:$0xff]
      %v1589 = vld [vmem:[#allocation3 + $0x68] sm:$0xff]
      %v1590 = vld [vmem:[#allocation3 + $0x70] sm:$0xff]
      %v1591 = vld [vmem:[#allocation3 + $0x78] sm:$0xff]
      %v1592 = vld [vmem:[#allocation3 + $0x80] sm:$0xff]
      %v1593 = vld [vmem:[#allocation3 + $0x88] sm:$0xff]
      %v1594 = vld [vmem:[#allocation3 + $0x90] sm:$0xff]
      %v1595 = vld [vmem:[#allocation3 + $0x98] sm:$0xff]
      %v1596 = vld [vmem:[#allocation3 + $0xa0] sm:$0xff]
      %v1597 = vld [vmem:[#allocation3 + $0xa8] sm:$0xff]
      %v1598 = vld [vmem:[#allocation3 + $0xb0] sm:$0xff]
      %v1599 = vld [vmem:[#allocation3 + $0xb8] sm:$0xff]
      %v1600 = vld [vmem:[#allocation3 + $0xc0] sm:$0xff]
      %v1601 = vld [vmem:[#allocation3 + $0xc8] sm:$0xff]
      %v1602 = vld [vmem:[#allocation3 + $0xd0] sm:$0xff]
      %v1603 = vld [vmem:[#allocation3 + $0xd8] sm:$0xff]
      %v1604 = vld [vmem:[#allocation3 + $0xe0] sm:$0xff]
      %v1605 = vld [vmem:[#allocation3 + $0xe8] sm:$0xff]
      %v1606 = vld [vmem:[#allocation3 + $0xf0] sm:$0xff]
      %v1607 = vld [vmem:[#allocation3 + $0xf8] sm:$0xff]
      %v1608 = vld [vmem:[#allocation3 + $0x100] sm:$0xff]
      %v1609 = vld [vmem:[#allocation3 + $0x108] sm:$0xff]
      %v1610 = vld [vmem:[#allocation3 + $0x110] sm:$0xff]
      %v1611 = vld [vmem:[#allocation3 + $0x118] sm:$0xff]
      %v1612 = vld [vmem:[#allocation3 + $0x120] sm:$0xff]
      %v1613 = vld [vmem:[#allocation3 + $0x128] sm:$0xff]
      %v1614 = vld [vmem:[#allocation3 + $0x130] sm:$0xff]
      %v1615 = vld [vmem:[#allocation3 + $0x138] sm:$0xff]
      %v1616 = vld [vmem:[#allocation3 + $0x140] sm:$0xff]
      %v1617 = vld [vmem:[#allocation3 + $0x148] sm:$0xff]
      %v1618 = vld [vmem:[#allocation3 + $0x150] sm:$0xff]
      %v1619 = vld [vmem:[#allocation3 + $0x158] sm:$0xff]
      %v1620 = vld [vmem:[#allocation3 + $0x160] sm:$0xff]
      %v1621 = vld [vmem:[#allocation3 + $0x168] sm:$0xff]
      %v1622 = vld [vmem:[#allocation3 + $0x170] sm:$0xff]
      %v1623 = vld [vmem:[#allocation3 + $0x178] sm:$0x3]
      %v1624 = vmax.f32 %v1528, %v1576
      %v1625 = vmax.f32 %v1529, %v1577
      %v1626 = vmax.f32 %v1530, %v1578
      %v1627 = vmax.f32 %v1531, %v1579
      %v1628 = vmax.f32 %v1532, %v1580
      %v1629 = vmax.f32 %v1533, %v1581
      %v1630 = vmax.f32 %v1534, %v1582
      %v1631 = vmax.f32 %v1535, %v1583
      %v1632 = vmax.f32 %v1536, %v1584
      %v1633 = vmax.f32 %v1537, %v1585
      %v1634 = vmax.f32 %v1538, %v1586
      %v1635 = vmax.f32 %v1539, %v1587
      %v1636 = vmax.f32 %v1540, %v1588
      %v1637 = vmax.f32 %v1541, %v1589
      %v1638 = vmax.f32 %v1542, %v1590
      %v1639 = vmax.f32 %v1543, %v1591
      %v1640 = vmax.f32 %v1544, %v1592
      %v1641 = vmax.f32 %v1545, %v1593
      %v1642 = vmax.f32 %v1546, %v1594
      %v1643 = vmax.f32 %v1547, %v1595
      %v1644 = vmax.f32 %v1548, %v1596
      %v1645 = vmax.f32 %v1549, %v1597
      %v1646 = vmax.f32 %v1550, %v1598
      %v1647 = vmax.f32 %v1551, %v1599
      %v1648 = vmax.f32 %v1552, %v1600
      %v1649 = vmax.f32 %v1553, %v1601
      %v1650 = vmax.f32 %v1554, %v1602
      %v1651 = vmax.f32 %v1555, %v1603
      %v1652 = vmax.f32 %v1556, %v1604
      %v1653 = vmax.f32 %v1557, %v1605
      %v1654 = vmax.f32 %v1558, %v1606
      %v1655 = vmax.f32 %v1559, %v1607
      %v1656 = vmax.f32 %v1560, %v1608
      %v1657 = vmax.f32 %v1561, %v1609
      %v1658 = vmax.f32 %v1562, %v1610
      %v1659 = vmax.f32 %v1563, %v1611
      %v1660 = vmax.f32 %v1564, %v1612
      %v1661 = vmax.f32 %v1565, %v1613
      %v1662 = vmax.f32 %v1566, %v1614
      %v1663 = vmax.f32 %v1567, %v1615
      %v1664 = vmax.f32 %v1568, %v1616
      %v1665 = vmax.f32 %v1569, %v1617
      %v1666 = vmax.f32 %v1570, %v1618
      %v1667 = vmax.f32 %v1571, %v1619
      %v1668 = vmax.f32 %v1572, %v1620
      %v1669 = vmax.f32 %v1573, %v1621
      %v1670 = vmax.f32 %v1574, %v1622
      %v1671 = vmax.f32 %v1575, %v1623
      %v1672 = vld [vmem:[#allocation2 + $0xe] sm:$0xff]
      %v1673 = vld [vmem:[#allocation2 + $0x16] sm:$0xff]
      %v1674 = vld [vmem:[#allocation2 + $0x1e] sm:$0xff]
      %v1675 = vld [vmem:[#allocation2 + $0x26] sm:$0xff]
      %v1676 = vld [vmem:[#allocation2 + $0x2e] sm:$0xff]
      %v1677 = vld [vmem:[#allocation2 + $0x36] sm:$0xff]
      %v1678 = vld [vmem:[#allocation2 + $0x3e] sm:$0xff]
      %v1679 = vld [vmem:[#allocation2 + $0x46] sm:$0xff]
      %v1680 = vld [vmem:[#allocation2 + $0x4e] sm:$0xff]
      %v1681 = vld [vmem:[#allocation2 + $0x56] sm:$0xff]
      %v1682 = vld [vmem:[#allocation2 + $0x5e] sm:$0xff]
      %v1683 = vld [vmem:[#allocation2 + $0x66] sm:$0xff]
      %v1684 = vld [vmem:[#allocation2 + $0x6e] sm:$0xff]
      %v1685 = vld [vmem:[#allocation2 + $0x76] sm:$0xff]
      %v1686 = vld [vmem:[#allocation2 + $0x7e] sm:$0xff]
      %v1687 = vld [vmem:[#allocation2 + $0x86] sm:$0xff]
      %v1688 = vld [vmem:[#allocation2 + $0x8e] sm:$0xff]
      %v1689 = vld [vmem:[#allocation2 + $0x96] sm:$0xff]
      %v1690 = vld [vmem:[#allocation2 + $0x9e] sm:$0xff]
      %v1691 = vld [vmem:[#allocation2 + $0xa6] sm:$0xff]
      %v1692 = vld [vmem:[#allocation2 + $0xae] sm:$0xff]
      %v1693 = vld [vmem:[#allocation2 + $0xb6] sm:$0xff]
      %v1694 = vld [vmem:[#allocation2 + $0xbe] sm:$0xff]
      %v1695 = vld [vmem:[#allocation2 + $0xc6] sm:$0xff]
      %v1696 = vld [vmem:[#allocation2 + $0xce] sm:$0xff]
      %v1697 = vld [vmem:[#allocation2 + $0xd6] sm:$0xff]
      %v1698 = vld [vmem:[#allocation2 + $0xde] sm:$0xff]
      %v1699 = vld [vmem:[#allocation2 + $0xe6] sm:$0xff]
      %v1700 = vld [vmem:[#allocation2 + $0xee] sm:$0xff]
      %v1701 = vld [vmem:[#allocation2 + $0xf6] sm:$0xff]
      %v1702 = vld [vmem:[#allocation2 + $0xfe] sm:$0xff]
      %v1703 = vld [vmem:[#allocation2 + $0x106] sm:$0xff]
      %v1704 = vld [vmem:[#allocation2 + $0x10e] sm:$0xff]
      %v1705 = vld [vmem:[#allocation2 + $0x116] sm:$0xff]
      %v1706 = vld [vmem:[#allocation2 + $0x11e] sm:$0xff]
      %v1707 = vld [vmem:[#allocation2 + $0x126] sm:$0xff]
      %v1708 = vld [vmem:[#allocation2 + $0x12e] sm:$0xff]
      %v1709 = vld [vmem:[#allocation2 + $0x136] sm:$0xff]
      %v1710 = vld [vmem:[#allocation2 + $0x13e] sm:$0xff]
      %v1711 = vld [vmem:[#allocation2 + $0x146] sm:$0xff]
      %v1712 = vld [vmem:[#allocation2 + $0x14e] sm:$0xff]
      %v1713 = vld [vmem:[#allocation2 + $0x156] sm:$0xff]
      %v1714 = vld [vmem:[#allocation2 + $0x15e] sm:$0xff]
      %v1715 = vld [vmem:[#allocation2 + $0x166] sm:$0xff]
      %v1716 = vld [vmem:[#allocation2 + $0x16e] sm:$0xff]
      %v1717 = vld [vmem:[#allocation2 + $0x176] sm:$0xff]
      %v1718 = vld [vmem:[#allocation2 + $0x17e] sm:$0xff]
      %v1719 = vld [vmem:[#allocation2 + $0x186] sm:$0x3]
      %v1720 = vld [vmem:[#allocation3 + $0xe] sm:$0xff]
      %v1721 = vld [vmem:[#allocation3 + $0x16] sm:$0xff]
      %v1722 = vld [vmem:[#allocation3 + $0x1e] sm:$0xff]
      %v1723 = vld [vmem:[#allocation3 + $0x26] sm:$0xff]
      %v1724 = vld [vmem:[#allocation3 + $0x2e] sm:$0xff]
      %v1725 = vld [vmem:[#allocation3 + $0x36] sm:$0xff]
      %v1726 = vld [vmem:[#allocation3 + $0x3e] sm:$0xff]
      %v1727 = vld [vmem:[#allocation3 + $0x46] sm:$0xff]
      %v1728 = vld [vmem:[#allocation3 + $0x4e] sm:$0xff]
      %v1729 = vld [vmem:[#allocation3 + $0x56] sm:$0xff]
      %v1730 = vld [vmem:[#allocation3 + $0x5e] sm:$0xff]
      %v1731 = vld [vmem:[#allocation3 + $0x66] sm:$0xff]
      %v1732 = vld [vmem:[#allocation3 + $0x6e] sm:$0xff]
      %v1733 = vld [vmem:[#allocation3 + $0x76] sm:$0xff]
      %v1734 = vld [vmem:[#allocation3 + $0x7e] sm:$0xff]
      %v1735 = vld [vmem:[#allocation3 + $0x86] sm:$0xff]
      %v1736 = vld [vmem:[#allocation3 + $0x8e] sm:$0xff]
      %v1737 = vld [vmem:[#allocation3 + $0x96] sm:$0xff]
      %v1738 = vld [vmem:[#allocation3 + $0x9e] sm:$0xff]
      %v1739 = vld [vmem:[#allocation3 + $0xa6] sm:$0xff]
      %v1740 = vld [vmem:[#allocation3 + $0xae] sm:$0xff]
      %v1741 = vld [vmem:[#allocation3 + $0xb6] sm:$0xff]
      %v1742 = vld [vmem:[#allocation3 + $0xbe] sm:$0xff]
      %v1743 = vld [vmem:[#allocation3 + $0xc6] sm:$0xff]
      %v1744 = vld [vmem:[#allocation3 + $0xce] sm:$0xff]
      %v1745 = vld [vmem:[#allocation3 + $0xd6] sm:$0xff]
      %v1746 = vld [vmem:[#allocation3 + $0xde] sm:$0xff]
      %v1747 = vld [vmem:[#allocation3 + $0xe6] sm:$0xff]
      %v1748 = vld [vmem:[#allocation3 + $0xee] sm:$0xff]
      %v1749 = vld [vmem:[#allocation3 + $0xf6] sm:$0xff]
      %v1750 = vld [vmem:[#allocation3 + $0xfe] sm:$0xff]
      %v1751 = vld [vmem:[#allocation3 + $0x106] sm:$0xff]
      %v1752 = vld [vmem:[#allocation3 + $0x10e] sm:$0xff]
      %v1753 = vld [vmem:[#allocation3 + $0x116] sm:$0xff]
      %v1754 = vld [vmem:[#allocation3 + $0x11e] sm:$0xff]
      %v1755 = vld [vmem:[#allocation3 + $0x126] sm:$0xff]
      %v1756 = vld [vmem:[#allocation3 + $0x12e] sm:$0xff]
      %v1757 = vld [vmem:[#allocation3 + $0x136] sm:$0xff]
      %v1758 = vld [vmem:[#allocation3 + $0x13e] sm:$0xff]
      %v1759 = vld [vmem:[#allocation3 + $0x146] sm:$0xff]
      %v1760 = vld [vmem:[#allocation3 + $0x14e] sm:$0xff]
      %v1761 = vld [vmem:[#allocation3 + $0x156] sm:$0xff]
      %v1762 = vld [vmem:[#allocation3 + $0x15e] sm:$0xff]
      %v1763 = vld [vmem:[#allocation3 + $0x166] sm:$0xff]
      %v1764 = vld [vmem:[#allocation3 + $0x16e] sm:$0xff]
      %v1765 = vld [vmem:[#allocation3 + $0x176] sm:$0xff]
      %v1766 = vld [vmem:[#allocation3 + $0x17e] sm:$0xff]
      %v1767 = vld [vmem:[#allocation3 + $0x186] sm:$0x3]
      %v1768 = vmax.f32 %v1672, %v1720
      %v1769 = vmax.f32 %v1673, %v1721
      %v1770 = vmax.f32 %v1674, %v1722
      %v1771 = vmax.f32 %v1675, %v1723
      %v1772 = vmax.f32 %v1676, %v1724
      %v1773 = vmax.f32 %v1677, %v1725
      %v1774 = vmax.f32 %v1678, %v1726
      %v1775 = vmax.f32 %v1679, %v1727
      %v1776 = vmax.f32 %v1680, %v1728
      %v1777 = vmax.f32 %v1681, %v1729
      %v1778 = vmax.f32 %v1682, %v1730
      %v1779 = vmax.f32 %v1683, %v1731
      %v1780 = vmax.f32 %v1684, %v1732
      %v1781 = vmax.f32 %v1685, %v1733
      %v1782 = vmax.f32 %v1686, %v1734
      %v1783 = vmax.f32 %v1687, %v1735
      %v1784 = vmax.f32 %v1688, %v1736
      %v1785 = vmax.f32 %v1689, %v1737
      %v1786 = vmax.f32 %v1690, %v1738
      %v1787 = vmax.f32 %v1691, %v1739
      %v1788 = vmax.f32 %v1692, %v1740
      %v1789 = vmax.f32 %v1693, %v1741
      %v1790 = vmax.f32 %v1694, %v1742
      %v1791 = vmax.f32 %v1695, %v1743
      %v1792 = vmax.f32 %v1696, %v1744
      %v1793 = vmax.f32 %v1697, %v1745
      %v1794 = vmax.f32 %v1698, %v1746
      %v1795 = vmax.f32 %v1699, %v1747
      %v1796 = vmax.f32 %v1700, %v1748
      %v1797 = vmax.f32 %v1701, %v1749
      %v1798 = vmax.f32 %v1702, %v1750
      %v1799 = vmax.f32 %v1703, %v1751
      %v1800 = vmax.f32 %v1704, %v1752
      %v1801 = vmax.f32 %v1705, %v1753
      %v1802 = vmax.f32 %v1706, %v1754
      %v1803 = vmax.f32 %v1707, %v1755
      %v1804 = vmax.f32 %v1708, %v1756
      %v1805 = vmax.f32 %v1709, %v1757
      %v1806 = vmax.f32 %v1710, %v1758
      %v1807 = vmax.f32 %v1711, %v1759
      %v1808 = vmax.f32 %v1712, %v1760
      %v1809 = vmax.f32 %v1713, %v1761
      %v1810 = vmax.f32 %v1714, %v1762
      %v1811 = vmax.f32 %v1715, %v1763
      %v1812 = vmax.f32 %v1716, %v1764
      %v1813 = vmax.f32 %v1717, %v1765
      %v1814 = vmax.f32 %v1718, %v1766
      %v1815 = vmax.f32 %v1719, %v1767
      %v1816 = vmax.f32 %v1624, %v1768
      %v1817 = vmax.f32 %v1625, %v1769
      %v1818 = vmax.f32 %v1626, %v1770
      %v1819 = vmax.f32 %v1627, %v1771
      %v1820 = vmax.f32 %v1628, %v1772
      %v1821 = vmax.f32 %v1629, %v1773
      %v1822 = vmax.f32 %v1630, %v1774
      %v1823 = vmax.f32 %v1631, %v1775
      %v1824 = vmax.f32 %v1632, %v1776
      %v1825 = vmax.f32 %v1633, %v1777
      %v1826 = vmax.f32 %v1634, %v1778
      %v1827 = vmax.f32 %v1635, %v1779
      %v1828 = vmax.f32 %v1636, %v1780
      %v1829 = vmax.f32 %v1637, %v1781
      %v1830 = vmax.f32 %v1638, %v1782
      %v1831 = vmax.f32 %v1639, %v1783
      %v1832 = vmax.f32 %v1640, %v1784
      %v1833 = vmax.f32 %v1641, %v1785
      %v1834 = vmax.f32 %v1642, %v1786
      %v1835 = vmax.f32 %v1643, %v1787
      %v1836 = vmax.f32 %v1644, %v1788
      %v1837 = vmax.f32 %v1645, %v1789
      %v1838 = vmax.f32 %v1646, %v1790
      %v1839 = vmax.f32 %v1647, %v1791
      %v1840 = vmax.f32 %v1648, %v1792
      %v1841 = vmax.f32 %v1649, %v1793
      %v1842 = vmax.f32 %v1650, %v1794
      %v1843 = vmax.f32 %v1651, %v1795
      %v1844 = vmax.f32 %v1652, %v1796
      %v1845 = vmax.f32 %v1653, %v1797
      %v1846 = vmax.f32 %v1654, %v1798
      %v1847 = vmax.f32 %v1655, %v1799
      %v1848 = vmax.f32 %v1656, %v1800
      %v1849 = vmax.f32 %v1657, %v1801
      %v1850 = vmax.f32 %v1658, %v1802
      %v1851 = vmax.f32 %v1659, %v1803
      %v1852 = vmax.f32 %v1660, %v1804
      %v1853 = vmax.f32 %v1661, %v1805
      %v1854 = vmax.f32 %v1662, %v1806
      %v1855 = vmax.f32 %v1663, %v1807
      %v1856 = vmax.f32 %v1664, %v1808
      %v1857 = vmax.f32 %v1665, %v1809
      %v1858 = vmax.f32 %v1666, %v1810
      %v1859 = vmax.f32 %v1667, %v1811
      %v1860 = vmax.f32 %v1668, %v1812
      %v1861 = vmax.f32 %v1669, %v1813
      %v1862 = vmax.f32 %v1670, %v1814
      %v1863 = vmax.f32 %v1671, %v1815
      %v1864 = vpack.c.bf16 %v1817, %v1816
      %v1865 = vpack.c.bf16 %v1819, %v1818
      %v1866 = vpack.c.bf16 %v1821, %v1820
      %v1867 = vpack.c.bf16 %v1823, %v1822
      %v1868 = vpack.c.bf16 %v1825, %v1824
      %v1869 = vpack.c.bf16 %v1827, %v1826
      %v1870 = vpack.c.bf16 %v1829, %v1828
      %v1871 = vpack.c.bf16 %v1831, %v1830
      %v1872 = vpack.c.bf16 %v1833, %v1832
      %v1873 = vpack.c.bf16 %v1835, %v1834
      %v1874 = vpack.c.bf16 %v1837, %v1836
      %v1875 = vpack.c.bf16 %v1839, %v1838
      %v1876 = vpack.c.bf16 %v1841, %v1840
      %v1877 = vpack.c.bf16 %v1843, %v1842
      %v1878 = vpack.c.bf16 %v1845, %v1844
      %v1879 = vpack.c.bf16 %v1847, %v1846
      %v1880 = vpack.c.bf16 %v1849, %v1848
      %v1881 = vpack.c.bf16 %v1851, %v1850
      %v1882 = vpack.c.bf16 %v1853, %v1852
      %v1883 = vpack.c.bf16 %v1855, %v1854
      %v1884 = vpack.c.bf16 %v1857, %v1856
      %v1885 = vpack.c.bf16 %v1859, %v1858
      %v1886 = vpack.c.bf16 %v1861, %v1860
      %v1887 = vpack.c.bf16 %v1863, %v1862
      %v1912 = vunpack.c.l.b16 %v1864
      %v1913 = vunpack.c.h.b16 %v1864
      %v1914 = vunpack.c.l.b16 %v1865
      %v1915 = vunpack.c.h.b16 %v1865
      %v1916 = vunpack.c.l.b16 %v1866
      %v1917 = vunpack.c.h.b16 %v1866
      %v1918 = vunpack.c.l.b16 %v1867
      %v1919 = vunpack.c.h.b16 %v1867
      %v1920 = vunpack.c.l.b16 %v1868
      %v1921 = vunpack.c.h.b16 %v1868
      %v1922 = vunpack.c.l.b16 %v1869
      %v1923 = vunpack.c.h.b16 %v1869
      %v1924 = vunpack.c.l.b16 %v1870
      %v1925 = vunpack.c.h.b16 %v1870
      %v1926 = vunpack.c.l.b16 %v1871
      %v1927 = vunpack.c.h.b16 %v1871
      %v1928 = vunpack.c.l.b16 %v1872
      %v1929 = vunpack.c.h.b16 %v1872
      %v1930 = vunpack.c.l.b16 %v1873
      %v1931 = vunpack.c.h.b16 %v1873
      %v1932 = vunpack.c.l.b16 %v1874
      %v1933 = vunpack.c.h.b16 %v1874
      %v1934 = vunpack.c.l.b16 %v1875
      %v1935 = vunpack.c.h.b16 %v1875
      %v1936 = vunpack.c.l.b16 %v1876
      %v1937 = vunpack.c.h.b16 %v1876
      %v1938 = vunpack.c.l.b16 %v1877
      %v1939 = vunpack.c.h.b16 %v1877
      %v1940 = vunpack.c.l.b16 %v1878
      %v1941 = vunpack.c.h.b16 %v1878
      %v1942 = vunpack.c.l.b16 %v1879
      %v1943 = vunpack.c.h.b16 %v1879
      %v1944 = vunpack.c.l.b16 %v1880
      %v1945 = vunpack.c.h.b16 %v1880
      %v1946 = vunpack.c.l.b16 %v1881
      %v1947 = vunpack.c.h.b16 %v1881
      %v1948 = vunpack.c.l.b16 %v1882
      %v1949 = vunpack.c.h.b16 %v1882
      %v1950 = vunpack.c.l.b16 %v1883
      %v1951 = vunpack.c.h.b16 %v1883
      %v1952 = vunpack.c.l.b16 %v1884
      %v1953 = vunpack.c.h.b16 %v1884
      %v1954 = vunpack.c.l.b16 %v1885
      %v1955 = vunpack.c.h.b16 %v1885
      %v1956 = vunpack.c.l.b16 %v1886
      %v1957 = vunpack.c.h.b16 %v1886
      %v1958 = vunpack.c.l.b16 %v1887
      %v1959 = vunpack.c.h.b16 %v1887
      %v1960 = vpack.c.b16 %v1912, %v1912
      %v1961 = vpack.c.b16 %v1913, %v1913
      %v1962 = vpack.c.b16 %v1914, %v1914
      %v1963 = vpack.c.b16 %v1915, %v1915
      %v1964 = vpack.c.b16 %v1916, %v1916
      %v1965 = vpack.c.b16 %v1917, %v1917
      %v1966 = vpack.c.b16 %v1918, %v1918
      %v1967 = vpack.c.b16 %v1919, %v1919
      %v1968 = vpack.c.b16 %v1920, %v1920
      %v1969 = vpack.c.b16 %v1921, %v1921
      %v1970 = vpack.c.b16 %v1922, %v1922
      %v1971 = vpack.c.b16 %v1923, %v1923
      %v1972 = vpack.c.b16 %v1924, %v1924
      %v1973 = vpack.c.b16 %v1925, %v1925
      %v1974 = vpack.c.b16 %v1926, %v1926
      %v1975 = vpack.c.b16 %v1927, %v1927
      %v1976 = vpack.c.b16 %v1928, %v1928
      %v1977 = vpack.c.b16 %v1929, %v1929
      %v1978 = vpack.c.b16 %v1930, %v1930
      %v1979 = vpack.c.b16 %v1931, %v1931
      %v1980 = vpack.c.b16 %v1932, %v1932
      %v1981 = vpack.c.b16 %v1933, %v1933
      %v1982 = vpack.c.b16 %v1934, %v1934
      %v1983 = vpack.c.b16 %v1935, %v1935
      %v1984 = vpack.c.b16 %v1936, %v1936
      %v1985 = vpack.c.b16 %v1937, %v1937
      %v1986 = vpack.c.b16 %v1938, %v1938
      %v1987 = vpack.c.b16 %v1939, %v1939
      %v1988 = vpack.c.b16 %v1940, %v1940
      %v1989 = vpack.c.b16 %v1941, %v1941
      %v1990 = vpack.c.b16 %v1942, %v1942
      %v1991 = vpack.c.b16 %v1943, %v1943
      %v1992 = vpack.c.b16 %v1944, %v1944
      %v1993 = vpack.c.b16 %v1945, %v1945
      %v1994 = vpack.c.b16 %v1946, %v1946
      %v1995 = vpack.c.b16 %v1947, %v1947
      %v1996 = vpack.c.b16 %v1948, %v1948
      %v1997 = vpack.c.b16 %v1949, %v1949
      %v1998 = vpack.c.b16 %v1950, %v1950
      %v1999 = vpack.c.b16 %v1951, %v1951
      %v2000 = vpack.c.b16 %v1952, %v1952
      %v2001 = vpack.c.b16 %v1953, %v1953
      %v2002 = vpack.c.b16 %v1954, %v1954
      %v2003 = vpack.c.b16 %v1955, %v1955
      %v2004 = vpack.c.b16 %v1956, %v1956
      %v2005 = vpack.c.b16 %v1957, %v1957
      %v2006 = vpack.c.b16 %v1958, %v1958
      %v2007 = vpack.c.b16 %v1959, %v1959
      %vm2056 = vcmask 257024
      %2057 = vst.msk [vmem:[#allocation4] sm:$0xf] %vm2056, %v1960
      %2058 = vst.msk [vmem:[#allocation4 + $0x4] sm:$0xf] %vm2056, %v1961
      %2059 = vst.msk [vmem:[#allocation4 + $0x8] sm:$0xf] %vm2056, %v1962
      %2060 = vst.msk [vmem:[#allocation4 + $0xc] sm:$0xf] %vm2056, %v1963
      %2061 = vst.msk [vmem:[#allocation4 + $0x10] sm:$0xf] %vm2056, %v1964
      %2062 = vst.msk [vmem:[#allocation4 + $0x14] sm:$0xf] %vm2056, %v1965
      %2063 = vst.msk [vmem:[#allocation4 + $0x18] sm:$0xf] %vm2056, %v1966
      %2064 = vst.msk [vmem:[#allocation4 + $0x1c] sm:$0xf] %vm2056, %v1967
      %2065 = vst.msk [vmem:[#allocation4 + $0x20] sm:$0xf] %vm2056, %v1968
      %2066 = vst.msk [vmem:[#allocation4 + $0x24] sm:$0xf] %vm2056, %v1969
      %2067 = vst.msk [vmem:[#allocation4 + $0x28] sm:$0xf] %vm2056, %v1970
      %2068 = vst.msk [vmem:[#allocation4 + $0x2c] sm:$0xf] %vm2056, %v1971
      %2069 = vst.msk [vmem:[#allocation4 + $0x30] sm:$0xf] %vm2056, %v1972
      %2070 = vst.msk [vmem:[#allocation4 + $0x34] sm:$0xf] %vm2056, %v1973
      %2071 = vst.msk [vmem:[#allocation4 + $0x38] sm:$0xf] %vm2056, %v1974
      %2072 = vst.msk [vmem:[#allocation4 + $0x3c] sm:$0xf] %vm2056, %v1975
      %2073 = vst.msk [vmem:[#allocation4 + $0x40] sm:$0xf] %vm2056, %v1976
      %2074 = vst.msk [vmem:[#allocation4 + $0x44] sm:$0xf] %vm2056, %v1977
      %2075 = vst.msk [vmem:[#allocation4 + $0x48] sm:$0xf] %vm2056, %v1978
      %2076 = vst.msk [vmem:[#allocation4 + $0x4c] sm:$0xf] %vm2056, %v1979
      %2077 = vst.msk [vmem:[#allocation4 + $0x50] sm:$0xf] %vm2056, %v1980
      %2078 = vst.msk [vmem:[#allocation4 + $0x54] sm:$0xf] %vm2056, %v1981
      %2079 = vst.msk [vmem:[#allocation4 + $0x58] sm:$0xf] %vm2056, %v1982
      %2080 = vst.msk [vmem:[#allocation4 + $0x5c] sm:$0xf] %vm2056, %v1983
      %2081 = vst.msk [vmem:[#allocation4 + $0x60] sm:$0xf] %vm2056, %v1984
      %2082 = vst.msk [vmem:[#allocation4 + $0x64] sm:$0xf] %vm2056, %v1985
      %2083 = vst.msk [vmem:[#allocation4 + $0x68] sm:$0xf] %vm2056, %v1986
      %2084 = vst.msk [vmem:[#allocation4 + $0x6c] sm:$0xf] %vm2056, %v1987
      %2085 = vst.msk [vmem:[#allocation4 + $0x70] sm:$0xf] %vm2056, %v1988
      %2086 = vst.msk [vmem:[#allocation4 + $0x74] sm:$0xf] %vm2056, %v1989
      %2087 = vst.msk [vmem:[#allocation4 + $0x78] sm:$0xf] %vm2056, %v1990
      %2088 = vst.msk [vmem:[#allocation4 + $0x7c] sm:$0xf] %vm2056, %v1991
      %2089 = vst.msk [vmem:[#allocation4 + $0x80] sm:$0xf] %vm2056, %v1992
      %2090 = vst.msk [vmem:[#allocation4 + $0x84] sm:$0xf] %vm2056, %v1993
      %2091 = vst.msk [vmem:[#allocation4 + $0x88] sm:$0xf] %vm2056, %v1994
      %2092 = vst.msk [vmem:[#allocation4 + $0x8c] sm:$0xf] %vm2056, %v1995
      %2093 = vst.msk [vmem:[#allocation4 + $0x90] sm:$0xf] %vm2056, %v1996
      %2094 = vst.msk [vmem:[#allocation4 + $0x94] sm:$0xf] %vm2056, %v1997
      %2095 = vst.msk [vmem:[#allocation4 + $0x98] sm:$0xf] %vm2056, %v1998
      %2096 = vst.msk [vmem:[#allocation4 + $0x9c] sm:$0xf] %vm2056, %v1999
      %2097 = vst.msk [vmem:[#allocation4 + $0xa0] sm:$0xf] %vm2056, %v2000
      %2098 = vst.msk [vmem:[#allocation4 + $0xa4] sm:$0xf] %vm2056, %v2001
      %2099 = vst.msk [vmem:[#allocation4 + $0xa8] sm:$0xf] %vm2056, %v2002
      %2100 = vst.msk [vmem:[#allocation4 + $0xac] sm:$0xf] %vm2056, %v2003
      %2101 = vst.msk [vmem:[#allocation4 + $0xb0] sm:$0xf] %vm2056, %v2004
      %2102 = vst.msk [vmem:[#allocation4 + $0xb4] sm:$0xf] %vm2056, %v2005
      %2103 = vst.msk [vmem:[#allocation4 + $0xb8] sm:$0xf] %vm2056, %v2006
      %vm2104 = vcmask 253952
      %2105 = vst.msk [vmem:[#allocation4 + $0xbc] sm:$0x1] %vm2104, %v2007
      %v2106 = vld [vmem:[%s5] sm:$0x1]
      %v2108 = vlaneseq
      %v2109 = vshrl.u32 %v2108, 7
      %v2110 = vsub.s32 0, %v2109
      %v2111 = vrot.slane %v2106, %v2110
      %v2113 = vld [vmem:[#allocation4] sm:$0xf]
      %v2114 = vld [vmem:[#allocation4 + $0x4] sm:$0xf]
      %v2115 = vld [vmem:[#allocation4 + $0x8] sm:$0xf]
      %v2116 = vld [vmem:[#allocation4 + $0xc] sm:$0xf]
      %v2117 = vld [vmem:[#allocation4 + $0x10] sm:$0xf]
      %v2118 = vld [vmem:[#allocation4 + $0x14] sm:$0xf]
      %v2119 = vld [vmem:[#allocation4 + $0x18] sm:$0xf]
      %v2120 = vld [vmem:[#allocation4 + $0x1c] sm:$0xf]
      %v2121 = vld [vmem:[#allocation4 + $0x20] sm:$0xf]
      %v2122 = vld [vmem:[#allocation4 + $0x24] sm:$0xf]
      %v2123 = vld [vmem:[#allocation4 + $0x28] sm:$0xf]
      %v2124 = vld [vmem:[#allocation4 + $0x2c] sm:$0xf]
      %v2125 = vld [vmem:[#allocation4 + $0x30] sm:$0xf]
      %v2126 = vld [vmem:[#allocation4 + $0x34] sm:$0xf]
      %v2127 = vld [vmem:[#allocation4 + $0x38] sm:$0xf]
      %v2128 = vld [vmem:[#allocation4 + $0x3c] sm:$0xf]
      %v2129 = vld [vmem:[#allocation4 + $0x40] sm:$0xf]
      %v2130 = vld [vmem:[#allocation4 + $0x44] sm:$0xf]
      %v2131 = vld [vmem:[#allocation4 + $0x48] sm:$0xf]
      %v2132 = vld [vmem:[#allocation4 + $0x4c] sm:$0xf]
      %v2133 = vld [vmem:[#allocation4 + $0x50] sm:$0xf]
      %v2134 = vld [vmem:[#allocation4 + $0x54] sm:$0xf]
      %v2135 = vld [vmem:[#allocation4 + $0x58] sm:$0xf]
      %v2136 = vld [vmem:[#allocation4 + $0x5c] sm:$0xf]
      %v2137 = vld [vmem:[#allocation4 + $0x60] sm:$0xf]
      %v2138 = vld [vmem:[#allocation4 + $0x64] sm:$0xf]
      %v2139 = vld [vmem:[#allocation4 + $0x68] sm:$0xf]
      %v2140 = vld [vmem:[#allocation4 + $0x6c] sm:$0xf]
      %v2141 = vld [vmem:[#allocation4 + $0x70] sm:$0xf]
      %v2142 = vld [vmem:[#allocation4 + $0x74] sm:$0xf]
      %v2143 = vld [vmem:[#allocation4 + $0x78] sm:$0xf]
      %v2144 = vld [vmem:[#allocation4 + $0x7c] sm:$0xf]
      %v2145 = vld [vmem:[#allocation4 + $0x80] sm:$0x7]
      %v2146 = vld [vmem:[%s4] sm:$0xf]
      %v2147 = vld [vmem:[%s4 + $0x4] sm:$0xf]
      %v2148 = vld [vmem:[%s4 + $0x8] sm:$0xf]
      %v2149 = vld [vmem:[%s4 + $0xc] sm:$0xf]
      %v2183 = vunpack.c.l.b16 %v2113
      %v2184 = vunpack.c.l.b16 %v2114
      %v2185 = vunpack.c.l.b16 %v2115
      %v2186 = vunpack.c.l.b16 %v2116
      %v2187 = vunpack.c.l.b16 %v2117
      %v2188 = vunpack.c.l.b16 %v2118
      %v2189 = vunpack.c.l.b16 %v2119
      %v2190 = vunpack.c.l.b16 %v2120
      %v2191 = vunpack.c.l.b16 %v2121
      %v2192 = vunpack.c.l.b16 %v2122
      %v2193 = vunpack.c.l.b16 %v2123
      %v2194 = vunpack.c.l.b16 %v2124
      %v2195 = vunpack.c.l.b16 %v2125
      %v2196 = vunpack.c.l.b16 %v2126
      %v2197 = vunpack.c.l.b16 %v2127
      %v2198 = vunpack.c.l.b16 %v2128
      %v2199 = vunpack.c.l.b16 %v2129
      %v2200 = vunpack.c.l.b16 %v2130
      %v2201 = vunpack.c.l.b16 %v2131
      %v2202 = vunpack.c.l.b16 %v2132
      %v2203 = vunpack.c.l.b16 %v2133
      %v2204 = vunpack.c.l.b16 %v2134
      %v2205 = vunpack.c.l.b16 %v2135
      %v2206 = vunpack.c.l.b16 %v2136
      %v2207 = vunpack.c.l.b16 %v2137
      %v2208 = vunpack.c.l.b16 %v2138
      %v2209 = vunpack.c.l.b16 %v2139
      %v2210 = vunpack.c.l.b16 %v2140
      %v2211 = vunpack.c.l.b16 %v2141
      %v2212 = vunpack.c.l.b16 %v2142
      %v2213 = vunpack.c.l.b16 %v2143
      %v2214 = vunpack.c.l.b16 %v2144
      %v2215 = vunpack.c.l.b16 %v2145
      %v2216 = vpack.c.b16 %v2184, %v2183
      %v2217 = vpack.c.b16 %v2186, %v2185
      %v2218 = vpack.c.b16 %v2188, %v2187
      %v2219 = vpack.c.b16 %v2190, %v2189
      %v2220 = vpack.c.b16 %v2192, %v2191
      %v2221 = vpack.c.b16 %v2194, %v2193
      %v2222 = vpack.c.b16 %v2196, %v2195
      %v2223 = vpack.c.b16 %v2198, %v2197
      %v2224 = vpack.c.b16 %v2200, %v2199
      %v2225 = vpack.c.b16 %v2202, %v2201
      %v2226 = vpack.c.b16 %v2204, %v2203
      %v2227 = vpack.c.b16 %v2206, %v2205
      %v2228 = vpack.c.b16 %v2208, %v2207
      %v2229 = vpack.c.b16 %v2210, %v2209
      %v2230 = vpack.c.b16 %v2212, %v2211
      %v2231 = vpack.c.b16 %v2214, %v2213
      %v2232 = vpack.c.b16 %v2215, %v2215
      %v2237 = vunpack.c.l.b16 %v2146
      %v2238 = vunpack.c.l.b16 %v2147
      %v2239 = vunpack.c.l.b16 %v2148
      %v2240 = vunpack.c.l.b16 %v2149
      %v2241 = vpack.c.b16 %v2238, %v2237
      %v2242 = vpack.c.b16 %v2240, %v2239
      %v2246 = vsel %vm859, %v2216, 0
      %v2249 = vsel %vm859, %v2217, 0
      %v2252 = vsel %vm859, %v2218, 0
      %v2255 = vsel %vm859, %v2219, 0
      %v2258 = vsel %vm859, %v2220, 0
      %v2261 = vsel %vm859, %v2221, 0
      %v2264 = vsel %vm859, %v2222, 0
      %v2267 = vsel %vm859, %v2223, 0
      %v2270 = vsel %vm859, %v2224, 0
      %v2273 = vsel %vm859, %v2225, 0
      %v2276 = vsel %vm859, %v2226, 0
      %v2279 = vsel %vm859, %v2227, 0
      %v2282 = vsel %vm859, %v2228, 0
      %v2285 = vsel %vm859, %v2229, 0
      %v2288 = vsel %vm859, %v2230, 0
      %v2291 = vsel %vm859, %v2231, 0
      %v2294 = vsel %vm859, %v2232, 0
      %2296 = vmatprep.subr.bf16.mxu0 0
      %2297 = vmatpush1.bf16.msra.mxu0 %v2241
      %2298 = vmatprep.subr.bf16.mxu0 0
      %2299 = vmatpush1.bf16.msra.mxu0 %v2242
      %2300 = vmatprep.subr.bf16.mxu0 0
      %2301 = vmatpush1.bf16.msra.mxu0 0
      %2302 = vmatprep.subr.bf16.mxu0 0
      %2303 = vmatpush1.bf16.msra.mxu0 0
      %2304 = vmatprep.subr.bf16.mxu0 0
      %2305 = vmatpush1.bf16.msra.mxu0 0
      %2306 = vmatprep.subr.bf16.mxu0 0
      %2307 = vmatpush1.bf16.msra.mxu0 0
      %2308 = vmatprep.subr.bf16.mxu0 0
      %2309 = vmatpush1.bf16.msra.mxu0 0
      %2310 = vmatprep.subr.bf16.mxu0 0
      %2311 = vmatpush1.bf16.msra.mxu0 0
      %2312 = vmatprep.subr.bf16.mxu0 0
      %2313 = vmatpush1.bf16.msra.mxu0 0
      %2314 = vmatprep.subr.bf16.mxu0 0
      %2315 = vmatpush1.bf16.msra.mxu0 0
      %2316 = vmatprep.subr.bf16.mxu0 0
      %2317 = vmatpush1.bf16.msra.mxu0 0
      %2318 = vmatprep.subr.bf16.mxu0 0
      %2319 = vmatpush1.bf16.msra.mxu0 0
      %2320 = vmatprep.subr.bf16.mxu0 0
      %2321 = vmatpush1.bf16.msra.mxu0 0
      %2322 = vmatprep.subr.bf16.mxu0 0
      %2323 = vmatpush1.bf16.msra.mxu0 0
      %2324 = vmatprep.subr.bf16.mxu0 0
      %2325 = vmatpush1.bf16.msra.mxu0 0
      %2326 = vmatprep.subr.bf16.mxu0 0
      %2327 = vmatpush1.bf16.msra.mxu0 0
      %2328 = vmatprep.mubr.bf16.mxu0 0
      %2329 = vmatmul.mubr.bf16.gmra.mrb[0].mxu0 %v2246
      %v2330 = vpop.f32.mrb[0].mxu0
      %v2331 = vadd.f32 0.0, %v2330
      %v2332 = vpop.f32.mrb[0].mxu0
      %v2333 = vpop.f32.mrb[0].mxu0
      %v2334 = vadd.f32 0.0, %v2333
      %v2335 = vpop.f32.mrb[0].mxu0
      %2336 = vmatprep.mubr.bf16.mxu0 0
      %2337 = vmatmul.mubr.bf16.gmra.mrb[0].mxu0 %v2249
      %v2338 = vpop.f32.mrb[0].mxu0
      %v2339 = vadd.f32 0.0, %v2338
      %v2340 = vpop.f32.mrb[0].mxu0
      %v2341 = vpop.f32.mrb[0].mxu0
      %v2342 = vadd.f32 0.0, %v2341
      %v2343 = vpop.f32.mrb[0].mxu0
      %2344 = vmatprep.mubr.bf16.mxu0 0
      %2345 = vmatmul.mubr.bf16.gmra.mrb[0].mxu0 %v2252
      %v2346 = vpop.f32.mrb[0].mxu0
      %v2347 = vadd.f32 0.0, %v2346
      %v2348 = vpop.f32.mrb[0].mxu0
      %v2349 = vpop.f32.mrb[0].mxu0
      %v2350 = vadd.f32 0.0, %v2349
      %v2351 = vpop.f32.mrb[0].mxu0
      %2352 = vmatprep.mubr.bf16.mxu0 0
      %2353 = vmatmul.mubr.bf16.gmra.mrb[0].mxu0 %v2255
      %v2354 = vpop.f32.mrb[0].mxu0
      %v2355 = vadd.f32 0.0, %v2354
      %v2356 = vpop.f32.mrb[0].mxu0
      %v2357 = vpop.f32.mrb[0].mxu0
      %v2358 = vadd.f32 0.0, %v2357
      %v2359 = vpop.f32.mrb[0].mxu0
      %2360 = vmatprep.mubr.bf16.mxu0 0
      %2361 = vmatmul.mubr.bf16.gmra.mrb[0].mxu0 %v2258
      %v2362 = vpop.f32.mrb[0].mxu0
      %v2363 = vadd.f32 0.0, %v2362
      %v2364 = vpop.f32.mrb[0].mxu0
      %v2365 = vpop.f32.mrb[0].mxu0
      %v2366 = vadd.f32 0.0, %v2365
      %v2367 = vpop.f32.mrb[0].mxu0
      %2368 = vmatprep.mubr.bf16.mxu0 0
      %2369 = vmatmul.mubr.bf16.gmra.mrb[0].mxu0 %v2261
      %v2370 = vpop.f32.mrb[0].mxu0
      %v2371 = vadd.f32 0.0, %v2370
      %v2372 = vpop.f32.mrb[0].mxu0
      %v2373 = vpop.f32.mrb[0].mxu0
      %v2374 = vadd.f32 0.0, %v2373
      %v2375 = vpop.f32.mrb[0].mxu0
      %2376 = vmatprep.mubr.bf16.mxu0 0
      %2377 = vmatmul.mubr.bf16.gmra.mrb[0].mxu0 %v2264
      %v2378 = vpop.f32.mrb[0].mxu0
      %v2379 = vadd.f32 0.0, %v2378
      %v2380 = vpop.f32.mrb[0].mxu0
      %v2381 = vpop.f32.mrb[0].mxu0
      %v2382 = vadd.f32 0.0, %v2381
      %v2383 = vpop.f32.mrb[0].mxu0
      %2384 = vmatprep.mubr.bf16.mxu0 0
      %2385 = vmatmul.mubr.bf16.gmra.mrb[0].mxu0 %v2267
      %v2386 = vpop.f32.mrb[0].mxu0
      %v2387 = vadd.f32 0.0, %v2386
      %v2388 = vpop.f32.mrb[0].mxu0
      %v2389 = vpop.f32.mrb[0].mxu0
      %v2390 = vadd.f32 0.0, %v2389
      %v2391 = vpop.f32.mrb[0].mxu0
      %2392 = vmatprep.mubr.bf16.mxu0 0
      %2393 = vmatmul.mubr.bf16.gmra.mrb[0].mxu0 %v2270
      %v2394 = vpop.f32.mrb[0].mxu0
      %v2395 = vadd.f32 0.0, %v2394
      %v2396 = vpop.f32.mrb[0].mxu0
      %v2397 = vpop.f32.mrb[0].mxu0
      %v2398 = vadd.f32 0.0, %v2397
      %v2399 = vpop.f32.mrb[0].mxu0
      %2400 = vmatprep.mubr.bf16.mxu0 0
      %2401 = vmatmul.mubr.bf16.gmra.mrb[0].mxu0 %v2273
      %v2402 = vpop.f32.mrb[0].mxu0
      %v2403 = vadd.f32 0.0, %v2402
      %v2404 = vpop.f32.mrb[0].mxu0
      %v2405 = vpop.f32.mrb[0].mxu0
      %v2406 = vadd.f32 0.0, %v2405
      %v2407 = vpop.f32.mrb[0].mxu0
      %2408 = vmatprep.mubr.bf16.mxu0 0
      %2409 = vmatmul.mubr.bf16.gmra.mrb[0].mxu0 %v2276
      %v2410 = vpop.f32.mrb[0].mxu0
      %v2411 = vadd.f32 0.0, %v2410
      %v2412 = vpop.f32.mrb[0].mxu0
      %v2413 = vpop.f32.mrb[0].mxu0
      %v2414 = vadd.f32 0.0, %v2413
      %v2415 = vpop.f32.mrb[0].mxu0
      %2416 = vmatprep.mubr.bf16.mxu0 0
      %2417 = vmatmul.mubr.bf16.gmra.mrb[0].mxu0 %v2279
      %v2418 = vpop.f32.mrb[0].mxu0
      %v2419 = vadd.f32 0.0, %v2418
      %v2420 = vpop.f32.mrb[0].mxu0
      %v2421 = vpop.f32.mrb[0].mxu0
      %v2422 = vadd.f32 0.0, %v2421
      %v2423 = vpop.f32.mrb[0].mxu0
      %2424 = vmatprep.mubr.bf16.mxu0 0
      %2425 = vmatmul.mubr.bf16.gmra.mrb[0].mxu0 %v2282
      %v2426 = vpop.f32.mrb[0].mxu0
      %v2427 = vadd.f32 0.0, %v2426
      %v2428 = vpop.f32.mrb[0].mxu0
      %v2429 = vpop.f32.mrb[0].mxu0
      %v2430 = vadd.f32 0.0, %v2429
      %v2431 = vpop.f32.mrb[0].mxu0
      %2432 = vmatprep.mubr.bf16.mxu0 0
      %2433 = vmatmul.mubr.bf16.gmra.mrb[0].mxu0 %v2285
      %v2434 = vpop.f32.mrb[0].mxu0
      %v2435 = vadd.f32 0.0, %v2434
      %v2436 = vpop.f32.mrb[0].mxu0
      %v2437 = vpop.f32.mrb[0].mxu0
      %v2438 = vadd.f32 0.0, %v2437
      %v2439 = vpop.f32.mrb[0].mxu0
      %2440 = vmatprep.mubr.bf16.mxu0 0
      %2441 = vmatmul.mubr.bf16.gmra.mrb[0].mxu0 %v2288
      %v2442 = vpop.f32.mrb[0].mxu0
      %v2443 = vadd.f32 0.0, %v2442
      %v2444 = vpop.f32.mrb[0].mxu0
      %v2445 = vpop.f32.mrb[0].mxu0
      %v2446 = vadd.f32 0.0, %v2445
      %v2447 = vpop.f32.mrb[0].mxu0
      %2448 = vmatprep.mubr.bf16.mxu0 0
      %2449 = vmatmul.mubr.bf16.gmra.mrb[0].mxu0 %v2291
      %v2450 = vpop.f32.mrb[0].mxu0
      %v2451 = vadd.f32 0.0, %v2450
      %v2452 = vpop.f32.mrb[0].mxu0
      %v2453 = vpop.f32.mrb[0].mxu0
      %v2454 = vadd.f32 0.0, %v2453
      %v2455 = vpop.f32.mrb[0].mxu0
      %2456 = vmatprep.mubr.bf16.mxu0 0
      %2457 = vmatmul.mubr.bf16.gmra.mrb[0].mxu0 %v2294
      %v2458 = vpop.f32.mrb[0].mxu0
      %v2459 = vadd.f32 0.0, %v2458
      %v2460 = vpop.f32.mrb[0].mxu0
      %v2461 = vpop.f32.mrb[0].mxu0
      %v2462 = vpop.f32.mrb[0].mxu0
      %2463 = vdwg.mxu0
      %v2464 = vadd.f32 %v2111, %v2331
      %v2465 = vadd.f32 %v2111, %v2334
      %v2466 = vadd.f32 %v2111, %v2339
      %v2467 = vadd.f32 %v2111, %v2342
      %v2468 = vadd.f32 %v2111, %v2347
      %v2469 = vadd.f32 %v2111, %v2350
      %v2470 = vadd.f32 %v2111, %v2355
      %v2471 = vadd.f32 %v2111, %v2358
      %v2472 = vadd.f32 %v2111, %v2363
      %v2473 = vadd.f32 %v2111, %v2366
      %v2474 = vadd.f32 %v2111, %v2371
      %v2475 = vadd.f32 %v2111, %v2374
      %v2476 = vadd.f32 %v2111, %v2379
      %v2477 = vadd.f32 %v2111, %v2382
      %v2478 = vadd.f32 %v2111, %v2387
      %v2479 = vadd.f32 %v2111, %v2390
      %v2480 = vadd.f32 %v2111, %v2395
      %v2481 = vadd.f32 %v2111, %v2398
      %v2482 = vadd.f32 %v2111, %v2403
      %v2483 = vadd.f32 %v2111, %v2406
      %v2484 = vadd.f32 %v2111, %v2411
      %v2485 = vadd.f32 %v2111, %v2414
      %v2486 = vadd.f32 %v2111, %v2419
      %v2487 = vadd.f32 %v2111, %v2422
      %v2488 = vadd.f32 %v2111, %v2427
      %v2489 = vadd.f32 %v2111, %v2430
      %v2490 = vadd.f32 %v2111, %v2435
      %v2491 = vadd.f32 %v2111, %v2438
      %v2492 = vadd.f32 %v2111, %v2443
      %v2493 = vadd.f32 %v2111, %v2446
      %v2494 = vadd.f32 %v2111, %v2451
      %v2495 = vadd.f32 %v2111, %v2454
      %v2496 = vadd.f32 %v2111, %v2459
      %v2497 = vld [vmem:[#allocation4 + $0x80] sm:$0xf]
      %s2498 = scalar_lea.vmem %s4, 16
      %v2499 = vld [vmem:[%s2498] sm:$0xf]
      %v2500 = vld [vmem:[%s2498 + $0x4] sm:$0xf]
      %v2501 = vld [vmem:[%s2498 + $0x8] sm:$0xf]
      %v2502 = vld [vmem:[%s2498 + $0xc] sm:$0xf]
      %v2504 = vunpack.c.l.b16 %v2497
      %v2505 = vpack.c.b16 %v2504, %v2504
      %vm2506 = vsmask.f32 7424
      %v2507 = vshrl.u32 %v2216, 16
      %v2509 = vshll.u32 %v2216, 16
      %v2511 = vrot.slane %v2509, 1
      %v2512 = vor.u32 %v2507, %v2511
      %v2513 = vshll.u32 %v2217, 16
      %v2515 = vrot.slane %v2513, 1
      %v2516 = vsel %vm2506, %v2512, %v2515
      %v2517 = vshrl.u32 %v2217, 16
      %v2519 = vor.u32 %v2517, %v2515
      %v2520 = vshll.u32 %v2218, 16
      %v2522 = vrot.slane %v2520, 1
      %v2523 = vsel %vm2506, %v2519, %v2522
      %v2524 = vshrl.u32 %v2218, 16
      %v2526 = vor.u32 %v2524, %v2522
      %v2527 = vshll.u32 %v2219, 16
      %v2529 = vrot.slane %v2527, 1
      %v2530 = vsel %vm2506, %v2526, %v2529
      %v2531 = vshrl.u32 %v2219, 16
      %v2533 = vor.u32 %v2531, %v2529
      %v2534 = vshll.u32 %v2220, 16
      %v2536 = vrot.slane %v2534, 1
      %v2537 = vsel %vm2506, %v2533, %v2536
      %v2538 = vshrl.u32 %v2220, 16
      %v2540 = vor.u32 %v2538, %v2536
      %v2541 = vshll.u32 %v2221, 16
      %v2543 = vrot.slane %v2541, 1
      %v2544 = vsel %vm2506, %v2540, %v2543
      %v2545 = vshrl.u32 %v2221, 16
      %v2547 = vor.u32 %v2545, %v2543
      %v2548 = vshll.u32 %v2222, 16
      %v2550 = vrot.slane %v2548, 1
      %v2551 = vsel %vm2506, %v2547, %v2550
      %v2552 = vshrl.u32 %v2222, 16
      %v2554 = vor.u32 %v2552, %v2550
      %v2555 = vshll.u32 %v2223, 16
      %v2557 = vrot.slane %v2555, 1
      %v2558 = vsel %vm2506, %v2554, %v2557
      %v2559 = vshrl.u32 %v2223, 16
      %v2561 = vor.u32 %v2559, %v2557
      %v2562 = vshll.u32 %v2224, 16
      %v2564 = vrot.slane %v2562, 1
      %v2565 = vsel %vm2506, %v2561, %v2564
      %v2566 = vshrl.u32 %v2224, 16
      %v2568 = vor.u32 %v2566, %v2564
      %v2569 = vshll.u32 %v2225, 16
      %v2571 = vrot.slane %v2569, 1
      %v2572 = vsel %vm2506, %v2568, %v2571
      %v2573 = vshrl.u32 %v2225, 16
      %v2575 = vor.u32 %v2573, %v2571
      %v2576 = vshll.u32 %v2226, 16
      %v2578 = vrot.slane %v2576, 1
      %v2579 = vsel %vm2506, %v2575, %v2578
      %v2580 = vshrl.u32 %v2226, 16
      %v2582 = vor.u32 %v2580, %v2578
      %v2583 = vshll.u32 %v2227, 16
      %v2585 = vrot.slane %v2583, 1
      %v2586 = vsel %vm2506, %v2582, %v2585
      %v2587 = vshrl.u32 %v2227, 16
      %v2589 = vor.u32 %v2587, %v2585
      %v2590 = vshll.u32 %v2228, 16
      %v2592 = vrot.slane %v2590, 1
      %v2593 = vsel %vm2506, %v2589, %v2592
      %v2594 = vshrl.u32 %v2228, 16
      %v2596 = vor.u32 %v2594, %v2592
      %v2597 = vshll.u32 %v2229, 16
      %v2599 = vrot.slane %v2597, 1
      %v2600 = vsel %vm2506, %v2596, %v2599
      %v2601 = vshrl.u32 %v2229, 16
      %v2603 = vor.u32 %v2601, %v2599
      %v2604 = vshll.u32 %v2230, 16
      %v2606 = vrot.slane %v2604, 1
      %v2607 = vsel %vm2506, %v2603, %v2606
      %v2608 = vshrl.u32 %v2230, 16
      %v2610 = vor.u32 %v2608, %v2606
      %v2611 = vshll.u32 %v2231, 16
      %v2613 = vrot.slane %v2611, 1
      %v2614 = vsel %vm2506, %v2610, %v2613
      %v2615 = vshrl.u32 %v2231, 16
      %v2617 = vor.u32 %v2615, %v2613
      %v2619 = vshll.u32 %v2505, 16
      %v2621 = vrot.slane %v2619, 1
      %v2622 = vsel %vm2506, %v2617, %v2621
      %v2623 = vshrl.u32 %v2505, 16
      %v2625 = vor.u32 %v2623, %v2621
      %v2630 = vunpack.c.l.b16 %v2499
      %v2631 = vunpack.c.l.b16 %v2500
      %v2632 = vunpack.c.l.b16 %v2501
      %v2633 = vunpack.c.l.b16 %v2502
      %v2634 = vpack.c.b16 %v2631, %v2630
      %v2635 = vpack.c.b16 %v2633, %v2632
      %v2639 = vsel %vm859, %v2516, 0
      %v2642 = vsel %vm859, %v2523, 0
      %v2645 = vsel %vm859, %v2530, 0
      %v2648 = vsel %vm859, %v2537, 0
      %v2651 = vsel %vm859, %v2544, 0
      %v2654 = vsel %vm859, %v2551, 0
      %v2657 = vsel %vm859, %v2558, 0
      %v2660 = vsel %vm859, %v2565, 0
      %v2663 = vsel %vm859, %v2572, 0
      %v2666 = vsel %vm859, %v2579, 0
      %v2669 = vsel %vm859, %v2586, 0
      %v2672 = vsel %vm859, %v2593, 0
      %v2675 = vsel %vm859, %v2600, 0
      %v2678 = vsel %vm859, %v2607, 0
      %v2681 = vsel %vm859, %v2614, 0
      %v2684 = vsel %vm859, %v2622, 0
      %v2687 = vsel %vm859, %v2625, 0
      %2689 = vmatprep.subr.bf16.mxu0 0
      %2690 = vmatpush1.bf16.msra.mxu0 %v2634
      %2691 = vmatprep.subr.bf16.mxu0 0
      %2692 = vmatpush1.bf16.msra.mxu0 %v2635
      %2693 = vmatprep.subr.bf16.mxu0 0
      %2694 = vmatpush1.bf16.msra.mxu0 0
      %2695 = vmatprep.subr.bf16.mxu0 0
      %2696 = vmatpush1.bf16.msra.mxu0 0
      %2697 = vmatprep.subr.bf16.mxu0 0
      %2698 = vmatpush1.bf16.msra.mxu0 0
      %2699 = vmatprep.subr.bf16.mxu0 0
      %2700 = vmatpush1.bf16.msra.mxu0 0
      %2701 = vmatprep.subr.bf16.mxu0 0
      %2702 = vmatpush1.bf16.msra.mxu0 0
      %2703 = vmatprep.subr.bf16.mxu0 0
      %2704 = vmatpush1.bf16.msra.mxu0 0
      %2705 = vmatprep.subr.bf16.mxu0 0
      %2706 = vmatpush1.bf16.msra.mxu0 0
      %2707 = vmatprep.subr.bf16.mxu0 0
      %2708 = vmatpush1.bf16.msra.mxu0 0
      %2709 = vmatprep.subr.bf16.mxu0 0
      %2710 = vmatpush1.bf16.msra.mxu0 0
      %2711 = vmatprep.subr.bf16.mxu0 0
      %2712 = vmatpush1.bf16.msra.mxu0 0
      %2713 = vmatprep.subr.bf16.mxu0 0
      %2714 = vmatpush1.bf16.msra.mxu0 0
      %2715 = vmatprep.subr.bf16.mxu0 0
      %2716 = vmatpush1.bf16.msra.mxu0 0
      %2717 = vmatprep.subr.bf16.mxu0 0
      %2718 = vmatpush1.bf16.msra.mxu0 0
      %2719 = vmatprep.subr.bf16.mxu0 0
      %2720 = vmatpush1.bf16.msra.mxu0 0
      %2721 = vmatprep.mubr.bf16.mxu0 0
      %2722 = vmatmul.mubr.bf16.gmra.mrb[0].mxu0 %v2639
      %v2723 = vpop.f32.mrb[0].mxu0
      %v2724 = vadd.f32 0.0, %v2723
      %v2725 = vpop.f32.mrb[0].mxu0
      %v2726 = vpop.f32.mrb[0].mxu0
      %v2727 = vadd.f32 0.0, %v2726
      %v2728 = vpop.f32.mrb[0].mxu0
      %2729 = vmatprep.mubr.bf16.mxu0 0
      %2730 = vmatmul.mubr.bf16.gmra.mrb[0].mxu0 %v2642
      %v2731 = vpop.f32.mrb[0].mxu0
      %v2732 = vadd.f32 0.0, %v2731
      %v2733 = vpop.f32.mrb[0].mxu0
      %v2734 = vpop.f32.mrb[0].mxu0
      %v2735 = vadd.f32 0.0, %v2734
      %v2736 = vpop.f32.mrb[0].mxu0
      %2737 = vmatprep.mubr.bf16.mxu0 0
      %2738 = vmatmul.mubr.bf16.gmra.mrb[0].mxu0 %v2645
      %v2739 = vpop.f32.mrb[0].mxu0
      %v2740 = vadd.f32 0.0, %v2739
      %v2741 = vpop.f32.mrb[0].mxu0
      %v2742 = vpop.f32.mrb[0].mxu0
      %v2743 = vadd.f32 0.0, %v2742
      %v2744 = vpop.f32.mrb[0].mxu0
      %2745 = vmatprep.mubr.bf16.mxu0 0
      %2746 = vmatmul.mubr.bf16.gmra.mrb[0].mxu0 %v2648
      %v2747 = vpop.f32.mrb[0].mxu0
      %v2748 = vadd.f32 0.0, %v2747
      %v2749 = vpop.f32.mrb[0].mxu0
      %v2750 = vpop.f32.mrb[0].mxu0
      %v2751 = vadd.f32 0.0, %v2750
      %v2752 = vpop.f32.mrb[0].mxu0
      %2753 = vmatprep.mubr.bf16.mxu0 0
      %2754 = vmatmul.mubr.bf16.gmra.mrb[0].mxu0 %v2651
      %v2755 = vpop.f32.mrb[0].mxu0
      %v2756 = vadd.f32 0.0, %v2755
      %v2757 = vpop.f32.mrb[0].mxu0
      %v2758 = vpop.f32.mrb[0].mxu0
      %v2759 = vadd.f32 0.0, %v2758
      %v2760 = vpop.f32.mrb[0].mxu0
      %2761 = vmatprep.mubr.bf16.mxu0 0
      %2762 = vmatmul.mubr.bf16.gmra.mrb[0].mxu0 %v2654
      %v2763 = vpop.f32.mrb[0].mxu0
      %v2764 = vadd.f32 0.0, %v2763
      %v2765 = vpop.f32.mrb[0].mxu0
      %v2766 = vpop.f32.mrb[0].mxu0
      %v2767 = vadd.f32 0.0, %v2766
      %v2768 = vpop.f32.mrb[0].mxu0
      %2769 = vmatprep.mubr.bf16.mxu0 0
      %2770 = vmatmul.mubr.bf16.gmra.mrb[0].mxu0 %v2657
      %v2771 = vpop.f32.mrb[0].mxu0
      %v2772 = vadd.f32 0.0, %v2771
      %v2773 = vpop.f32.mrb[0].mxu0
      %v2774 = vpop.f32.mrb[0].mxu0
      %v2775 = vadd.f32 0.0, %v2774
      %v2776 = vpop.f32.mrb[0].mxu0
      %2777 = vmatprep.mubr.bf16.mxu0 0
      %2778 = vmatmul.mubr.bf16.gmra.mrb[0].mxu0 %v2660
      %v2779 = vpop.f32.mrb[0].mxu0
      %v2780 = vadd.f32 0.0, %v2779
      %v2781 = vpop.f32.mrb[0].mxu0
      %v2782 = vpop.f32.mrb[0].mxu0
      %v2783 = vadd.f32 0.0, %v2782
      %v2784 = vpop.f32.mrb[0].mxu0
      %2785 = vmatprep.mubr.bf16.mxu0 0
      %2786 = vmatmul.mubr.bf16.gmra.mrb[0].mxu0 %v2663
      %v2787 = vpop.f32.mrb[0].mxu0
      %v2788 = vadd.f32 0.0, %v2787
      %v2789 = vpop.f32.mrb[0].mxu0
      %v2790 = vpop.f32.mrb[0].mxu0
      %v2791 = vadd.f32 0.0, %v2790
      %v2792 = vpop.f32.mrb[0].mxu0
      %2793 = vmatprep.mubr.bf16.mxu0 0
      %2794 = vmatmul.mubr.bf16.gmra.mrb[0].mxu0 %v2666
      %v2795 = vpop.f32.mrb[0].mxu0
      %v2796 = vadd.f32 0.0, %v2795
      %v2797 = vpop.f32.mrb[0].mxu0
      %v2798 = vpop.f32.mrb[0].mxu0
      %v2799 = vadd.f32 0.0, %v2798
      %v2800 = vpop.f32.mrb[0].mxu0
      %2801 = vmatprep.mubr.bf16.mxu0 0
      %2802 = vmatmul.mubr.bf16.gmra.mrb[0].mxu0 %v2669
      %v2803 = vpop.f32.mrb[0].mxu0
      %v2804 = vadd.f32 0.0, %v2803
      %v2805 = vpop.f32.mrb[0].mxu0
      %v2806 = vpop.f32.mrb[0].mxu0
      %v2807 = vadd.f32 0.0, %v2806
      %v2808 = vpop.f32.mrb[0].mxu0
      %2809 = vmatprep.mubr.bf16.mxu0 0
      %2810 = vmatmul.mubr.bf16.gmra.mrb[0].mxu0 %v2672
      %v2811 = vpop.f32.mrb[0].mxu0
      %v2812 = vadd.f32 0.0, %v2811
      %v2813 = vpop.f32.mrb[0].mxu0
      %v2814 = vpop.f32.mrb[0].mxu0
      %v2815 = vadd.f32 0.0, %v2814
      %v2816 = vpop.f32.mrb[0].mxu0
      %2817 = vmatprep.mubr.bf16.mxu0 0
      %2818 = vmatmul.mubr.bf16.gmra.mrb[0].mxu0 %v2675
      %v2819 = vpop.f32.mrb[0].mxu0
      %v2820 = vadd.f32 0.0, %v2819
      %v2821 = vpop.f32.mrb[0].mxu0
      %v2822 = vpop.f32.mrb[0].mxu0
      %v2823 = vadd.f32 0.0, %v2822
      %v2824 = vpop.f32.mrb[0].mxu0
      %2825 = vmatprep.mubr.bf16.mxu0 0
      %2826 = vmatmul.mubr.bf16.gmra.mrb[0].mxu0 %v2678
      %v2827 = vpop.f32.mrb[0].mxu0
      %v2828 = vadd.f32 0.0, %v2827
      %v2829 = vpop.f32.mrb[0].mxu0
      %v2830 = vpop.f32.mrb[0].mxu0
      %v2831 = vadd.f32 0.0, %v2830
      %v2832 = vpop.f32.mrb[0].mxu0
      %2833 = vmatprep.mubr.bf16.mxu0 0
      %2834 = vmatmul.mubr.bf16.gmra.mrb[0].mxu0 %v2681
      %v2835 = vpop.f32.mrb[0].mxu0
      %v2836 = vadd.f32 0.0, %v2835
      %v2837 = vpop.f32.mrb[0].mxu0
      %v2838 = vpop.f32.mrb[0].mxu0
      %v2839 = vadd.f32 0.0, %v2838
      %v2840 = vpop.f32.mrb[0].mxu0
      %2841 = vmatprep.mubr.bf16.mxu0 0
      %2842 = vmatmul.mubr.bf16.gmra.mrb[0].mxu0 %v2684
      %v2843 = vpop.f32.mrb[0].mxu0
      %v2844 = vadd.f32 0.0, %v2843
      %v2845 = vpop.f32.mrb[0].mxu0
      %v2846 = vpop.f32.mrb[0].mxu0
      %v2847 = vadd.f32 0.0, %v2846
      %v2848 = vpop.f32.mrb[0].mxu0
      %2849 = vmatprep.mubr.bf16.mxu0 0
      %2850 = vmatmul.mubr.bf16.gmra.mrb[0].mxu0 %v2687
      %v2851 = vpop.f32.mrb[0].mxu0
      %v2852 = vadd.f32 0.0, %v2851
      %v2853 = vpop.f32.mrb[0].mxu0
      %v2854 = vpop.f32.mrb[0].mxu0
      %v2855 = vpop.f32.mrb[0].mxu0
      %2856 = vdwg.mxu0
      %v2857 = vadd.f32 %v2464, %v2724
      %v2858 = vadd.f32 %v2465, %v2727
      %v2859 = vadd.f32 %v2466, %v2732
      %v2860 = vadd.f32 %v2467, %v2735
      %v2861 = vadd.f32 %v2468, %v2740
      %v2862 = vadd.f32 %v2469, %v2743
      %v2863 = vadd.f32 %v2470, %v2748
      %v2864 = vadd.f32 %v2471, %v2751
      %v2865 = vadd.f32 %v2472, %v2756
      %v2866 = vadd.f32 %v2473, %v2759
      %v2867 = vadd.f32 %v2474, %v2764
      %v2868 = vadd.f32 %v2475, %v2767
      %v2869 = vadd.f32 %v2476, %v2772
      %v2870 = vadd.f32 %v2477, %v2775
      %v2871 = vadd.f32 %v2478, %v2780
      %v2872 = vadd.f32 %v2479, %v2783
      %v2873 = vadd.f32 %v2480, %v2788
      %v2874 = vadd.f32 %v2481, %v2791
      %v2875 = vadd.f32 %v2482, %v2796
      %v2876 = vadd.f32 %v2483, %v2799
      %v2877 = vadd.f32 %v2484, %v2804
      %v2878 = vadd.f32 %v2485, %v2807
      %v2879 = vadd.f32 %v2486, %v2812
      %v2880 = vadd.f32 %v2487, %v2815
      %v2881 = vadd.f32 %v2488, %v2820
      %v2882 = vadd.f32 %v2489, %v2823
      %v2883 = vadd.f32 %v2490, %v2828
      %v2884 = vadd.f32 %v2491, %v2831
      %v2885 = vadd.f32 %v2492, %v2836
      %v2886 = vadd.f32 %v2493, %v2839
      %v2887 = vadd.f32 %v2494, %v2844
      %v2888 = vadd.f32 %v2495, %v2847
      %v2889 = vadd.f32 %v2496, %v2852
      %v2890 = vld [vmem:[#allocation4] sm:$0xe]
      %s2891 = scalar_lea.vmem %s4, 32
      %v2892 = vld [vmem:[%s2891] sm:$0xf]
      %v2893 = vld [vmem:[%s2891 + $0x4] sm:$0xf]
      %v2894 = vld [vmem:[%s2891 + $0x8] sm:$0xf]
      %v2895 = vld [vmem:[%s2891 + $0xc] sm:$0xf]
      %v2897 = vunpack.c.l.b16 %v2890
      %v2898 = vpack.c.b16 %v2184, %v2897
      %vm2899 = vcmask 1046528
      %v2900 = vrot.slane %v2898, 1
      %v2901 = vrot.slane %v2217, 1
      %v2902 = vsel %vm2899, %v2900, %v2901
      %v2903 = vrot.slane %v2218, 1
      %v2904 = vsel %vm2899, %v2901, %v2903
      %v2905 = vrot.slane %v2219, 1
      %v2906 = vsel %vm2899, %v2903, %v2905
      %v2907 = vrot.slane %v2220, 1
      %v2908 = vsel %vm2899, %v2905, %v2907
      %v2909 = vrot.slane %v2221, 1
      %v2910 = vsel %vm2899, %v2907, %v2909
      %v2911 = vrot.slane %v2222, 1
      %v2912 = vsel %vm2899, %v2909, %v2911
      %v2913 = vrot.slane %v2223, 1
      %v2914 = vsel %vm2899, %v2911, %v2913
      %v2915 = vrot.slane %v2224, 1
      %v2916 = vsel %vm2899, %v2913, %v2915
      %v2917 = vrot.slane %v2225, 1
      %v2918 = vsel %vm2899, %v2915, %v2917
      %v2919 = vrot.slane %v2226, 1
      %v2920 = vsel %vm2899, %v2917, %v2919
      %v2921 = vrot.slane %v2227, 1
      %v2922 = vsel %vm2899, %v2919, %v2921
      %v2923 = vrot.slane %v2228, 1
      %v2924 = vsel %vm2899, %v2921, %v2923
      %v2925 = vrot.slane %v2229, 1
      %v2926 = vsel %vm2899, %v2923, %v2925
      %v2927 = vrot.slane %v2230, 1
      %v2928 = vsel %vm2899, %v2925, %v2927
      %v2929 = vrot.slane %v2231, 1
      %v2930 = vsel %vm2899, %v2927, %v2929
      %v2931 = vrot.slane %v2505, 1
      %v2932 = vsel %vm2899, %v2929, %v2931
      %v2937 = vunpack.c.l.b16 %v2892
      %v2938 = vunpack.c.l.b16 %v2893
      %v2939 = vunpack.c.l.b16 %v2894
      %v2940 = vunpack.c.l.b16 %v2895
      %v2941 = vpack.c.b16 %v2938, %v2937
      %v2942 = vpack.c.b16 %v2940, %v2939
      %v2946 = vsel %vm859, %v2902, 0
      %v2949 = vsel %vm859, %v2904, 0
      %v2952 = vsel %vm859, %v2906, 0
      %v2955 = vsel %vm859, %v2908, 0
      %v2958 = vsel %vm859, %v2910, 0
      %v2961 = vsel %vm859, %v2912, 0
      %v2964 = vsel %vm859, %v2914, 0
      %v2967 = vsel %vm859, %v2916, 0
      %v2970 = vsel %vm859, %v2918, 0
      %v2973 = vsel %vm859, %v2920, 0
      %v2976 = vsel %vm859, %v2922, 0
      %v2979 = vsel %vm859, %v2924, 0
      %v2982 = vsel %vm859, %v2926, 0
      %v2985 = vsel %vm859, %v2928, 0
      %v2988 = vsel %vm859, %v2930, 0
      %v2991 = vsel %vm859, %v2932, 0
      %v2994 = vsel %vm859, %v2931, 0
      %2996 = vmatprep.subr.bf16.mxu0 0
      %2997 = vmatpush1.bf16.msra.mxu0 %v2941
      %2998 = vmatprep.subr.bf16.mxu0 0
      %2999 = vmatpush1.bf16.msra.mxu0 %v2942
      %3000 = vmatprep.subr.bf16.mxu0 0
      %3001 = vmatpush1.bf16.msra.mxu0 0
      %3002 = vmatprep.subr.bf16.mxu0 0
      %3003 = vmatpush1.bf16.msra.mxu0 0
      %3004 = vmatprep.subr.bf16.mxu0 0
      %3005 = vmatpush1.bf16.msra.mxu0 0
      %3006 = vmatprep.subr.bf16.mxu0 0
      %3007 = vmatpush1.bf16.msra.mxu0 0
      %3008 = vmatprep.subr.bf16.mxu0 0
      %3009 = vmatpush1.bf16.msra.mxu0 0
      %3010 = vmatprep.subr.bf16.mxu0 0
      %3011 = vmatpush1.bf16.msra.mxu0 0
      %3012 = vmatprep.subr.bf16.mxu0 0
      %3013 = vmatpush1.bf16.msra.mxu0 0
      %3014 = vmatprep.subr.bf16.mxu0 0
      %3015 = vmatpush1.bf16.msra.mxu0 0
      %3016 = vmatprep.subr.bf16.mxu0 0
      %3017 = vmatpush1.bf16.msra.mxu0 0
      %3018 = vmatprep.subr.bf16.mxu0 0
      %3019 = vmatpush1.bf16.msra.mxu0 0
      %3020 = vmatprep.subr.bf16.mxu0 0
      %3021 = vmatpush1.bf16.msra.mxu0 0
      %3022 = vmatprep.subr.bf16.mxu0 0
      %3023 = vmatpush1.bf16.msra.mxu0 0
      %3024 = vmatprep.subr.bf16.mxu0 0
      %3025 = vmatpush1.bf16.msra.mxu0 0
      %3026 = vmatprep.subr.bf16.mxu0 0
      %3027 = vmatpush1.bf16.msra.mxu0 0
      %3028 = vmatprep.mubr.bf16.mxu0 0
      %3029 = vmatmul.mubr.bf16.gmra.mrb[0].mxu0 %v2946
      %v3030 = vpop.f32.mrb[0].mxu0
      %v3031 = vadd.f32 0.0, %v3030
      %v3032 = vpop.f32.mrb[0].mxu0
      %v3033 = vpop.f32.mrb[0].mxu0
      %v3034 = vadd.f32 0.0, %v3033
      %v3035 = vpop.f32.mrb[0].mxu0
      %3036 = vmatprep.mubr.bf16.mxu0 0
      %3037 = vmatmul.mubr.bf16.gmra.mrb[0].mxu0 %v2949
      %v3038 = vpop.f32.mrb[0].mxu0
      %v3039 = vadd.f32 0.0, %v3038
      %v3040 = vpop.f32.mrb[0].mxu0
      %v3041 = vpop.f32.mrb[0].mxu0
      %v3042 = vadd.f32 0.0, %v3041
      %v3043 = vpop.f32.mrb[0].mxu0
      %3044 = vmatprep.mubr.bf16.mxu0 0
      %3045 = vmatmul.mubr.bf16.gmra.mrb[0].mxu0 %v2952
      %v3046 = vpop.f32.mrb[0].mxu0
      %v3047 = vadd.f32 0.0, %v3046
      %v3048 = vpop.f32.mrb[0].mxu0
      %v3049 = vpop.f32.mrb[0].mxu0
      %v3050 = vadd.f32 0.0, %v3049
      %v3051 = vpop.f32.mrb[0].mxu0
      %3052 = vmatprep.mubr.bf16.mxu0 0
      %3053 = vmatmul.mubr.bf16.gmra.mrb[0].mxu0 %v2955
      %v3054 = vpop.f32.mrb[0].mxu0
      %v3055 = vadd.f32 0.0, %v3054
      %v3056 = vpop.f32.mrb[0].mxu0
      %v3057 = vpop.f32.mrb[0].mxu0
      %v3058 = vadd.f32 0.0, %v3057
      %v3059 = vpop.f32.mrb[0].mxu0
      %3060 = vmatprep.mubr.bf16.mxu0 0
      %3061 = vmatmul.mubr.bf16.gmra.mrb[0].mxu0 %v2958
      %v3062 = vpop.f32.mrb[0].mxu0
      %v3063 = vadd.f32 0.0, %v3062
      %v3064 = vpop.f32.mrb[0].mxu0
      %v3065 = vpop.f32.mrb[0].mxu0
      %v3066 = vadd.f32 0.0, %v3065
      %v3067 = vpop.f32.mrb[0].mxu0
      %3068 = vmatprep.mubr.bf16.mxu0 0
      %3069 = vmatmul.mubr.bf16.gmra.mrb[0].mxu0 %v2961
      %v3070 = vpop.f32.mrb[0].mxu0
      %v3071 = vadd.f32 0.0, %v3070
      %v3072 = vpop.f32.mrb[0].mxu0
      %v3073 = vpop.f32.mrb[0].mxu0
      %v3074 = vadd.f32 0.0, %v3073
      %v3075 = vpop.f32.mrb[0].mxu0
      %3076 = vmatprep.mubr.bf16.mxu0 0
      %3077 = vmatmul.mubr.bf16.gmra.mrb[0].mxu0 %v2964
      %v3078 = vpop.f32.mrb[0].mxu0
      %v3079 = vadd.f32 0.0, %v3078
      %v3080 = vpop.f32.mrb[0].mxu0
      %v3081 = vpop.f32.mrb[0].mxu0
      %v3082 = vadd.f32 0.0, %v3081
      %v3083 = vpop.f32.mrb[0].mxu0
      %3084 = vmatprep.mubr.bf16.mxu0 0
      %3085 = vmatmul.mubr.bf16.gmra.mrb[0].mxu0 %v2967
      %v3086 = vpop.f32.mrb[0].mxu0
      %v3087 = vadd.f32 0.0, %v3086
      %v3088 = vpop.f32.mrb[0].mxu0
      %v3089 = vpop.f32.mrb[0].mxu0
      %v3090 = vadd.f32 0.0, %v3089
      %v3091 = vpop.f32.mrb[0].mxu0
      %3092 = vmatprep.mubr.bf16.mxu0 0
      %3093 = vmatmul.mubr.bf16.gmra.mrb[0].mxu0 %v2970
      %v3094 = vpop.f32.mrb[0].mxu0
      %v3095 = vadd.f32 0.0, %v3094
      %v3096 = vpop.f32.mrb[0].mxu0
      %v3097 = vpop.f32.mrb[0].mxu0
      %v3098 = vadd.f32 0.0, %v3097
      %v3099 = vpop.f32.mrb[0].mxu0
      %3100 = vmatprep.mubr.bf16.mxu0 0
      %3101 = vmatmul.mubr.bf16.gmra.mrb[0].mxu0 %v2973
      %v3102 = vpop.f32.mrb[0].mxu0
      %v3103 = vadd.f32 0.0, %v3102
      %v3104 = vpop.f32.mrb[0].mxu0
      %v3105 = vpop.f32.mrb[0].mxu0
      %v3106 = vadd.f32 0.0, %v3105
      %v3107 = vpop.f32.mrb[0].mxu0
      %3108 = vmatprep.mubr.bf16.mxu0 0
      %3109 = vmatmul.mubr.bf16.gmra.mrb[0].mxu0 %v2976
      %v3110 = vpop.f32.mrb[0].mxu0
      %v3111 = vadd.f32 0.0, %v3110
      %v3112 = vpop.f32.mrb[0].mxu0
      %v3113 = vpop.f32.mrb[0].mxu0
      %v3114 = vadd.f32 0.0, %v3113
      %v3115 = vpop.f32.mrb[0].mxu0
      %3116 = vmatprep.mubr.bf16.mxu0 0
      %3117 = vmatmul.mubr.bf16.gmra.mrb[0].mxu0 %v2979
      %v3118 = vpop.f32.mrb[0].mxu0
      %v3119 = vadd.f32 0.0, %v3118
      %v3120 = vpop.f32.mrb[0].mxu0
      %v3121 = vpop.f32.mrb[0].mxu0
      %v3122 = vadd.f32 0.0, %v3121
      %v3123 = vpop.f32.mrb[0].mxu0
      %3124 = vmatprep.mubr.bf16.mxu0 0
      %3125 = vmatmul.mubr.bf16.gmra.mrb[0].mxu0 %v2982
      %v3126 = vpop.f32.mrb[0].mxu0
      %v3127 = vadd.f32 0.0, %v3126
      %v3128 = vpop.f32.mrb[0].mxu0
      %v3129 = vpop.f32.mrb[0].mxu0
      %v3130 = vadd.f32 0.0, %v3129
      %v3131 = vpop.f32.mrb[0].mxu0
      %3132 = vmatprep.mubr.bf16.mxu0 0
      %3133 = vmatmul.mubr.bf16.gmra.mrb[0].mxu0 %v2985
      %v3134 = vpop.f32.mrb[0].mxu0
      %v3135 = vadd.f32 0.0, %v3134
      %v3136 = vpop.f32.mrb[0].mxu0
      %v3137 = vpop.f32.mrb[0].mxu0
      %v3138 = vadd.f32 0.0, %v3137
      %v3139 = vpop.f32.mrb[0].mxu0
      %3140 = vmatprep.mubr.bf16.mxu0 0
      %3141 = vmatmul.mubr.bf16.gmra.mrb[0].mxu0 %v2988
      %v3142 = vpop.f32.mrb[0].mxu0
      %v3143 = vadd.f32 0.0, %v3142
      %v3144 = vpop.f32.mrb[0].mxu0
      %v3145 = vpop.f32.mrb[0].mxu0
      %v3146 = vadd.f32 0.0, %v3145
      %v3147 = vpop.f32.mrb[0].mxu0
      %3148 = vmatprep.mubr.bf16.mxu0 0
      %3149 = vmatmul.mubr.bf16.gmra.mrb[0].mxu0 %v2991
      %v3150 = vpop.f32.mrb[0].mxu0
      %v3151 = vadd.f32 0.0, %v3150
      %v3152 = vpop.f32.mrb[0].mxu0
      %v3153 = vpop.f32.mrb[0].mxu0
      %v3154 = vadd.f32 0.0, %v3153
      %v3155 = vpop.f32.mrb[0].mxu0
      %3156 = vmatprep.mubr.bf16.mxu0 0
      %3157 = vmatmul.mubr.bf16.gmra.mrb[0].mxu0 %v2994
      %v3158 = vpop.f32.mrb[0].mxu0
      %v3159 = vadd.f32 0.0, %v3158
      %v3160 = vpop.f32.mrb[0].mxu0
      %v3161 = vpop.f32.mrb[0].mxu0
      %v3162 = vpop.f32.mrb[0].mxu0
      %3163 = vdwg.mxu0
      %v3164 = vadd.f32 %v2857, %v3031
      %v3165 = vadd.f32 %v2858, %v3034
      %v3166 = vadd.f32 %v2859, %v3039
      %v3167 = vadd.f32 %v2860, %v3042
      %v3168 = vadd.f32 %v2861, %v3047
      %v3169 = vadd.f32 %v2862, %v3050
      %v3170 = vadd.f32 %v2863, %v3055
      %v3171 = vadd.f32 %v2864, %v3058
      %v3172 = vadd.f32 %v2865, %v3063
      %v3173 = vadd.f32 %v2866, %v3066
      %v3174 = vadd.f32 %v2867, %v3071
      %v3175 = vadd.f32 %v2868, %v3074
      %v3176 = vadd.f32 %v2869, %v3079
      %v3177 = vadd.f32 %v2870, %v3082
      %v3178 = vadd.f32 %v2871, %v3087
      %v3179 = vadd.f32 %v2872, %v3090
      %v3180 = vadd.f32 %v2873, %v3095
      %v3181 = vadd.f32 %v2874, %v3098
      %v3182 = vadd.f32 %v2875, %v3103
      %v3183 = vadd.f32 %v2876, %v3106
      %v3184 = vadd.f32 %v2877, %v3111
      %v3185 = vadd.f32 %v2878, %v3114
      %v3186 = vadd.f32 %v2879, %v3119
      %v3187 = vadd.f32 %v2880, %v3122
      %v3188 = vadd.f32 %v2881, %v3127
      %v3189 = vadd.f32 %v2882, %v3130
      %v3190 = vadd.f32 %v2883, %v3135
      %v3191 = vadd.f32 %v2884, %v3138
      %v3192 = vadd.f32 %v2885, %v3143
      %v3193 = vadd.f32 %v2886, %v3146
      %v3194 = vadd.f32 %v2887, %v3151
      %v3195 = vadd.f32 %v2888, %v3154
      %v3196 = vadd.f32 %v2889, %v3159
      %v3197 = vld [vmem:[#allocation4] sm:$0xe]
      %v3198 = vld [vmem:[#allocation4 + $0x4] sm:$0xf]
      %v3199 = vld [vmem:[#allocation4 + $0x8] sm:$0xf]
      %v3200 = vld [vmem:[#allocation4 + $0xc] sm:$0xf]
      %v3201 = vld [vmem:[#allocation4 + $0x10] sm:$0xf]
      %v3202 = vld [vmem:[#allocation4 + $0x14] sm:$0xf]
      %v3203 = vld [vmem:[#allocation4 + $0x18] sm:$0xf]
      %v3204 = vld [vmem:[#allocation4 + $0x1c] sm:$0xf]
      %v3205 = vld [vmem:[#allocation4 + $0x20] sm:$0xf]
      %v3206 = vld [vmem:[#allocation4 + $0x24] sm:$0xf]
      %v3207 = vld [vmem:[#allocation4 + $0x28] sm:$0xf]
      %v3208 = vld [vmem:[#allocation4 + $0x2c] sm:$0xf]
      %v3209 = vld [vmem:[#allocation4 + $0x30] sm:$0xf]
      %v3210 = vld [vmem:[#allocation4 + $0x34] sm:$0xf]
      %v3211 = vld [vmem:[#allocation4 + $0x38] sm:$0xf]
      %v3212 = vld [vmem:[#allocation4 + $0x3c] sm:$0xf]
      %v3213 = vld [vmem:[#allocation4 + $0x40] sm:$0xf]
      %v3214 = vld [vmem:[#allocation4 + $0x44] sm:$0xf]
      %v3215 = vld [vmem:[#allocation4 + $0x48] sm:$0xf]
      %v3216 = vld [vmem:[#allocation4 + $0x4c] sm:$0xf]
      %v3217 = vld [vmem:[#allocation4 + $0x50] sm:$0xf]
      %v3218 = vld [vmem:[#allocation4 + $0x54] sm:$0xf]
      %v3219 = vld [vmem:[#allocation4 + $0x58] sm:$0xf]
      %v3220 = vld [vmem:[#allocation4 + $0x5c] sm:$0xf]
      %v3221 = vld [vmem:[#allocation4 + $0x60] sm:$0xf]
      %v3222 = vld [vmem:[#allocation4 + $0x64] sm:$0xf]
      %v3223 = vld [vmem:[#allocation4 + $0x68] sm:$0xf]
      %v3224 = vld [vmem:[#allocation4 + $0x6c] sm:$0xf]
      %v3225 = vld [vmem:[#allocation4 + $0x70] sm:$0xf]
      %v3226 = vld [vmem:[#allocation4 + $0x74] sm:$0xf]
      %v3227 = vld [vmem:[#allocation4 + $0x78] sm:$0xf]
      %v3228 = vld [vmem:[#allocation4 + $0x7c] sm:$0xf]
      %v3229 = vld [vmem:[#allocation4 + $0x80] sm:$0xf]
      %v3230 = vld [vmem:[#allocation4 + $0x84] sm:$0x1]
      %s3231 = scalar_lea.vmem %s4, 48
      %v3232 = vld [vmem:[%s3231] sm:$0xf]
      %v3233 = vld [vmem:[%s3231 + $0x4] sm:$0xf]
      %v3234 = vld [vmem:[%s3231 + $0x8] sm:$0xf]
      %v3235 = vld [vmem:[%s3231 + $0xc] sm:$0xf]
      %v3270 = vunpack.c.l.b16 %v3197
      %v3271 = vunpack.c.l.b16 %v3198
      %v3272 = vunpack.c.l.b16 %v3199
      %v3273 = vunpack.c.l.b16 %v3200
      %v3274 = vunpack.c.l.b16 %v3201
      %v3275 = vunpack.c.l.b16 %v3202
      %v3276 = vunpack.c.l.b16 %v3203
      %v3277 = vunpack.c.l.b16 %v3204
      %v3278 = vunpack.c.l.b16 %v3205
      %v3279 = vunpack.c.l.b16 %v3206
      %v3280 = vunpack.c.l.b16 %v3207
      %v3281 = vunpack.c.l.b16 %v3208
      %v3282 = vunpack.c.l.b16 %v3209
      %v3283 = vunpack.c.l.b16 %v3210
      %v3284 = vunpack.c.l.b16 %v3211
      %v3285 = vunpack.c.l.b16 %v3212
      %v3286 = vunpack.c.l.b16 %v3213
      %v3287 = vunpack.c.l.b16 %v3214
      %v3288 = vunpack.c.l.b16 %v3215
      %v3289 = vunpack.c.l.b16 %v3216
      %v3290 = vunpack.c.l.b16 %v3217
      %v3291 = vunpack.c.l.b16 %v3218
      %v3292 = vunpack.c.l.b16 %v3219
      %v3293 = vunpack.c.l.b16 %v3220
      %v3294 = vunpack.c.l.b16 %v3221
      %v3295 = vunpack.c.l.b16 %v3222
      %v3296 = vunpack.c.l.b16 %v3223
      %v3297 = vunpack.c.l.b16 %v3224
      %v3298 = vunpack.c.l.b16 %v3225
      %v3299 = vunpack.c.l.b16 %v3226
      %v3300 = vunpack.c.l.b16 %v3227
      %v3301 = vunpack.c.l.b16 %v3228
      %v3302 = vunpack.c.l.b16 %v3229
      %v3303 = vunpack.c.l.b16 %v3230
      %v3304 = vpack.c.b16 %v3271, %v3270
      %v3305 = vpack.c.b16 %v3273, %v3272
      %v3306 = vpack.c.b16 %v3275, %v3274
      %v3307 = vpack.c.b16 %v3277, %v3276
      %v3308 = vpack.c.b16 %v3279, %v3278
      %v3309 = vpack.c.b16 %v3281, %v3280
      %v3310 = vpack.c.b16 %v3283, %v3282
      %v3311 = vpack.c.b16 %v3285, %v3284
      %v3312 = vpack.c.b16 %v3287, %v3286
      %v3313 = vpack.c.b16 %v3289, %v3288
      %v3314 = vpack.c.b16 %v3291, %v3290
      %v3315 = vpack.c.b16 %v3293, %v3292
      %v3316 = vpack.c.b16 %v3295, %v3294
      %v3317 = vpack.c.b16 %v3297, %v3296
      %v3318 = vpack.c.b16 %v3299, %v3298
      %v3319 = vpack.c.b16 %v3301, %v3300
      %v3320 = vpack.c.b16 %v3303, %v3302
      %vm3321 = vsmask.f32 6400
      %v3323 = vshrl.u32 %v3304, 16
      %v3325 = vrot.slane %v3323, 1
      %v3326 = vshll.u32 %v3304, 16
      %v3328 = vrot.slane %v3326, 2
      %v3329 = vor.u32 %v3325, %v3328
      %v3331 = vshrl.u32 %v3305, 16
      %v3333 = vrot.slane %v3331, 1
      %v3334 = vshll.u32 %v3305, 16
      %v3336 = vrot.slane %v3334, 2
      %v3337 = vor.u32 %v3333, %v3336
      %v3338 = vsel %vm3321, %v3329, %v3337
      %v3340 = vshrl.u32 %v3306, 16
      %v3342 = vrot.slane %v3340, 1
      %v3343 = vshll.u32 %v3306, 16
      %v3345 = vrot.slane %v3343, 2
      %v3346 = vor.u32 %v3342, %v3345
      %v3347 = vsel %vm3321, %v3337, %v3346
      %v3349 = vshrl.u32 %v3307, 16
      %v3351 = vrot.slane %v3349, 1
      %v3352 = vshll.u32 %v3307, 16
      %v3354 = vrot.slane %v3352, 2
      %v3355 = vor.u32 %v3351, %v3354
      %v3356 = vsel %vm3321, %v3346, %v3355
      %v3358 = vshrl.u32 %v3308, 16
      %v3360 = vrot.slane %v3358, 1
      %v3361 = vshll.u32 %v3308, 16
      %v3363 = vrot.slane %v3361, 2
      %v3364 = vor.u32 %v3360, %v3363
      %v3365 = vsel %vm3321, %v3355, %v3364
      %v3367 = vshrl.u32 %v3309, 16
      %v3369 = vrot.slane %v3367, 1
      %v3370 = vshll.u32 %v3309, 16
      %v3372 = vrot.slane %v3370, 2
      %v3373 = vor.u32 %v3369, %v3372
      %v3374 = vsel %vm3321, %v3364, %v3373
      %v3376 = vshrl.u32 %v3310, 16
      %v3378 = vrot.slane %v3376, 1
      %v3379 = vshll.u32 %v3310, 16
      %v3381 = vrot.slane %v3379, 2
      %v3382 = vor.u32 %v3378, %v3381
      %v3383 = vsel %vm3321, %v3373, %v3382
      %v3385 = vshrl.u32 %v3311, 16
      %v3387 = vrot.slane %v3385, 1
      %v3388 = vshll.u32 %v3311, 16
      %v3390 = vrot.slane %v3388, 2
      %v3391 = vor.u32 %v3387, %v3390
      %v3392 = vsel %vm3321, %v3382, %v3391
      %v3394 = vshrl.u32 %v3312, 16
      %v3396 = vrot.slane %v3394, 1
      %v3397 = vshll.u32 %v3312, 16
      %v3399 = vrot.slane %v3397, 2
      %v3400 = vor.u32 %v3396, %v3399
      %v3401 = vsel %vm3321, %v3391, %v3400
      %v3403 = vshrl.u32 %v3313, 16
      %v3405 = vrot.slane %v3403, 1
      %v3406 = vshll.u32 %v3313, 16
      %v3408 = vrot.slane %v3406, 2
      %v3409 = vor.u32 %v3405, %v3408
      %v3410 = vsel %vm3321, %v3400, %v3409
      %v3412 = vshrl.u32 %v3314, 16
      %v3414 = vrot.slane %v3412, 1
      %v3415 = vshll.u32 %v3314, 16
      %v3417 = vrot.slane %v3415, 2
      %v3418 = vor.u32 %v3414, %v3417
      %v3419 = vsel %vm3321, %v3409, %v3418
      %v3421 = vshrl.u32 %v3315, 16
      %v3423 = vrot.slane %v3421, 1
      %v3424 = vshll.u32 %v3315, 16
      %v3426 = vrot.slane %v3424, 2
      %v3427 = vor.u32 %v3423, %v3426
      %v3428 = vsel %vm3321, %v3418, %v3427
      %v3430 = vshrl.u32 %v3316, 16
      %v3432 = vrot.slane %v3430, 1
      %v3433 = vshll.u32 %v3316, 16
      %v3435 = vrot.slane %v3433, 2
      %v3436 = vor.u32 %v3432, %v3435
      %v3437 = vsel %vm3321, %v3427, %v3436
      %v3439 = vshrl.u32 %v3317, 16
      %v3441 = vrot.slane %v3439, 1
      %v3442 = vshll.u32 %v3317, 16
      %v3444 = vrot.slane %v3442, 2
      %v3445 = vor.u32 %v3441, %v3444
      %v3446 = vsel %vm3321, %v3436, %v3445
      %v3448 = vshrl.u32 %v3318, 16
      %v3450 = vrot.slane %v3448, 1
      %v3451 = vshll.u32 %v3318, 16
      %v3453 = vrot.slane %v3451, 2
      %v3454 = vor.u32 %v3450, %v3453
      %v3455 = vsel %vm3321, %v3445, %v3454
      %v3457 = vshrl.u32 %v3319, 16
      %v3459 = vrot.slane %v3457, 1
      %v3460 = vshll.u32 %v3319, 16
      %v3462 = vrot.slane %v3460, 2
      %v3463 = vor.u32 %v3459, %v3462
      %v3464 = vsel %vm3321, %v3454, %v3463
      %v3466 = vshrl.u32 %v3320, 16
      %v3468 = vrot.slane %v3466, 1
      %v3469 = vshll.u32 %v3320, 16
      %v3471 = vrot.slane %v3469, 2
      %v3472 = vor.u32 %v3468, %v3471
      %v3473 = vsel %vm3321, %v3463, %v3472
      %v3478 = vunpack.c.l.b16 %v3232
      %v3479 = vunpack.c.l.b16 %v3233
      %v3480 = vunpack.c.l.b16 %v3234
      %v3481 = vunpack.c.l.b16 %v3235
      %v3482 = vpack.c.b16 %v3479, %v3478
      %v3483 = vpack.c.b16 %v3481, %v3480
      %v3487 = vsel %vm859, %v3338, 0
      %v3490 = vsel %vm859, %v3347, 0
      %v3493 = vsel %vm859, %v3356, 0
      %v3496 = vsel %vm859, %v3365, 0
      %v3499 = vsel %vm859, %v3374, 0
      %v3502 = vsel %vm859, %v3383, 0
      %v3505 = vsel %vm859, %v3392, 0
      %v3508 = vsel %vm859, %v3401, 0
      %v3511 = vsel %vm859, %v3410, 0
      %v3514 = vsel %vm859, %v3419, 0
      %v3517 = vsel %vm859, %v3428, 0
      %v3520 = vsel %vm859, %v3437, 0
      %v3523 = vsel %vm859, %v3446, 0
      %v3526 = vsel %vm859, %v3455, 0
      %v3529 = vsel %vm859, %v3464, 0
      %v3532 = vsel %vm859, %v3473, 0
      %v3535 = vsel %vm859, %v3472, 0
      %3537 = vmatprep.subr.bf16.mxu0 0
      %3538 = vmatpush1.bf16.msra.mxu0 %v3482
      %3539 = vmatprep.subr.bf16.mxu0 0
      %3540 = vmatpush1.bf16.msra.mxu0 %v3483
      %3541 = vmatprep.subr.bf16.mxu0 0
      %3542 = vmatpush1.bf16.msra.mxu0 0
      %3543 = vmatprep.subr.bf16.mxu0 0
      %3544 = vmatpush1.bf16.msra.mxu0 0
      %3545 = vmatprep.subr.bf16.mxu0 0
      %3546 = vmatpush1.bf16.msra.mxu0 0
      %3547 = vmatprep.subr.bf16.mxu0 0
      %3548 = vmatpush1.bf16.msra.mxu0 0
      %3549 = vmatprep.subr.bf16.mxu0 0
      %3550 = vmatpush1.bf16.msra.mxu0 0
      %3551 = vmatprep.subr.bf16.mxu0 0
      %3552 = vmatpush1.bf16.msra.mxu0 0
      %3553 = vmatprep.subr.bf16.mxu0 0
      %3554 = vmatpush1.bf16.msra.mxu0 0
      %3555 = vmatprep.subr.bf16.mxu0 0
      %3556 = vmatpush1.bf16.msra.mxu0 0
      %3557 = vmatprep.subr.bf16.mxu0 0
      %3558 = vmatpush1.bf16.msra.mxu0 0
      %3559 = vmatprep.subr.bf16.mxu0 0
      %3560 = vmatpush1.bf16.msra.mxu0 0
      %3561 = vmatprep.subr.bf16.mxu0 0
      %3562 = vmatpush1.bf16.msra.mxu0 0
      %3563 = vmatprep.subr.bf16.mxu0 0
      %3564 = vmatpush1.bf16.msra.mxu0 0
      %3565 = vmatprep.subr.bf16.mxu0 0
      %3566 = vmatpush1.bf16.msra.mxu0 0
      %3567 = vmatprep.subr.bf16.mxu0 0
      %3568 = vmatpush1.bf16.msra.mxu0 0
      %3569 = vmatprep.mubr.bf16.mxu0 0
      %3570 = vmatmul.mubr.bf16.gmra.mrb[0].mxu0 %v3487
      %v3571 = vpop.f32.mrb[0].mxu0
      %v3572 = vadd.f32 0.0, %v3571
      %v3573 = vpop.f32.mrb[0].mxu0
      %v3574 = vpop.f32.mrb[0].mxu0
      %v3575 = vadd.f32 0.0, %v3574
      %v3576 = vpop.f32.mrb[0].mxu0
      %3577 = vmatprep.mubr.bf16.mxu0 0
      %3578 = vmatmul.mubr.bf16.gmra.mrb[0].mxu0 %v3490
      %v3579 = vpop.f32.mrb[0].mxu0
      %v3580 = vadd.f32 0.0, %v3579
      %v3581 = vpop.f32.mrb[0].mxu0
      %v3582 = vpop.f32.mrb[0].mxu0
      %v3583 = vadd.f32 0.0, %v3582
      %v3584 = vpop.f32.mrb[0].mxu0
      %3585 = vmatprep.mubr.bf16.mxu0 0
      %3586 = vmatmul.mubr.bf16.gmra.mrb[0].mxu0 %v3493
      %v3587 = vpop.f32.mrb[0].mxu0
      %v3588 = vadd.f32 0.0, %v3587
      %v3589 = vpop.f32.mrb[0].mxu0
      %v3590 = vpop.f32.mrb[0].mxu0
      %v3591 = vadd.f32 0.0, %v3590
      %v3592 = vpop.f32.mrb[0].mxu0
      %3593 = vmatprep.mubr.bf16.mxu0 0
      %3594 = vmatmul.mubr.bf16.gmra.mrb[0].mxu0 %v3496
      %v3595 = vpop.f32.mrb[0].mxu0
      %v3596 = vadd.f32 0.0, %v3595
      %v3597 = vpop.f32.mrb[0].mxu0
      %v3598 = vpop.f32.mrb[0].mxu0
      %v3599 = vadd.f32 0.0, %v3598
      %v3600 = vpop.f32.mrb[0].mxu0
      %3601 = vmatprep.mubr.bf16.mxu0 0
      %3602 = vmatmul.mubr.bf16.gmra.mrb[0].mxu0 %v3499
      %v3603 = vpop.f32.mrb[0].mxu0
      %v3604 = vadd.f32 0.0, %v3603
      %v3605 = vpop.f32.mrb[0].mxu0
      %v3606 = vpop.f32.mrb[0].mxu0
      %v3607 = vadd.f32 0.0, %v3606
      %v3608 = vpop.f32.mrb[0].mxu0
      %3609 = vmatprep.mubr.bf16.mxu0 0
      %3610 = vmatmul.mubr.bf16.gmra.mrb[0].mxu0 %v3502
      %v3611 = vpop.f32.mrb[0].mxu0
      %v3612 = vadd.f32 0.0, %v3611
      %v3613 = vpop.f32.mrb[0].mxu0
      %v3614 = vpop.f32.mrb[0].mxu0
      %v3615 = vadd.f32 0.0, %v3614
      %v3616 = vpop.f32.mrb[0].mxu0
      %3617 = vmatprep.mubr.bf16.mxu0 0
      %3618 = vmatmul.mubr.bf16.gmra.mrb[0].mxu0 %v3505
      %v3619 = vpop.f32.mrb[0].mxu0
      %v3620 = vadd.f32 0.0, %v3619
      %v3621 = vpop.f32.mrb[0].mxu0
      %v3622 = vpop.f32.mrb[0].mxu0
      %v3623 = vadd.f32 0.0, %v3622
      %v3624 = vpop.f32.mrb[0].mxu0
      %3625 = vmatprep.mubr.bf16.mxu0 0
      %3626 = vmatmul.mubr.bf16.gmra.mrb[0].mxu0 %v3508
      %v3627 = vpop.f32.mrb[0].mxu0
      %v3628 = vadd.f32 0.0, %v3627
      %v3629 = vpop.f32.mrb[0].mxu0
      %v3630 = vpop.f32.mrb[0].mxu0
      %v3631 = vadd.f32 0.0, %v3630
      %v3632 = vpop.f32.mrb[0].mxu0
      %3633 = vmatprep.mubr.bf16.mxu0 0
      %3634 = vmatmul.mubr.bf16.gmra.mrb[0].mxu0 %v3511
      %v3635 = vpop.f32.mrb[0].mxu0
      %v3636 = vadd.f32 0.0, %v3635
      %v3637 = vpop.f32.mrb[0].mxu0
      %v3638 = vpop.f32.mrb[0].mxu0
      %v3639 = vadd.f32 0.0, %v3638
      %v3640 = vpop.f32.mrb[0].mxu0
      %3641 = vmatprep.mubr.bf16.mxu0 0
      %3642 = vmatmul.mubr.bf16.gmra.mrb[0].mxu0 %v3514
      %v3643 = vpop.f32.mrb[0].mxu0
      %v3644 = vadd.f32 0.0, %v3643
      %v3645 = vpop.f32.mrb[0].mxu0
      %v3646 = vpop.f32.mrb[0].mxu0
      %v3647 = vadd.f32 0.0, %v3646
      %v3648 = vpop.f32.mrb[0].mxu0
      %3649 = vmatprep.mubr.bf16.mxu0 0
      %3650 = vmatmul.mubr.bf16.gmra.mrb[0].mxu0 %v3517
      %v3651 = vpop.f32.mrb[0].mxu0
      %v3652 = vadd.f32 0.0, %v3651
      %v3653 = vpop.f32.mrb[0].mxu0
      %v3654 = vpop.f32.mrb[0].mxu0
      %v3655 = vadd.f32 0.0, %v3654
      %v3656 = vpop.f32.mrb[0].mxu0
      %3657 = vmatprep.mubr.bf16.mxu0 0
      %3658 = vmatmul.mubr.bf16.gmra.mrb[0].mxu0 %v3520
      %v3659 = vpop.f32.mrb[0].mxu0
      %v3660 = vadd.f32 0.0, %v3659
      %v3661 = vpop.f32.mrb[0].mxu0
      %v3662 = vpop.f32.mrb[0].mxu0
      %v3663 = vadd.f32 0.0, %v3662
      %v3664 = vpop.f32.mrb[0].mxu0
      %3665 = vmatprep.mubr.bf16.mxu0 0
      %3666 = vmatmul.mubr.bf16.gmra.mrb[0].mxu0 %v3523
      %v3667 = vpop.f32.mrb[0].mxu0
      %v3668 = vadd.f32 0.0, %v3667
      %v3669 = vpop.f32.mrb[0].mxu0
      %v3670 = vpop.f32.mrb[0].mxu0
      %v3671 = vadd.f32 0.0, %v3670
      %v3672 = vpop.f32.mrb[0].mxu0
      %3673 = vmatprep.mubr.bf16.mxu0 0
      %3674 = vmatmul.mubr.bf16.gmra.mrb[0].mxu0 %v3526
      %v3675 = vpop.f32.mrb[0].mxu0
      %v3676 = vadd.f32 0.0, %v3675
      %v3677 = vpop.f32.mrb[0].mxu0
      %v3678 = vpop.f32.mrb[0].mxu0
      %v3679 = vadd.f32 0.0, %v3678
      %v3680 = vpop.f32.mrb[0].mxu0
      %3681 = vmatprep.mubr.bf16.mxu0 0
      %3682 = vmatmul.mubr.bf16.gmra.mrb[0].mxu0 %v3529
      %v3683 = vpop.f32.mrb[0].mxu0
      %v3684 = vadd.f32 0.0, %v3683
      %v3685 = vpop.f32.mrb[0].mxu0
      %v3686 = vpop.f32.mrb[0].mxu0
      %v3687 = vadd.f32 0.0, %v3686
      %v3688 = vpop.f32.mrb[0].mxu0
      %3689 = vmatprep.mubr.bf16.mxu0 0
      %3690 = vmatmul.mubr.bf16.gmra.mrb[0].mxu0 %v3532
      %v3691 = vpop.f32.mrb[0].mxu0
      %v3692 = vadd.f32 0.0, %v3691
      %v3693 = vpop.f32.mrb[0].mxu0
      %v3694 = vpop.f32.mrb[0].mxu0
      %v3695 = vadd.f32 0.0, %v3694
      %v3696 = vpop.f32.mrb[0].mxu0
      %3697 = vmatprep.mubr.bf16.mxu0 0
      %3698 = vmatmul.mubr.bf16.gmra.mrb[0].mxu0 %v3535
      %v3699 = vpop.f32.mrb[0].mxu0
      %v3700 = vadd.f32 0.0, %v3699
      %v3701 = vpop.f32.mrb[0].mxu0
      %v3702 = vpop.f32.mrb[0].mxu0
      %v3703 = vpop.f32.mrb[0].mxu0
      %3704 = vdwg.mxu0
      %v3705 = vadd.f32 %v3164, %v3572
      %v3706 = vadd.f32 %v3165, %v3575
      %v3707 = vadd.f32 %v3166, %v3580
      %v3708 = vadd.f32 %v3167, %v3583
      %v3709 = vadd.f32 %v3168, %v3588
      %v3710 = vadd.f32 %v3169, %v3591
      %v3711 = vadd.f32 %v3170, %v3596
      %v3712 = vadd.f32 %v3171, %v3599
      %v3713 = vadd.f32 %v3172, %v3604
      %v3714 = vadd.f32 %v3173, %v3607
      %v3715 = vadd.f32 %v3174, %v3612
      %v3716 = vadd.f32 %v3175, %v3615
      %v3717 = vadd.f32 %v3176, %v3620
      %v3718 = vadd.f32 %v3177, %v3623
      %v3719 = vadd.f32 %v3178, %v3628
      %v3720 = vadd.f32 %v3179, %v3631
      %v3721 = vadd.f32 %v3180, %v3636
      %v3722 = vadd.f32 %v3181, %v3639
      %v3723 = vadd.f32 %v3182, %v3644
      %v3724 = vadd.f32 %v3183, %v3647
      %v3725 = vadd.f32 %v3184, %v3652
      %v3726 = vadd.f32 %v3185, %v3655
      %v3727 = vadd.f32 %v3186, %v3660
      %v3728 = vadd.f32 %v3187, %v3663
      %v3729 = vadd.f32 %v3188, %v3668
      %v3730 = vadd.f32 %v3189, %v3671
      %v3731 = vadd.f32 %v3190, %v3676
      %v3732 = vadd.f32 %v3191, %v3679
      %v3733 = vadd.f32 %v3192, %v3684
      %v3734 = vadd.f32 %v3193, %v3687
      %v3735 = vadd.f32 %v3194, %v3692
      %v3736 = vadd.f32 %v3195, %v3695
      %v3737 = vadd.f32 %v3196, %v3700
      %v3738 = vld [vmem:[#allocation4] sm:$0xc]
      %s3739 = scalar_lea.vmem %s4, 64
      %v3740 = vld [vmem:[%s3739] sm:$0xf]
      %v3741 = vld [vmem:[%s3739 + $0x4] sm:$0xf]
      %v3742 = vld [vmem:[%s3739 + $0x8] sm:$0xf]
      %v3743 = vld [vmem:[%s3739 + $0xc] sm:$0xf]
      %v3745 = vunpack.c.l.b16 %v3738
      %v3746 = vpack.c.b16 %v3271, %v3745
      %vm3747 = vcmask 1045504
      %v3748 = vrot.slane %v3746, 2
      %v3749 = vrot.slane %v3305, 2
      %v3750 = vsel %vm3747, %v3748, %v3749
      %v3751 = vrot.slane %v3306, 2
      %v3752 = vsel %vm3747, %v3749, %v3751
      %v3753 = vrot.slane %v3307, 2
      %v3754 = vsel %vm3747, %v3751, %v3753
      %v3755 = vrot.slane %v3308, 2
      %v3756 = vsel %vm3747, %v3753, %v3755
      %v3757 = vrot.slane %v3309, 2
      %v3758 = vsel %vm3747, %v3755, %v3757
      %v3759 = vrot.slane %v3310, 2
      %v3760 = vsel %vm3747, %v3757, %v3759
      %v3761 = vrot.slane %v3311, 2
      %v3762 = vsel %vm3747, %v3759, %v3761
      %v3763 = vrot.slane %v3312, 2
      %v3764 = vsel %vm3747, %v3761, %v3763
      %v3765 = vrot.slane %v3313, 2
      %v3766 = vsel %vm3747, %v3763, %v3765
      %v3767 = vrot.slane %v3314, 2
      %v3768 = vsel %vm3747, %v3765, %v3767
      %v3769 = vrot.slane %v3315, 2
      %v3770 = vsel %vm3747, %v3767, %v3769
      %v3771 = vrot.slane %v3316, 2
      %v3772 = vsel %vm3747, %v3769, %v3771
      %v3773 = vrot.slane %v3317, 2
      %v3774 = vsel %vm3747, %v3771, %v3773
      %v3775 = vrot.slane %v3318, 2
      %v3776 = vsel %vm3747, %v3773, %v3775
      %v3777 = vrot.slane %v3319, 2
      %v3778 = vsel %vm3747, %v3775, %v3777
      %v3779 = vrot.slane %v3320, 2
      %v3780 = vsel %vm3747, %v3777, %v3779
      %v3785 = vunpack.c.l.b16 %v3740
      %v3786 = vunpack.c.l.b16 %v3741
      %v3787 = vunpack.c.l.b16 %v3742
      %v3788 = vunpack.c.l.b16 %v3743
      %v3789 = vpack.c.b16 %v3786, %v3785
      %v3790 = vpack.c.b16 %v3788, %v3787
      %v3794 = vsel %vm859, %v3750, 0
      %v3797 = vsel %vm859, %v3752, 0
      %v3800 = vsel %vm859, %v3754, 0
      %v3803 = vsel %vm859, %v3756, 0
      %v3806 = vsel %vm859, %v3758, 0
      %v3809 = vsel %vm859, %v3760, 0
      %v3812 = vsel %vm859, %v3762, 0
      %v3815 = vsel %vm859, %v3764, 0
      %v3818 = vsel %vm859, %v3766, 0
      %v3821 = vsel %vm859, %v3768, 0
      %v3824 = vsel %vm859, %v3770, 0
      %v3827 = vsel %vm859, %v3772, 0
      %v3830 = vsel %vm859, %v3774, 0
      %v3833 = vsel %vm859, %v3776, 0
      %v3836 = vsel %vm859, %v3778, 0
      %v3839 = vsel %vm859, %v3780, 0
      %v3842 = vsel %vm859, %v3779, 0
      %3844 = vmatprep.subr.bf16.mxu0 0
      %3845 = vmatpush1.bf16.msra.mxu0 %v3789
      %3846 = vmatprep.subr.bf16.mxu0 0
      %3847 = vmatpush1.bf16.msra.mxu0 %v3790
      %3848 = vmatprep.subr.bf16.mxu0 0
      %3849 = vmatpush1.bf16.msra.mxu0 0
      %3850 = vmatprep.subr.bf16.mxu0 0
      %3851 = vmatpush1.bf16.msra.mxu0 0
      %3852 = vmatprep.subr.bf16.mxu0 0
      %3853 = vmatpush1.bf16.msra.mxu0 0
      %3854 = vmatprep.subr.bf16.mxu0 0
      %3855 = vmatpush1.bf16.msra.mxu0 0
      %3856 = vmatprep.subr.bf16.mxu0 0
      %3857 = vmatpush1.bf16.msra.mxu0 0
      %3858 = vmatprep.subr.bf16.mxu0 0
      %3859 = vmatpush1.bf16.msra.mxu0 0
      %3860 = vmatprep.subr.bf16.mxu0 0
      %3861 = vmatpush1.bf16.msra.mxu0 0
      %3862 = vmatprep.subr.bf16.mxu0 0
      %3863 = vmatpush1.bf16.msra.mxu0 0
      %3864 = vmatprep.subr.bf16.mxu0 0
      %3865 = vmatpush1.bf16.msra.mxu0 0
      %3866 = vmatprep.subr.bf16.mxu0 0
      %3867 = vmatpush1.bf16.msra.mxu0 0
      %3868 = vmatprep.subr.bf16.mxu0 0
      %3869 = vmatpush1.bf16.msra.mxu0 0
      %3870 = vmatprep.subr.bf16.mxu0 0
      %3871 = vmatpush1.bf16.msra.mxu0 0
      %3872 = vmatprep.subr.bf16.mxu0 0
      %3873 = vmatpush1.bf16.msra.mxu0 0
      %3874 = vmatprep.subr.bf16.mxu0 0
      %3875 = vmatpush1.bf16.msra.mxu0 0
      %3876 = vmatprep.mubr.bf16.mxu0 0
      %3877 = vmatmul.mubr.bf16.gmra.mrb[0].mxu0 %v3794
      %v3878 = vpop.f32.mrb[0].mxu0
      %v3879 = vadd.f32 0.0, %v3878
      %v3880 = vpop.f32.mrb[0].mxu0
      %v3881 = vpop.f32.mrb[0].mxu0
      %v3882 = vadd.f32 0.0, %v3881
      %v3883 = vpop.f32.mrb[0].mxu0
      %3884 = vmatprep.mubr.bf16.mxu0 0
      %3885 = vmatmul.mubr.bf16.gmra.mrb[0].mxu0 %v3797
      %v3886 = vpop.f32.mrb[0].mxu0
      %v3887 = vadd.f32 0.0, %v3886
      %v3888 = vpop.f32.mrb[0].mxu0
      %v3889 = vpop.f32.mrb[0].mxu0
      %v3890 = vadd.f32 0.0, %v3889
      %v3891 = vpop.f32.mrb[0].mxu0
      %3892 = vmatprep.mubr.bf16.mxu0 0
      %3893 = vmatmul.mubr.bf16.gmra.mrb[0].mxu0 %v3800
      %v3894 = vpop.f32.mrb[0].mxu0
      %v3895 = vadd.f32 0.0, %v3894
      %v3896 = vpop.f32.mrb[0].mxu0
      %v3897 = vpop.f32.mrb[0].mxu0
      %v3898 = vadd.f32 0.0, %v3897
      %v3899 = vpop.f32.mrb[0].mxu0
      %3900 = vmatprep.mubr.bf16.mxu0 0
      %3901 = vmatmul.mubr.bf16.gmra.mrb[0].mxu0 %v3803
      %v3902 = vpop.f32.mrb[0].mxu0
      %v3903 = vadd.f32 0.0, %v3902
      %v3904 = vpop.f32.mrb[0].mxu0
      %v3905 = vpop.f32.mrb[0].mxu0
      %v3906 = vadd.f32 0.0, %v3905
      %v3907 = vpop.f32.mrb[0].mxu0
      %3908 = vmatprep.mubr.bf16.mxu0 0
      %3909 = vmatmul.mubr.bf16.gmra.mrb[0].mxu0 %v3806
      %v3910 = vpop.f32.mrb[0].mxu0
      %v3911 = vadd.f32 0.0, %v3910
      %v3912 = vpop.f32.mrb[0].mxu0
      %v3913 = vpop.f32.mrb[0].mxu0
      %v3914 = vadd.f32 0.0, %v3913
      %v3915 = vpop.f32.mrb[0].mxu0
      %3916 = vmatprep.mubr.bf16.mxu0 0
      %3917 = vmatmul.mubr.bf16.gmra.mrb[0].mxu0 %v3809
      %v3918 = vpop.f32.mrb[0].mxu0
      %v3919 = vadd.f32 0.0, %v3918
      %v3920 = vpop.f32.mrb[0].mxu0
      %v3921 = vpop.f32.mrb[0].mxu0
      %v3922 = vadd.f32 0.0, %v3921
      %v3923 = vpop.f32.mrb[0].mxu0
      %3924 = vmatprep.mubr.bf16.mxu0 0
      %3925 = vmatmul.mubr.bf16.gmra.mrb[0].mxu0 %v3812
      %v3926 = vpop.f32.mrb[0].mxu0
      %v3927 = vadd.f32 0.0, %v3926
      %v3928 = vpop.f32.mrb[0].mxu0
      %v3929 = vpop.f32.mrb[0].mxu0
      %v3930 = vadd.f32 0.0, %v3929
      %v3931 = vpop.f32.mrb[0].mxu0
      %3932 = vmatprep.mubr.bf16.mxu0 0
      %3933 = vmatmul.mubr.bf16.gmra.mrb[0].mxu0 %v3815
      %v3934 = vpop.f32.mrb[0].mxu0
      %v3935 = vadd.f32 0.0, %v3934
      %v3936 = vpop.f32.mrb[0].mxu0
      %v3937 = vpop.f32.mrb[0].mxu0
      %v3938 = vadd.f32 0.0, %v3937
      %v3939 = vpop.f32.mrb[0].mxu0
      %3940 = vmatprep.mubr.bf16.mxu0 0
      %3941 = vmatmul.mubr.bf16.gmra.mrb[0].mxu0 %v3818
      %v3942 = vpop.f32.mrb[0].mxu0
      %v3943 = vadd.f32 0.0, %v3942
      %v3944 = vpop.f32.mrb[0].mxu0
      %v3945 = vpop.f32.mrb[0].mxu0
      %v3946 = vadd.f32 0.0, %v3945
      %v3947 = vpop.f32.mrb[0].mxu0
      %3948 = vmatprep.mubr.bf16.mxu0 0
      %3949 = vmatmul.mubr.bf16.gmra.mrb[0].mxu0 %v3821
      %v3950 = vpop.f32.mrb[0].mxu0
      %v3951 = vadd.f32 0.0, %v3950
      %v3952 = vpop.f32.mrb[0].mxu0
      %v3953 = vpop.f32.mrb[0].mxu0
      %v3954 = vadd.f32 0.0, %v3953
      %v3955 = vpop.f32.mrb[0].mxu0
      %3956 = vmatprep.mubr.bf16.mxu0 0
      %3957 = vmatmul.mubr.bf16.gmra.mrb[0].mxu0 %v3824
      %v3958 = vpop.f32.mrb[0].mxu0
      %v3959 = vadd.f32 0.0, %v3958
      %v3960 = vpop.f32.mrb[0].mxu0
      %v3961 = vpop.f32.mrb[0].mxu0
      %v3962 = vadd.f32 0.0, %v3961
      %v3963 = vpop.f32.mrb[0].mxu0
      %3964 = vmatprep.mubr.bf16.mxu0 0
      %3965 = vmatmul.mubr.bf16.gmra.mrb[0].mxu0 %v3827
      %v3966 = vpop.f32.mrb[0].mxu0
      %v3967 = vadd.f32 0.0, %v3966
      %v3968 = vpop.f32.mrb[0].mxu0
      %v3969 = vpop.f32.mrb[0].mxu0
      %v3970 = vadd.f32 0.0, %v3969
      %v3971 = vpop.f32.mrb[0].mxu0
      %3972 = vmatprep.mubr.bf16.mxu0 0
      %3973 = vmatmul.mubr.bf16.gmra.mrb[0].mxu0 %v3830
      %v3974 = vpop.f32.mrb[0].mxu0
      %v3975 = vadd.f32 0.0, %v3974
      %v3976 = vpop.f32.mrb[0].mxu0
      %v3977 = vpop.f32.mrb[0].mxu0
      %v3978 = vadd.f32 0.0, %v3977
      %v3979 = vpop.f32.mrb[0].mxu0
      %3980 = vmatprep.mubr.bf16.mxu0 0
      %3981 = vmatmul.mubr.bf16.gmra.mrb[0].mxu0 %v3833
      %v3982 = vpop.f32.mrb[0].mxu0
      %v3983 = vadd.f32 0.0, %v3982
      %v3984 = vpop.f32.mrb[0].mxu0
      %v3985 = vpop.f32.mrb[0].mxu0
      %v3986 = vadd.f32 0.0, %v3985
      %v3987 = vpop.f32.mrb[0].mxu0
      %3988 = vmatprep.mubr.bf16.mxu0 0
      %3989 = vmatmul.mubr.bf16.gmra.mrb[0].mxu0 %v3836
      %v3990 = vpop.f32.mrb[0].mxu0
      %v3991 = vadd.f32 0.0, %v3990
      %v3992 = vpop.f32.mrb[0].mxu0
      %v3993 = vpop.f32.mrb[0].mxu0
      %v3994 = vadd.f32 0.0, %v3993
      %v3995 = vpop.f32.mrb[0].mxu0
      %3996 = vmatprep.mubr.bf16.mxu0 0
      %3997 = vmatmul.mubr.bf16.gmra.mrb[0].mxu0 %v3839
      %v3998 = vpop.f32.mrb[0].mxu0
      %v3999 = vadd.f32 0.0, %v3998
      %v4000 = vpop.f32.mrb[0].mxu0
      %v4001 = vpop.f32.mrb[0].mxu0
      %v4002 = vadd.f32 0.0, %v4001
      %v4003 = vpop.f32.mrb[0].mxu0
      %4004 = vmatprep.mubr.bf16.mxu0 0
      %4005 = vmatmul.mubr.bf16.gmra.mrb[0].mxu0 %v3842
      %v4006 = vpop.f32.mrb[0].mxu0
      %v4007 = vadd.f32 0.0, %v4006
      %v4008 = vpop.f32.mrb[0].mxu0
      %v4009 = vpop.f32.mrb[0].mxu0
      %v4010 = vpop.f32.mrb[0].mxu0
      %4011 = vdwg.mxu0
      %v4012 = vadd.f32 %v3705, %v3879
      %v4013 = vadd.f32 %v3706, %v3882
      %v4014 = vadd.f32 %v3707, %v3887
      %v4015 = vadd.f32 %v3708, %v3890
      %v4016 = vadd.f32 %v3709, %v3895
      %v4017 = vadd.f32 %v3710, %v3898
      %v4018 = vadd.f32 %v3711, %v3903
      %v4019 = vadd.f32 %v3712, %v3906
      %v4020 = vadd.f32 %v3713, %v3911
      %v4021 = vadd.f32 %v3714, %v3914
      %v4022 = vadd.f32 %v3715, %v3919
      %v4023 = vadd.f32 %v3716, %v3922
      %v4024 = vadd.f32 %v3717, %v3927
      %v4025 = vadd.f32 %v3718, %v3930
      %v4026 = vadd.f32 %v3719, %v3935
      %v4027 = vadd.f32 %v3720, %v3938
      %v4028 = vadd.f32 %v3721, %v3943
      %v4029 = vadd.f32 %v3722, %v3946
      %v4030 = vadd.f32 %v3723, %v3951
      %v4031 = vadd.f32 %v3724, %v3954
      %v4032 = vadd.f32 %v3725, %v3959
      %v4033 = vadd.f32 %v3726, %v3962
      %v4034 = vadd.f32 %v3727, %v3967
      %v4035 = vadd.f32 %v3728, %v3970
      %v4036 = vadd.f32 %v3729, %v3975
      %v4037 = vadd.f32 %v3730, %v3978
      %v4038 = vadd.f32 %v3731, %v3983
      %v4039 = vadd.f32 %v3732, %v3986
      %v4040 = vadd.f32 %v3733, %v3991
      %v4041 = vadd.f32 %v3734, %v3994
      %v4042 = vadd.f32 %v3735, %v3999
      %v4043 = vadd.f32 %v3736, %v4002
      %v4044 = vadd.f32 %v3737, %v4007
      %v4045 = vld [vmem:[#allocation4 + $0xc] sm:$0xc]
      %v4046 = vld [vmem:[#allocation4 + $0x10] sm:$0xf]
      %v4047 = vld [vmem:[#allocation4 + $0x14] sm:$0xf]
      %v4048 = vld [vmem:[#allocation4 + $0x18] sm:$0xf]
      %v4049 = vld [vmem:[#allocation4 + $0x1c] sm:$0xf]
      %v4050 = vld [vmem:[#allocation4 + $0x20] sm:$0xf]
      %v4051 = vld [vmem:[#allocation4 + $0x24] sm:$0xf]
      %v4052 = vld [vmem:[#allocation4 + $0x28] sm:$0xf]
      %v4053 = vld [vmem:[#allocation4 + $0x2c] sm:$0xf]
      %v4054 = vld [vmem:[#allocation4 + $0x30] sm:$0xf]
      %v4055 = vld [vmem:[#allocation4 + $0x34] sm:$0xf]
      %v4056 = vld [vmem:[#allocation4 + $0x38] sm:$0xf]
      %v4057 = vld [vmem:[#allocation4 + $0x3c] sm:$0xf]
      %v4058 = vld [vmem:[#allocation4 + $0x40] sm:$0xf]
      %v4059 = vld [vmem:[#allocation4 + $0x44] sm:$0xf]
      %v4060 = vld [vmem:[#allocation4 + $0x48] sm:$0xf]
      %v4061 = vld [vmem:[#allocation4 + $0x4c] sm:$0xf]
      %v4062 = vld [vmem:[#allocation4 + $0x50] sm:$0xf]
      %v4063 = vld [vmem:[#allocation4 + $0x54] sm:$0xf]
      %v4064 = vld [vmem:[#allocation4 + $0x58] sm:$0xf]
      %v4065 = vld [vmem:[#allocation4 + $0x5c] sm:$0xf]
      %v4066 = vld [vmem:[#allocation4 + $0x60] sm:$0xf]
      %v4067 = vld [vmem:[#allocation4 + $0x64] sm:$0xf]
      %v4068 = vld [vmem:[#allocation4 + $0x68] sm:$0xf]
      %v4069 = vld [vmem:[#allocation4 + $0x6c] sm:$0xf]
      %v4070 = vld [vmem:[#allocation4 + $0x70] sm:$0xf]
      %v4071 = vld [vmem:[#allocation4 + $0x74] sm:$0xf]
      %v4072 = vld [vmem:[#allocation4 + $0x78] sm:$0xf]
      %v4073 = vld [vmem:[#allocation4 + $0x7c] sm:$0xf]
      %v4074 = vld [vmem:[#allocation4 + $0x80] sm:$0xf]
      %v4075 = vld [vmem:[#allocation4 + $0x84] sm:$0xf]
      %v4076 = vld [vmem:[#allocation4 + $0x88] sm:$0xf]
      %v4077 = vld [vmem:[#allocation4 + $0x8c] sm:$0xf]
      %v4078 = vld [vmem:[#allocation4 + $0x90] sm:$0x1]
      %s4079 = scalar_lea.vmem %s4, 80
      %v4080 = vld [vmem:[%s4079] sm:$0xf]
      %v4081 = vld [vmem:[%s4079 + $0x4] sm:$0xf]
      %v4082 = vld [vmem:[%s4079 + $0x8] sm:$0xf]
      %v4083 = vld [vmem:[%s4079 + $0xc] sm:$0xf]
      %v4118 = vunpack.c.l.b16 %v4045
      %v4119 = vunpack.c.l.b16 %v4046
      %v4120 = vunpack.c.l.b16 %v4047
      %v4121 = vunpack.c.l.b16 %v4048
      %v4122 = vunpack.c.l.b16 %v4049
      %v4123 = vunpack.c.l.b16 %v4050
      %v4124 = vunpack.c.l.b16 %v4051
      %v4125 = vunpack.c.l.b16 %v4052
      %v4126 = vunpack.c.l.b16 %v4053
      %v4127 = vunpack.c.l.b16 %v4054
      %v4128 = vunpack.c.l.b16 %v4055
      %v4129 = vunpack.c.l.b16 %v4056
      %v4130 = vunpack.c.l.b16 %v4057
      %v4131 = vunpack.c.l.b16 %v4058
      %v4132 = vunpack.c.l.b16 %v4059
      %v4133 = vunpack.c.l.b16 %v4060
      %v4134 = vunpack.c.l.b16 %v4061
      %v4135 = vunpack.c.l.b16 %v4062
      %v4136 = vunpack.c.l.b16 %v4063
      %v4137 = vunpack.c.l.b16 %v4064
      %v4138 = vunpack.c.l.b16 %v4065
      %v4139 = vunpack.c.l.b16 %v4066
      %v4140 = vunpack.c.l.b16 %v4067
      %v4141 = vunpack.c.l.b16 %v4068
      %v4142 = vunpack.c.l.b16 %v4069
      %v4143 = vunpack.c.l.b16 %v4070
      %v4144 = vunpack.c.l.b16 %v4071
      %v4145 = vunpack.c.l.b16 %v4072
      %v4146 = vunpack.c.l.b16 %v4073
      %v4147 = vunpack.c.l.b16 %v4074
      %v4148 = vunpack.c.l.b16 %v4075
      %v4149 = vunpack.c.l.b16 %v4076
      %v4150 = vunpack.c.l.b16 %v4077
      %v4151 = vunpack.c.l.b16 %v4078
      %v4152 = vpack.c.b16 %v4119, %v4118
      %v4153 = vpack.c.b16 %v4121, %v4120
      %v4154 = vpack.c.b16 %v4123, %v4122
      %v4155 = vpack.c.b16 %v4125, %v4124
      %v4156 = vpack.c.b16 %v4127, %v4126
      %v4157 = vpack.c.b16 %v4129, %v4128
      %v4158 = vpack.c.b16 %v4131, %v4130
      %v4159 = vpack.c.b16 %v4133, %v4132
      %v4160 = vpack.c.b16 %v4135, %v4134
      %v4161 = vpack.c.b16 %v4137, %v4136
      %v4162 = vpack.c.b16 %v4139, %v4138
      %v4163 = vpack.c.b16 %v4141, %v4140
      %v4164 = vpack.c.b16 %v4143, %v4142
      %v4165 = vpack.c.b16 %v4145, %v4144
      %v4166 = vpack.c.b16 %v4147, %v4146
      %v4167 = vpack.c.b16 %v4149, %v4148
      %v4168 = vpack.c.b16 %v4151, %v4150
      %v4169 = vrot.slane %v4152, 2
      %v4170 = vrot.slane %v4153, 2
      %v4171 = vsel %vm3747, %v4169, %v4170
      %v4172 = vrot.slane %v4154, 2
      %v4173 = vsel %vm3747, %v4170, %v4172
      %v4174 = vrot.slane %v4155, 2
      %v4175 = vsel %vm3747, %v4172, %v4174
      %v4176 = vrot.slane %v4156, 2
      %v4177 = vsel %vm3747, %v4174, %v4176
      %v4178 = vrot.slane %v4157, 2
      %v4179 = vsel %vm3747, %v4176, %v4178
      %v4180 = vrot.slane %v4158, 2
      %v4181 = vsel %vm3747, %v4178, %v4180
      %v4182 = vrot.slane %v4159, 2
      %v4183 = vsel %vm3747, %v4180, %v4182
      %v4184 = vrot.slane %v4160, 2
      %v4185 = vsel %vm3747, %v4182, %v4184
      %v4186 = vrot.slane %v4161, 2
      %v4187 = vsel %vm3747, %v4184, %v4186
      %v4188 = vrot.slane %v4162, 2
      %v4189 = vsel %vm3747, %v4186, %v4188
      %v4190 = vrot.slane %v4163, 2
      %v4191 = vsel %vm3747, %v4188, %v4190
      %v4192 = vrot.slane %v4164, 2
      %v4193 = vsel %vm3747, %v4190, %v4192
      %v4194 = vrot.slane %v4165, 2
      %v4195 = vsel %vm3747, %v4192, %v4194
      %v4196 = vrot.slane %v4166, 2
      %v4197 = vsel %vm3747, %v4194, %v4196
      %v4198 = vrot.slane %v4167, 2
      %v4199 = vsel %vm3747, %v4196, %v4198
      %v4200 = vrot.slane %v4168, 2
      %v4201 = vsel %vm3747, %v4198, %v4200
      %v4206 = vunpack.c.l.b16 %v4080
      %v4207 = vunpack.c.l.b16 %v4081
      %v4208 = vunpack.c.l.b16 %v4082
      %v4209 = vunpack.c.l.b16 %v4083
      %v4210 = vpack.c.b16 %v4207, %v4206
      %v4211 = vpack.c.b16 %v4209, %v4208
      %v4215 = vsel %vm859, %v4171, 0
      %v4218 = vsel %vm859, %v4173, 0
      %v4221 = vsel %vm859, %v4175, 0
      %v4224 = vsel %vm859, %v4177, 0
      %v4227 = vsel %vm859, %v4179, 0
      %v4230 = vsel %vm859, %v4181, 0
      %v4233 = vsel %vm859, %v4183, 0
      %v4236 = vsel %vm859, %v4185, 0
      %v4239 = vsel %vm859, %v4187, 0
      %v4242 = vsel %vm859, %v4189, 0
      %v4245 = vsel %vm859, %v4191, 0
      %v4248 = vsel %vm859, %v4193, 0
      %v4251 = vsel %vm859, %v4195, 0
      %v4254 = vsel %vm859, %v4197, 0
      %v4257 = vsel %vm859, %v4199, 0
      %v4260 = vsel %vm859, %v4201, 0
      %v4263 = vsel %vm859, %v4200, 0
      %4265 = vmatprep.subr.bf16.mxu0 0
      %4266 = vmatpush1.bf16.msra.mxu0 %v4210
      %4267 = vmatprep.subr.bf16.mxu0 0
      %4268 = vmatpush1.bf16.msra.mxu0 %v4211
      %4269 = vmatprep.subr.bf16.mxu0 0
      %4270 = vmatpush1.bf16.msra.mxu0 0
      %4271 = vmatprep.subr.bf16.mxu0 0
      %4272 = vmatpush1.bf16.msra.mxu0 0
      %4273 = vmatprep.subr.bf16.mxu0 0
      %4274 = vmatpush1.bf16.msra.mxu0 0
      %4275 = vmatprep.subr.bf16.mxu0 0
      %4276 = vmatpush1.bf16.msra.mxu0 0
      %4277 = vmatprep.subr.bf16.mxu0 0
      %4278 = vmatpush1.bf16.msra.mxu0 0
      %4279 = vmatprep.subr.bf16.mxu0 0
      %4280 = vmatpush1.bf16.msra.mxu0 0
      %4281 = vmatprep.subr.bf16.mxu0 0
      %4282 = vmatpush1.bf16.msra.mxu0 0
      %4283 = vmatprep.subr.bf16.mxu0 0
      %4284 = vmatpush1.bf16.msra.mxu0 0
      %4285 = vmatprep.subr.bf16.mxu0 0
      %4286 = vmatpush1.bf16.msra.mxu0 0
      %4287 = vmatprep.subr.bf16.mxu0 0
      %4288 = vmatpush1.bf16.msra.mxu0 0
      %4289 = vmatprep.subr.bf16.mxu0 0
      %4290 = vmatpush1.bf16.msra.mxu0 0
      %4291 = vmatprep.subr.bf16.mxu0 0
      %4292 = vmatpush1.bf16.msra.mxu0 0
      %4293 = vmatprep.subr.bf16.mxu0 0
      %4294 = vmatpush1.bf16.msra.mxu0 0
      %4295 = vmatprep.subr.bf16.mxu0 0
      %4296 = vmatpush1.bf16.msra.mxu0 0
      %4297 = vmatprep.mubr.bf16.mxu0 0
      %4298 = vmatmul.mubr.bf16.gmra.mrb[0].mxu0 %v4215
      %v4299 = vpop.f32.mrb[0].mxu0
      %v4300 = vadd.f32 0.0, %v4299
      %v4301 = vpop.f32.mrb[0].mxu0
      %v4302 = vpop.f32.mrb[0].mxu0
      %v4303 = vadd.f32 0.0, %v4302
      %v4304 = vpop.f32.mrb[0].mxu0
      %4305 = vmatprep.mubr.bf16.mxu0 0
      %4306 = vmatmul.mubr.bf16.gmra.mrb[0].mxu0 %v4218
      %v4307 = vpop.f32.mrb[0].mxu0
      %v4308 = vadd.f32 0.0, %v4307
      %v4309 = vpop.f32.mrb[0].mxu0
      %v4310 = vpop.f32.mrb[0].mxu0
      %v4311 = vadd.f32 0.0, %v4310
      %v4312 = vpop.f32.mrb[0].mxu0
      %4313 = vmatprep.mubr.bf16.mxu0 0
      %4314 = vmatmul.mubr.bf16.gmra.mrb[0].mxu0 %v4221
      %v4315 = vpop.f32.mrb[0].mxu0
      %v4316 = vadd.f32 0.0, %v4315
      %v4317 = vpop.f32.mrb[0].mxu0
      %v4318 = vpop.f32.mrb[0].mxu0
      %v4319 = vadd.f32 0.0, %v4318
      %v4320 = vpop.f32.mrb[0].mxu0
      %4321 = vmatprep.mubr.bf16.mxu0 0
      %4322 = vmatmul.mubr.bf16.gmra.mrb[0].mxu0 %v4224
      %v4323 = vpop.f32.mrb[0].mxu0
      %v4324 = vadd.f32 0.0, %v4323
      %v4325 = vpop.f32.mrb[0].mxu0
      %v4326 = vpop.f32.mrb[0].mxu0
      %v4327 = vadd.f32 0.0, %v4326
      %v4328 = vpop.f32.mrb[0].mxu0
      %4329 = vmatprep.mubr.bf16.mxu0 0
      %4330 = vmatmul.mubr.bf16.gmra.mrb[0].mxu0 %v4227
      %v4331 = vpop.f32.mrb[0].mxu0
      %v4332 = vadd.f32 0.0, %v4331
      %v4333 = vpop.f32.mrb[0].mxu0
      %v4334 = vpop.f32.mrb[0].mxu0
      %v4335 = vadd.f32 0.0, %v4334
      %v4336 = vpop.f32.mrb[0].mxu0
      %4337 = vmatprep.mubr.bf16.mxu0 0
      %4338 = vmatmul.mubr.bf16.gmra.mrb[0].mxu0 %v4230
      %v4339 = vpop.f32.mrb[0].mxu0
      %v4340 = vadd.f32 0.0, %v4339
      %v4341 = vpop.f32.mrb[0].mxu0
      %v4342 = vpop.f32.mrb[0].mxu0
      %v4343 = vadd.f32 0.0, %v4342
      %v4344 = vpop.f32.mrb[0].mxu0
      %4345 = vmatprep.mubr.bf16.mxu0 0
      %4346 = vmatmul.mubr.bf16.gmra.mrb[0].mxu0 %v4233
      %v4347 = vpop.f32.mrb[0].mxu0
      %v4348 = vadd.f32 0.0, %v4347
      %v4349 = vpop.f32.mrb[0].mxu0
      %v4350 = vpop.f32.mrb[0].mxu0
      %v4351 = vadd.f32 0.0, %v4350
      %v4352 = vpop.f32.mrb[0].mxu0
      %4353 = vmatprep.mubr.bf16.mxu0 0
      %4354 = vmatmul.mubr.bf16.gmra.mrb[0].mxu0 %v4236
      %v4355 = vpop.f32.mrb[0].mxu0
      %v4356 = vadd.f32 0.0, %v4355
      %v4357 = vpop.f32.mrb[0].mxu0
      %v4358 = vpop.f32.mrb[0].mxu0
      %v4359 = vadd.f32 0.0, %v4358
      %v4360 = vpop.f32.mrb[0].mxu0
      %4361 = vmatprep.mubr.bf16.mxu0 0
      %4362 = vmatmul.mubr.bf16.gmra.mrb[0].mxu0 %v4239
      %v4363 = vpop.f32.mrb[0].mxu0
      %v4364 = vadd.f32 0.0, %v4363
      %v4365 = vpop.f32.mrb[0].mxu0
      %v4366 = vpop.f32.mrb[0].mxu0
      %v4367 = vadd.f32 0.0, %v4366
      %v4368 = vpop.f32.mrb[0].mxu0
      %4369 = vmatprep.mubr.bf16.mxu0 0
      %4370 = vmatmul.mubr.bf16.gmra.mrb[0].mxu0 %v4242
      %v4371 = vpop.f32.mrb[0].mxu0
      %v4372 = vadd.f32 0.0, %v4371
      %v4373 = vpop.f32.mrb[0].mxu0
      %v4374 = vpop.f32.mrb[0].mxu0
      %v4375 = vadd.f32 0.0, %v4374
      %v4376 = vpop.f32.mrb[0].mxu0
      %4377 = vmatprep.mubr.bf16.mxu0 0
      %4378 = vmatmul.mubr.bf16.gmra.mrb[0].mxu0 %v4245
      %v4379 = vpop.f32.mrb[0].mxu0
      %v4380 = vadd.f32 0.0, %v4379
      %v4381 = vpop.f32.mrb[0].mxu0
      %v4382 = vpop.f32.mrb[0].mxu0
      %v4383 = vadd.f32 0.0, %v4382
      %v4384 = vpop.f32.mrb[0].mxu0
      %4385 = vmatprep.mubr.bf16.mxu0 0
      %4386 = vmatmul.mubr.bf16.gmra.mrb[0].mxu0 %v4248
      %v4387 = vpop.f32.mrb[0].mxu0
      %v4388 = vadd.f32 0.0, %v4387
      %v4389 = vpop.f32.mrb[0].mxu0
      %v4390 = vpop.f32.mrb[0].mxu0
      %v4391 = vadd.f32 0.0, %v4390
      %v4392 = vpop.f32.mrb[0].mxu0
      %4393 = vmatprep.mubr.bf16.mxu0 0
      %4394 = vmatmul.mubr.bf16.gmra.mrb[0].mxu0 %v4251
      %v4395 = vpop.f32.mrb[0].mxu0
      %v4396 = vadd.f32 0.0, %v4395
      %v4397 = vpop.f32.mrb[0].mxu0
      %v4398 = vpop.f32.mrb[0].mxu0
      %v4399 = vadd.f32 0.0, %v4398
      %v4400 = vpop.f32.mrb[0].mxu0
      %4401 = vmatprep.mubr.bf16.mxu0 0
      %4402 = vmatmul.mubr.bf16.gmra.mrb[0].mxu0 %v4254
      %v4403 = vpop.f32.mrb[0].mxu0
      %v4404 = vadd.f32 0.0, %v4403
      %v4405 = vpop.f32.mrb[0].mxu0
      %v4406 = vpop.f32.mrb[0].mxu0
      %v4407 = vadd.f32 0.0, %v4406
      %v4408 = vpop.f32.mrb[0].mxu0
      %4409 = vmatprep.mubr.bf16.mxu0 0
      %4410 = vmatmul.mubr.bf16.gmra.mrb[0].mxu0 %v4257
      %v4411 = vpop.f32.mrb[0].mxu0
      %v4412 = vadd.f32 0.0, %v4411
      %v4413 = vpop.f32.mrb[0].mxu0
      %v4414 = vpop.f32.mrb[0].mxu0
      %v4415 = vadd.f32 0.0, %v4414
      %v4416 = vpop.f32.mrb[0].mxu0
      %4417 = vmatprep.mubr.bf16.mxu0 0
      %4418 = vmatmul.mubr.bf16.gmra.mrb[0].mxu0 %v4260
      %v4419 = vpop.f32.mrb[0].mxu0
      %v4420 = vadd.f32 0.0, %v4419
      %v4421 = vpop.f32.mrb[0].mxu0
      %v4422 = vpop.f32.mrb[0].mxu0
      %v4423 = vadd.f32 0.0, %v4422
      %v4424 = vpop.f32.mrb[0].mxu0
      %4425 = vmatprep.mubr.bf16.mxu0 0
      %4426 = vmatmul.mubr.bf16.gmra.mrb[0].mxu0 %v4263
      %v4427 = vpop.f32.mrb[0].mxu0
      %v4428 = vadd.f32 0.0, %v4427
      %v4429 = vpop.f32.mrb[0].mxu0
      %v4430 = vpop.f32.mrb[0].mxu0
      %v4431 = vpop.f32.mrb[0].mxu0
      %4432 = vdwg.mxu0
      %v4433 = vadd.f32 %v4012, %v4300
      %v4434 = vadd.f32 %v4013, %v4303
      %v4435 = vadd.f32 %v4014, %v4308
      %v4436 = vadd.f32 %v4015, %v4311
      %v4437 = vadd.f32 %v4016, %v4316
      %v4438 = vadd.f32 %v4017, %v4319
      %v4439 = vadd.f32 %v4018, %v4324
      %v4440 = vadd.f32 %v4019, %v4327
      %v4441 = vadd.f32 %v4020, %v4332
      %v4442 = vadd.f32 %v4021, %v4335
      %v4443 = vadd.f32 %v4022, %v4340
      %v4444 = vadd.f32 %v4023, %v4343
      %v4445 = vadd.f32 %v4024, %v4348
      %v4446 = vadd.f32 %v4025, %v4351
      %v4447 = vadd.f32 %v4026, %v4356
      %v4448 = vadd.f32 %v4027, %v4359
      %v4449 = vadd.f32 %v4028, %v4364
      %v4450 = vadd.f32 %v4029, %v4367
      %v4451 = vadd.f32 %v4030, %v4372
      %v4452 = vadd.f32 %v4031, %v4375
      %v4453 = vadd.f32 %v4032, %v4380
      %v4454 = vadd.f32 %v4033, %v4383
      %v4455 = vadd.f32 %v4034, %v4388
      %v4456 = vadd.f32 %v4035, %v4391
      %v4457 = vadd.f32 %v4036, %v4396
      %v4458 = vadd.f32 %v4037, %v4399
      %v4459 = vadd.f32 %v4038, %v4404
      %v4460 = vadd.f32 %v4039, %v4407
      %v4461 = vadd.f32 %v4040, %v4412
      %v4462 = vadd.f32 %v4041, %v4415
      %v4463 = vadd.f32 %v4042, %v4420
      %v4464 = vadd.f32 %v4043, %v4423
      %v4465 = vadd.f32 %v4044, %v4428
      %v4466 = vld [vmem:[#allocation4 + $0x90] sm:$0x3]
      %s4467 = scalar_lea.vmem %s4, 96
      %v4468 = vld [vmem:[%s4467] sm:$0xf]
      %v4469 = vld [vmem:[%s4467 + $0x4] sm:$0xf]
      %v4470 = vld [vmem:[%s4467 + $0x8] sm:$0xf]
      %v4471 = vld [vmem:[%s4467 + $0xc] sm:$0xf]
      %v4473 = vunpack.c.l.b16 %v4466
      %v4474 = vpack.c.b16 %v4473, %v4150
      %vm4475 = vsmask.f32 5376
      %v4477 = vshrl.u32 %v4152, 16
      %v4479 = vrot.slane %v4477, 2
      %v4480 = vshll.u32 %v4152, 16
      %v4482 = vrot.slane %v4480, 3
      %v4483 = vor.u32 %v4479, %v4482
      %v4485 = vshrl.u32 %v4153, 16
      %v4487 = vrot.slane %v4485, 2
      %v4488 = vshll.u32 %v4153, 16
      %v4490 = vrot.slane %v4488, 3
      %v4491 = vor.u32 %v4487, %v4490
      %v4492 = vsel %vm4475, %v4483, %v4491
      %v4494 = vshrl.u32 %v4154, 16
      %v4496 = vrot.slane %v4494, 2
      %v4497 = vshll.u32 %v4154, 16
      %v4499 = vrot.slane %v4497, 3
      %v4500 = vor.u32 %v4496, %v4499
      %v4501 = vsel %vm4475, %v4491, %v4500
      %v4503 = vshrl.u32 %v4155, 16
      %v4505 = vrot.slane %v4503, 2
      %v4506 = vshll.u32 %v4155, 16
      %v4508 = vrot.slane %v4506, 3
      %v4509 = vor.u32 %v4505, %v4508
      %v4510 = vsel %vm4475, %v4500, %v4509
      %v4512 = vshrl.u32 %v4156, 16
      %v4514 = vrot.slane %v4512, 2
      %v4515 = vshll.u32 %v4156, 16
      %v4517 = vrot.slane %v4515, 3
      %v4518 = vor.u32 %v4514, %v4517
      %v4519 = vsel %vm4475, %v4509, %v4518
      %v4521 = vshrl.u32 %v4157, 16
      %v4523 = vrot.slane %v4521, 2
      %v4524 = vshll.u32 %v4157, 16
      %v4526 = vrot.slane %v4524, 3
      %v4527 = vor.u32 %v4523, %v4526
      %v4528 = vsel %vm4475, %v4518, %v4527
      %v4530 = vshrl.u32 %v4158, 16
      %v4532 = vrot.slane %v4530, 2
      %v4533 = vshll.u32 %v4158, 16
      %v4535 = vrot.slane %v4533, 3
      %v4536 = vor.u32 %v4532, %v4535
      %v4537 = vsel %vm4475, %v4527, %v4536
      %v4539 = vshrl.u32 %v4159, 16
      %v4541 = vrot.slane %v4539, 2
      %v4542 = vshll.u32 %v4159, 16
      %v4544 = vrot.slane %v4542, 3
      %v4545 = vor.u32 %v4541, %v4544
      %v4546 = vsel %vm4475, %v4536, %v4545
      %v4548 = vshrl.u32 %v4160, 16
      %v4550 = vrot.slane %v4548, 2
      %v4551 = vshll.u32 %v4160, 16
      %v4553 = vrot.slane %v4551, 3
      %v4554 = vor.u32 %v4550, %v4553
      %v4555 = vsel %vm4475, %v4545, %v4554
      %v4557 = vshrl.u32 %v4161, 16
      %v4559 = vrot.slane %v4557, 2
      %v4560 = vshll.u32 %v4161, 16
      %v4562 = vrot.slane %v4560, 3
      %v4563 = vor.u32 %v4559, %v4562
      %v4564 = vsel %vm4475, %v4554, %v4563
      %v4566 = vshrl.u32 %v4162, 16
      %v4568 = vrot.slane %v4566, 2
      %v4569 = vshll.u32 %v4162, 16
      %v4571 = vrot.slane %v4569, 3
      %v4572 = vor.u32 %v4568, %v4571
      %v4573 = vsel %vm4475, %v4563, %v4572
      %v4575 = vshrl.u32 %v4163, 16
      %v4577 = vrot.slane %v4575, 2
      %v4578 = vshll.u32 %v4163, 16
      %v4580 = vrot.slane %v4578, 3
      %v4581 = vor.u32 %v4577, %v4580
      %v4582 = vsel %vm4475, %v4572, %v4581
      %v4584 = vshrl.u32 %v4164, 16
      %v4586 = vrot.slane %v4584, 2
      %v4587 = vshll.u32 %v4164, 16
      %v4589 = vrot.slane %v4587, 3
      %v4590 = vor.u32 %v4586, %v4589
      %v4591 = vsel %vm4475, %v4581, %v4590
      %v4593 = vshrl.u32 %v4165, 16
      %v4595 = vrot.slane %v4593, 2
      %v4596 = vshll.u32 %v4165, 16
      %v4598 = vrot.slane %v4596, 3
      %v4599 = vor.u32 %v4595, %v4598
      %v4600 = vsel %vm4475, %v4590, %v4599
      %v4602 = vshrl.u32 %v4166, 16
      %v4604 = vrot.slane %v4602, 2
      %v4605 = vshll.u32 %v4166, 16
      %v4607 = vrot.slane %v4605, 3
      %v4608 = vor.u32 %v4604, %v4607
      %v4609 = vsel %vm4475, %v4599, %v4608
      %v4611 = vshrl.u32 %v4167, 16
      %v4613 = vrot.slane %v4611, 2
      %v4614 = vshll.u32 %v4167, 16
      %v4616 = vrot.slane %v4614, 3
      %v4617 = vor.u32 %v4613, %v4616
      %v4618 = vsel %vm4475, %v4608, %v4617
      %v4620 = vshrl.u32 %v4474, 16
      %v4622 = vrot.slane %v4620, 2
      %v4623 = vshll.u32 %v4474, 16
      %v4625 = vrot.slane %v4623, 3
      %v4626 = vor.u32 %v4622, %v4625
      %v4627 = vsel %vm4475, %v4617, %v4626
      %v4632 = vunpack.c.l.b16 %v4468
      %v4633 = vunpack.c.l.b16 %v4469
      %v4634 = vunpack.c.l.b16 %v4470
      %v4635 = vunpack.c.l.b16 %v4471
      %v4636 = vpack.c.b16 %v4633, %v4632
      %v4637 = vpack.c.b16 %v4635, %v4634
      %v4641 = vsel %vm859, %v4492, 0
      %v4644 = vsel %vm859, %v4501, 0
      %v4647 = vsel %vm859, %v4510, 0
      %v4650 = vsel %vm859, %v4519, 0
      %v4653 = vsel %vm859, %v4528, 0
      %v4656 = vsel %vm859, %v4537, 0
      %v4659 = vsel %vm859, %v4546, 0
      %v4662 = vsel %vm859, %v4555, 0
      %v4665 = vsel %vm859, %v4564, 0
      %v4668 = vsel %vm859, %v4573, 0
      %v4671 = vsel %vm859, %v4582, 0
      %v4674 = vsel %vm859, %v4591, 0
      %v4677 = vsel %vm859, %v4600, 0
      %v4680 = vsel %vm859, %v4609, 0
      %v4683 = vsel %vm859, %v4618, 0
      %v4686 = vsel %vm859, %v4627, 0
      %v4689 = vsel %vm859, %v4626, 0
      %4691 = vmatprep.subr.bf16.mxu0 0
      %4692 = vmatpush1.bf16.msra.mxu0 %v4636
      %4693 = vmatprep.subr.bf16.mxu0 0
      %4694 = vmatpush1.bf16.msra.mxu0 %v4637
      %4695 = vmatprep.subr.bf16.mxu0 0
      %4696 = vmatpush1.bf16.msra.mxu0 0
      %4697 = vmatprep.subr.bf16.mxu0 0
      %4698 = vmatpush1.bf16.msra.mxu0 0
      %4699 = vmatprep.subr.bf16.mxu0 0
      %4700 = vmatpush1.bf16.msra.mxu0 0
      %4701 = vmatprep.subr.bf16.mxu0 0
      %4702 = vmatpush1.bf16.msra.mxu0 0
      %4703 = vmatprep.subr.bf16.mxu0 0
      %4704 = vmatpush1.bf16.msra.mxu0 0
      %4705 = vmatprep.subr.bf16.mxu0 0
      %4706 = vmatpush1.bf16.msra.mxu0 0
      %4707 = vmatprep.subr.bf16.mxu0 0
      %4708 = vmatpush1.bf16.msra.mxu0 0
      %4709 = vmatprep.subr.bf16.mxu0 0
      %4710 = vmatpush1.bf16.msra.mxu0 0
      %4711 = vmatprep.subr.bf16.mxu0 0
      %4712 = vmatpush1.bf16.msra.mxu0 0
      %4713 = vmatprep.subr.bf16.mxu0 0
      %4714 = vmatpush1.bf16.msra.mxu0 0
      %4715 = vmatprep.subr.bf16.mxu0 0
      %4716 = vmatpush1.bf16.msra.mxu0 0
      %4717 = vmatprep.subr.bf16.mxu0 0
      %4718 = vmatpush1.bf16.msra.mxu0 0
      %4719 = vmatprep.subr.bf16.mxu0 0
      %4720 = vmatpush1.bf16.msra.mxu0 0
      %4721 = vmatprep.subr.bf16.mxu0 0
      %4722 = vmatpush1.bf16.msra.mxu0 0
      %4723 = vmatprep.mubr.bf16.mxu0 0
      %4724 = vmatmul.mubr.bf16.gmra.mrb[0].mxu0 %v4641
      %v4725 = vpop.f32.mrb[0].mxu0
      %v4726 = vadd.f32 0.0, %v4725
      %v4727 = vpop.f32.mrb[0].mxu0
      %v4728 = vpop.f32.mrb[0].mxu0
      %v4729 = vadd.f32 0.0, %v4728
      %v4730 = vpop.f32.mrb[0].mxu0
      %4731 = vmatprep.mubr.bf16.mxu0 0
      %4732 = vmatmul.mubr.bf16.gmra.mrb[0].mxu0 %v4644
      %v4733 = vpop.f32.mrb[0].mxu0
      %v4734 = vadd.f32 0.0, %v4733
      %v4735 = vpop.f32.mrb[0].mxu0
      %v4736 = vpop.f32.mrb[0].mxu0
      %v4737 = vadd.f32 0.0, %v4736
      %v4738 = vpop.f32.mrb[0].mxu0
      %4739 = vmatprep.mubr.bf16.mxu0 0
      %4740 = vmatmul.mubr.bf16.gmra.mrb[0].mxu0 %v4647
      %v4741 = vpop.f32.mrb[0].mxu0
      %v4742 = vadd.f32 0.0, %v4741
      %v4743 = vpop.f32.mrb[0].mxu0
      %v4744 = vpop.f32.mrb[0].mxu0
      %v4745 = vadd.f32 0.0, %v4744
      %v4746 = vpop.f32.mrb[0].mxu0
      %4747 = vmatprep.mubr.bf16.mxu0 0
      %4748 = vmatmul.mubr.bf16.gmra.mrb[0].mxu0 %v4650
      %v4749 = vpop.f32.mrb[0].mxu0
      %v4750 = vadd.f32 0.0, %v4749
      %v4751 = vpop.f32.mrb[0].mxu0
      %v4752 = vpop.f32.mrb[0].mxu0
      %v4753 = vadd.f32 0.0, %v4752
      %v4754 = vpop.f32.mrb[0].mxu0
      %4755 = vmatprep.mubr.bf16.mxu0 0
      %4756 = vmatmul.mubr.bf16.gmra.mrb[0].mxu0 %v4653
      %v4757 = vpop.f32.mrb[0].mxu0
      %v4758 = vadd.f32 0.0, %v4757
      %v4759 = vpop.f32.mrb[0].mxu0
      %v4760 = vpop.f32.mrb[0].mxu0
      %v4761 = vadd.f32 0.0, %v4760
      %v4762 = vpop.f32.mrb[0].mxu0
      %4763 = vmatprep.mubr.bf16.mxu0 0
      %4764 = vmatmul.mubr.bf16.gmra.mrb[0].mxu0 %v4656
      %v4765 = vpop.f32.mrb[0].mxu0
      %v4766 = vadd.f32 0.0, %v4765
      %v4767 = vpop.f32.mrb[0].mxu0
      %v4768 = vpop.f32.mrb[0].mxu0
      %v4769 = vadd.f32 0.0, %v4768
      %v4770 = vpop.f32.mrb[0].mxu0
      %4771 = vmatprep.mubr.bf16.mxu0 0
      %4772 = vmatmul.mubr.bf16.gmra.mrb[0].mxu0 %v4659
      %v4773 = vpop.f32.mrb[0].mxu0
      %v4774 = vadd.f32 0.0, %v4773
      %v4775 = vpop.f32.mrb[0].mxu0
      %v4776 = vpop.f32.mrb[0].mxu0
      %v4777 = vadd.f32 0.0, %v4776
      %v4778 = vpop.f32.mrb[0].mxu0
      %4779 = vmatprep.mubr.bf16.mxu0 0
      %4780 = vmatmul.mubr.bf16.gmra.mrb[0].mxu0 %v4662
      %v4781 = vpop.f32.mrb[0].mxu0
      %v4782 = vadd.f32 0.0, %v4781
      %v4783 = vpop.f32.mrb[0].mxu0
      %v4784 = vpop.f32.mrb[0].mxu0
      %v4785 = vadd.f32 0.0, %v4784
      %v4786 = vpop.f32.mrb[0].mxu0
      %4787 = vmatprep.mubr.bf16.mxu0 0
      %4788 = vmatmul.mubr.bf16.gmra.mrb[0].mxu0 %v4665
      %v4789 = vpop.f32.mrb[0].mxu0
      %v4790 = vadd.f32 0.0, %v4789
      %v4791 = vpop.f32.mrb[0].mxu0
      %v4792 = vpop.f32.mrb[0].mxu0
      %v4793 = vadd.f32 0.0, %v4792
      %v4794 = vpop.f32.mrb[0].mxu0
      %4795 = vmatprep.mubr.bf16.mxu0 0
      %4796 = vmatmul.mubr.bf16.gmra.mrb[0].mxu0 %v4668
      %v4797 = vpop.f32.mrb[0].mxu0
      %v4798 = vadd.f32 0.0, %v4797
      %v4799 = vpop.f32.mrb[0].mxu0
      %v4800 = vpop.f32.mrb[0].mxu0
      %v4801 = vadd.f32 0.0, %v4800
      %v4802 = vpop.f32.mrb[0].mxu0
      %4803 = vmatprep.mubr.bf16.mxu0 0
      %4804 = vmatmul.mubr.bf16.gmra.mrb[0].mxu0 %v4671
      %v4805 = vpop.f32.mrb[0].mxu0
      %v4806 = vadd.f32 0.0, %v4805
      %v4807 = vpop.f32.mrb[0].mxu0
      %v4808 = vpop.f32.mrb[0].mxu0
      %v4809 = vadd.f32 0.0, %v4808
      %v4810 = vpop.f32.mrb[0].mxu0
      %4811 = vmatprep.mubr.bf16.mxu0 0
      %4812 = vmatmul.mubr.bf16.gmra.mrb[0].mxu0 %v4674
      %v4813 = vpop.f32.mrb[0].mxu0
      %v4814 = vadd.f32 0.0, %v4813
      %v4815 = vpop.f32.mrb[0].mxu0
      %v4816 = vpop.f32.mrb[0].mxu0
      %v4817 = vadd.f32 0.0, %v4816
      %v4818 = vpop.f32.mrb[0].mxu0
      %4819 = vmatprep.mubr.bf16.mxu0 0
      %4820 = vmatmul.mubr.bf16.gmra.mrb[0].mxu0 %v4677
      %v4821 = vpop.f32.mrb[0].mxu0
      %v4822 = vadd.f32 0.0, %v4821
      %v4823 = vpop.f32.mrb[0].mxu0
      %v4824 = vpop.f32.mrb[0].mxu0
      %v4825 = vadd.f32 0.0, %v4824
      %v4826 = vpop.f32.mrb[0].mxu0
      %4827 = vmatprep.mubr.bf16.mxu0 0
      %4828 = vmatmul.mubr.bf16.gmra.mrb[0].mxu0 %v4680
      %v4829 = vpop.f32.mrb[0].mxu0
      %v4830 = vadd.f32 0.0, %v4829
      %v4831 = vpop.f32.mrb[0].mxu0
      %v4832 = vpop.f32.mrb[0].mxu0
      %v4833 = vadd.f32 0.0, %v4832
      %v4834 = vpop.f32.mrb[0].mxu0
      %4835 = vmatprep.mubr.bf16.mxu0 0
      %4836 = vmatmul.mubr.bf16.gmra.mrb[0].mxu0 %v4683
      %v4837 = vpop.f32.mrb[0].mxu0
      %v4838 = vadd.f32 0.0, %v4837
      %v4839 = vpop.f32.mrb[0].mxu0
      %v4840 = vpop.f32.mrb[0].mxu0
      %v4841 = vadd.f32 0.0, %v4840
      %v4842 = vpop.f32.mrb[0].mxu0
      %4843 = vmatprep.mubr.bf16.mxu0 0
      %4844 = vmatmul.mubr.bf16.gmra.mrb[0].mxu0 %v4686
      %v4845 = vpop.f32.mrb[0].mxu0
      %v4846 = vadd.f32 0.0, %v4845
      %v4847 = vpop.f32.mrb[0].mxu0
      %v4848 = vpop.f32.mrb[0].mxu0
      %v4849 = vadd.f32 0.0, %v4848
      %v4850 = vpop.f32.mrb[0].mxu0
      %4851 = vmatprep.mubr.bf16.mxu0 0
      %4852 = vmatmul.mubr.bf16.gmra.mrb[0].mxu0 %v4689
      %v4853 = vpop.f32.mrb[0].mxu0
      %v4854 = vadd.f32 0.0, %v4853
      %v4855 = vpop.f32.mrb[0].mxu0
      %v4856 = vpop.f32.mrb[0].mxu0
      %v4857 = vpop.f32.mrb[0].mxu0
      %4858 = vdwg.mxu0
      %v4859 = vadd.f32 %v4433, %v4726
      %v4860 = vadd.f32 %v4434, %v4729
      %v4861 = vadd.f32 %v4435, %v4734
      %v4862 = vadd.f32 %v4436, %v4737
      %v4863 = vadd.f32 %v4437, %v4742
      %v4864 = vadd.f32 %v4438, %v4745
      %v4865 = vadd.f32 %v4439, %v4750
      %v4866 = vadd.f32 %v4440, %v4753
      %v4867 = vadd.f32 %v4441, %v4758
      %v4868 = vadd.f32 %v4442, %v4761
      %v4869 = vadd.f32 %v4443, %v4766
      %v4870 = vadd.f32 %v4444, %v4769
      %v4871 = vadd.f32 %v4445, %v4774
      %v4872 = vadd.f32 %v4446, %v4777
      %v4873 = vadd.f32 %v4447, %v4782
      %v4874 = vadd.f32 %v4448, %v4785
      %v4875 = vadd.f32 %v4449, %v4790
      %v4876 = vadd.f32 %v4450, %v4793
      %v4877 = vadd.f32 %v4451, %v4798
      %v4878 = vadd.f32 %v4452, %v4801
      %v4879 = vadd.f32 %v4453, %v4806
      %v4880 = vadd.f32 %v4454, %v4809
      %v4881 = vadd.f32 %v4455, %v4814
      %v4882 = vadd.f32 %v4456, %v4817
      %v4883 = vadd.f32 %v4457, %v4822
      %v4884 = vadd.f32 %v4458, %v4825
      %v4885 = vadd.f32 %v4459, %v4830
      %v4886 = vadd.f32 %v4460, %v4833
      %v4887 = vadd.f32 %v4461, %v4838
      %v4888 = vadd.f32 %v4462, %v4841
      %v4889 = vadd.f32 %v4463, %v4846
      %v4890 = vadd.f32 %v4464, %v4849
      %v4891 = vadd.f32 %v4465, %v4854
      %v4892 = vld [vmem:[#allocation4 + $0xc] sm:$0x8]
      %s4893 = scalar_lea.vmem %s4, 112
      %v4894 = vld [vmem:[%s4893] sm:$0xf]
      %v4895 = vld [vmem:[%s4893 + $0x4] sm:$0xf]
      %v4896 = vld [vmem:[%s4893 + $0x8] sm:$0xf]
      %v4897 = vld [vmem:[%s4893 + $0xc] sm:$0xf]
      %v4899 = vunpack.c.l.b16 %v4892
      %v4900 = vpack.c.b16 %v4119, %v4899
      %vm4901 = vcmask 1044480
      %v4902 = vrot.slane %v4900, 3
      %v4903 = vrot.slane %v4153, 3
      %v4904 = vsel %vm4901, %v4902, %v4903
      %v4905 = vrot.slane %v4154, 3
      %v4906 = vsel %vm4901, %v4903, %v4905
      %v4907 = vrot.slane %v4155, 3
      %v4908 = vsel %vm4901, %v4905, %v4907
      %v4909 = vrot.slane %v4156, 3
      %v4910 = vsel %vm4901, %v4907, %v4909
      %v4911 = vrot.slane %v4157, 3
      %v4912 = vsel %vm4901, %v4909, %v4911
      %v4913 = vrot.slane %v4158, 3
      %v4914 = vsel %vm4901, %v4911, %v4913
      %v4915 = vrot.slane %v4159, 3
      %v4916 = vsel %vm4901, %v4913, %v4915
      %v4917 = vrot.slane %v4160, 3
      %v4918 = vsel %vm4901, %v4915, %v4917
      %v4919 = vrot.slane %v4161, 3
      %v4920 = vsel %vm4901, %v4917, %v4919
      %v4921 = vrot.slane %v4162, 3
      %v4922 = vsel %vm4901, %v4919, %v4921
      %v4923 = vrot.slane %v4163, 3
      %v4924 = vsel %vm4901, %v4921, %v4923
      %v4925 = vrot.slane %v4164, 3
      %v4926 = vsel %vm4901, %v4923, %v4925
      %v4927 = vrot.slane %v4165, 3
      %v4928 = vsel %vm4901, %v4925, %v4927
      %v4929 = vrot.slane %v4166, 3
      %v4930 = vsel %vm4901, %v4927, %v4929
      %v4931 = vrot.slane %v4167, 3
      %v4932 = vsel %vm4901, %v4929, %v4931
      %v4933 = vrot.slane %v4474, 3
      %v4934 = vsel %vm4901, %v4931, %v4933
      %v4939 = vunpack.c.l.b16 %v4894
      %v4940 = vunpack.c.l.b16 %v4895
      %v4941 = vunpack.c.l.b16 %v4896
      %v4942 = vunpack.c.l.b16 %v4897
      %v4943 = vpack.c.b16 %v4940, %v4939
      %v4944 = vpack.c.b16 %v4942, %v4941
      %v4948 = vsel %vm859, %v4904, 0
      %v4951 = vsel %vm859, %v4906, 0
      %v4954 = vsel %vm859, %v4908, 0
      %v4957 = vsel %vm859, %v4910, 0
      %v4960 = vsel %vm859, %v4912, 0
      %v4963 = vsel %vm859, %v4914, 0
      %v4966 = vsel %vm859, %v4916, 0
      %v4969 = vsel %vm859, %v4918, 0
      %v4972 = vsel %vm859, %v4920, 0
      %v4975 = vsel %vm859, %v4922, 0
      %v4978 = vsel %vm859, %v4924, 0
      %v4981 = vsel %vm859, %v4926, 0
      %v4984 = vsel %vm859, %v4928, 0
      %v4987 = vsel %vm859, %v4930, 0
      %v4990 = vsel %vm859, %v4932, 0
      %v4993 = vsel %vm859, %v4934, 0
      %v4996 = vsel %vm859, %v4933, 0
      %4998 = vmatprep.subr.bf16.mxu0 0
      %4999 = vmatpush1.bf16.msra.mxu0 %v4943
      %5000 = vmatprep.subr.bf16.mxu0 0
      %5001 = vmatpush1.bf16.msra.mxu0 %v4944
      %5002 = vmatprep.subr.bf16.mxu0 0
      %5003 = vmatpush1.bf16.msra.mxu0 0
      %5004 = vmatprep.subr.bf16.mxu0 0
      %5005 = vmatpush1.bf16.msra.mxu0 0
      %5006 = vmatprep.subr.bf16.mxu0 0
      %5007 = vmatpush1.bf16.msra.mxu0 0
      %5008 = vmatprep.subr.bf16.mxu0 0
      %5009 = vmatpush1.bf16.msra.mxu0 0
      %5010 = vmatprep.subr.bf16.mxu0 0
      %5011 = vmatpush1.bf16.msra.mxu0 0
      %5012 = vmatprep.subr.bf16.mxu0 0
      %5013 = vmatpush1.bf16.msra.mxu0 0
      %5014 = vmatprep.subr.bf16.mxu0 0
      %5015 = vmatpush1.bf16.msra.mxu0 0
      %5016 = vmatprep.subr.bf16.mxu0 0
      %5017 = vmatpush1.bf16.msra.mxu0 0
      %5018 = vmatprep.subr.bf16.mxu0 0
      %5019 = vmatpush1.bf16.msra.mxu0 0
      %5020 = vmatprep.subr.bf16.mxu0 0
      %5021 = vmatpush1.bf16.msra.mxu0 0
      %5022 = vmatprep.subr.bf16.mxu0 0
      %5023 = vmatpush1.bf16.msra.mxu0 0
      %5024 = vmatprep.subr.bf16.mxu0 0
      %5025 = vmatpush1.bf16.msra.mxu0 0
      %5026 = vmatprep.subr.bf16.mxu0 0
      %5027 = vmatpush1.bf16.msra.mxu0 0
      %5028 = vmatprep.subr.bf16.mxu0 0
      %5029 = vmatpush1.bf16.msra.mxu0 0
      %5030 = vmatprep.mubr.bf16.mxu0 0
      %5031 = vmatmul.mubr.bf16.gmra.mrb[0].mxu0 %v4948
      %v5032 = vpop.f32.mrb[0].mxu0
      %v5033 = vadd.f32 0.0, %v5032
      %v5034 = vpop.f32.mrb[0].mxu0
      %v5035 = vpop.f32.mrb[0].mxu0
      %v5036 = vadd.f32 0.0, %v5035
      %v5037 = vpop.f32.mrb[0].mxu0
      %5038 = vmatprep.mubr.bf16.mxu0 0
      %5039 = vmatmul.mubr.bf16.gmra.mrb[0].mxu0 %v4951
      %v5040 = vpop.f32.mrb[0].mxu0
      %v5041 = vadd.f32 0.0, %v5040
      %v5042 = vpop.f32.mrb[0].mxu0
      %v5043 = vpop.f32.mrb[0].mxu0
      %v5044 = vadd.f32 0.0, %v5043
      %v5045 = vpop.f32.mrb[0].mxu0
      %5046 = vmatprep.mubr.bf16.mxu0 0
      %5047 = vmatmul.mubr.bf16.gmra.mrb[0].mxu0 %v4954
      %v5048 = vpop.f32.mrb[0].mxu0
      %v5049 = vadd.f32 0.0, %v5048
      %v5050 = vpop.f32.mrb[0].mxu0
      %v5051 = vpop.f32.mrb[0].mxu0
      %v5052 = vadd.f32 0.0, %v5051
      %v5053 = vpop.f32.mrb[0].mxu0
      %5054 = vmatprep.mubr.bf16.mxu0 0
      %5055 = vmatmul.mubr.bf16.gmra.mrb[0].mxu0 %v4957
      %v5056 = vpop.f32.mrb[0].mxu0
      %v5057 = vadd.f32 0.0, %v5056
      %v5058 = vpop.f32.mrb[0].mxu0
      %v5059 = vpop.f32.mrb[0].mxu0
      %v5060 = vadd.f32 0.0, %v5059
      %v5061 = vpop.f32.mrb[0].mxu0
      %5062 = vmatprep.mubr.bf16.mxu0 0
      %5063 = vmatmul.mubr.bf16.gmra.mrb[0].mxu0 %v4960
      %v5064 = vpop.f32.mrb[0].mxu0
      %v5065 = vadd.f32 0.0, %v5064
      %v5066 = vpop.f32.mrb[0].mxu0
      %v5067 = vpop.f32.mrb[0].mxu0
      %v5068 = vadd.f32 0.0, %v5067
      %v5069 = vpop.f32.mrb[0].mxu0
      %5070 = vmatprep.mubr.bf16.mxu0 0
      %5071 = vmatmul.mubr.bf16.gmra.mrb[0].mxu0 %v4963
      %v5072 = vpop.f32.mrb[0].mxu0
      %v5073 = vadd.f32 0.0, %v5072
      %v5074 = vpop.f32.mrb[0].mxu0
      %v5075 = vpop.f32.mrb[0].mxu0
      %v5076 = vadd.f32 0.0, %v5075
      %v5077 = vpop.f32.mrb[0].mxu0
      %5078 = vmatprep.mubr.bf16.mxu0 0
      %5079 = vmatmul.mubr.bf16.gmra.mrb[0].mxu0 %v4966
      %v5080 = vpop.f32.mrb[0].mxu0
      %v5081 = vadd.f32 0.0, %v5080
      %v5082 = vpop.f32.mrb[0].mxu0
      %v5083 = vpop.f32.mrb[0].mxu0
      %v5084 = vadd.f32 0.0, %v5083
      %v5085 = vpop.f32.mrb[0].mxu0
      %5086 = vmatprep.mubr.bf16.mxu0 0
      %5087 = vmatmul.mubr.bf16.gmra.mrb[0].mxu0 %v4969
      %v5088 = vpop.f32.mrb[0].mxu0
      %v5089 = vadd.f32 0.0, %v5088
      %v5090 = vpop.f32.mrb[0].mxu0
      %v5091 = vpop.f32.mrb[0].mxu0
      %v5092 = vadd.f32 0.0, %v5091
      %v5093 = vpop.f32.mrb[0].mxu0
      %5094 = vmatprep.mubr.bf16.mxu0 0
      %5095 = vmatmul.mubr.bf16.gmra.mrb[0].mxu0 %v4972
      %v5096 = vpop.f32.mrb[0].mxu0
      %v5097 = vadd.f32 0.0, %v5096
      %v5098 = vpop.f32.mrb[0].mxu0
      %v5099 = vpop.f32.mrb[0].mxu0
      %v5100 = vadd.f32 0.0, %v5099
      %v5101 = vpop.f32.mrb[0].mxu0
      %5102 = vmatprep.mubr.bf16.mxu0 0
      %5103 = vmatmul.mubr.bf16.gmra.mrb[0].mxu0 %v4975
      %v5104 = vpop.f32.mrb[0].mxu0
      %v5105 = vadd.f32 0.0, %v5104
      %v5106 = vpop.f32.mrb[0].mxu0
      %v5107 = vpop.f32.mrb[0].mxu0
      %v5108 = vadd.f32 0.0, %v5107
      %v5109 = vpop.f32.mrb[0].mxu0
      %5110 = vmatprep.mubr.bf16.mxu0 0
      %5111 = vmatmul.mubr.bf16.gmra.mrb[0].mxu0 %v4978
      %v5112 = vpop.f32.mrb[0].mxu0
      %v5113 = vadd.f32 0.0, %v5112
      %v5114 = vpop.f32.mrb[0].mxu0
      %v5115 = vpop.f32.mrb[0].mxu0
      %v5116 = vadd.f32 0.0, %v5115
      %v5117 = vpop.f32.mrb[0].mxu0
      %5118 = vmatprep.mubr.bf16.mxu0 0
      %5119 = vmatmul.mubr.bf16.gmra.mrb[0].mxu0 %v4981
      %v5120 = vpop.f32.mrb[0].mxu0
      %v5121 = vadd.f32 0.0, %v5120
      %v5122 = vpop.f32.mrb[0].mxu0
      %v5123 = vpop.f32.mrb[0].mxu0
      %v5124 = vadd.f32 0.0, %v5123
      %v5125 = vpop.f32.mrb[0].mxu0
      %5126 = vmatprep.mubr.bf16.mxu0 0
      %5127 = vmatmul.mubr.bf16.gmra.mrb[0].mxu0 %v4984
      %v5128 = vpop.f32.mrb[0].mxu0
      %v5129 = vadd.f32 0.0, %v5128
      %v5130 = vpop.f32.mrb[0].mxu0
      %v5131 = vpop.f32.mrb[0].mxu0
      %v5132 = vadd.f32 0.0, %v5131
      %v5133 = vpop.f32.mrb[0].mxu0
      %5134 = vmatprep.mubr.bf16.mxu0 0
      %5135 = vmatmul.mubr.bf16.gmra.mrb[0].mxu0 %v4987
      %v5136 = vpop.f32.mrb[0].mxu0
      %v5137 = vadd.f32 0.0, %v5136
      %v5138 = vpop.f32.mrb[0].mxu0
      %v5139 = vpop.f32.mrb[0].mxu0
      %v5140 = vadd.f32 0.0, %v5139
      %v5141 = vpop.f32.mrb[0].mxu0
      %5142 = vmatprep.mubr.bf16.mxu0 0
      %5143 = vmatmul.mubr.bf16.gmra.mrb[0].mxu0 %v4990
      %v5144 = vpop.f32.mrb[0].mxu0
      %v5145 = vadd.f32 0.0, %v5144
      %v5146 = vpop.f32.mrb[0].mxu0
      %v5147 = vpop.f32.mrb[0].mxu0
      %v5148 = vadd.f32 0.0, %v5147
      %v5149 = vpop.f32.mrb[0].mxu0
      %5150 = vmatprep.mubr.bf16.mxu0 0
      %5151 = vmatmul.mubr.bf16.gmra.mrb[0].mxu0 %v4993
      %v5152 = vpop.f32.mrb[0].mxu0
      %v5153 = vadd.f32 0.0, %v5152
      %v5154 = vpop.f32.mrb[0].mxu0
      %v5155 = vpop.f32.mrb[0].mxu0
      %v5156 = vadd.f32 0.0, %v5155
      %v5157 = vpop.f32.mrb[0].mxu0
      %5158 = vmatprep.mubr.bf16.mxu0 0
      %5159 = vmatmul.mubr.bf16.gmra.mrb[0].mxu0 %v4996
      %v5160 = vpop.f32.mrb[0].mxu0
      %v5161 = vadd.f32 0.0, %v5160
      %v5162 = vpop.f32.mrb[0].mxu0
      %v5163 = vpop.f32.mrb[0].mxu0
      %v5164 = vpop.f32.mrb[0].mxu0
      %5165 = vdwg.mxu0
      %v5166 = vadd.f32 %v4859, %v5033
      %v5167 = vadd.f32 %v4860, %v5036
      %v5168 = vadd.f32 %v4861, %v5041
      %v5169 = vadd.f32 %v4862, %v5044
      %v5170 = vadd.f32 %v4863, %v5049
      %v5171 = vadd.f32 %v4864, %v5052
      %v5172 = vadd.f32 %v4865, %v5057
      %v5173 = vadd.f32 %v4866, %v5060
      %v5174 = vadd.f32 %v4867, %v5065
      %v5175 = vadd.f32 %v4868, %v5068
      %v5176 = vadd.f32 %v4869, %v5073
      %v5177 = vadd.f32 %v4870, %v5076
      %v5178 = vadd.f32 %v4871, %v5081
      %v5179 = vadd.f32 %v4872, %v5084
      %v5180 = vadd.f32 %v4873, %v5089
      %v5181 = vadd.f32 %v4874, %v5092
      %v5182 = vadd.f32 %v4875, %v5097
      %v5183 = vadd.f32 %v4876, %v5100
      %v5184 = vadd.f32 %v4877, %v5105
      %v5185 = vadd.f32 %v4878, %v5108
      %v5186 = vadd.f32 %v4879, %v5113
      %v5187 = vadd.f32 %v4880, %v5116
      %v5188 = vadd.f32 %v4881, %v5121
      %v5189 = vadd.f32 %v4882, %v5124
      %v5190 = vadd.f32 %v4883, %v5129
      %v5191 = vadd.f32 %v4884, %v5132
      %v5192 = vadd.f32 %v4885, %v5137
      %v5193 = vadd.f32 %v4886, %v5140
      %v5194 = vadd.f32 %v4887, %v5145
      %v5195 = vadd.f32 %v4888, %v5148
      %v5196 = vadd.f32 %v4889, %v5153
      %v5197 = vadd.f32 %v4890, %v5156
      %v5198 = vadd.f32 %v4891, %v5161
      %v5199 = vld [vmem:[#allocation4 + $0x90] sm:$0x7]
      %s5200 = scalar_lea.vmem %s4, 128
      %v5201 = vld [vmem:[%s5200] sm:$0xf]
      %v5202 = vld [vmem:[%s5200 + $0x4] sm:$0xf]
      %v5203 = vld [vmem:[%s5200 + $0x8] sm:$0xf]
      %v5204 = vld [vmem:[%s5200 + $0xc] sm:$0xf]
      %v5206 = vunpack.c.l.b16 %v5199
      %v5207 = vpack.c.b16 %v5206, %v4150
      %vm5208 = vsmask.f32 4352
      %v5210 = vshrl.u32 %v4900, 16
      %v5212 = vrot.slane %v5210, 3
      %v5213 = vshll.u32 %v4900, 16
      %v5215 = vrot.slane %v5213, 4
      %v5216 = vor.u32 %v5212, %v5215
      %v5217 = vrot.slane %v4485, 3
      %v5218 = vrot.slane %v4488, 4
      %v5219 = vor.u32 %v5217, %v5218
      %v5220 = vsel %vm5208, %v5216, %v5219
      %v5221 = vrot.slane %v4494, 3
      %v5222 = vrot.slane %v4497, 4
      %v5223 = vor.u32 %v5221, %v5222
      %v5224 = vsel %vm5208, %v5219, %v5223
      %v5225 = vrot.slane %v4503, 3
      %v5226 = vrot.slane %v4506, 4
      %v5227 = vor.u32 %v5225, %v5226
      %v5228 = vsel %vm5208, %v5223, %v5227
      %v5229 = vrot.slane %v4512, 3
      %v5230 = vrot.slane %v4515, 4
      %v5231 = vor.u32 %v5229, %v5230
      %v5232 = vsel %vm5208, %v5227, %v5231
      %v5233 = vrot.slane %v4521, 3
      %v5234 = vrot.slane %v4524, 4
      %v5235 = vor.u32 %v5233, %v5234
      %v5236 = vsel %vm5208, %v5231, %v5235
      %v5237 = vrot.slane %v4530, 3
      %v5238 = vrot.slane %v4533, 4
      %v5239 = vor.u32 %v5237, %v5238
      %v5240 = vsel %vm5208, %v5235, %v5239
      %v5241 = vrot.slane %v4539, 3
      %v5242 = vrot.slane %v4542, 4
      %v5243 = vor.u32 %v5241, %v5242
      %v5244 = vsel %vm5208, %v5239, %v5243
      %v5245 = vrot.slane %v4548, 3
      %v5246 = vrot.slane %v4551, 4
      %v5247 = vor.u32 %v5245, %v5246
      %v5248 = vsel %vm5208, %v5243, %v5247
      %v5249 = vrot.slane %v4557, 3
      %v5250 = vrot.slane %v4560, 4
      %v5251 = vor.u32 %v5249, %v5250
      %v5252 = vsel %vm5208, %v5247, %v5251
      %v5253 = vrot.slane %v4566, 3
      %v5254 = vrot.slane %v4569, 4
      %v5255 = vor.u32 %v5253, %v5254
      %v5256 = vsel %vm5208, %v5251, %v5255
      %v5257 = vrot.slane %v4575, 3
      %v5258 = vrot.slane %v4578, 4
      %v5259 = vor.u32 %v5257, %v5258
      %v5260 = vsel %vm5208, %v5255, %v5259
      %v5261 = vrot.slane %v4584, 3
      %v5262 = vrot.slane %v4587, 4
      %v5263 = vor.u32 %v5261, %v5262
      %v5264 = vsel %vm5208, %v5259, %v5263
      %v5265 = vrot.slane %v4593, 3
      %v5266 = vrot.slane %v4596, 4
      %v5267 = vor.u32 %v5265, %v5266
      %v5268 = vsel %vm5208, %v5263, %v5267
      %v5269 = vrot.slane %v4602, 3
      %v5270 = vrot.slane %v4605, 4
      %v5271 = vor.u32 %v5269, %v5270
      %v5272 = vsel %vm5208, %v5267, %v5271
      %v5273 = vrot.slane %v4611, 3
      %v5274 = vrot.slane %v4614, 4
      %v5275 = vor.u32 %v5273, %v5274
      %v5276 = vsel %vm5208, %v5271, %v5275
      %v5278 = vshrl.u32 %v5207, 16
      %v5280 = vrot.slane %v5278, 3
      %v5281 = vshll.u32 %v5207, 16
      %v5283 = vrot.slane %v5281, 4
      %v5284 = vor.u32 %v5280, %v5283
      %v5285 = vsel %vm5208, %v5275, %v5284
      %v5290 = vunpack.c.l.b16 %v5201
      %v5291 = vunpack.c.l.b16 %v5202
      %v5292 = vunpack.c.l.b16 %v5203
      %v5293 = vunpack.c.l.b16 %v5204
      %v5294 = vpack.c.b16 %v5291, %v5290
      %v5295 = vpack.c.b16 %v5293, %v5292
      %v5299 = vsel %vm859, %v5220, 0
      %v5302 = vsel %vm859, %v5224, 0
      %v5305 = vsel %vm859, %v5228, 0
      %v5308 = vsel %vm859, %v5232, 0
      %v5311 = vsel %vm859, %v5236, 0
      %v5314 = vsel %vm859, %v5240, 0
      %v5317 = vsel %vm859, %v5244, 0
      %v5320 = vsel %vm859, %v5248, 0
      %v5323 = vsel %vm859, %v5252, 0
      %v5326 = vsel %vm859, %v5256, 0
      %v5329 = vsel %vm859, %v5260, 0
      %v5332 = vsel %vm859, %v5264, 0
      %v5335 = vsel %vm859, %v5268, 0
      %v5338 = vsel %vm859, %v5272, 0
      %v5341 = vsel %vm859, %v5276, 0
      %v5344 = vsel %vm859, %v5285, 0
      %v5347 = vsel %vm859, %v5284, 0
      %5349 = vmatprep.subr.bf16.mxu0 0
      %5350 = vmatpush1.bf16.msra.mxu0 %v5294
      %5351 = vmatprep.subr.bf16.mxu0 0
      %5352 = vmatpush1.bf16.msra.mxu0 %v5295
      %5353 = vmatprep.subr.bf16.mxu0 0
      %5354 = vmatpush1.bf16.msra.mxu0 0
      %5355 = vmatprep.subr.bf16.mxu0 0
      %5356 = vmatpush1.bf16.msra.mxu0 0
      %5357 = vmatprep.subr.bf16.mxu0 0
      %5358 = vmatpush1.bf16.msra.mxu0 0
      %5359 = vmatprep.subr.bf16.mxu0 0
      %5360 = vmatpush1.bf16.msra.mxu0 0
      %5361 = vmatprep.subr.bf16.mxu0 0
      %5362 = vmatpush1.bf16.msra.mxu0 0
      %5363 = vmatprep.subr.bf16.mxu0 0
      %5364 = vmatpush1.bf16.msra.mxu0 0
      %5365 = vmatprep.subr.bf16.mxu0 0
      %5366 = vmatpush1.bf16.msra.mxu0 0
      %5367 = vmatprep.subr.bf16.mxu0 0
      %5368 = vmatpush1.bf16.msra.mxu0 0
      %5369 = vmatprep.subr.bf16.mxu0 0
      %5370 = vmatpush1.bf16.msra.mxu0 0
      %5371 = vmatprep.subr.bf16.mxu0 0
      %5372 = vmatpush1.bf16.msra.mxu0 0
      %5373 = vmatprep.subr.bf16.mxu0 0
      %5374 = vmatpush1.bf16.msra.mxu0 0
      %5375 = vmatprep.subr.bf16.mxu0 0
      %5376 = vmatpush1.bf16.msra.mxu0 0
      %5377 = vmatprep.subr.bf16.mxu0 0
      %5378 = vmatpush1.bf16.msra.mxu0 0
      %5379 = vmatprep.subr.bf16.mxu0 0
      %5380 = vmatpush1.bf16.msra.mxu0 0
      %5381 = vmatprep.mubr.bf16.mxu0 0
      %5382 = vmatmul.mubr.bf16.gmra.mrb[0].mxu0 %v5299
      %v5383 = vpop.f32.mrb[0].mxu0
      %v5384 = vadd.f32 0.0, %v5383
      %v5385 = vpop.f32.mrb[0].mxu0
      %v5386 = vpop.f32.mrb[0].mxu0
      %v5387 = vadd.f32 0.0, %v5386
      %v5388 = vpop.f32.mrb[0].mxu0
      %5389 = vmatprep.mubr.bf16.mxu0 0
      %5390 = vmatmul.mubr.bf16.gmra.mrb[0].mxu0 %v5302
      %v5391 = vpop.f32.mrb[0].mxu0
      %v5392 = vadd.f32 0.0, %v5391
      %v5393 = vpop.f32.mrb[0].mxu0
      %v5394 = vpop.f32.mrb[0].mxu0
      %v5395 = vadd.f32 0.0, %v5394
      %v5396 = vpop.f32.mrb[0].mxu0
      %5397 = vmatprep.mubr.bf16.mxu0 0
      %5398 = vmatmul.mubr.bf16.gmra.mrb[0].mxu0 %v5305
      %v5399 = vpop.f32.mrb[0].mxu0
      %v5400 = vadd.f32 0.0, %v5399
      %v5401 = vpop.f32.mrb[0].mxu0
      %v5402 = vpop.f32.mrb[0].mxu0
      %v5403 = vadd.f32 0.0, %v5402
      %v5404 = vpop.f32.mrb[0].mxu0
      %5405 = vmatprep.mubr.bf16.mxu0 0
      %5406 = vmatmul.mubr.bf16.gmra.mrb[0].mxu0 %v5308
      %v5407 = vpop.f32.mrb[0].mxu0
      %v5408 = vadd.f32 0.0, %v5407
      %v5409 = vpop.f32.mrb[0].mxu0
      %v5410 = vpop.f32.mrb[0].mxu0
      %v5411 = vadd.f32 0.0, %v5410
      %v5412 = vpop.f32.mrb[0].mxu0
      %5413 = vmatprep.mubr.bf16.mxu0 0
      %5414 = vmatmul.mubr.bf16.gmra.mrb[0].mxu0 %v5311
      %v5415 = vpop.f32.mrb[0].mxu0
      %v5416 = vadd.f32 0.0, %v5415
      %v5417 = vpop.f32.mrb[0].mxu0
      %v5418 = vpop.f32.mrb[0].mxu0
      %v5419 = vadd.f32 0.0, %v5418
      %v5420 = vpop.f32.mrb[0].mxu0
      %5421 = vmatprep.mubr.bf16.mxu0 0
      %5422 = vmatmul.mubr.bf16.gmra.mrb[0].mxu0 %v5314
      %v5423 = vpop.f32.mrb[0].mxu0
      %v5424 = vadd.f32 0.0, %v5423
      %v5425 = vpop.f32.mrb[0].mxu0
      %v5426 = vpop.f32.mrb[0].mxu0
      %v5427 = vadd.f32 0.0, %v5426
      %v5428 = vpop.f32.mrb[0].mxu0
      %5429 = vmatprep.mubr.bf16.mxu0 0
      %5430 = vmatmul.mubr.bf16.gmra.mrb[0].mxu0 %v5317
      %v5431 = vpop.f32.mrb[0].mxu0
      %v5432 = vadd.f32 0.0, %v5431
      %v5433 = vpop.f32.mrb[0].mxu0
      %v5434 = vpop.f32.mrb[0].mxu0
      %v5435 = vadd.f32 0.0, %v5434
      %v5436 = vpop.f32.mrb[0].mxu0
      %5437 = vmatprep.mubr.bf16.mxu0 0
      %5438 = vmatmul.mubr.bf16.gmra.mrb[0].mxu0 %v5320
      %v5439 = vpop.f32.mrb[0].mxu0
      %v5440 = vadd.f32 0.0, %v5439
      %v5441 = vpop.f32.mrb[0].mxu0
      %v5442 = vpop.f32.mrb[0].mxu0
      %v5443 = vadd.f32 0.0, %v5442
      %v5444 = vpop.f32.mrb[0].mxu0
      %5445 = vmatprep.mubr.bf16.mxu0 0
      %5446 = vmatmul.mubr.bf16.gmra.mrb[0].mxu0 %v5323
      %v5447 = vpop.f32.mrb[0].mxu0
      %v5448 = vadd.f32 0.0, %v5447
      %v5449 = vpop.f32.mrb[0].mxu0
      %v5450 = vpop.f32.mrb[0].mxu0
      %v5451 = vadd.f32 0.0, %v5450
      %v5452 = vpop.f32.mrb[0].mxu0
      %5453 = vmatprep.mubr.bf16.mxu0 0
      %5454 = vmatmul.mubr.bf16.gmra.mrb[0].mxu0 %v5326
      %v5455 = vpop.f32.mrb[0].mxu0
      %v5456 = vadd.f32 0.0, %v5455
      %v5457 = vpop.f32.mrb[0].mxu0
      %v5458 = vpop.f32.mrb[0].mxu0
      %v5459 = vadd.f32 0.0, %v5458
      %v5460 = vpop.f32.mrb[0].mxu0
      %5461 = vmatprep.mubr.bf16.mxu0 0
      %5462 = vmatmul.mubr.bf16.gmra.mrb[0].mxu0 %v5329
      %v5463 = vpop.f32.mrb[0].mxu0
      %v5464 = vadd.f32 0.0, %v5463
      %v5465 = vpop.f32.mrb[0].mxu0
      %v5466 = vpop.f32.mrb[0].mxu0
      %v5467 = vadd.f32 0.0, %v5466
      %v5468 = vpop.f32.mrb[0].mxu0
      %5469 = vmatprep.mubr.bf16.mxu0 0
      %5470 = vmatmul.mubr.bf16.gmra.mrb[0].mxu0 %v5332
      %v5471 = vpop.f32.mrb[0].mxu0
      %v5472 = vadd.f32 0.0, %v5471
      %v5473 = vpop.f32.mrb[0].mxu0
      %v5474 = vpop.f32.mrb[0].mxu0
      %v5475 = vadd.f32 0.0, %v5474
      %v5476 = vpop.f32.mrb[0].mxu0
      %5477 = vmatprep.mubr.bf16.mxu0 0
      %5478 = vmatmul.mubr.bf16.gmra.mrb[0].mxu0 %v5335
      %v5479 = vpop.f32.mrb[0].mxu0
      %v5480 = vadd.f32 0.0, %v5479
      %v5481 = vpop.f32.mrb[0].mxu0
      %v5482 = vpop.f32.mrb[0].mxu0
      %v5483 = vadd.f32 0.0, %v5482
      %v5484 = vpop.f32.mrb[0].mxu0
      %5485 = vmatprep.mubr.bf16.mxu0 0
      %5486 = vmatmul.mubr.bf16.gmra.mrb[0].mxu0 %v5338
      %v5487 = vpop.f32.mrb[0].mxu0
      %v5488 = vadd.f32 0.0, %v5487
      %v5489 = vpop.f32.mrb[0].mxu0
      %v5490 = vpop.f32.mrb[0].mxu0
      %v5491 = vadd.f32 0.0, %v5490
      %v5492 = vpop.f32.mrb[0].mxu0
      %5493 = vmatprep.mubr.bf16.mxu0 0
      %5494 = vmatmul.mubr.bf16.gmra.mrb[0].mxu0 %v5341
      %v5495 = vpop.f32.mrb[0].mxu0
      %v5496 = vadd.f32 0.0, %v5495
      %v5497 = vpop.f32.mrb[0].mxu0
      %v5498 = vpop.f32.mrb[0].mxu0
      %v5499 = vadd.f32 0.0, %v5498
      %v5500 = vpop.f32.mrb[0].mxu0
      %5501 = vmatprep.mubr.bf16.mxu0 0
      %5502 = vmatmul.mubr.bf16.gmra.mrb[0].mxu0 %v5344
      %v5503 = vpop.f32.mrb[0].mxu0
      %v5504 = vadd.f32 0.0, %v5503
      %v5505 = vpop.f32.mrb[0].mxu0
      %v5506 = vpop.f32.mrb[0].mxu0
      %v5507 = vadd.f32 0.0, %v5506
      %v5508 = vpop.f32.mrb[0].mxu0
      %5509 = vmatprep.mubr.bf16.mxu0 0
      %5510 = vmatmul.mubr.bf16.gmra.mrb[0].mxu0 %v5347
      %v5511 = vpop.f32.mrb[0].mxu0
      %v5512 = vadd.f32 0.0, %v5511
      %v5513 = vpop.f32.mrb[0].mxu0
      %v5514 = vpop.f32.mrb[0].mxu0
      %v5515 = vpop.f32.mrb[0].mxu0
      %5516 = vdwg.mxu0
      %v5517 = vadd.f32 %v5166, %v5384
      %v5518 = vadd.f32 %v5167, %v5387
      %v5519 = vadd.f32 %v5168, %v5392
      %v5520 = vadd.f32 %v5169, %v5395
      %v5521 = vadd.f32 %v5170, %v5400
      %v5522 = vadd.f32 %v5171, %v5403
      %v5523 = vadd.f32 %v5172, %v5408
      %v5524 = vadd.f32 %v5173, %v5411
      %v5525 = vadd.f32 %v5174, %v5416
      %v5526 = vadd.f32 %v5175, %v5419
      %v5527 = vadd.f32 %v5176, %v5424
      %v5528 = vadd.f32 %v5177, %v5427
      %v5529 = vadd.f32 %v5178, %v5432
      %v5530 = vadd.f32 %v5179, %v5435
      %v5531 = vadd.f32 %v5180, %v5440
      %v5532 = vadd.f32 %v5181, %v5443
      %v5533 = vadd.f32 %v5182, %v5448
      %v5534 = vadd.f32 %v5183, %v5451
      %v5535 = vadd.f32 %v5184, %v5456
      %v5536 = vadd.f32 %v5185, %v5459
      %v5537 = vadd.f32 %v5186, %v5464
      %v5538 = vadd.f32 %v5187, %v5467
      %v5539 = vadd.f32 %v5188, %v5472
      %v5540 = vadd.f32 %v5189, %v5475
      %v5541 = vadd.f32 %v5190, %v5480
      %v5542 = vadd.f32 %v5191, %v5483
      %v5543 = vadd.f32 %v5192, %v5488
      %v5544 = vadd.f32 %v5193, %v5491
      %v5545 = vadd.f32 %v5194, %v5496
      %v5546 = vadd.f32 %v5195, %v5499
      %v5547 = vadd.f32 %v5196, %v5504
      %v5548 = vadd.f32 %v5197, %v5507
      %v5549 = vadd.f32 %v5198, %v5512
      %s5550 = scalar_lea.vmem %s4, 144
      %v5551 = vld [vmem:[%s5550] sm:$0xf]
      %v5552 = vld [vmem:[%s5550 + $0x4] sm:$0xf]
      %v5553 = vld [vmem:[%s5550 + $0x8] sm:$0xf]
      %v5554 = vld [vmem:[%s5550 + $0xc] sm:$0xf]
      %v5555 = vpack.c.b16 %v4120, %v4119
      %v5556 = vpack.c.b16 %v4122, %v4121
      %v5557 = vpack.c.b16 %v4124, %v4123
      %v5558 = vpack.c.b16 %v4126, %v4125
      %v5559 = vpack.c.b16 %v4128, %v4127
      %v5560 = vpack.c.b16 %v4130, %v4129
      %v5561 = vpack.c.b16 %v4132, %v4131
      %v5562 = vpack.c.b16 %v4134, %v4133
      %v5563 = vpack.c.b16 %v4136, %v4135
      %v5564 = vpack.c.b16 %v4138, %v4137
      %v5565 = vpack.c.b16 %v4140, %v4139
      %v5566 = vpack.c.b16 %v4142, %v4141
      %v5567 = vpack.c.b16 %v4144, %v4143
      %v5568 = vpack.c.b16 %v4146, %v4145
      %v5569 = vpack.c.b16 %v4148, %v4147
      %v5570 = vpack.c.b16 %v4150, %v4149
      %v5571 = vpack.c.b16 %v5206, %v5206
      %v5576 = vunpack.c.l.b16 %v5551
      %v5577 = vunpack.c.l.b16 %v5552
      %v5578 = vunpack.c.l.b16 %v5553
      %v5579 = vunpack.c.l.b16 %v5554
      %v5580 = vpack.c.b16 %v5577, %v5576
      %v5581 = vpack.c.b16 %v5579, %v5578
      %v5585 = vsel %vm859, %v5555, 0
      %v5588 = vsel %vm859, %v5556, 0
      %v5591 = vsel %vm859, %v5557, 0
      %v5594 = vsel %vm859, %v5558, 0
      %v5597 = vsel %vm859, %v5559, 0
      %v5600 = vsel %vm859, %v5560, 0
      %v5603 = vsel %vm859, %v5561, 0
      %v5606 = vsel %vm859, %v5562, 0
      %v5609 = vsel %vm859, %v5563, 0
      %v5612 = vsel %vm859, %v5564, 0
      %v5615 = vsel %vm859, %v5565, 0
      %v5618 = vsel %vm859, %v5566, 0
      %v5621 = vsel %vm859, %v5567, 0
      %v5624 = vsel %vm859, %v5568, 0
      %v5627 = vsel %vm859, %v5569, 0
      %v5630 = vsel %vm859, %v5570, 0
      %v5633 = vsel %vm859, %v5571, 0
      %5635 = vmatprep.subr.bf16.mxu0 0
      %5636 = vmatpush1.bf16.msra.mxu0 %v5580
      %5637 = vmatprep.subr.bf16.mxu0 0
      %5638 = vmatpush1.bf16.msra.mxu0 %v5581
      %5639 = vmatprep.subr.bf16.mxu0 0
      %5640 = vmatpush1.bf16.msra.mxu0 0
      %5641 = vmatprep.subr.bf16.mxu0 0
      %5642 = vmatpush1.bf16.msra.mxu0 0
      %5643 = vmatprep.subr.bf16.mxu0 0
      %5644 = vmatpush1.bf16.msra.mxu0 0
      %5645 = vmatprep.subr.bf16.mxu0 0
      %5646 = vmatpush1.bf16.msra.mxu0 0
      %5647 = vmatprep.subr.bf16.mxu0 0
      %5648 = vmatpush1.bf16.msra.mxu0 0
      %5649 = vmatprep.subr.bf16.mxu0 0
      %5650 = vmatpush1.bf16.msra.mxu0 0
      %5651 = vmatprep.subr.bf16.mxu0 0
      %5652 = vmatpush1.bf16.msra.mxu0 0
      %5653 = vmatprep.subr.bf16.mxu0 0
      %5654 = vmatpush1.bf16.msra.mxu0 0
      %5655 = vmatprep.subr.bf16.mxu0 0
      %5656 = vmatpush1.bf16.msra.mxu0 0
      %5657 = vmatprep.subr.bf16.mxu0 0
      %5658 = vmatpush1.bf16.msra.mxu0 0
      %5659 = vmatprep.subr.bf16.mxu0 0
      %5660 = vmatpush1.bf16.msra.mxu0 0
      %5661 = vmatprep.subr.bf16.mxu0 0
      %5662 = vmatpush1.bf16.msra.mxu0 0
      %5663 = vmatprep.subr.bf16.mxu0 0
      %5664 = vmatpush1.bf16.msra.mxu0 0
      %5665 = vmatprep.subr.bf16.mxu0 0
      %5666 = vmatpush1.bf16.msra.mxu0 0
      %5667 = vmatprep.mubr.bf16.mxu0 0
      %5668 = vmatmul.mubr.bf16.gmra.mrb[0].mxu0 %v5585
      %v5669 = vpop.f32.mrb[0].mxu0
      %v5670 = vadd.f32 0.0, %v5669
      %v5671 = vpop.f32.mrb[0].mxu0
      %v5672 = vpop.f32.mrb[0].mxu0
      %v5673 = vadd.f32 0.0, %v5672
      %v5674 = vpop.f32.mrb[0].mxu0
      %5675 = vmatprep.mubr.bf16.mxu0 0
      %5676 = vmatmul.mubr.bf16.gmra.mrb[0].mxu0 %v5588
      %v5677 = vpop.f32.mrb[0].mxu0
      %v5678 = vadd.f32 0.0, %v5677
      %v5679 = vpop.f32.mrb[0].mxu0
      %v5680 = vpop.f32.mrb[0].mxu0
      %v5681 = vadd.f32 0.0, %v5680
      %v5682 = vpop.f32.mrb[0].mxu0
      %5683 = vmatprep.mubr.bf16.mxu0 0
      %5684 = vmatmul.mubr.bf16.gmra.mrb[0].mxu0 %v5591
      %v5685 = vpop.f32.mrb[0].mxu0
      %v5686 = vadd.f32 0.0, %v5685
      %v5687 = vpop.f32.mrb[0].mxu0
      %v5688 = vpop.f32.mrb[0].mxu0
      %v5689 = vadd.f32 0.0, %v5688
      %v5690 = vpop.f32.mrb[0].mxu0
      %5691 = vmatprep.mubr.bf16.mxu0 0
      %5692 = vmatmul.mubr.bf16.gmra.mrb[0].mxu0 %v5594
      %v5693 = vpop.f32.mrb[0].mxu0
      %v5694 = vadd.f32 0.0, %v5693
      %v5695 = vpop.f32.mrb[0].mxu0
      %v5696 = vpop.f32.mrb[0].mxu0
      %v5697 = vadd.f32 0.0, %v5696
      %v5698 = vpop.f32.mrb[0].mxu0
      %5699 = vmatprep.mubr.bf16.mxu0 0
      %5700 = vmatmul.mubr.bf16.gmra.mrb[0].mxu0 %v5597
      %v5701 = vpop.f32.mrb[0].mxu0
      %v5702 = vadd.f32 0.0, %v5701
      %v5703 = vpop.f32.mrb[0].mxu0
      %v5704 = vpop.f32.mrb[0].mxu0
      %v5705 = vadd.f32 0.0, %v5704
      %v5706 = vpop.f32.mrb[0].mxu0
      %5707 = vmatprep.mubr.bf16.mxu0 0
      %5708 = vmatmul.mubr.bf16.gmra.mrb[0].mxu0 %v5600
      %v5709 = vpop.f32.mrb[0].mxu0
      %v5710 = vadd.f32 0.0, %v5709
      %v5711 = vpop.f32.mrb[0].mxu0
      %v5712 = vpop.f32.mrb[0].mxu0
      %v5713 = vadd.f32 0.0, %v5712
      %v5714 = vpop.f32.mrb[0].mxu0
      %5715 = vmatprep.mubr.bf16.mxu0 0
      %5716 = vmatmul.mubr.bf16.gmra.mrb[0].mxu0 %v5603
      %v5717 = vpop.f32.mrb[0].mxu0
      %v5718 = vadd.f32 0.0, %v5717
      %v5719 = vpop.f32.mrb[0].mxu0
      %v5720 = vpop.f32.mrb[0].mxu0
      %v5721 = vadd.f32 0.0, %v5720
      %v5722 = vpop.f32.mrb[0].mxu0
      %5723 = vmatprep.mubr.bf16.mxu0 0
      %5724 = vmatmul.mubr.bf16.gmra.mrb[0].mxu0 %v5606
      %v5725 = vpop.f32.mrb[0].mxu0
      %v5726 = vadd.f32 0.0, %v5725
      %v5727 = vpop.f32.mrb[0].mxu0
      %v5728 = vpop.f32.mrb[0].mxu0
      %v5729 = vadd.f32 0.0, %v5728
      %v5730 = vpop.f32.mrb[0].mxu0
      %5731 = vmatprep.mubr.bf16.mxu0 0
      %5732 = vmatmul.mubr.bf16.gmra.mrb[0].mxu0 %v5609
      %v5733 = vpop.f32.mrb[0].mxu0
      %v5734 = vadd.f32 0.0, %v5733
      %v5735 = vpop.f32.mrb[0].mxu0
      %v5736 = vpop.f32.mrb[0].mxu0
      %v5737 = vadd.f32 0.0, %v5736
      %v5738 = vpop.f32.mrb[0].mxu0
      %5739 = vmatprep.mubr.bf16.mxu0 0
      %5740 = vmatmul.mubr.bf16.gmra.mrb[0].mxu0 %v5612
      %v5741 = vpop.f32.mrb[0].mxu0
      %v5742 = vadd.f32 0.0, %v5741
      %v5743 = vpop.f32.mrb[0].mxu0
      %v5744 = vpop.f32.mrb[0].mxu0
      %v5745 = vadd.f32 0.0, %v5744
      %v5746 = vpop.f32.mrb[0].mxu0
      %5747 = vmatprep.mubr.bf16.mxu0 0
      %5748 = vmatmul.mubr.bf16.gmra.mrb[0].mxu0 %v5615
      %v5749 = vpop.f32.mrb[0].mxu0
      %v5750 = vadd.f32 0.0, %v5749
      %v5751 = vpop.f32.mrb[0].mxu0
      %v5752 = vpop.f32.mrb[0].mxu0
      %v5753 = vadd.f32 0.0, %v5752
      %v5754 = vpop.f32.mrb[0].mxu0
      %5755 = vmatprep.mubr.bf16.mxu0 0
      %5756 = vmatmul.mubr.bf16.gmra.mrb[0].mxu0 %v5618
      %v5757 = vpop.f32.mrb[0].mxu0
      %v5758 = vadd.f32 0.0, %v5757
      %v5759 = vpop.f32.mrb[0].mxu0
      %v5760 = vpop.f32.mrb[0].mxu0
      %v5761 = vadd.f32 0.0, %v5760
      %v5762 = vpop.f32.mrb[0].mxu0
      %5763 = vmatprep.mubr.bf16.mxu0 0
      %5764 = vmatmul.mubr.bf16.gmra.mrb[0].mxu0 %v5621
      %v5765 = vpop.f32.mrb[0].mxu0
      %v5766 = vadd.f32 0.0, %v5765
      %v5767 = vpop.f32.mrb[0].mxu0
      %v5768 = vpop.f32.mrb[0].mxu0
      %v5769 = vadd.f32 0.0, %v5768
      %v5770 = vpop.f32.mrb[0].mxu0
      %5771 = vmatprep.mubr.bf16.mxu0 0
      %5772 = vmatmul.mubr.bf16.gmra.mrb[0].mxu0 %v5624
      %v5773 = vpop.f32.mrb[0].mxu0
      %v5774 = vadd.f32 0.0, %v5773
      %v5775 = vpop.f32.mrb[0].mxu0
      %v5776 = vpop.f32.mrb[0].mxu0
      %v5777 = vadd.f32 0.0, %v5776
      %v5778 = vpop.f32.mrb[0].mxu0
      %5779 = vmatprep.mubr.bf16.mxu0 0
      %5780 = vmatmul.mubr.bf16.gmra.mrb[0].mxu0 %v5627
      %v5781 = vpop.f32.mrb[0].mxu0
      %v5782 = vadd.f32 0.0, %v5781
      %v5783 = vpop.f32.mrb[0].mxu0
      %v5784 = vpop.f32.mrb[0].mxu0
      %v5785 = vadd.f32 0.0, %v5784
      %v5786 = vpop.f32.mrb[0].mxu0
      %5787 = vmatprep.mubr.bf16.mxu0 0
      %5788 = vmatmul.mubr.bf16.gmra.mrb[0].mxu0 %v5630
      %v5789 = vpop.f32.mrb[0].mxu0
      %v5790 = vadd.f32 0.0, %v5789
      %v5791 = vpop.f32.mrb[0].mxu0
      %v5792 = vpop.f32.mrb[0].mxu0
      %v5793 = vadd.f32 0.0, %v5792
      %v5794 = vpop.f32.mrb[0].mxu0
      %5795 = vmatprep.mubr.bf16.mxu0 0
      %5796 = vmatmul.mubr.bf16.gmra.mrb[0].mxu0 %v5633
      %v5797 = vpop.f32.mrb[0].mxu0
      %v5798 = vadd.f32 0.0, %v5797
      %v5799 = vpop.f32.mrb[0].mxu0
      %v5800 = vpop.f32.mrb[0].mxu0
      %v5801 = vpop.f32.mrb[0].mxu0
      %5802 = vdwg.mxu0
      %v5803 = vadd.f32 %v5517, %v5670
      %v5804 = vadd.f32 %v5518, %v5673
      %v5805 = vadd.f32 %v5519, %v5678
      %v5806 = vadd.f32 %v5520, %v5681
      %v5807 = vadd.f32 %v5521, %v5686
      %v5808 = vadd.f32 %v5522, %v5689
      %v5809 = vadd.f32 %v5523, %v5694
      %v5810 = vadd.f32 %v5524, %v5697
      %v5811 = vadd.f32 %v5525, %v5702
      %v5812 = vadd.f32 %v5526, %v5705
      %v5813 = vadd.f32 %v5527, %v5710
      %v5814 = vadd.f32 %v5528, %v5713
      %v5815 = vadd.f32 %v5529, %v5718
      %v5816 = vadd.f32 %v5530, %v5721
      %v5817 = vadd.f32 %v5531, %v5726
      %v5818 = vadd.f32 %v5532, %v5729
      %v5819 = vadd.f32 %v5533, %v5734
      %v5820 = vadd.f32 %v5534, %v5737
      %v5821 = vadd.f32 %v5535, %v5742
      %v5822 = vadd.f32 %v5536, %v5745
      %v5823 = vadd.f32 %v5537, %v5750
      %v5824 = vadd.f32 %v5538, %v5753
      %v5825 = vadd.f32 %v5539, %v5758
      %v5826 = vadd.f32 %v5540, %v5761
      %v5827 = vadd.f32 %v5541, %v5766
      %v5828 = vadd.f32 %v5542, %v5769
      %v5829 = vadd.f32 %v5543, %v5774
      %v5830 = vadd.f32 %v5544, %v5777
      %v5831 = vadd.f32 %v5545, %v5782
      %v5832 = vadd.f32 %v5546, %v5785
      %v5833 = vadd.f32 %v5547, %v5790
      %v5834 = vadd.f32 %v5548, %v5793
      %v5835 = vadd.f32 %v5549, %v5798
      %v5836 = vld [vmem:[#allocation4 + $0x1c] sm:$0xf]
      %v5837 = vld [vmem:[#allocation4 + $0x20] sm:$0xf]
      %v5838 = vld [vmem:[#allocation4 + $0x24] sm:$0xf]
      %v5839 = vld [vmem:[#allocation4 + $0x28] sm:$0xf]
      %v5840 = vld [vmem:[#allocation4 + $0x2c] sm:$0xf]
      %v5841 = vld [vmem:[#allocation4 + $0x30] sm:$0xf]
      %v5842 = vld [vmem:[#allocation4 + $0x34] sm:$0xf]
      %v5843 = vld [vmem:[#allocation4 + $0x38] sm:$0xf]
      %v5844 = vld [vmem:[#allocation4 + $0x3c] sm:$0xf]
      %v5845 = vld [vmem:[#allocation4 + $0x40] sm:$0xf]
      %v5846 = vld [vmem:[#allocation4 + $0x44] sm:$0xf]
      %v5847 = vld [vmem:[#allocation4 + $0x48] sm:$0xf]
      %v5848 = vld [vmem:[#allocation4 + $0x4c] sm:$0xf]
      %v5849 = vld [vmem:[#allocation4 + $0x50] sm:$0xf]
      %v5850 = vld [vmem:[#allocation4 + $0x54] sm:$0xf]
      %v5851 = vld [vmem:[#allocation4 + $0x58] sm:$0xf]
      %v5852 = vld [vmem:[#allocation4 + $0x5c] sm:$0xf]
      %v5853 = vld [vmem:[#allocation4 + $0x60] sm:$0xf]
      %v5854 = vld [vmem:[#allocation4 + $0x64] sm:$0xf]
      %v5855 = vld [vmem:[#allocation4 + $0x68] sm:$0xf]
      %v5856 = vld [vmem:[#allocation4 + $0x6c] sm:$0xf]
      %v5857 = vld [vmem:[#allocation4 + $0x70] sm:$0xf]
      %v5858 = vld [vmem:[#allocation4 + $0x74] sm:$0xf]
      %v5859 = vld [vmem:[#allocation4 + $0x78] sm:$0xf]
      %v5860 = vld [vmem:[#allocation4 + $0x7c] sm:$0xf]
      %v5861 = vld [vmem:[#allocation4 + $0x80] sm:$0xf]
      %v5862 = vld [vmem:[#allocation4 + $0x84] sm:$0xf]
      %v5863 = vld [vmem:[#allocation4 + $0x88] sm:$0xf]
      %v5864 = vld [vmem:[#allocation4 + $0x8c] sm:$0xf]
      %v5865 = vld [vmem:[#allocation4 + $0x90] sm:$0xf]
      %v5866 = vld [vmem:[#allocation4 + $0x94] sm:$0xf]
      %v5867 = vld [vmem:[#allocation4 + $0x98] sm:$0xf]
      %v5868 = vld [vmem:[#allocation4 + $0x9c] sm:$0x7]
      %s5869 = scalar_lea.vmem %s4, 160
      %v5870 = vld [vmem:[%s5869] sm:$0xf]
      %v5871 = vld [vmem:[%s5869 + $0x4] sm:$0xf]
      %v5872 = vld [vmem:[%s5869 + $0x8] sm:$0xf]
      %v5873 = vld [vmem:[%s5869 + $0xc] sm:$0xf]
      %v5907 = vunpack.c.l.b16 %v5836
      %v5908 = vunpack.c.l.b16 %v5837
      %v5909 = vunpack.c.l.b16 %v5838
      %v5910 = vunpack.c.l.b16 %v5839
      %v5911 = vunpack.c.l.b16 %v5840
      %v5912 = vunpack.c.l.b16 %v5841
      %v5913 = vunpack.c.l.b16 %v5842
      %v5914 = vunpack.c.l.b16 %v5843
      %v5915 = vunpack.c.l.b16 %v5844
      %v5916 = vunpack.c.l.b16 %v5845
      %v5917 = vunpack.c.l.b16 %v5846
      %v5918 = vunpack.c.l.b16 %v5847
      %v5919 = vunpack.c.l.b16 %v5848
      %v5920 = vunpack.c.l.b16 %v5849
      %v5921 = vunpack.c.l.b16 %v5850
      %v5922 = vunpack.c.l.b16 %v5851
      %v5923 = vunpack.c.l.b16 %v5852
      %v5924 = vunpack.c.l.b16 %v5853
      %v5925 = vunpack.c.l.b16 %v5854
      %v5926 = vunpack.c.l.b16 %v5855
      %v5927 = vunpack.c.l.b16 %v5856
      %v5928 = vunpack.c.l.b16 %v5857
      %v5929 = vunpack.c.l.b16 %v5858
      %v5930 = vunpack.c.l.b16 %v5859
      %v5931 = vunpack.c.l.b16 %v5860
      %v5932 = vunpack.c.l.b16 %v5861
      %v5933 = vunpack.c.l.b16 %v5862
      %v5934 = vunpack.c.l.b16 %v5863
      %v5935 = vunpack.c.l.b16 %v5864
      %v5936 = vunpack.c.l.b16 %v5865
      %v5937 = vunpack.c.l.b16 %v5866
      %v5938 = vunpack.c.l.b16 %v5867
      %v5939 = vunpack.c.l.b16 %v5868
      %v5940 = vpack.c.b16 %v5908, %v5907
      %v5941 = vpack.c.b16 %v5910, %v5909
      %v5942 = vpack.c.b16 %v5912, %v5911
      %v5943 = vpack.c.b16 %v5914, %v5913
      %v5944 = vpack.c.b16 %v5916, %v5915
      %v5945 = vpack.c.b16 %v5918, %v5917
      %v5946 = vpack.c.b16 %v5920, %v5919
      %v5947 = vpack.c.b16 %v5922, %v5921
      %v5948 = vpack.c.b16 %v5924, %v5923
      %v5949 = vpack.c.b16 %v5926, %v5925
      %v5950 = vpack.c.b16 %v5928, %v5927
      %v5951 = vpack.c.b16 %v5930, %v5929
      %v5952 = vpack.c.b16 %v5932, %v5931
      %v5953 = vpack.c.b16 %v5934, %v5933
      %v5954 = vpack.c.b16 %v5936, %v5935
      %v5955 = vpack.c.b16 %v5938, %v5937
      %v5956 = vpack.c.b16 %v5939, %v5939
      %v5961 = vunpack.c.l.b16 %v5870
      %v5962 = vunpack.c.l.b16 %v5871
      %v5963 = vunpack.c.l.b16 %v5872
      %v5964 = vunpack.c.l.b16 %v5873
      %v5965 = vpack.c.b16 %v5962, %v5961
      %v5966 = vpack.c.b16 %v5964, %v5963
      %v5970 = vsel %vm859, %v5940, 0
      %v5973 = vsel %vm859, %v5941, 0
      %v5976 = vsel %vm859, %v5942, 0
      %v5979 = vsel %vm859, %v5943, 0
      %v5982 = vsel %vm859, %v5944, 0
      %v5985 = vsel %vm859, %v5945, 0
      %v5988 = vsel %vm859, %v5946, 0
      %v5991 = vsel %vm859, %v5947, 0
      %v5994 = vsel %vm859, %v5948, 0
      %v5997 = vsel %vm859, %v5949, 0
      %v6000 = vsel %vm859, %v5950, 0
      %v6003 = vsel %vm859, %v5951, 0
      %v6006 = vsel %vm859, %v5952, 0
      %v6009 = vsel %vm859, %v5953, 0
      %v6012 = vsel %vm859, %v5954, 0
      %v6015 = vsel %vm859, %v5955, 0
      %v6018 = vsel %vm859, %v5956, 0
      %6020 = vmatprep.subr.bf16.mxu0 0
      %6021 = vmatpush1.bf16.msra.mxu0 %v5965
      %6022 = vmatprep.subr.bf16.mxu0 0
      %6023 = vmatpush1.bf16.msra.mxu0 %v5966
      %6024 = vmatprep.subr.bf16.mxu0 0
      %6025 = vmatpush1.bf16.msra.mxu0 0
      %6026 = vmatprep.subr.bf16.mxu0 0
      %6027 = vmatpush1.bf16.msra.mxu0 0
      %6028 = vmatprep.subr.bf16.mxu0 0
      %6029 = vmatpush1.bf16.msra.mxu0 0
      %6030 = vmatprep.subr.bf16.mxu0 0
      %6031 = vmatpush1.bf16.msra.mxu0 0
      %6032 = vmatprep.subr.bf16.mxu0 0
      %6033 = vmatpush1.bf16.msra.mxu0 0
      %6034 = vmatprep.subr.bf16.mxu0 0
      %6035 = vmatpush1.bf16.msra.mxu0 0
      %6036 = vmatprep.subr.bf16.mxu0 0
      %6037 = vmatpush1.bf16.msra.mxu0 0
      %6038 = vmatprep.subr.bf16.mxu0 0
      %6039 = vmatpush1.bf16.msra.mxu0 0
      %6040 = vmatprep.subr.bf16.mxu0 0
      %6041 = vmatpush1.bf16.msra.mxu0 0
      %6042 = vmatprep.subr.bf16.mxu0 0
      %6043 = vmatpush1.bf16.msra.mxu0 0
      %6044 = vmatprep.subr.bf16.mxu0 0
      %6045 = vmatpush1.bf16.msra.mxu0 0
      %6046 = vmatprep.subr.bf16.mxu0 0
      %6047 = vmatpush1.bf16.msra.mxu0 0
      %6048 = vmatprep.subr.bf16.mxu0 0
      %6049 = vmatpush1.bf16.msra.mxu0 0
      %6050 = vmatprep.subr.bf16.mxu0 0
      %6051 = vmatpush1.bf16.msra.mxu0 0
      %6052 = vmatprep.mubr.bf16.mxu0 0
      %6053 = vmatmul.mubr.bf16.gmra.mrb[0].mxu0 %v5970
      %v6054 = vpop.f32.mrb[0].mxu0
      %v6055 = vadd.f32 0.0, %v6054
      %v6056 = vpop.f32.mrb[0].mxu0
      %v6057 = vpop.f32.mrb[0].mxu0
      %v6058 = vadd.f32 0.0, %v6057
      %v6059 = vpop.f32.mrb[0].mxu0
      %6060 = vmatprep.mubr.bf16.mxu0 0
      %6061 = vmatmul.mubr.bf16.gmra.mrb[0].mxu0 %v5973
      %v6062 = vpop.f32.mrb[0].mxu0
      %v6063 = vadd.f32 0.0, %v6062
      %v6064 = vpop.f32.mrb[0].mxu0
      %v6065 = vpop.f32.mrb[0].mxu0
      %v6066 = vadd.f32 0.0, %v6065
      %v6067 = vpop.f32.mrb[0].mxu0
      %6068 = vmatprep.mubr.bf16.mxu0 0
      %6069 = vmatmul.mubr.bf16.gmra.mrb[0].mxu0 %v5976
      %v6070 = vpop.f32.mrb[0].mxu0
      %v6071 = vadd.f32 0.0, %v6070
      %v6072 = vpop.f32.mrb[0].mxu0
      %v6073 = vpop.f32.mrb[0].mxu0
      %v6074 = vadd.f32 0.0, %v6073
      %v6075 = vpop.f32.mrb[0].mxu0
      %6076 = vmatprep.mubr.bf16.mxu0 0
      %6077 = vmatmul.mubr.bf16.gmra.mrb[0].mxu0 %v5979
      %v6078 = vpop.f32.mrb[0].mxu0
      %v6079 = vadd.f32 0.0, %v6078
      %v6080 = vpop.f32.mrb[0].mxu0
      %v6081 = vpop.f32.mrb[0].mxu0
      %v6082 = vadd.f32 0.0, %v6081
      %v6083 = vpop.f32.mrb[0].mxu0
      %6084 = vmatprep.mubr.bf16.mxu0 0
      %6085 = vmatmul.mubr.bf16.gmra.mrb[0].mxu0 %v5982
      %v6086 = vpop.f32.mrb[0].mxu0
      %v6087 = vadd.f32 0.0, %v6086
      %v6088 = vpop.f32.mrb[0].mxu0
      %v6089 = vpop.f32.mrb[0].mxu0
      %v6090 = vadd.f32 0.0, %v6089
      %v6091 = vpop.f32.mrb[0].mxu0
      %6092 = vmatprep.mubr.bf16.mxu0 0
      %6093 = vmatmul.mubr.bf16.gmra.mrb[0].mxu0 %v5985
      %v6094 = vpop.f32.mrb[0].mxu0
      %v6095 = vadd.f32 0.0, %v6094
      %v6096 = vpop.f32.mrb[0].mxu0
      %v6097 = vpop.f32.mrb[0].mxu0
      %v6098 = vadd.f32 0.0, %v6097
      %v6099 = vpop.f32.mrb[0].mxu0
      %6100 = vmatprep.mubr.bf16.mxu0 0
      %6101 = vmatmul.mubr.bf16.gmra.mrb[0].mxu0 %v5988
      %v6102 = vpop.f32.mrb[0].mxu0
      %v6103 = vadd.f32 0.0, %v6102
      %v6104 = vpop.f32.mrb[0].mxu0
      %v6105 = vpop.f32.mrb[0].mxu0
      %v6106 = vadd.f32 0.0, %v6105
      %v6107 = vpop.f32.mrb[0].mxu0
      %6108 = vmatprep.mubr.bf16.mxu0 0
      %6109 = vmatmul.mubr.bf16.gmra.mrb[0].mxu0 %v5991
      %v6110 = vpop.f32.mrb[0].mxu0
      %v6111 = vadd.f32 0.0, %v6110
      %v6112 = vpop.f32.mrb[0].mxu0
      %v6113 = vpop.f32.mrb[0].mxu0
      %v6114 = vadd.f32 0.0, %v6113
      %v6115 = vpop.f32.mrb[0].mxu0
      %6116 = vmatprep.mubr.bf16.mxu0 0
      %6117 = vmatmul.mubr.bf16.gmra.mrb[0].mxu0 %v5994
      %v6118 = vpop.f32.mrb[0].mxu0
      %v6119 = vadd.f32 0.0, %v6118
      %v6120 = vpop.f32.mrb[0].mxu0
      %v6121 = vpop.f32.mrb[0].mxu0
      %v6122 = vadd.f32 0.0, %v6121
      %v6123 = vpop.f32.mrb[0].mxu0
      %6124 = vmatprep.mubr.bf16.mxu0 0
      %6125 = vmatmul.mubr.bf16.gmra.mrb[0].mxu0 %v5997
      %v6126 = vpop.f32.mrb[0].mxu0
      %v6127 = vadd.f32 0.0, %v6126
      %v6128 = vpop.f32.mrb[0].mxu0
      %v6129 = vpop.f32.mrb[0].mxu0
      %v6130 = vadd.f32 0.0, %v6129
      %v6131 = vpop.f32.mrb[0].mxu0
      %6132 = vmatprep.mubr.bf16.mxu0 0
      %6133 = vmatmul.mubr.bf16.gmra.mrb[0].mxu0 %v6000
      %v6134 = vpop.f32.mrb[0].mxu0
      %v6135 = vadd.f32 0.0, %v6134
      %v6136 = vpop.f32.mrb[0].mxu0
      %v6137 = vpop.f32.mrb[0].mxu0
      %v6138 = vadd.f32 0.0, %v6137
      %v6139 = vpop.f32.mrb[0].mxu0
      %6140 = vmatprep.mubr.bf16.mxu0 0
      %6141 = vmatmul.mubr.bf16.gmra.mrb[0].mxu0 %v6003
      %v6142 = vpop.f32.mrb[0].mxu0
      %v6143 = vadd.f32 0.0, %v6142
      %v6144 = vpop.f32.mrb[0].mxu0
      %v6145 = vpop.f32.mrb[0].mxu0
      %v6146 = vadd.f32 0.0, %v6145
      %v6147 = vpop.f32.mrb[0].mxu0
      %6148 = vmatprep.mubr.bf16.mxu0 0
      %6149 = vmatmul.mubr.bf16.gmra.mrb[0].mxu0 %v6006
      %v6150 = vpop.f32.mrb[0].mxu0
      %v6151 = vadd.f32 0.0, %v6150
      %v6152 = vpop.f32.mrb[0].mxu0
      %v6153 = vpop.f32.mrb[0].mxu0
      %v6154 = vadd.f32 0.0, %v6153
      %v6155 = vpop.f32.mrb[0].mxu0
      %6156 = vmatprep.mubr.bf16.mxu0 0
      %6157 = vmatmul.mubr.bf16.gmra.mrb[0].mxu0 %v6009
      %v6158 = vpop.f32.mrb[0].mxu0
      %v6159 = vadd.f32 0.0, %v6158
      %v6160 = vpop.f32.mrb[0].mxu0
      %v6161 = vpop.f32.mrb[0].mxu0
      %v6162 = vadd.f32 0.0, %v6161
      %v6163 = vpop.f32.mrb[0].mxu0
      %6164 = vmatprep.mubr.bf16.mxu0 0
      %6165 = vmatmul.mubr.bf16.gmra.mrb[0].mxu0 %v6012
      %v6166 = vpop.f32.mrb[0].mxu0
      %v6167 = vadd.f32 0.0, %v6166
      %v6168 = vpop.f32.mrb[0].mxu0
      %v6169 = vpop.f32.mrb[0].mxu0
      %v6170 = vadd.f32 0.0, %v6169
      %v6171 = vpop.f32.mrb[0].mxu0
      %6172 = vmatprep.mubr.bf16.mxu0 0
      %6173 = vmatmul.mubr.bf16.gmra.mrb[0].mxu0 %v6015
      %v6174 = vpop.f32.mrb[0].mxu0
      %v6175 = vadd.f32 0.0, %v6174
      %v6176 = vpop.f32.mrb[0].mxu0
      %v6177 = vpop.f32.mrb[0].mxu0
      %v6178 = vadd.f32 0.0, %v6177
      %v6179 = vpop.f32.mrb[0].mxu0
      %6180 = vmatprep.mubr.bf16.mxu0 0
      %6181 = vmatmul.mubr.bf16.gmra.mrb[0].mxu0 %v6018
      %v6182 = vpop.f32.mrb[0].mxu0
      %v6183 = vadd.f32 0.0, %v6182
      %v6184 = vpop.f32.mrb[0].mxu0
      %v6185 = vpop.f32.mrb[0].mxu0
      %v6186 = vpop.f32.mrb[0].mxu0
      %6187 = vdwg.mxu0
      %v6188 = vadd.f32 %v5803, %v6055
      %v6189 = vadd.f32 %v5804, %v6058
      %v6190 = vadd.f32 %v5805, %v6063
      %v6191 = vadd.f32 %v5806, %v6066
      %v6192 = vadd.f32 %v5807, %v6071
      %v6193 = vadd.f32 %v5808, %v6074
      %v6194 = vadd.f32 %v5809, %v6079
      %v6195 = vadd.f32 %v5810, %v6082
      %v6196 = vadd.f32 %v5811, %v6087
      %v6197 = vadd.f32 %v5812, %v6090
      %v6198 = vadd.f32 %v5813, %v6095
      %v6199 = vadd.f32 %v5814, %v6098
      %v6200 = vadd.f32 %v5815, %v6103
      %v6201 = vadd.f32 %v5816, %v6106
      %v6202 = vadd.f32 %v5817, %v6111
      %v6203 = vadd.f32 %v5818, %v6114
      %v6204 = vadd.f32 %v5819, %v6119
      %v6205 = vadd.f32 %v5820, %v6122
      %v6206 = vadd.f32 %v5821, %v6127
      %v6207 = vadd.f32 %v5822, %v6130
      %v6208 = vadd.f32 %v5823, %v6135
      %v6209 = vadd.f32 %v5824, %v6138
      %v6210 = vadd.f32 %v5825, %v6143
      %v6211 = vadd.f32 %v5826, %v6146
      %v6212 = vadd.f32 %v5827, %v6151
      %v6213 = vadd.f32 %v5828, %v6154
      %v6214 = vadd.f32 %v5829, %v6159
      %v6215 = vadd.f32 %v5830, %v6162
      %v6216 = vadd.f32 %v5831, %v6167
      %v6217 = vadd.f32 %v5832, %v6170
      %v6218 = vadd.f32 %v5833, %v6175
      %v6219 = vadd.f32 %v5834, %v6178
      %v6220 = vadd.f32 %v5835, %v6183
      %v6221 = vld [vmem:[#allocation4 + $0x9c] sm:$0xf]
      %s6222 = scalar_lea.vmem %s4, 176
      %v6223 = vld [vmem:[%s6222] sm:$0xf]
      %v6224 = vld [vmem:[%s6222 + $0x4] sm:$0xf]
      %v6225 = vld [vmem:[%s6222 + $0x8] sm:$0xf]
      %v6226 = vld [vmem:[%s6222 + $0xc] sm:$0xf]
      %v6228 = vunpack.c.l.b16 %v6221
      %v6229 = vpack.c.b16 %v6228, %v6228
      %v6230 = vshrl.u32 %v5940, 16
      %v6232 = vshll.u32 %v5940, 16
      %v6234 = vrot.slane %v6232, 1
      %v6235 = vor.u32 %v6230, %v6234
      %v6236 = vshll.u32 %v5941, 16
      %v6238 = vrot.slane %v6236, 1
      %v6239 = vsel %vm2506, %v6235, %v6238
      %v6240 = vshrl.u32 %v5941, 16
      %v6242 = vor.u32 %v6240, %v6238
      %v6243 = vshll.u32 %v5942, 16
      %v6245 = vrot.slane %v6243, 1
      %v6246 = vsel %vm2506, %v6242, %v6245
      %v6247 = vshrl.u32 %v5942, 16
      %v6249 = vor.u32 %v6247, %v6245
      %v6250 = vshll.u32 %v5943, 16
      %v6252 = vrot.slane %v6250, 1
      %v6253 = vsel %vm2506, %v6249, %v6252
      %v6254 = vshrl.u32 %v5943, 16
      %v6256 = vor.u32 %v6254, %v6252
      %v6257 = vshll.u32 %v5944, 16
      %v6259 = vrot.slane %v6257, 1
      %v6260 = vsel %vm2506, %v6256, %v6259
      %v6261 = vshrl.u32 %v5944, 16
      %v6263 = vor.u32 %v6261, %v6259
      %v6264 = vshll.u32 %v5945, 16
      %v6266 = vrot.slane %v6264, 1
      %v6267 = vsel %vm2506, %v6263, %v6266
      %v6268 = vshrl.u32 %v5945, 16
      %v6270 = vor.u32 %v6268, %v6266
      %v6271 = vshll.u32 %v5946, 16
      %v6273 = vrot.slane %v6271, 1
      %v6274 = vsel %vm2506, %v6270, %v6273
      %v6275 = vshrl.u32 %v5946, 16
      %v6277 = vor.u32 %v6275, %v6273
      %v6278 = vshll.u32 %v5947, 16
      %v6280 = vrot.slane %v6278, 1
      %v6281 = vsel %vm2506, %v6277, %v6280
      %v6282 = vshrl.u32 %v5947, 16
      %v6284 = vor.u32 %v6282, %v6280
      %v6285 = vshll.u32 %v5948, 16
      %v6287 = vrot.slane %v6285, 1
      %v6288 = vsel %vm2506, %v6284, %v6287
      %v6289 = vshrl.u32 %v5948, 16
      %v6291 = vor.u32 %v6289, %v6287
      %v6292 = vshll.u32 %v5949, 16
      %v6294 = vrot.slane %v6292, 1
      %v6295 = vsel %vm2506, %v6291, %v6294
      %v6296 = vshrl.u32 %v5949, 16
      %v6298 = vor.u32 %v6296, %v6294
      %v6299 = vshll.u32 %v5950, 16
      %v6301 = vrot.slane %v6299, 1
      %v6302 = vsel %vm2506, %v6298, %v6301
      %v6303 = vshrl.u32 %v5950, 16
      %v6305 = vor.u32 %v6303, %v6301
      %v6306 = vshll.u32 %v5951, 16
      %v6308 = vrot.slane %v6306, 1
      %v6309 = vsel %vm2506, %v6305, %v6308
      %v6310 = vshrl.u32 %v5951, 16
      %v6312 = vor.u32 %v6310, %v6308
      %v6313 = vshll.u32 %v5952, 16
      %v6315 = vrot.slane %v6313, 1
      %v6316 = vsel %vm2506, %v6312, %v6315
      %v6317 = vshrl.u32 %v5952, 16
      %v6319 = vor.u32 %v6317, %v6315
      %v6320 = vshll.u32 %v5953, 16
      %v6322 = vrot.slane %v6320, 1
      %v6323 = vsel %vm2506, %v6319, %v6322
      %v6324 = vshrl.u32 %v5953, 16
      %v6326 = vor.u32 %v6324, %v6322
      %v6327 = vshll.u32 %v5954, 16
      %v6329 = vrot.slane %v6327, 1
      %v6330 = vsel %vm2506, %v6326, %v6329
      %v6331 = vshrl.u32 %v5954, 16
      %v6333 = vor.u32 %v6331, %v6329
      %v6334 = vshll.u32 %v5955, 16
      %v6336 = vrot.slane %v6334, 1
      %v6337 = vsel %vm2506, %v6333, %v6336
      %v6338 = vshrl.u32 %v5955, 16
      %v6340 = vor.u32 %v6338, %v6336
      %v6342 = vshll.u32 %v6229, 16
      %v6344 = vrot.slane %v6342, 1
      %v6345 = vsel %vm2506, %v6340, %v6344
      %v6346 = vshrl.u32 %v6229, 16
      %v6348 = vor.u32 %v6346, %v6344
      %v6353 = vunpack.c.l.b16 %v6223
      %v6354 = vunpack.c.l.b16 %v6224
      %v6355 = vunpack.c.l.b16 %v6225
      %v6356 = vunpack.c.l.b16 %v6226
      %v6357 = vpack.c.b16 %v6354, %v6353
      %v6358 = vpack.c.b16 %v6356, %v6355
      %v6362 = vsel %vm859, %v6239, 0
      %v6365 = vsel %vm859, %v6246, 0
      %v6368 = vsel %vm859, %v6253, 0
      %v6371 = vsel %vm859, %v6260, 0
      %v6374 = vsel %vm859, %v6267, 0
      %v6377 = vsel %vm859, %v6274, 0
      %v6380 = vsel %vm859, %v6281, 0
      %v6383 = vsel %vm859, %v6288, 0
      %v6386 = vsel %vm859, %v6295, 0
      %v6389 = vsel %vm859, %v6302, 0
      %v6392 = vsel %vm859, %v6309, 0
      %v6395 = vsel %vm859, %v6316, 0
      %v6398 = vsel %vm859, %v6323, 0
      %v6401 = vsel %vm859, %v6330, 0
      %v6404 = vsel %vm859, %v6337, 0
      %v6407 = vsel %vm859, %v6345, 0
      %v6410 = vsel %vm859, %v6348, 0
      %6412 = vmatprep.subr.bf16.mxu0 0
      %6413 = vmatpush1.bf16.msra.mxu0 %v6357
      %6414 = vmatprep.subr.bf16.mxu0 0
      %6415 = vmatpush1.bf16.msra.mxu0 %v6358
      %6416 = vmatprep.subr.bf16.mxu0 0
      %6417 = vmatpush1.bf16.msra.mxu0 0
      %6418 = vmatprep.subr.bf16.mxu0 0
      %6419 = vmatpush1.bf16.msra.mxu0 0
      %6420 = vmatprep.subr.bf16.mxu0 0
      %6421 = vmatpush1.bf16.msra.mxu0 0
      %6422 = vmatprep.subr.bf16.mxu0 0
      %6423 = vmatpush1.bf16.msra.mxu0 0
      %6424 = vmatprep.subr.bf16.mxu0 0
      %6425 = vmatpush1.bf16.msra.mxu0 0
      %6426 = vmatprep.subr.bf16.mxu0 0
      %6427 = vmatpush1.bf16.msra.mxu0 0
      %6428 = vmatprep.subr.bf16.mxu0 0
      %6429 = vmatpush1.bf16.msra.mxu0 0
      %6430 = vmatprep.subr.bf16.mxu0 0
      %6431 = vmatpush1.bf16.msra.mxu0 0
      %6432 = vmatprep.subr.bf16.mxu0 0
      %6433 = vmatpush1.bf16.msra.mxu0 0
      %6434 = vmatprep.subr.bf16.mxu0 0
      %6435 = vmatpush1.bf16.msra.mxu0 0
      %6436 = vmatprep.subr.bf16.mxu0 0
      %6437 = vmatpush1.bf16.msra.mxu0 0
      %6438 = vmatprep.subr.bf16.mxu0 0
      %6439 = vmatpush1.bf16.msra.mxu0 0
      %6440 = vmatprep.subr.bf16.mxu0 0
      %6441 = vmatpush1.bf16.msra.mxu0 0
      %6442 = vmatprep.subr.bf16.mxu0 0
      %6443 = vmatpush1.bf16.msra.mxu0 0
      %6444 = vmatprep.mubr.bf16.mxu0 0
      %6445 = vmatmul.mubr.bf16.gmra.mrb[0].mxu0 %v6362
      %v6446 = vpop.f32.mrb[0].mxu0
      %v6447 = vadd.f32 0.0, %v6446
      %v6448 = vpop.f32.mrb[0].mxu0
      %v6449 = vpop.f32.mrb[0].mxu0
      %v6450 = vadd.f32 0.0, %v6449
      %v6451 = vpop.f32.mrb[0].mxu0
      %6452 = vmatprep.mubr.bf16.mxu0 0
      %6453 = vmatmul.mubr.bf16.gmra.mrb[0].mxu0 %v6365
      %v6454 = vpop.f32.mrb[0].mxu0
      %v6455 = vadd.f32 0.0, %v6454
      %v6456 = vpop.f32.mrb[0].mxu0
      %v6457 = vpop.f32.mrb[0].mxu0
      %v6458 = vadd.f32 0.0, %v6457
      %v6459 = vpop.f32.mrb[0].mxu0
      %6460 = vmatprep.mubr.bf16.mxu0 0
      %6461 = vmatmul.mubr.bf16.gmra.mrb[0].mxu0 %v6368
      %v6462 = vpop.f32.mrb[0].mxu0
      %v6463 = vadd.f32 0.0, %v6462
      %v6464 = vpop.f32.mrb[0].mxu0
      %v6465 = vpop.f32.mrb[0].mxu0
      %v6466 = vadd.f32 0.0, %v6465
      %v6467 = vpop.f32.mrb[0].mxu0
      %6468 = vmatprep.mubr.bf16.mxu0 0
      %6469 = vmatmul.mubr.bf16.gmra.mrb[0].mxu0 %v6371
      %v6470 = vpop.f32.mrb[0].mxu0
      %v6471 = vadd.f32 0.0, %v6470
      %v6472 = vpop.f32.mrb[0].mxu0
      %v6473 = vpop.f32.mrb[0].mxu0
      %v6474 = vadd.f32 0.0, %v6473
      %v6475 = vpop.f32.mrb[0].mxu0
      %6476 = vmatprep.mubr.bf16.mxu0 0
      %6477 = vmatmul.mubr.bf16.gmra.mrb[0].mxu0 %v6374
      %v6478 = vpop.f32.mrb[0].mxu0
      %v6479 = vadd.f32 0.0, %v6478
      %v6480 = vpop.f32.mrb[0].mxu0
      %v6481 = vpop.f32.mrb[0].mxu0
      %v6482 = vadd.f32 0.0, %v6481
      %v6483 = vpop.f32.mrb[0].mxu0
      %6484 = vmatprep.mubr.bf16.mxu0 0
      %6485 = vmatmul.mubr.bf16.gmra.mrb[0].mxu0 %v6377
      %v6486 = vpop.f32.mrb[0].mxu0
      %v6487 = vadd.f32 0.0, %v6486
      %v6488 = vpop.f32.mrb[0].mxu0
      %v6489 = vpop.f32.mrb[0].mxu0
      %v6490 = vadd.f32 0.0, %v6489
      %v6491 = vpop.f32.mrb[0].mxu0
      %6492 = vmatprep.mubr.bf16.mxu0 0
      %6493 = vmatmul.mubr.bf16.gmra.mrb[0].mxu0 %v6380
      %v6494 = vpop.f32.mrb[0].mxu0
      %v6495 = vadd.f32 0.0, %v6494
      %v6496 = vpop.f32.mrb[0].mxu0
      %v6497 = vpop.f32.mrb[0].mxu0
      %v6498 = vadd.f32 0.0, %v6497
      %v6499 = vpop.f32.mrb[0].mxu0
      %6500 = vmatprep.mubr.bf16.mxu0 0
      %6501 = vmatmul.mubr.bf16.gmra.mrb[0].mxu0 %v6383
      %v6502 = vpop.f32.mrb[0].mxu0
      %v6503 = vadd.f32 0.0, %v6502
      %v6504 = vpop.f32.mrb[0].mxu0
      %v6505 = vpop.f32.mrb[0].mxu0
      %v6506 = vadd.f32 0.0, %v6505
      %v6507 = vpop.f32.mrb[0].mxu0
      %6508 = vmatprep.mubr.bf16.mxu0 0
      %6509 = vmatmul.mubr.bf16.gmra.mrb[0].mxu0 %v6386
      %v6510 = vpop.f32.mrb[0].mxu0
      %v6511 = vadd.f32 0.0, %v6510
      %v6512 = vpop.f32.mrb[0].mxu0
      %v6513 = vpop.f32.mrb[0].mxu0
      %v6514 = vadd.f32 0.0, %v6513
      %v6515 = vpop.f32.mrb[0].mxu0
      %6516 = vmatprep.mubr.bf16.mxu0 0
      %6517 = vmatmul.mubr.bf16.gmra.mrb[0].mxu0 %v6389
      %v6518 = vpop.f32.mrb[0].mxu0
      %v6519 = vadd.f32 0.0, %v6518
      %v6520 = vpop.f32.mrb[0].mxu0
      %v6521 = vpop.f32.mrb[0].mxu0
      %v6522 = vadd.f32 0.0, %v6521
      %v6523 = vpop.f32.mrb[0].mxu0
      %6524 = vmatprep.mubr.bf16.mxu0 0
      %6525 = vmatmul.mubr.bf16.gmra.mrb[0].mxu0 %v6392
      %v6526 = vpop.f32.mrb[0].mxu0
      %v6527 = vadd.f32 0.0, %v6526
      %v6528 = vpop.f32.mrb[0].mxu0
      %v6529 = vpop.f32.mrb[0].mxu0
      %v6530 = vadd.f32 0.0, %v6529
      %v6531 = vpop.f32.mrb[0].mxu0
      %6532 = vmatprep.mubr.bf16.mxu0 0
      %6533 = vmatmul.mubr.bf16.gmra.mrb[0].mxu0 %v6395
      %v6534 = vpop.f32.mrb[0].mxu0
      %v6535 = vadd.f32 0.0, %v6534
      %v6536 = vpop.f32.mrb[0].mxu0
      %v6537 = vpop.f32.mrb[0].mxu0
      %v6538 = vadd.f32 0.0, %v6537
      %v6539 = vpop.f32.mrb[0].mxu0
      %6540 = vmatprep.mubr.bf16.mxu0 0
      %6541 = vmatmul.mubr.bf16.gmra.mrb[0].mxu0 %v6398
      %v6542 = vpop.f32.mrb[0].mxu0
      %v6543 = vadd.f32 0.0, %v6542
      %v6544 = vpop.f32.mrb[0].mxu0
      %v6545 = vpop.f32.mrb[0].mxu0
      %v6546 = vadd.f32 0.0, %v6545
      %v6547 = vpop.f32.mrb[0].mxu0
      %6548 = vmatprep.mubr.bf16.mxu0 0
      %6549 = vmatmul.mubr.bf16.gmra.mrb[0].mxu0 %v6401
      %v6550 = vpop.f32.mrb[0].mxu0
      %v6551 = vadd.f32 0.0, %v6550
      %v6552 = vpop.f32.mrb[0].mxu0
      %v6553 = vpop.f32.mrb[0].mxu0
      %v6554 = vadd.f32 0.0, %v6553
      %v6555 = vpop.f32.mrb[0].mxu0
      %6556 = vmatprep.mubr.bf16.mxu0 0
      %6557 = vmatmul.mubr.bf16.gmra.mrb[0].mxu0 %v6404
      %v6558 = vpop.f32.mrb[0].mxu0
      %v6559 = vadd.f32 0.0, %v6558
      %v6560 = vpop.f32.mrb[0].mxu0
      %v6561 = vpop.f32.mrb[0].mxu0
      %v6562 = vadd.f32 0.0, %v6561
      %v6563 = vpop.f32.mrb[0].mxu0
      %6564 = vmatprep.mubr.bf16.mxu0 0
      %6565 = vmatmul.mubr.bf16.gmra.mrb[0].mxu0 %v6407
      %v6566 = vpop.f32.mrb[0].mxu0
      %v6567 = vadd.f32 0.0, %v6566
      %v6568 = vpop.f32.mrb[0].mxu0
      %v6569 = vpop.f32.mrb[0].mxu0
      %v6570 = vadd.f32 0.0, %v6569
      %v6571 = vpop.f32.mrb[0].mxu0
      %6572 = vmatprep.mubr.bf16.mxu0 0
      %6573 = vmatmul.mubr.bf16.gmra.mrb[0].mxu0 %v6410
      %v6574 = vpop.f32.mrb[0].mxu0
      %v6575 = vadd.f32 0.0, %v6574
      %v6576 = vpop.f32.mrb[0].mxu0
      %v6577 = vpop.f32.mrb[0].mxu0
      %v6578 = vpop.f32.mrb[0].mxu0
      %6579 = vdwg.mxu0
      %v6580 = vadd.f32 %v6188, %v6447
      %v6581 = vadd.f32 %v6189, %v6450
      %v6582 = vadd.f32 %v6190, %v6455
      %v6583 = vadd.f32 %v6191, %v6458
      %v6584 = vadd.f32 %v6192, %v6463
      %v6585 = vadd.f32 %v6193, %v6466
      %v6586 = vadd.f32 %v6194, %v6471
      %v6587 = vadd.f32 %v6195, %v6474
      %v6588 = vadd.f32 %v6196, %v6479
      %v6589 = vadd.f32 %v6197, %v6482
      %v6590 = vadd.f32 %v6198, %v6487
      %v6591 = vadd.f32 %v6199, %v6490
      %v6592 = vadd.f32 %v6200, %v6495
      %v6593 = vadd.f32 %v6201, %v6498
      %v6594 = vadd.f32 %v6202, %v6503
      %v6595 = vadd.f32 %v6203, %v6506
      %v6596 = vadd.f32 %v6204, %v6511
      %v6597 = vadd.f32 %v6205, %v6514
      %v6598 = vadd.f32 %v6206, %v6519
      %v6599 = vadd.f32 %v6207, %v6522
      %v6600 = vadd.f32 %v6208, %v6527
      %v6601 = vadd.f32 %v6209, %v6530
      %v6602 = vadd.f32 %v6210, %v6535
      %v6603 = vadd.f32 %v6211, %v6538
      %v6604 = vadd.f32 %v6212, %v6543
      %v6605 = vadd.f32 %v6213, %v6546
      %v6606 = vadd.f32 %v6214, %v6551
      %v6607 = vadd.f32 %v6215, %v6554
      %v6608 = vadd.f32 %v6216, %v6559
      %v6609 = vadd.f32 %v6217, %v6562
      %v6610 = vadd.f32 %v6218, %v6567
      %v6611 = vadd.f32 %v6219, %v6570
      %v6612 = vadd.f32 %v6220, %v6575
      %v6613 = vld [vmem:[#allocation4 + $0x1c] sm:$0xe]
      %s6614 = scalar_lea.vmem %s4, 192
      %v6615 = vld [vmem:[%s6614] sm:$0xf]
      %v6616 = vld [vmem:[%s6614 + $0x4] sm:$0xf]
      %v6617 = vld [vmem:[%s6614 + $0x8] sm:$0xf]
      %v6618 = vld [vmem:[%s6614 + $0xc] sm:$0xf]
      %v6620 = vunpack.c.l.b16 %v6613
      %v6621 = vpack.c.b16 %v5908, %v6620
      %v6622 = vrot.slane %v6621, 1
      %v6623 = vrot.slane %v5941, 1
      %v6624 = vsel %vm2899, %v6622, %v6623
      %v6625 = vrot.slane %v5942, 1
      %v6626 = vsel %vm2899, %v6623, %v6625
      %v6627 = vrot.slane %v5943, 1
      %v6628 = vsel %vm2899, %v6625, %v6627
      %v6629 = vrot.slane %v5944, 1
      %v6630 = vsel %vm2899, %v6627, %v6629
      %v6631 = vrot.slane %v5945, 1
      %v6632 = vsel %vm2899, %v6629, %v6631
      %v6633 = vrot.slane %v5946, 1
      %v6634 = vsel %vm2899, %v6631, %v6633
      %v6635 = vrot.slane %v5947, 1
      %v6636 = vsel %vm2899, %v6633, %v6635
      %v6637 = vrot.slane %v5948, 1
      %v6638 = vsel %vm2899, %v6635, %v6637
      %v6639 = vrot.slane %v5949, 1
      %v6640 = vsel %vm2899, %v6637, %v6639
      %v6641 = vrot.slane %v5950, 1
      %v6642 = vsel %vm2899, %v6639, %v6641
      %v6643 = vrot.slane %v5951, 1
      %v6644 = vsel %vm2899, %v6641, %v6643
      %v6645 = vrot.slane %v5952, 1
      %v6646 = vsel %vm2899, %v6643, %v6645
      %v6647 = vrot.slane %v5953, 1
      %v6648 = vsel %vm2899, %v6645, %v6647
      %v6649 = vrot.slane %v5954, 1
      %v6650 = vsel %vm2899, %v6647, %v6649
      %v6651 = vrot.slane %v5955, 1
      %v6652 = vsel %vm2899, %v6649, %v6651
      %v6653 = vrot.slane %v6229, 1
      %v6654 = vsel %vm2899, %v6651, %v6653
      %v6659 = vunpack.c.l.b16 %v6615
      %v6660 = vunpack.c.l.b16 %v6616
      %v6661 = vunpack.c.l.b16 %v6617
      %v6662 = vunpack.c.l.b16 %v6618
      %v6663 = vpack.c.b16 %v6660, %v6659
      %v6664 = vpack.c.b16 %v6662, %v6661
      %v6668 = vsel %vm859, %v6624, 0
      %v6671 = vsel %vm859, %v6626, 0
      %v6674 = vsel %vm859, %v6628, 0
      %v6677 = vsel %vm859, %v6630, 0
      %v6680 = vsel %vm859, %v6632, 0
      %v6683 = vsel %vm859, %v6634, 0
      %v6686 = vsel %vm859, %v6636, 0
      %v6689 = vsel %vm859, %v6638, 0
      %v6692 = vsel %vm859, %v6640, 0
      %v6695 = vsel %vm859, %v6642, 0
      %v6698 = vsel %vm859, %v6644, 0
      %v6701 = vsel %vm859, %v6646, 0
      %v6704 = vsel %vm859, %v6648, 0
      %v6707 = vsel %vm859, %v6650, 0
      %v6710 = vsel %vm859, %v6652, 0
      %v6713 = vsel %vm859, %v6654, 0
      %v6716 = vsel %vm859, %v6653, 0
      %6718 = vmatprep.subr.bf16.mxu0 0
      %6719 = vmatpush1.bf16.msra.mxu0 %v6663
      %6720 = vmatprep.subr.bf16.mxu0 0
      %6721 = vmatpush1.bf16.msra.mxu0 %v6664
      %6722 = vmatprep.subr.bf16.mxu0 0
      %6723 = vmatpush1.bf16.msra.mxu0 0
      %6724 = vmatprep.subr.bf16.mxu0 0
      %6725 = vmatpush1.bf16.msra.mxu0 0
      %6726 = vmatprep.subr.bf16.mxu0 0
      %6727 = vmatpush1.bf16.msra.mxu0 0
      %6728 = vmatprep.subr.bf16.mxu0 0
      %6729 = vmatpush1.bf16.msra.mxu0 0
      %6730 = vmatprep.subr.bf16.mxu0 0
      %6731 = vmatpush1.bf16.msra.mxu0 0
      %6732 = vmatprep.subr.bf16.mxu0 0
      %6733 = vmatpush1.bf16.msra.mxu0 0
      %6734 = vmatprep.subr.bf16.mxu0 0
      %6735 = vmatpush1.bf16.msra.mxu0 0
      %6736 = vmatprep.subr.bf16.mxu0 0
      %6737 = vmatpush1.bf16.msra.mxu0 0
      %6738 = vmatprep.subr.bf16.mxu0 0
      %6739 = vmatpush1.bf16.msra.mxu0 0
      %6740 = vmatprep.subr.bf16.mxu0 0
      %6741 = vmatpush1.bf16.msra.mxu0 0
      %6742 = vmatprep.subr.bf16.mxu0 0
      %6743 = vmatpush1.bf16.msra.mxu0 0
      %6744 = vmatprep.subr.bf16.mxu0 0
      %6745 = vmatpush1.bf16.msra.mxu0 0
      %6746 = vmatprep.subr.bf16.mxu0 0
      %6747 = vmatpush1.bf16.msra.mxu0 0
      %6748 = vmatprep.subr.bf16.mxu0 0
      %6749 = vmatpush1.bf16.msra.mxu0 0
      %6750 = vmatprep.mubr.bf16.mxu0 0
      %6751 = vmatmul.mubr.bf16.gmra.mrb[0].mxu0 %v6668
      %v6752 = vpop.f32.mrb[0].mxu0
      %v6753 = vadd.f32 0.0, %v6752
      %v6754 = vpop.f32.mrb[0].mxu0
      %v6755 = vpop.f32.mrb[0].mxu0
      %v6756 = vadd.f32 0.0, %v6755
      %v6757 = vpop.f32.mrb[0].mxu0
      %6758 = vmatprep.mubr.bf16.mxu0 0
      %6759 = vmatmul.mubr.bf16.gmra.mrb[0].mxu0 %v6671
      %v6760 = vpop.f32.mrb[0].mxu0
      %v6761 = vadd.f32 0.0, %v6760
      %v6762 = vpop.f32.mrb[0].mxu0
      %v6763 = vpop.f32.mrb[0].mxu0
      %v6764 = vadd.f32 0.0, %v6763
      %v6765 = vpop.f32.mrb[0].mxu0
      %6766 = vmatprep.mubr.bf16.mxu0 0
      %6767 = vmatmul.mubr.bf16.gmra.mrb[0].mxu0 %v6674
      %v6768 = vpop.f32.mrb[0].mxu0
      %v6769 = vadd.f32 0.0, %v6768
      %v6770 = vpop.f32.mrb[0].mxu0
      %v6771 = vpop.f32.mrb[0].mxu0
      %v6772 = vadd.f32 0.0, %v6771
      %v6773 = vpop.f32.mrb[0].mxu0
      %6774 = vmatprep.mubr.bf16.mxu0 0
      %6775 = vmatmul.mubr.bf16.gmra.mrb[0].mxu0 %v6677
      %v6776 = vpop.f32.mrb[0].mxu0
      %v6777 = vadd.f32 0.0, %v6776
      %v6778 = vpop.f32.mrb[0].mxu0
      %v6779 = vpop.f32.mrb[0].mxu0
      %v6780 = vadd.f32 0.0, %v6779
      %v6781 = vpop.f32.mrb[0].mxu0
      %6782 = vmatprep.mubr.bf16.mxu0 0
      %6783 = vmatmul.mubr.bf16.gmra.mrb[0].mxu0 %v6680
      %v6784 = vpop.f32.mrb[0].mxu0
      %v6785 = vadd.f32 0.0, %v6784
      %v6786 = vpop.f32.mrb[0].mxu0
      %v6787 = vpop.f32.mrb[0].mxu0
      %v6788 = vadd.f32 0.0, %v6787
      %v6789 = vpop.f32.mrb[0].mxu0
      %6790 = vmatprep.mubr.bf16.mxu0 0
      %6791 = vmatmul.mubr.bf16.gmra.mrb[0].mxu0 %v6683
      %v6792 = vpop.f32.mrb[0].mxu0
      %v6793 = vadd.f32 0.0, %v6792
      %v6794 = vpop.f32.mrb[0].mxu0
      %v6795 = vpop.f32.mrb[0].mxu0
      %v6796 = vadd.f32 0.0, %v6795
      %v6797 = vpop.f32.mrb[0].mxu0
      %6798 = vmatprep.mubr.bf16.mxu0 0
      %6799 = vmatmul.mubr.bf16.gmra.mrb[0].mxu0 %v6686
      %v6800 = vpop.f32.mrb[0].mxu0
      %v6801 = vadd.f32 0.0, %v6800
      %v6802 = vpop.f32.mrb[0].mxu0
      %v6803 = vpop.f32.mrb[0].mxu0
      %v6804 = vadd.f32 0.0, %v6803
      %v6805 = vpop.f32.mrb[0].mxu0
      %6806 = vmatprep.mubr.bf16.mxu0 0
      %6807 = vmatmul.mubr.bf16.gmra.mrb[0].mxu0 %v6689
      %v6808 = vpop.f32.mrb[0].mxu0
      %v6809 = vadd.f32 0.0, %v6808
      %v6810 = vpop.f32.mrb[0].mxu0
      %v6811 = vpop.f32.mrb[0].mxu0
      %v6812 = vadd.f32 0.0, %v6811
      %v6813 = vpop.f32.mrb[0].mxu0
      %6814 = vmatprep.mubr.bf16.mxu0 0
      %6815 = vmatmul.mubr.bf16.gmra.mrb[0].mxu0 %v6692
      %v6816 = vpop.f32.mrb[0].mxu0
      %v6817 = vadd.f32 0.0, %v6816
      %v6818 = vpop.f32.mrb[0].mxu0
      %v6819 = vpop.f32.mrb[0].mxu0
      %v6820 = vadd.f32 0.0, %v6819
      %v6821 = vpop.f32.mrb[0].mxu0
      %6822 = vmatprep.mubr.bf16.mxu0 0
      %6823 = vmatmul.mubr.bf16.gmra.mrb[0].mxu0 %v6695
      %v6824 = vpop.f32.mrb[0].mxu0
      %v6825 = vadd.f32 0.0, %v6824
      %v6826 = vpop.f32.mrb[0].mxu0
      %v6827 = vpop.f32.mrb[0].mxu0
      %v6828 = vadd.f32 0.0, %v6827
      %v6829 = vpop.f32.mrb[0].mxu0
      %6830 = vmatprep.mubr.bf16.mxu0 0
      %6831 = vmatmul.mubr.bf16.gmra.mrb[0].mxu0 %v6698
      %v6832 = vpop.f32.mrb[0].mxu0
      %v6833 = vadd.f32 0.0, %v6832
      %v6834 = vpop.f32.mrb[0].mxu0
      %v6835 = vpop.f32.mrb[0].mxu0
      %v6836 = vadd.f32 0.0, %v6835
      %v6837 = vpop.f32.mrb[0].mxu0
      %6838 = vmatprep.mubr.bf16.mxu0 0
      %6839 = vmatmul.mubr.bf16.gmra.mrb[0].mxu0 %v6701
      %v6840 = vpop.f32.mrb[0].mxu0
      %v6841 = vadd.f32 0.0, %v6840
      %v6842 = vpop.f32.mrb[0].mxu0
      %v6843 = vpop.f32.mrb[0].mxu0
      %v6844 = vadd.f32 0.0, %v6843
      %v6845 = vpop.f32.mrb[0].mxu0
      %6846 = vmatprep.mubr.bf16.mxu0 0
      %6847 = vmatmul.mubr.bf16.gmra.mrb[0].mxu0 %v6704
      %v6848 = vpop.f32.mrb[0].mxu0
      %v6849 = vadd.f32 0.0, %v6848
      %v6850 = vpop.f32.mrb[0].mxu0
      %v6851 = vpop.f32.mrb[0].mxu0
      %v6852 = vadd.f32 0.0, %v6851
      %v6853 = vpop.f32.mrb[0].mxu0
      %6854 = vmatprep.mubr.bf16.mxu0 0
      %6855 = vmatmul.mubr.bf16.gmra.mrb[0].mxu0 %v6707
      %v6856 = vpop.f32.mrb[0].mxu0
      %v6857 = vadd.f32 0.0, %v6856
      %v6858 = vpop.f32.mrb[0].mxu0
      %v6859 = vpop.f32.mrb[0].mxu0
      %v6860 = vadd.f32 0.0, %v6859
      %v6861 = vpop.f32.mrb[0].mxu0
      %6862 = vmatprep.mubr.bf16.mxu0 0
      %6863 = vmatmul.mubr.bf16.gmra.mrb[0].mxu0 %v6710
      %v6864 = vpop.f32.mrb[0].mxu0
      %v6865 = vadd.f32 0.0, %v6864
      %v6866 = vpop.f32.mrb[0].mxu0
      %v6867 = vpop.f32.mrb[0].mxu0
      %v6868 = vadd.f32 0.0, %v6867
      %v6869 = vpop.f32.mrb[0].mxu0
      %6870 = vmatprep.mubr.bf16.mxu0 0
      %6871 = vmatmul.mubr.bf16.gmra.mrb[0].mxu0 %v6713
      %v6872 = vpop.f32.mrb[0].mxu0
      %v6873 = vadd.f32 0.0, %v6872
      %v6874 = vpop.f32.mrb[0].mxu0
      %v6875 = vpop.f32.mrb[0].mxu0
      %v6876 = vadd.f32 0.0, %v6875
      %v6877 = vpop.f32.mrb[0].mxu0
      %6878 = vmatprep.mubr.bf16.mxu0 0
      %6879 = vmatmul.mubr.bf16.gmra.mrb[0].mxu0 %v6716
      %v6880 = vpop.f32.mrb[0].mxu0
      %v6881 = vadd.f32 0.0, %v6880
      %v6882 = vpop.f32.mrb[0].mxu0
      %v6883 = vpop.f32.mrb[0].mxu0
      %v6884 = vpop.f32.mrb[0].mxu0
      %6885 = vdwg.mxu0
      %v6886 = vadd.f32 %v6580, %v6753
      %v6887 = vadd.f32 %v6581, %v6756
      %v6888 = vadd.f32 %v6582, %v6761
      %v6889 = vadd.f32 %v6583, %v6764
      %v6890 = vadd.f32 %v6584, %v6769
      %v6891 = vadd.f32 %v6585, %v6772
      %v6892 = vadd.f32 %v6586, %v6777
      %v6893 = vadd.f32 %v6587, %v6780
      %v6894 = vadd.f32 %v6588, %v6785
      %v6895 = vadd.f32 %v6589, %v6788
      %v6896 = vadd.f32 %v6590, %v6793
      %v6897 = vadd.f32 %v6591, %v6796
      %v6898 = vadd.f32 %v6592, %v6801
      %v6899 = vadd.f32 %v6593, %v6804
      %v6900 = vadd.f32 %v6594, %v6809
      %v6901 = vadd.f32 %v6595, %v6812
      %v6902 = vadd.f32 %v6596, %v6817
      %v6903 = vadd.f32 %v6597, %v6820
      %v6904 = vadd.f32 %v6598, %v6825
      %v6905 = vadd.f32 %v6599, %v6828
      %v6906 = vadd.f32 %v6600, %v6833
      %v6907 = vadd.f32 %v6601, %v6836
      %v6908 = vadd.f32 %v6602, %v6841
      %v6909 = vadd.f32 %v6603, %v6844
      %v6910 = vadd.f32 %v6604, %v6849
      %v6911 = vadd.f32 %v6605, %v6852
      %v6912 = vadd.f32 %v6606, %v6857
      %v6913 = vadd.f32 %v6607, %v6860
      %v6914 = vadd.f32 %v6608, %v6865
      %v6915 = vadd.f32 %v6609, %v6868
      %v6916 = vadd.f32 %v6610, %v6873
      %v6917 = vadd.f32 %v6611, %v6876
      %v6918 = vadd.f32 %v6612, %v6881
      %v6919 = vld [vmem:[#allocation4 + $0x1c] sm:$0xe]
      %v6920 = vld [vmem:[#allocation4 + $0x20] sm:$0xf]
      %v6921 = vld [vmem:[#allocation4 + $0x24] sm:$0xf]
      %v6922 = vld [vmem:[#allocation4 + $0x28] sm:$0xf]
      %v6923 = vld [vmem:[#allocation4 + $0x2c] sm:$0xf]
      %v6924 = vld [vmem:[#allocation4 + $0x30] sm:$0xf]
      %v6925 = vld [vmem:[#allocation4 + $0x34] sm:$0xf]
      %v6926 = vld [vmem:[#allocation4 + $0x38] sm:$0xf]
      %v6927 = vld [vmem:[#allocation4 + $0x3c] sm:$0xf]
      %v6928 = vld [vmem:[#allocation4 + $0x40] sm:$0xf]
      %v6929 = vld [vmem:[#allocation4 + $0x44] sm:$0xf]
      %v6930 = vld [vmem:[#allocation4 + $0x48] sm:$0xf]
      %v6931 = vld [vmem:[#allocation4 + $0x4c] sm:$0xf]
      %v6932 = vld [vmem:[#allocation4 + $0x50] sm:$0xf]
      %v6933 = vld [vmem:[#allocation4 + $0x54] sm:$0xf]
      %v6934 = vld [vmem:[#allocation4 + $0x58] sm:$0xf]
      %v6935 = vld [vmem:[#allocation4 + $0x5c] sm:$0xf]
      %v6936 = vld [vmem:[#allocation4 + $0x60] sm:$0xf]
      %v6937 = vld [vmem:[#allocation4 + $0x64] sm:$0xf]
      %v6938 = vld [vmem:[#allocation4 + $0x68] sm:$0xf]
      %v6939 = vld [vmem:[#allocation4 + $0x6c] sm:$0xf]
      %v6940 = vld [vmem:[#allocation4 + $0x70] sm:$0xf]
      %v6941 = vld [vmem:[#allocation4 + $0x74] sm:$0xf]
      %v6942 = vld [vmem:[#allocation4 + $0x78] sm:$0xf]
      %v6943 = vld [vmem:[#allocation4 + $0x7c] sm:$0xf]
      %v6944 = vld [vmem:[#allocation4 + $0x80] sm:$0xf]
      %v6945 = vld [vmem:[#allocation4 + $0x84] sm:$0xf]
      %v6946 = vld [vmem:[#allocation4 + $0x88] sm:$0xf]
      %v6947 = vld [vmem:[#allocation4 + $0x8c] sm:$0xf]
      %v6948 = vld [vmem:[#allocation4 + $0x90] sm:$0xf]
      %v6949 = vld [vmem:[#allocation4 + $0x94] sm:$0xf]
      %v6950 = vld [vmem:[#allocation4 + $0x98] sm:$0xf]
      %v6951 = vld [vmem:[#allocation4 + $0x9c] sm:$0xf]
      %v6952 = vld [vmem:[#allocation4 + $0xa0] sm:$0x1]
      %s6953 = scalar_lea.vmem %s4, 208
      %v6954 = vld [vmem:[%s6953] sm:$0xf]
      %v6955 = vld [vmem:[%s6953 + $0x4] sm:$0xf]
      %v6956 = vld [vmem:[%s6953 + $0x8] sm:$0xf]
      %v6957 = vld [vmem:[%s6953 + $0xc] sm:$0xf]
      %v6992 = vunpack.c.l.b16 %v6919
      %v6993 = vunpack.c.l.b16 %v6920
      %v6994 = vunpack.c.l.b16 %v6921
      %v6995 = vunpack.c.l.b16 %v6922
      %v6996 = vunpack.c.l.b16 %v6923
      %v6997 = vunpack.c.l.b16 %v6924
      %v6998 = vunpack.c.l.b16 %v6925
      %v6999 = vunpack.c.l.b16 %v6926
      %v7000 = vunpack.c.l.b16 %v6927
      %v7001 = vunpack.c.l.b16 %v6928
      %v7002 = vunpack.c.l.b16 %v6929
      %v7003 = vunpack.c.l.b16 %v6930
      %v7004 = vunpack.c.l.b16 %v6931
      %v7005 = vunpack.c.l.b16 %v6932
      %v7006 = vunpack.c.l.b16 %v6933
      %v7007 = vunpack.c.l.b16 %v6934
      %v7008 = vunpack.c.l.b16 %v6935
      %v7009 = vunpack.c.l.b16 %v6936
      %v7010 = vunpack.c.l.b16 %v6937
      %v7011 = vunpack.c.l.b16 %v6938
      %v7012 = vunpack.c.l.b16 %v6939
      %v7013 = vunpack.c.l.b16 %v6940
      %v7014 = vunpack.c.l.b16 %v6941
      %v7015 = vunpack.c.l.b16 %v6942
      %v7016 = vunpack.c.l.b16 %v6943
      %v7017 = vunpack.c.l.b16 %v6944
      %v7018 = vunpack.c.l.b16 %v6945
      %v7019 = vunpack.c.l.b16 %v6946
      %v7020 = vunpack.c.l.b16 %v6947
      %v7021 = vunpack.c.l.b16 %v6948
      %v7022 = vunpack.c.l.b16 %v6949
      %v7023 = vunpack.c.l.b16 %v6950
      %v7024 = vunpack.c.l.b16 %v6951
      %v7025 = vunpack.c.l.b16 %v6952
      %v7026 = vpack.c.b16 %v6993, %v6992
      %v7027 = vpack.c.b16 %v6995, %v6994
      %v7028 = vpack.c.b16 %v6997, %v6996
      %v7029 = vpack.c.b16 %v6999, %v6998
      %v7030 = vpack.c.b16 %v7001, %v7000
      %v7031 = vpack.c.b16 %v7003, %v7002
      %v7032 = vpack.c.b16 %v7005, %v7004
      %v7033 = vpack.c.b16 %v7007, %v7006
      %v7034 = vpack.c.b16 %v7009, %v7008
      %v7035 = vpack.c.b16 %v7011, %v7010
      %v7036 = vpack.c.b16 %v7013, %v7012
      %v7037 = vpack.c.b16 %v7015, %v7014
      %v7038 = vpack.c.b16 %v7017, %v7016
      %v7039 = vpack.c.b16 %v7019, %v7018
      %v7040 = vpack.c.b16 %v7021, %v7020
      %v7041 = vpack.c.b16 %v7023, %v7022
      %v7042 = vpack.c.b16 %v7025, %v7024
      %v7044 = vshrl.u32 %v7026, 16
      %v7046 = vrot.slane %v7044, 1
      %v7047 = vshll.u32 %v7026, 16
      %v7049 = vrot.slane %v7047, 2
      %v7050 = vor.u32 %v7046, %v7049
      %v7052 = vshrl.u32 %v7027, 16
      %v7054 = vrot.slane %v7052, 1
      %v7055 = vshll.u32 %v7027, 16
      %v7057 = vrot.slane %v7055, 2
      %v7058 = vor.u32 %v7054, %v7057
      %v7059 = vsel %vm3321, %v7050, %v7058
      %v7061 = vshrl.u32 %v7028, 16
      %v7063 = vrot.slane %v7061, 1
      %v7064 = vshll.u32 %v7028, 16
      %v7066 = vrot.slane %v7064, 2
      %v7067 = vor.u32 %v7063, %v7066
      %v7068 = vsel %vm3321, %v7058, %v7067
      %v7070 = vshrl.u32 %v7029, 16
      %v7072 = vrot.slane %v7070, 1
      %v7073 = vshll.u32 %v7029, 16
      %v7075 = vrot.slane %v7073, 2
      %v7076 = vor.u32 %v7072, %v7075
      %v7077 = vsel %vm3321, %v7067, %v7076
      %v7079 = vshrl.u32 %v7030, 16
      %v7081 = vrot.slane %v7079, 1
      %v7082 = vshll.u32 %v7030, 16
      %v7084 = vrot.slane %v7082, 2
      %v7085 = vor.u32 %v7081, %v7084
      %v7086 = vsel %vm3321, %v7076, %v7085
      %v7088 = vshrl.u32 %v7031, 16
      %v7090 = vrot.slane %v7088, 1
      %v7091 = vshll.u32 %v7031, 16
      %v7093 = vrot.slane %v7091, 2
      %v7094 = vor.u32 %v7090, %v7093
      %v7095 = vsel %vm3321, %v7085, %v7094
      %v7097 = vshrl.u32 %v7032, 16
      %v7099 = vrot.slane %v7097, 1
      %v7100 = vshll.u32 %v7032, 16
      %v7102 = vrot.slane %v7100, 2
      %v7103 = vor.u32 %v7099, %v7102
      %v7104 = vsel %vm3321, %v7094, %v7103
      %v7106 = vshrl.u32 %v7033, 16
      %v7108 = vrot.slane %v7106, 1
      %v7109 = vshll.u32 %v7033, 16
      %v7111 = vrot.slane %v7109, 2
      %v7112 = vor.u32 %v7108, %v7111
      %v7113 = vsel %vm3321, %v7103, %v7112
      %v7115 = vshrl.u32 %v7034, 16
      %v7117 = vrot.slane %v7115, 1
      %v7118 = vshll.u32 %v7034, 16
      %v7120 = vrot.slane %v7118, 2
      %v7121 = vor.u32 %v7117, %v7120
      %v7122 = vsel %vm3321, %v7112, %v7121
      %v7124 = vshrl.u32 %v7035, 16
      %v7126 = vrot.slane %v7124, 1
      %v7127 = vshll.u32 %v7035, 16
      %v7129 = vrot.slane %v7127, 2
      %v7130 = vor.u32 %v7126, %v7129
      %v7131 = vsel %vm3321, %v7121, %v7130
      %v7133 = vshrl.u32 %v7036, 16
      %v7135 = vrot.slane %v7133, 1
      %v7136 = vshll.u32 %v7036, 16
      %v7138 = vrot.slane %v7136, 2
      %v7139 = vor.u32 %v7135, %v7138
      %v7140 = vsel %vm3321, %v7130, %v7139
      %v7142 = vshrl.u32 %v7037, 16
      %v7144 = vrot.slane %v7142, 1
      %v7145 = vshll.u32 %v7037, 16
      %v7147 = vrot.slane %v7145, 2
      %v7148 = vor.u32 %v7144, %v7147
      %v7149 = vsel %vm3321, %v7139, %v7148
      %v7151 = vshrl.u32 %v7038, 16
      %v7153 = vrot.slane %v7151, 1
      %v7154 = vshll.u32 %v7038, 16
      %v7156 = vrot.slane %v7154, 2
      %v7157 = vor.u32 %v7153, %v7156
      %v7158 = vsel %vm3321, %v7148, %v7157
      %v7160 = vshrl.u32 %v7039, 16
      %v7162 = vrot.slane %v7160, 1
      %v7163 = vshll.u32 %v7039, 16
      %v7165 = vrot.slane %v7163, 2
      %v7166 = vor.u32 %v7162, %v7165
      %v7167 = vsel %vm3321, %v7157, %v7166
      %v7169 = vshrl.u32 %v7040, 16
      %v7171 = vrot.slane %v7169, 1
      %v7172 = vshll.u32 %v7040, 16
      %v7174 = vrot.slane %v7172, 2
      %v7175 = vor.u32 %v7171, %v7174
      %v7176 = vsel %vm3321, %v7166, %v7175
      %v7178 = vshrl.u32 %v7041, 16
      %v7180 = vrot.slane %v7178, 1
      %v7181 = vshll.u32 %v7041, 16
      %v7183 = vrot.slane %v7181, 2
      %v7184 = vor.u32 %v7180, %v7183
      %v7185 = vsel %vm3321, %v7175, %v7184
      %v7187 = vshrl.u32 %v7042, 16
      %v7189 = vrot.slane %v7187, 1
      %v7190 = vshll.u32 %v7042, 16
      %v7192 = vrot.slane %v7190, 2
      %v7193 = vor.u32 %v7189, %v7192
      %v7194 = vsel %vm3321, %v7184, %v7193
      %v7199 = vunpack.c.l.b16 %v6954
      %v7200 = vunpack.c.l.b16 %v6955
      %v7201 = vunpack.c.l.b16 %v6956
      %v7202 = vunpack.c.l.b16 %v6957
      %v7203 = vpack.c.b16 %v7200, %v7199
      %v7204 = vpack.c.b16 %v7202, %v7201
      %v7208 = vsel %vm859, %v7059, 0
      %v7211 = vsel %vm859, %v7068, 0
      %v7214 = vsel %vm859, %v7077, 0
      %v7217 = vsel %vm859, %v7086, 0
      %v7220 = vsel %vm859, %v7095, 0
      %v7223 = vsel %vm859, %v7104, 0
      %v7226 = vsel %vm859, %v7113, 0
      %v7229 = vsel %vm859, %v7122, 0
      %v7232 = vsel %vm859, %v7131, 0
      %v7235 = vsel %vm859, %v7140, 0
      %v7238 = vsel %vm859, %v7149, 0
      %v7241 = vsel %vm859, %v7158, 0
      %v7244 = vsel %vm859, %v7167, 0
      %v7247 = vsel %vm859, %v7176, 0
      %v7250 = vsel %vm859, %v7185, 0
      %v7253 = vsel %vm859, %v7194, 0
      %v7256 = vsel %vm859, %v7193, 0
      %7258 = vmatprep.subr.bf16.mxu0 0
      %7259 = vmatpush1.bf16.msra.mxu0 %v7203
      %7260 = vmatprep.subr.bf16.mxu0 0
      %7261 = vmatpush1.bf16.msra.mxu0 %v7204
      %7262 = vmatprep.subr.bf16.mxu0 0
      %7263 = vmatpush1.bf16.msra.mxu0 0
      %7264 = vmatprep.subr.bf16.mxu0 0
      %7265 = vmatpush1.bf16.msra.mxu0 0
      %7266 = vmatprep.subr.bf16.mxu0 0
      %7267 = vmatpush1.bf16.msra.mxu0 0
      %7268 = vmatprep.subr.bf16.mxu0 0
      %7269 = vmatpush1.bf16.msra.mxu0 0
      %7270 = vmatprep.subr.bf16.mxu0 0
      %7271 = vmatpush1.bf16.msra.mxu0 0
      %7272 = vmatprep.subr.bf16.mxu0 0
      %7273 = vmatpush1.bf16.msra.mxu0 0
      %7274 = vmatprep.subr.bf16.mxu0 0
      %7275 = vmatpush1.bf16.msra.mxu0 0
      %7276 = vmatprep.subr.bf16.mxu0 0
      %7277 = vmatpush1.bf16.msra.mxu0 0
      %7278 = vmatprep.subr.bf16.mxu0 0
      %7279 = vmatpush1.bf16.msra.mxu0 0
      %7280 = vmatprep.subr.bf16.mxu0 0
      %7281 = vmatpush1.bf16.msra.mxu0 0
      %7282 = vmatprep.subr.bf16.mxu0 0
      %7283 = vmatpush1.bf16.msra.mxu0 0
      %7284 = vmatprep.subr.bf16.mxu0 0
      %7285 = vmatpush1.bf16.msra.mxu0 0
      %7286 = vmatprep.subr.bf16.mxu0 0
      %7287 = vmatpush1.bf16.msra.mxu0 0
      %7288 = vmatprep.subr.bf16.mxu0 0
      %7289 = vmatpush1.bf16.msra.mxu0 0
      %7290 = vmatprep.mubr.bf16.mxu0 0
      %7291 = vmatmul.mubr.bf16.gmra.mrb[0].mxu0 %v7208
      %v7292 = vpop.f32.mrb[0].mxu0
      %v7293 = vadd.f32 0.0, %v7292
      %v7294 = vpop.f32.mrb[0].mxu0
      %v7295 = vpop.f32.mrb[0].mxu0
      %v7296 = vadd.f32 0.0, %v7295
      %v7297 = vpop.f32.mrb[0].mxu0
      %7298 = vmatprep.mubr.bf16.mxu0 0
      %7299 = vmatmul.mubr.bf16.gmra.mrb[0].mxu0 %v7211
      %v7300 = vpop.f32.mrb[0].mxu0
      %v7301 = vadd.f32 0.0, %v7300
      %v7302 = vpop.f32.mrb[0].mxu0
      %v7303 = vpop.f32.mrb[0].mxu0
      %v7304 = vadd.f32 0.0, %v7303
      %v7305 = vpop.f32.mrb[0].mxu0
      %7306 = vmatprep.mubr.bf16.mxu0 0
      %7307 = vmatmul.mubr.bf16.gmra.mrb[0].mxu0 %v7214
      %v7308 = vpop.f32.mrb[0].mxu0
      %v7309 = vadd.f32 0.0, %v7308
      %v7310 = vpop.f32.mrb[0].mxu0
      %v7311 = vpop.f32.mrb[0].mxu0
      %v7312 = vadd.f32 0.0, %v7311
      %v7313 = vpop.f32.mrb[0].mxu0
      %7314 = vmatprep.mubr.bf16.mxu0 0
      %7315 = vmatmul.mubr.bf16.gmra.mrb[0].mxu0 %v7217
      %v7316 = vpop.f32.mrb[0].mxu0
      %v7317 = vadd.f32 0.0, %v7316
      %v7318 = vpop.f32.mrb[0].mxu0
      %v7319 = vpop.f32.mrb[0].mxu0
      %v7320 = vadd.f32 0.0, %v7319
      %v7321 = vpop.f32.mrb[0].mxu0
      %7322 = vmatprep.mubr.bf16.mxu0 0
      %7323 = vmatmul.mubr.bf16.gmra.mrb[0].mxu0 %v7220
      %v7324 = vpop.f32.mrb[0].mxu0
      %v7325 = vadd.f32 0.0, %v7324
      %v7326 = vpop.f32.mrb[0].mxu0
      %v7327 = vpop.f32.mrb[0].mxu0
      %v7328 = vadd.f32 0.0, %v7327
      %v7329 = vpop.f32.mrb[0].mxu0
      %7330 = vmatprep.mubr.bf16.mxu0 0
      %7331 = vmatmul.mubr.bf16.gmra.mrb[0].mxu0 %v7223
      %v7332 = vpop.f32.mrb[0].mxu0
      %v7333 = vadd.f32 0.0, %v7332
      %v7334 = vpop.f32.mrb[0].mxu0
      %v7335 = vpop.f32.mrb[0].mxu0
      %v7336 = vadd.f32 0.0, %v7335
      %v7337 = vpop.f32.mrb[0].mxu0
      %7338 = vmatprep.mubr.bf16.mxu0 0
      %7339 = vmatmul.mubr.bf16.gmra.mrb[0].mxu0 %v7226
      %v7340 = vpop.f32.mrb[0].mxu0
      %v7341 = vadd.f32 0.0, %v7340
      %v7342 = vpop.f32.mrb[0].mxu0
      %v7343 = vpop.f32.mrb[0].mxu0
      %v7344 = vadd.f32 0.0, %v7343
      %v7345 = vpop.f32.mrb[0].mxu0
      %7346 = vmatprep.mubr.bf16.mxu0 0
      %7347 = vmatmul.mubr.bf16.gmra.mrb[0].mxu0 %v7229
      %v7348 = vpop.f32.mrb[0].mxu0
      %v7349 = vadd.f32 0.0, %v7348
      %v7350 = vpop.f32.mrb[0].mxu0
      %v7351 = vpop.f32.mrb[0].mxu0
      %v7352 = vadd.f32 0.0, %v7351
      %v7353 = vpop.f32.mrb[0].mxu0
      %7354 = vmatprep.mubr.bf16.mxu0 0
      %7355 = vmatmul.mubr.bf16.gmra.mrb[0].mxu0 %v7232
      %v7356 = vpop.f32.mrb[0].mxu0
      %v7357 = vadd.f32 0.0, %v7356
      %v7358 = vpop.f32.mrb[0].mxu0
      %v7359 = vpop.f32.mrb[0].mxu0
      %v7360 = vadd.f32 0.0, %v7359
      %v7361 = vpop.f32.mrb[0].mxu0
      %7362 = vmatprep.mubr.bf16.mxu0 0
      %7363 = vmatmul.mubr.bf16.gmra.mrb[0].mxu0 %v7235
      %v7364 = vpop.f32.mrb[0].mxu0
      %v7365 = vadd.f32 0.0, %v7364
      %v7366 = vpop.f32.mrb[0].mxu0
      %v7367 = vpop.f32.mrb[0].mxu0
      %v7368 = vadd.f32 0.0, %v7367
      %v7369 = vpop.f32.mrb[0].mxu0
      %7370 = vmatprep.mubr.bf16.mxu0 0
      %7371 = vmatmul.mubr.bf16.gmra.mrb[0].mxu0 %v7238
      %v7372 = vpop.f32.mrb[0].mxu0
      %v7373 = vadd.f32 0.0, %v7372
      %v7374 = vpop.f32.mrb[0].mxu0
      %v7375 = vpop.f32.mrb[0].mxu0
      %v7376 = vadd.f32 0.0, %v7375
      %v7377 = vpop.f32.mrb[0].mxu0
      %7378 = vmatprep.mubr.bf16.mxu0 0
      %7379 = vmatmul.mubr.bf16.gmra.mrb[0].mxu0 %v7241
      %v7380 = vpop.f32.mrb[0].mxu0
      %v7381 = vadd.f32 0.0, %v7380
      %v7382 = vpop.f32.mrb[0].mxu0
      %v7383 = vpop.f32.mrb[0].mxu0
      %v7384 = vadd.f32 0.0, %v7383
      %v7385 = vpop.f32.mrb[0].mxu0
      %7386 = vmatprep.mubr.bf16.mxu0 0
      %7387 = vmatmul.mubr.bf16.gmra.mrb[0].mxu0 %v7244
      %v7388 = vpop.f32.mrb[0].mxu0
      %v7389 = vadd.f32 0.0, %v7388
      %v7390 = vpop.f32.mrb[0].mxu0
      %v7391 = vpop.f32.mrb[0].mxu0
      %v7392 = vadd.f32 0.0, %v7391
      %v7393 = vpop.f32.mrb[0].mxu0
      %7394 = vmatprep.mubr.bf16.mxu0 0
      %7395 = vmatmul.mubr.bf16.gmra.mrb[0].mxu0 %v7247
      %v7396 = vpop.f32.mrb[0].mxu0
      %v7397 = vadd.f32 0.0, %v7396
      %v7398 = vpop.f32.mrb[0].mxu0
      %v7399 = vpop.f32.mrb[0].mxu0
      %v7400 = vadd.f32 0.0, %v7399
      %v7401 = vpop.f32.mrb[0].mxu0
      %7402 = vmatprep.mubr.bf16.mxu0 0
      %7403 = vmatmul.mubr.bf16.gmra.mrb[0].mxu0 %v7250
      %v7404 = vpop.f32.mrb[0].mxu0
      %v7405 = vadd.f32 0.0, %v7404
      %v7406 = vpop.f32.mrb[0].mxu0
      %v7407 = vpop.f32.mrb[0].mxu0
      %v7408 = vadd.f32 0.0, %v7407
      %v7409 = vpop.f32.mrb[0].mxu0
      %7410 = vmatprep.mubr.bf16.mxu0 0
      %7411 = vmatmul.mubr.bf16.gmra.mrb[0].mxu0 %v7253
      %v7412 = vpop.f32.mrb[0].mxu0
      %v7413 = vadd.f32 0.0, %v7412
      %v7414 = vpop.f32.mrb[0].mxu0
      %v7415 = vpop.f32.mrb[0].mxu0
      %v7416 = vadd.f32 0.0, %v7415
      %v7417 = vpop.f32.mrb[0].mxu0
      %7418 = vmatprep.mubr.bf16.mxu0 0
      %7419 = vmatmul.mubr.bf16.gmra.mrb[0].mxu0 %v7256
      %v7420 = vpop.f32.mrb[0].mxu0
      %v7421 = vadd.f32 0.0, %v7420
      %v7422 = vpop.f32.mrb[0].mxu0
      %v7423 = vpop.f32.mrb[0].mxu0
      %v7424 = vpop.f32.mrb[0].mxu0
      %7425 = vdwg.mxu0
      %v7426 = vadd.f32 %v6886, %v7293
      %v7427 = vadd.f32 %v6887, %v7296
      %v7428 = vadd.f32 %v6888, %v7301
      %v7429 = vadd.f32 %v6889, %v7304
      %v7430 = vadd.f32 %v6890, %v7309
      %v7431 = vadd.f32 %v6891, %v7312
      %v7432 = vadd.f32 %v6892, %v7317
      %v7433 = vadd.f32 %v6893, %v7320
      %v7434 = vadd.f32 %v6894, %v7325
      %v7435 = vadd.f32 %v6895, %v7328
      %v7436 = vadd.f32 %v6896, %v7333
      %v7437 = vadd.f32 %v6897, %v7336
      %v7438 = vadd.f32 %v6898, %v7341
      %v7439 = vadd.f32 %v6899, %v7344
      %v7440 = vadd.f32 %v6900, %v7349
      %v7441 = vadd.f32 %v6901, %v7352
      %v7442 = vadd.f32 %v6902, %v7357
      %v7443 = vadd.f32 %v6903, %v7360
      %v7444 = vadd.f32 %v6904, %v7365
      %v7445 = vadd.f32 %v6905, %v7368
      %v7446 = vadd.f32 %v6906, %v7373
      %v7447 = vadd.f32 %v6907, %v7376
      %v7448 = vadd.f32 %v6908, %v7381
      %v7449 = vadd.f32 %v6909, %v7384
      %v7450 = vadd.f32 %v6910, %v7389
      %v7451 = vadd.f32 %v6911, %v7392
      %v7452 = vadd.f32 %v6912, %v7397
      %v7453 = vadd.f32 %v6913, %v7400
      %v7454 = vadd.f32 %v6914, %v7405
      %v7455 = vadd.f32 %v6915, %v7408
      %v7456 = vadd.f32 %v6916, %v7413
      %v7457 = vadd.f32 %v6917, %v7416
      %v7458 = vadd.f32 %v6918, %v7421
      %v7459 = vld [vmem:[#allocation4 + $0x1c] sm:$0xc]
      %s7460 = scalar_lea.vmem %s4, 224
      %v7461 = vld [vmem:[%s7460] sm:$0xf]
      %v7462 = vld [vmem:[%s7460 + $0x4] sm:$0xf]
      %v7463 = vld [vmem:[%s7460 + $0x8] sm:$0xf]
      %v7464 = vld [vmem:[%s7460 + $0xc] sm:$0xf]
      %v7466 = vunpack.c.l.b16 %v7459
      %v7467 = vpack.c.b16 %v6993, %v7466
      %v7468 = vrot.slane %v7467, 2
      %v7469 = vrot.slane %v7027, 2
      %v7470 = vsel %vm3747, %v7468, %v7469
      %v7471 = vrot.slane %v7028, 2
      %v7472 = vsel %vm3747, %v7469, %v7471
      %v7473 = vrot.slane %v7029, 2
      %v7474 = vsel %vm3747, %v7471, %v7473
      %v7475 = vrot.slane %v7030, 2
      %v7476 = vsel %vm3747, %v7473, %v7475
      %v7477 = vrot.slane %v7031, 2
      %v7478 = vsel %vm3747, %v7475, %v7477
      %v7479 = vrot.slane %v7032, 2
      %v7480 = vsel %vm3747, %v7477, %v7479
      %v7481 = vrot.slane %v7033, 2
      %v7482 = vsel %vm3747, %v7479, %v7481
      %v7483 = vrot.slane %v7034, 2
      %v7484 = vsel %vm3747, %v7481, %v7483
      %v7485 = vrot.slane %v7035, 2
      %v7486 = vsel %vm3747, %v7483, %v7485
      %v7487 = vrot.slane %v7036, 2
      %v7488 = vsel %vm3747, %v7485, %v7487
      %v7489 = vrot.slane %v7037, 2
      %v7490 = vsel %vm3747, %v7487, %v7489
      %v7491 = vrot.slane %v7038, 2
      %v7492 = vsel %vm3747, %v7489, %v7491
      %v7493 = vrot.slane %v7039, 2
      %v7494 = vsel %vm3747, %v7491, %v7493
      %v7495 = vrot.slane %v7040, 2
      %v7496 = vsel %vm3747, %v7493, %v7495
      %v7497 = vrot.slane %v7041, 2
      %v7498 = vsel %vm3747, %v7495, %v7497
      %v7499 = vrot.slane %v7042, 2
      %v7500 = vsel %vm3747, %v7497, %v7499
      %v7505 = vunpack.c.l.b16 %v7461
      %v7506 = vunpack.c.l.b16 %v7462
      %v7507 = vunpack.c.l.b16 %v7463
      %v7508 = vunpack.c.l.b16 %v7464
      %v7509 = vpack.c.b16 %v7506, %v7505
      %v7510 = vpack.c.b16 %v7508, %v7507
      %v7514 = vsel %vm859, %v7470, 0
      %v7517 = vsel %vm859, %v7472, 0
      %v7520 = vsel %vm859, %v7474, 0
      %v7523 = vsel %vm859, %v7476, 0
      %v7526 = vsel %vm859, %v7478, 0
      %v7529 = vsel %vm859, %v7480, 0
      %v7532 = vsel %vm859, %v7482, 0
      %v7535 = vsel %vm859, %v7484, 0
      %v7538 = vsel %vm859, %v7486, 0
      %v7541 = vsel %vm859, %v7488, 0
      %v7544 = vsel %vm859, %v7490, 0
      %v7547 = vsel %vm859, %v7492, 0
      %v7550 = vsel %vm859, %v7494, 0
      %v7553 = vsel %vm859, %v7496, 0
      %v7556 = vsel %vm859, %v7498, 0
      %v7559 = vsel %vm859, %v7500, 0
      %v7562 = vsel %vm859, %v7499, 0
      %7564 = vmatprep.subr.bf16.mxu0 0
      %7565 = vmatpush1.bf16.msra.mxu0 %v7509
      %7566 = vmatprep.subr.bf16.mxu0 0
      %7567 = vmatpush1.bf16.msra.mxu0 %v7510
      %7568 = vmatprep.subr.bf16.mxu0 0
      %7569 = vmatpush1.bf16.msra.mxu0 0
      %7570 = vmatprep.subr.bf16.mxu0 0
      %7571 = vmatpush1.bf16.msra.mxu0 0
      %7572 = vmatprep.subr.bf16.mxu0 0
      %7573 = vmatpush1.bf16.msra.mxu0 0
      %7574 = vmatprep.subr.bf16.mxu0 0
      %7575 = vmatpush1.bf16.msra.mxu0 0
      %7576 = vmatprep.subr.bf16.mxu0 0
      %7577 = vmatpush1.bf16.msra.mxu0 0
      %7578 = vmatprep.subr.bf16.mxu0 0
      %7579 = vmatpush1.bf16.msra.mxu0 0
      %7580 = vmatprep.subr.bf16.mxu0 0
      %7581 = vmatpush1.bf16.msra.mxu0 0
      %7582 = vmatprep.subr.bf16.mxu0 0
      %7583 = vmatpush1.bf16.msra.mxu0 0
      %7584 = vmatprep.subr.bf16.mxu0 0
      %7585 = vmatpush1.bf16.msra.mxu0 0
      %7586 = vmatprep.subr.bf16.mxu0 0
      %7587 = vmatpush1.bf16.msra.mxu0 0
      %7588 = vmatprep.subr.bf16.mxu0 0
      %7589 = vmatpush1.bf16.msra.mxu0 0
      %7590 = vmatprep.subr.bf16.mxu0 0
      %7591 = vmatpush1.bf16.msra.mxu0 0
      %7592 = vmatprep.subr.bf16.mxu0 0
      %7593 = vmatpush1.bf16.msra.mxu0 0
      %7594 = vmatprep.subr.bf16.mxu0 0
      %7595 = vmatpush1.bf16.msra.mxu0 0
      %7596 = vmatprep.mubr.bf16.mxu0 0
      %7597 = vmatmul.mubr.bf16.gmra.mrb[0].mxu0 %v7514
      %v7598 = vpop.f32.mrb[0].mxu0
      %v7599 = vadd.f32 0.0, %v7598
      %v7600 = vpop.f32.mrb[0].mxu0
      %v7601 = vpop.f32.mrb[0].mxu0
      %v7602 = vadd.f32 0.0, %v7601
      %v7603 = vpop.f32.mrb[0].mxu0
      %7604 = vmatprep.mubr.bf16.mxu0 0
      %7605 = vmatmul.mubr.bf16.gmra.mrb[0].mxu0 %v7517
      %v7606 = vpop.f32.mrb[0].mxu0
      %v7607 = vadd.f32 0.0, %v7606
      %v7608 = vpop.f32.mrb[0].mxu0
      %v7609 = vpop.f32.mrb[0].mxu0
      %v7610 = vadd.f32 0.0, %v7609
      %v7611 = vpop.f32.mrb[0].mxu0
      %7612 = vmatprep.mubr.bf16.mxu0 0
      %7613 = vmatmul.mubr.bf16.gmra.mrb[0].mxu0 %v7520
      %v7614 = vpop.f32.mrb[0].mxu0
      %v7615 = vadd.f32 0.0, %v7614
      %v7616 = vpop.f32.mrb[0].mxu0
      %v7617 = vpop.f32.mrb[0].mxu0
      %v7618 = vadd.f32 0.0, %v7617
      %v7619 = vpop.f32.mrb[0].mxu0
      %7620 = vmatprep.mubr.bf16.mxu0 0
      %7621 = vmatmul.mubr.bf16.gmra.mrb[0].mxu0 %v7523
      %v7622 = vpop.f32.mrb[0].mxu0
      %v7623 = vadd.f32 0.0, %v7622
      %v7624 = vpop.f32.mrb[0].mxu0
      %v7625 = vpop.f32.mrb[0].mxu0
      %v7626 = vadd.f32 0.0, %v7625
      %v7627 = vpop.f32.mrb[0].mxu0
      %7628 = vmatprep.mubr.bf16.mxu0 0
      %7629 = vmatmul.mubr.bf16.gmra.mrb[0].mxu0 %v7526
      %v7630 = vpop.f32.mrb[0].mxu0
      %v7631 = vadd.f32 0.0, %v7630
      %v7632 = vpop.f32.mrb[0].mxu0
      %v7633 = vpop.f32.mrb[0].mxu0
      %v7634 = vadd.f32 0.0, %v7633
      %v7635 = vpop.f32.mrb[0].mxu0
      %7636 = vmatprep.mubr.bf16.mxu0 0
      %7637 = vmatmul.mubr.bf16.gmra.mrb[0].mxu0 %v7529
      %v7638 = vpop.f32.mrb[0].mxu0
      %v7639 = vadd.f32 0.0, %v7638
      %v7640 = vpop.f32.mrb[0].mxu0
      %v7641 = vpop.f32.mrb[0].mxu0
      %v7642 = vadd.f32 0.0, %v7641
      %v7643 = vpop.f32.mrb[0].mxu0
      %7644 = vmatprep.mubr.bf16.mxu0 0
      %7645 = vmatmul.mubr.bf16.gmra.mrb[0].mxu0 %v7532
      %v7646 = vpop.f32.mrb[0].mxu0
      %v7647 = vadd.f32 0.0, %v7646
      %v7648 = vpop.f32.mrb[0].mxu0
      %v7649 = vpop.f32.mrb[0].mxu0
      %v7650 = vadd.f32 0.0, %v7649
      %v7651 = vpop.f32.mrb[0].mxu0
      %7652 = vmatprep.mubr.bf16.mxu0 0
      %7653 = vmatmul.mubr.bf16.gmra.mrb[0].mxu0 %v7535
      %v7654 = vpop.f32.mrb[0].mxu0
      %v7655 = vadd.f32 0.0, %v7654
      %v7656 = vpop.f32.mrb[0].mxu0
      %v7657 = vpop.f32.mrb[0].mxu0
      %v7658 = vadd.f32 0.0, %v7657
      %v7659 = vpop.f32.mrb[0].mxu0
      %7660 = vmatprep.mubr.bf16.mxu0 0
      %7661 = vmatmul.mubr.bf16.gmra.mrb[0].mxu0 %v7538
      %v7662 = vpop.f32.mrb[0].mxu0
      %v7663 = vadd.f32 0.0, %v7662
      %v7664 = vpop.f32.mrb[0].mxu0
      %v7665 = vpop.f32.mrb[0].mxu0
      %v7666 = vadd.f32 0.0, %v7665
      %v7667 = vpop.f32.mrb[0].mxu0
      %7668 = vmatprep.mubr.bf16.mxu0 0
      %7669 = vmatmul.mubr.bf16.gmra.mrb[0].mxu0 %v7541
      %v7670 = vpop.f32.mrb[0].mxu0
      %v7671 = vadd.f32 0.0, %v7670
      %v7672 = vpop.f32.mrb[0].mxu0
      %v7673 = vpop.f32.mrb[0].mxu0
      %v7674 = vadd.f32 0.0, %v7673
      %v7675 = vpop.f32.mrb[0].mxu0
      %7676 = vmatprep.mubr.bf16.mxu0 0
      %7677 = vmatmul.mubr.bf16.gmra.mrb[0].mxu0 %v7544
      %v7678 = vpop.f32.mrb[0].mxu0
      %v7679 = vadd.f32 0.0, %v7678
      %v7680 = vpop.f32.mrb[0].mxu0
      %v7681 = vpop.f32.mrb[0].mxu0
      %v7682 = vadd.f32 0.0, %v7681
      %v7683 = vpop.f32.mrb[0].mxu0
      %7684 = vmatprep.mubr.bf16.mxu0 0
      %7685 = vmatmul.mubr.bf16.gmra.mrb[0].mxu0 %v7547
      %v7686 = vpop.f32.mrb[0].mxu0
      %v7687 = vadd.f32 0.0, %v7686
      %v7688 = vpop.f32.mrb[0].mxu0
      %v7689 = vpop.f32.mrb[0].mxu0
      %v7690 = vadd.f32 0.0, %v7689
      %v7691 = vpop.f32.mrb[0].mxu0
      %7692 = vmatprep.mubr.bf16.mxu0 0
      %7693 = vmatmul.mubr.bf16.gmra.mrb[0].mxu0 %v7550
      %v7694 = vpop.f32.mrb[0].mxu0
      %v7695 = vadd.f32 0.0, %v7694
      %v7696 = vpop.f32.mrb[0].mxu0
      %v7697 = vpop.f32.mrb[0].mxu0
      %v7698 = vadd.f32 0.0, %v7697
      %v7699 = vpop.f32.mrb[0].mxu0
      %7700 = vmatprep.mubr.bf16.mxu0 0
      %7701 = vmatmul.mubr.bf16.gmra.mrb[0].mxu0 %v7553
      %v7702 = vpop.f32.mrb[0].mxu0
      %v7703 = vadd.f32 0.0, %v7702
      %v7704 = vpop.f32.mrb[0].mxu0
      %v7705 = vpop.f32.mrb[0].mxu0
      %v7706 = vadd.f32 0.0, %v7705
      %v7707 = vpop.f32.mrb[0].mxu0
      %7708 = vmatprep.mubr.bf16.mxu0 0
      %7709 = vmatmul.mubr.bf16.gmra.mrb[0].mxu0 %v7556
      %v7710 = vpop.f32.mrb[0].mxu0
      %v7711 = vadd.f32 0.0, %v7710
      %v7712 = vpop.f32.mrb[0].mxu0
      %v7713 = vpop.f32.mrb[0].mxu0
      %v7714 = vadd.f32 0.0, %v7713
      %v7715 = vpop.f32.mrb[0].mxu0
      %7716 = vmatprep.mubr.bf16.mxu0 0
      %7717 = vmatmul.mubr.bf16.gmra.mrb[0].mxu0 %v7559
      %v7718 = vpop.f32.mrb[0].mxu0
      %v7719 = vadd.f32 0.0, %v7718
      %v7720 = vpop.f32.mrb[0].mxu0
      %v7721 = vpop.f32.mrb[0].mxu0
      %v7722 = vadd.f32 0.0, %v7721
      %v7723 = vpop.f32.mrb[0].mxu0
      %7724 = vmatprep.mubr.bf16.mxu0 0
      %7725 = vmatmul.mubr.bf16.gmra.mrb[0].mxu0 %v7562
      %v7726 = vpop.f32.mrb[0].mxu0
      %v7727 = vadd.f32 0.0, %v7726
      %v7728 = vpop.f32.mrb[0].mxu0
      %v7729 = vpop.f32.mrb[0].mxu0
      %v7730 = vpop.f32.mrb[0].mxu0
      %7731 = vdwg.mxu0
      %v7732 = vadd.f32 %v7426, %v7599
      %v7733 = vadd.f32 %v7427, %v7602
      %v7734 = vadd.f32 %v7428, %v7607
      %v7735 = vadd.f32 %v7429, %v7610
      %v7736 = vadd.f32 %v7430, %v7615
      %v7737 = vadd.f32 %v7431, %v7618
      %v7738 = vadd.f32 %v7432, %v7623
      %v7739 = vadd.f32 %v7433, %v7626
      %v7740 = vadd.f32 %v7434, %v7631
      %v7741 = vadd.f32 %v7435, %v7634
      %v7742 = vadd.f32 %v7436, %v7639
      %v7743 = vadd.f32 %v7437, %v7642
      %v7744 = vadd.f32 %v7438, %v7647
      %v7745 = vadd.f32 %v7439, %v7650
      %v7746 = vadd.f32 %v7440, %v7655
      %v7747 = vadd.f32 %v7441, %v7658
      %v7748 = vadd.f32 %v7442, %v7663
      %v7749 = vadd.f32 %v7443, %v7666
      %v7750 = vadd.f32 %v7444, %v7671
      %v7751 = vadd.f32 %v7445, %v7674
      %v7752 = vadd.f32 %v7446, %v7679
      %v7753 = vadd.f32 %v7447, %v7682
      %v7754 = vadd.f32 %v7448, %v7687
      %v7755 = vadd.f32 %v7449, %v7690
      %v7756 = vadd.f32 %v7450, %v7695
      %v7757 = vadd.f32 %v7451, %v7698
      %v7758 = vadd.f32 %v7452, %v7703
      %v7759 = vadd.f32 %v7453, %v7706
      %v7760 = vadd.f32 %v7454, %v7711
      %v7761 = vadd.f32 %v7455, %v7714
      %v7762 = vadd.f32 %v7456, %v7719
      %v7763 = vadd.f32 %v7457, %v7722
      %v7764 = vadd.f32 %v7458, %v7727
      %v7765 = vld [vmem:[#allocation4 + $0x28] sm:$0xc]
      %v7766 = vld [vmem:[#allocation4 + $0x2c] sm:$0xf]
      %v7767 = vld [vmem:[#allocation4 + $0x30] sm:$0xf]
      %v7768 = vld [vmem:[#allocation4 + $0x34] sm:$0xf]
      %v7769 = vld [vmem:[#allocation4 + $0x38] sm:$0xf]
      %v7770 = vld [vmem:[#allocation4 + $0x3c] sm:$0xf]
      %v7771 = vld [vmem:[#allocation4 + $0x40] sm:$0xf]
      %v7772 = vld [vmem:[#allocation4 + $0x44] sm:$0xf]
      %v7773 = vld [vmem:[#allocation4 + $0x48] sm:$0xf]
      %v7774 = vld [vmem:[#allocation4 + $0x4c] sm:$0xf]
      %v7775 = vld [vmem:[#allocation4 + $0x50] sm:$0xf]
      %v7776 = vld [vmem:[#allocation4 + $0x54] sm:$0xf]
      %v7777 = vld [vmem:[#allocation4 + $0x58] sm:$0xf]
      %v7778 = vld [vmem:[#allocation4 + $0x5c] sm:$0xf]
      %v7779 = vld [vmem:[#allocation4 + $0x60] sm:$0xf]
      %v7780 = vld [vmem:[#allocation4 + $0x64] sm:$0xf]
      %v7781 = vld [vmem:[#allocation4 + $0x68] sm:$0xf]
      %v7782 = vld [vmem:[#allocation4 + $0x6c] sm:$0xf]
      %v7783 = vld [vmem:[#allocation4 + $0x70] sm:$0xf]
      %v7784 = vld [vmem:[#allocation4 + $0x74] sm:$0xf]
      %v7785 = vld [vmem:[#allocation4 + $0x78] sm:$0xf]
      %v7786 = vld [vmem:[#allocation4 + $0x7c] sm:$0xf]
      %v7787 = vld [vmem:[#allocation4 + $0x80] sm:$0xf]
      %v7788 = vld [vmem:[#allocation4 + $0x84] sm:$0xf]
      %v7789 = vld [vmem:[#allocation4 + $0x88] sm:$0xf]
      %v7790 = vld [vmem:[#allocation4 + $0x8c] sm:$0xf]
      %v7791 = vld [vmem:[#allocation4 + $0x90] sm:$0xf]
      %v7792 = vld [vmem:[#allocation4 + $0x94] sm:$0xf]
      %v7793 = vld [vmem:[#allocation4 + $0x98] sm:$0xf]
      %v7794 = vld [vmem:[#allocation4 + $0x9c] sm:$0xf]
      %v7795 = vld [vmem:[#allocation4 + $0xa0] sm:$0xf]
      %v7796 = vld [vmem:[#allocation4 + $0xa4] sm:$0xf]
      %v7797 = vld [vmem:[#allocation4 + $0xa8] sm:$0xf]
      %v7798 = vld [vmem:[#allocation4 + $0xac] sm:$0x1]
      %s7799 = scalar_lea.vmem %s4, 240
      %v7800 = vld [vmem:[%s7799] sm:$0xf]
      %v7801 = vld [vmem:[%s7799 + $0x4] sm:$0xf]
      %v7802 = vld [vmem:[%s7799 + $0x8] sm:$0xf]
      %v7803 = vld [vmem:[%s7799 + $0xc] sm:$0xf]
      %v7838 = vunpack.c.l.b16 %v7765
      %v7839 = vunpack.c.l.b16 %v7766
      %v7840 = vunpack.c.l.b16 %v7767
      %v7841 = vunpack.c.l.b16 %v7768
      %v7842 = vunpack.c.l.b16 %v7769
      %v7843 = vunpack.c.l.b16 %v7770
      %v7844 = vunpack.c.l.b16 %v7771
      %v7845 = vunpack.c.l.b16 %v7772
      %v7846 = vunpack.c.l.b16 %v7773
      %v7847 = vunpack.c.l.b16 %v7774
      %v7848 = vunpack.c.l.b16 %v7775
      %v7849 = vunpack.c.l.b16 %v7776
      %v7850 = vunpack.c.l.b16 %v7777
      %v7851 = vunpack.c.l.b16 %v7778
      %v7852 = vunpack.c.l.b16 %v7779
      %v7853 = vunpack.c.l.b16 %v7780
      %v7854 = vunpack.c.l.b16 %v7781
      %v7855 = vunpack.c.l.b16 %v7782
      %v7856 = vunpack.c.l.b16 %v7783
      %v7857 = vunpack.c.l.b16 %v7784
      %v7858 = vunpack.c.l.b16 %v7785
      %v7859 = vunpack.c.l.b16 %v7786
      %v7860 = vunpack.c.l.b16 %v7787
      %v7861 = vunpack.c.l.b16 %v7788
      %v7862 = vunpack.c.l.b16 %v7789
      %v7863 = vunpack.c.l.b16 %v7790
      %v7864 = vunpack.c.l.b16 %v7791
      %v7865 = vunpack.c.l.b16 %v7792
      %v7866 = vunpack.c.l.b16 %v7793
      %v7867 = vunpack.c.l.b16 %v7794
      %v7868 = vunpack.c.l.b16 %v7795
      %v7869 = vunpack.c.l.b16 %v7796
      %v7870 = vunpack.c.l.b16 %v7797
      %v7871 = vunpack.c.l.b16 %v7798
      %v7872 = vpack.c.b16 %v7839, %v7838
      %v7873 = vpack.c.b16 %v7841, %v7840
      %v7874 = vpack.c.b16 %v7843, %v7842
      %v7875 = vpack.c.b16 %v7845, %v7844
      %v7876 = vpack.c.b16 %v7847, %v7846
      %v7877 = vpack.c.b16 %v7849, %v7848
      %v7878 = vpack.c.b16 %v7851, %v7850
      %v7879 = vpack.c.b16 %v7853, %v7852
      %v7880 = vpack.c.b16 %v7855, %v7854
      %v7881 = vpack.c.b16 %v7857, %v7856
      %v7882 = vpack.c.b16 %v7859, %v7858
      %v7883 = vpack.c.b16 %v7861, %v7860
      %v7884 = vpack.c.b16 %v7863, %v7862
      %v7885 = vpack.c.b16 %v7865, %v7864
      %v7886 = vpack.c.b16 %v7867, %v7866
      %v7887 = vpack.c.b16 %v7869, %v7868
      %v7888 = vpack.c.b16 %v7871, %v7870
      %v7889 = vrot.slane %v7872, 2
      %v7890 = vrot.slane %v7873, 2
      %v7891 = vsel %vm3747, %v7889, %v7890
      %v7892 = vrot.slane %v7874, 2
      %v7893 = vsel %vm3747, %v7890, %v7892
      %v7894 = vrot.slane %v7875, 2
      %v7895 = vsel %vm3747, %v7892, %v7894
      %v7896 = vrot.slane %v7876, 2
      %v7897 = vsel %vm3747, %v7894, %v7896
      %v7898 = vrot.slane %v7877, 2
      %v7899 = vsel %vm3747, %v7896, %v7898
      %v7900 = vrot.slane %v7878, 2
      %v7901 = vsel %vm3747, %v7898, %v7900
      %v7902 = vrot.slane %v7879, 2
      %v7903 = vsel %vm3747, %v7900, %v7902
      %v7904 = vrot.slane %v7880, 2
      %v7905 = vsel %vm3747, %v7902, %v7904
      %v7906 = vrot.slane %v7881, 2
      %v7907 = vsel %vm3747, %v7904, %v7906
      %v7908 = vrot.slane %v7882, 2
      %v7909 = vsel %vm3747, %v7906, %v7908
      %v7910 = vrot.slane %v7883, 2
      %v7911 = vsel %vm3747, %v7908, %v7910
      %v7912 = vrot.slane %v7884, 2
      %v7913 = vsel %vm3747, %v7910, %v7912
      %v7914 = vrot.slane %v7885, 2
      %v7915 = vsel %vm3747, %v7912, %v7914
      %v7916 = vrot.slane %v7886, 2
      %v7917 = vsel %vm3747, %v7914, %v7916
      %v7918 = vrot.slane %v7887, 2
      %v7919 = vsel %vm3747, %v7916, %v7918
      %v7920 = vrot.slane %v7888, 2
      %v7921 = vsel %vm3747, %v7918, %v7920
      %v7926 = vunpack.c.l.b16 %v7800
      %v7927 = vunpack.c.l.b16 %v7801
      %v7928 = vunpack.c.l.b16 %v7802
      %v7929 = vunpack.c.l.b16 %v7803
      %v7930 = vpack.c.b16 %v7927, %v7926
      %v7931 = vpack.c.b16 %v7929, %v7928
      %v7935 = vsel %vm859, %v7891, 0
      %v7938 = vsel %vm859, %v7893, 0
      %v7941 = vsel %vm859, %v7895, 0
      %v7944 = vsel %vm859, %v7897, 0
      %v7947 = vsel %vm859, %v7899, 0
      %v7950 = vsel %vm859, %v7901, 0
      %v7953 = vsel %vm859, %v7903, 0
      %v7956 = vsel %vm859, %v7905, 0
      %v7959 = vsel %vm859, %v7907, 0
      %v7962 = vsel %vm859, %v7909, 0
      %v7965 = vsel %vm859, %v7911, 0
      %v7968 = vsel %vm859, %v7913, 0
      %v7971 = vsel %vm859, %v7915, 0
      %v7974 = vsel %vm859, %v7917, 0
      %v7977 = vsel %vm859, %v7919, 0
      %v7980 = vsel %vm859, %v7921, 0
      %v7983 = vsel %vm859, %v7920, 0
      %7985 = vmatprep.subr.bf16.mxu0 0
      %7986 = vmatpush1.bf16.msra.mxu0 %v7930
      %7987 = vmatprep.subr.bf16.mxu0 0
      %7988 = vmatpush1.bf16.msra.mxu0 %v7931
      %7989 = vmatprep.subr.bf16.mxu0 0
      %7990 = vmatpush1.bf16.msra.mxu0 0
      %7991 = vmatprep.subr.bf16.mxu0 0
      %7992 = vmatpush1.bf16.msra.mxu0 0
      %7993 = vmatprep.subr.bf16.mxu0 0
      %7994 = vmatpush1.bf16.msra.mxu0 0
      %7995 = vmatprep.subr.bf16.mxu0 0
      %7996 = vmatpush1.bf16.msra.mxu0 0
      %7997 = vmatprep.subr.bf16.mxu0 0
      %7998 = vmatpush1.bf16.msra.mxu0 0
      %7999 = vmatprep.subr.bf16.mxu0 0
      %8000 = vmatpush1.bf16.msra.mxu0 0
      %8001 = vmatprep.subr.bf16.mxu0 0
      %8002 = vmatpush1.bf16.msra.mxu0 0
      %8003 = vmatprep.subr.bf16.mxu0 0
      %8004 = vmatpush1.bf16.msra.mxu0 0
      %8005 = vmatprep.subr.bf16.mxu0 0
      %8006 = vmatpush1.bf16.msra.mxu0 0
      %8007 = vmatprep.subr.bf16.mxu0 0
      %8008 = vmatpush1.bf16.msra.mxu0 0
      %8009 = vmatprep.subr.bf16.mxu0 0
      %8010 = vmatpush1.bf16.msra.mxu0 0
      %8011 = vmatprep.subr.bf16.mxu0 0
      %8012 = vmatpush1.bf16.msra.mxu0 0
      %8013 = vmatprep.subr.bf16.mxu0 0
      %8014 = vmatpush1.bf16.msra.mxu0 0
      %8015 = vmatprep.subr.bf16.mxu0 0
      %8016 = vmatpush1.bf16.msra.mxu0 0
      %8017 = vmatprep.mubr.bf16.mxu0 0
      %8018 = vmatmul.mubr.bf16.gmra.mrb[0].mxu0 %v7935
      %v8019 = vpop.f32.mrb[0].mxu0
      %v8020 = vadd.f32 0.0, %v8019
      %v8021 = vpop.f32.mrb[0].mxu0
      %v8022 = vpop.f32.mrb[0].mxu0
      %v8023 = vadd.f32 0.0, %v8022
      %v8024 = vpop.f32.mrb[0].mxu0
      %8025 = vmatprep.mubr.bf16.mxu0 0
      %8026 = vmatmul.mubr.bf16.gmra.mrb[0].mxu0 %v7938
      %v8027 = vpop.f32.mrb[0].mxu0
      %v8028 = vadd.f32 0.0, %v8027
      %v8029 = vpop.f32.mrb[0].mxu0
      %v8030 = vpop.f32.mrb[0].mxu0
      %v8031 = vadd.f32 0.0, %v8030
      %v8032 = vpop.f32.mrb[0].mxu0
      %8033 = vmatprep.mubr.bf16.mxu0 0
      %8034 = vmatmul.mubr.bf16.gmra.mrb[0].mxu0 %v7941
      %v8035 = vpop.f32.mrb[0].mxu0
      %v8036 = vadd.f32 0.0, %v8035
      %v8037 = vpop.f32.mrb[0].mxu0
      %v8038 = vpop.f32.mrb[0].mxu0
      %v8039 = vadd.f32 0.0, %v8038
      %v8040 = vpop.f32.mrb[0].mxu0
      %8041 = vmatprep.mubr.bf16.mxu0 0
      %8042 = vmatmul.mubr.bf16.gmra.mrb[0].mxu0 %v7944
      %v8043 = vpop.f32.mrb[0].mxu0
      %v8044 = vadd.f32 0.0, %v8043
      %v8045 = vpop.f32.mrb[0].mxu0
      %v8046 = vpop.f32.mrb[0].mxu0
      %v8047 = vadd.f32 0.0, %v8046
      %v8048 = vpop.f32.mrb[0].mxu0
      %8049 = vmatprep.mubr.bf16.mxu0 0
      %8050 = vmatmul.mubr.bf16.gmra.mrb[0].mxu0 %v7947
      %v8051 = vpop.f32.mrb[0].mxu0
      %v8052 = vadd.f32 0.0, %v8051
      %v8053 = vpop.f32.mrb[0].mxu0
      %v8054 = vpop.f32.mrb[0].mxu0
      %v8055 = vadd.f32 0.0, %v8054
      %v8056 = vpop.f32.mrb[0].mxu0
      %8057 = vmatprep.mubr.bf16.mxu0 0
      %8058 = vmatmul.mubr.bf16.gmra.mrb[0].mxu0 %v7950
      %v8059 = vpop.f32.mrb[0].mxu0
      %v8060 = vadd.f32 0.0, %v8059
      %v8061 = vpop.f32.mrb[0].mxu0
      %v8062 = vpop.f32.mrb[0].mxu0
      %v8063 = vadd.f32 0.0, %v8062
      %v8064 = vpop.f32.mrb[0].mxu0
      %8065 = vmatprep.mubr.bf16.mxu0 0
      %8066 = vmatmul.mubr.bf16.gmra.mrb[0].mxu0 %v7953
      %v8067 = vpop.f32.mrb[0].mxu0
      %v8068 = vadd.f32 0.0, %v8067
      %v8069 = vpop.f32.mrb[0].mxu0
      %v8070 = vpop.f32.mrb[0].mxu0
      %v8071 = vadd.f32 0.0, %v8070
      %v8072 = vpop.f32.mrb[0].mxu0
      %8073 = vmatprep.mubr.bf16.mxu0 0
      %8074 = vmatmul.mubr.bf16.gmra.mrb[0].mxu0 %v7956
      %v8075 = vpop.f32.mrb[0].mxu0
      %v8076 = vadd.f32 0.0, %v8075
      %v8077 = vpop.f32.mrb[0].mxu0
      %v8078 = vpop.f32.mrb[0].mxu0
      %v8079 = vadd.f32 0.0, %v8078
      %v8080 = vpop.f32.mrb[0].mxu0
      %8081 = vmatprep.mubr.bf16.mxu0 0
      %8082 = vmatmul.mubr.bf16.gmra.mrb[0].mxu0 %v7959
      %v8083 = vpop.f32.mrb[0].mxu0
      %v8084 = vadd.f32 0.0, %v8083
      %v8085 = vpop.f32.mrb[0].mxu0
      %v8086 = vpop.f32.mrb[0].mxu0
      %v8087 = vadd.f32 0.0, %v8086
      %v8088 = vpop.f32.mrb[0].mxu0
      %8089 = vmatprep.mubr.bf16.mxu0 0
      %8090 = vmatmul.mubr.bf16.gmra.mrb[0].mxu0 %v7962
      %v8091 = vpop.f32.mrb[0].mxu0
      %v8092 = vadd.f32 0.0, %v8091
      %v8093 = vpop.f32.mrb[0].mxu0
      %v8094 = vpop.f32.mrb[0].mxu0
      %v8095 = vadd.f32 0.0, %v8094
      %v8096 = vpop.f32.mrb[0].mxu0
      %8097 = vmatprep.mubr.bf16.mxu0 0
      %8098 = vmatmul.mubr.bf16.gmra.mrb[0].mxu0 %v7965
      %v8099 = vpop.f32.mrb[0].mxu0
      %v8100 = vadd.f32 0.0, %v8099
      %v8101 = vpop.f32.mrb[0].mxu0
      %v8102 = vpop.f32.mrb[0].mxu0
      %v8103 = vadd.f32 0.0, %v8102
      %v8104 = vpop.f32.mrb[0].mxu0
      %8105 = vmatprep.mubr.bf16.mxu0 0
      %8106 = vmatmul.mubr.bf16.gmra.mrb[0].mxu0 %v7968
      %v8107 = vpop.f32.mrb[0].mxu0
      %v8108 = vadd.f32 0.0, %v8107
      %v8109 = vpop.f32.mrb[0].mxu0
      %v8110 = vpop.f32.mrb[0].mxu0
      %v8111 = vadd.f32 0.0, %v8110
      %v8112 = vpop.f32.mrb[0].mxu0
      %8113 = vmatprep.mubr.bf16.mxu0 0
      %8114 = vmatmul.mubr.bf16.gmra.mrb[0].mxu0 %v7971
      %v8115 = vpop.f32.mrb[0].mxu0
      %v8116 = vadd.f32 0.0, %v8115
      %v8117 = vpop.f32.mrb[0].mxu0
      %v8118 = vpop.f32.mrb[0].mxu0
      %v8119 = vadd.f32 0.0, %v8118
      %v8120 = vpop.f32.mrb[0].mxu0
      %8121 = vmatprep.mubr.bf16.mxu0 0
      %8122 = vmatmul.mubr.bf16.gmra.mrb[0].mxu0 %v7974
      %v8123 = vpop.f32.mrb[0].mxu0
      %v8124 = vadd.f32 0.0, %v8123
      %v8125 = vpop.f32.mrb[0].mxu0
      %v8126 = vpop.f32.mrb[0].mxu0
      %v8127 = vadd.f32 0.0, %v8126
      %v8128 = vpop.f32.mrb[0].mxu0
      %8129 = vmatprep.mubr.bf16.mxu0 0
      %8130 = vmatmul.mubr.bf16.gmra.mrb[0].mxu0 %v7977
      %v8131 = vpop.f32.mrb[0].mxu0
      %v8132 = vadd.f32 0.0, %v8131
      %v8133 = vpop.f32.mrb[0].mxu0
      %v8134 = vpop.f32.mrb[0].mxu0
      %v8135 = vadd.f32 0.0, %v8134
      %v8136 = vpop.f32.mrb[0].mxu0
      %8137 = vmatprep.mubr.bf16.mxu0 0
      %8138 = vmatmul.mubr.bf16.gmra.mrb[0].mxu0 %v7980
      %v8139 = vpop.f32.mrb[0].mxu0
      %v8140 = vadd.f32 0.0, %v8139
      %v8141 = vpop.f32.mrb[0].mxu0
      %v8142 = vpop.f32.mrb[0].mxu0
      %v8143 = vadd.f32 0.0, %v8142
      %v8144 = vpop.f32.mrb[0].mxu0
      %8145 = vmatprep.mubr.bf16.mxu0 0
      %8146 = vmatmul.mubr.bf16.gmra.mrb[0].mxu0 %v7983
      %v8147 = vpop.f32.mrb[0].mxu0
      %v8148 = vadd.f32 0.0, %v8147
      %v8149 = vpop.f32.mrb[0].mxu0
      %v8150 = vpop.f32.mrb[0].mxu0
      %v8151 = vpop.f32.mrb[0].mxu0
      %8152 = vdwg.mxu0
      %v8153 = vadd.f32 %v7732, %v8020
      %v8154 = vadd.f32 %v7733, %v8023
      %v8155 = vadd.f32 %v7734, %v8028
      %v8156 = vadd.f32 %v7735, %v8031
      %v8157 = vadd.f32 %v7736, %v8036
      %v8158 = vadd.f32 %v7737, %v8039
      %v8159 = vadd.f32 %v7738, %v8044
      %v8160 = vadd.f32 %v7739, %v8047
      %v8161 = vadd.f32 %v7740, %v8052
      %v8162 = vadd.f32 %v7741, %v8055
      %v8163 = vadd.f32 %v7742, %v8060
      %v8164 = vadd.f32 %v7743, %v8063
      %v8165 = vadd.f32 %v7744, %v8068
      %v8166 = vadd.f32 %v7745, %v8071
      %v8167 = vadd.f32 %v7746, %v8076
      %v8168 = vadd.f32 %v7747, %v8079
      %v8169 = vadd.f32 %v7748, %v8084
      %v8170 = vadd.f32 %v7749, %v8087
      %v8171 = vadd.f32 %v7750, %v8092
      %v8172 = vadd.f32 %v7751, %v8095
      %v8173 = vadd.f32 %v7752, %v8100
      %v8174 = vadd.f32 %v7753, %v8103
      %v8175 = vadd.f32 %v7754, %v8108
      %v8176 = vadd.f32 %v7755, %v8111
      %v8177 = vadd.f32 %v7756, %v8116
      %v8178 = vadd.f32 %v7757, %v8119
      %v8179 = vadd.f32 %v7758, %v8124
      %v8180 = vadd.f32 %v7759, %v8127
      %v8181 = vadd.f32 %v7760, %v8132
      %v8182 = vadd.f32 %v7761, %v8135
      %v8183 = vadd.f32 %v7762, %v8140
      %v8184 = vadd.f32 %v7763, %v8143
      %v8185 = vadd.f32 %v7764, %v8148
      %v8186 = vld [vmem:[#allocation4 + $0xac] sm:$0x3]
      %s8187 = scalar_lea.vmem %s4, 256
      %v8188 = vld [vmem:[%s8187] sm:$0xf]
      %v8189 = vld [vmem:[%s8187 + $0x4] sm:$0xf]
      %v8190 = vld [vmem:[%s8187 + $0x8] sm:$0xf]
      %v8191 = vld [vmem:[%s8187 + $0xc] sm:$0xf]
      %v8193 = vunpack.c.l.b16 %v8186
      %v8194 = vpack.c.b16 %v8193, %v7870
      %v8196 = vshrl.u32 %v7872, 16
      %v8198 = vrot.slane %v8196, 2
      %v8199 = vshll.u32 %v7872, 16
      %v8201 = vrot.slane %v8199, 3
      %v8202 = vor.u32 %v8198, %v8201
      %v8204 = vshrl.u32 %v7873, 16
      %v8206 = vrot.slane %v8204, 2
      %v8207 = vshll.u32 %v7873, 16
      %v8209 = vrot.slane %v8207, 3
      %v8210 = vor.u32 %v8206, %v8209
      %v8211 = vsel %vm4475, %v8202, %v8210
      %v8213 = vshrl.u32 %v7874, 16
      %v8215 = vrot.slane %v8213, 2
      %v8216 = vshll.u32 %v7874, 16
      %v8218 = vrot.slane %v8216, 3
      %v8219 = vor.u32 %v8215, %v8218
      %v8220 = vsel %vm4475, %v8210, %v8219
      %v8222 = vshrl.u32 %v7875, 16
      %v8224 = vrot.slane %v8222, 2
      %v8225 = vshll.u32 %v7875, 16
      %v8227 = vrot.slane %v8225, 3
      %v8228 = vor.u32 %v8224, %v8227
      %v8229 = vsel %vm4475, %v8219, %v8228
      %v8231 = vshrl.u32 %v7876, 16
      %v8233 = vrot.slane %v8231, 2
      %v8234 = vshll.u32 %v7876, 16
      %v8236 = vrot.slane %v8234, 3
      %v8237 = vor.u32 %v8233, %v8236
      %v8238 = vsel %vm4475, %v8228, %v8237
      %v8240 = vshrl.u32 %v7877, 16
      %v8242 = vrot.slane %v8240, 2
      %v8243 = vshll.u32 %v7877, 16
      %v8245 = vrot.slane %v8243, 3
      %v8246 = vor.u32 %v8242, %v8245
      %v8247 = vsel %vm4475, %v8237, %v8246
      %v8249 = vshrl.u32 %v7878, 16
      %v8251 = vrot.slane %v8249, 2
      %v8252 = vshll.u32 %v7878, 16
      %v8254 = vrot.slane %v8252, 3
      %v8255 = vor.u32 %v8251, %v8254
      %v8256 = vsel %vm4475, %v8246, %v8255
      %v8258 = vshrl.u32 %v7879, 16
      %v8260 = vrot.slane %v8258, 2
      %v8261 = vshll.u32 %v7879, 16
      %v8263 = vrot.slane %v8261, 3
      %v8264 = vor.u32 %v8260, %v8263
      %v8265 = vsel %vm4475, %v8255, %v8264
      %v8267 = vshrl.u32 %v7880, 16
      %v8269 = vrot.slane %v8267, 2
      %v8270 = vshll.u32 %v7880, 16
      %v8272 = vrot.slane %v8270, 3
      %v8273 = vor.u32 %v8269, %v8272
      %v8274 = vsel %vm4475, %v8264, %v8273
      %v8276 = vshrl.u32 %v7881, 16
      %v8278 = vrot.slane %v8276, 2
      %v8279 = vshll.u32 %v7881, 16
      %v8281 = vrot.slane %v8279, 3
      %v8282 = vor.u32 %v8278, %v8281
      %v8283 = vsel %vm4475, %v8273, %v8282
      %v8285 = vshrl.u32 %v7882, 16
      %v8287 = vrot.slane %v8285, 2
      %v8288 = vshll.u32 %v7882, 16
      %v8290 = vrot.slane %v8288, 3
      %v8291 = vor.u32 %v8287, %v8290
      %v8292 = vsel %vm4475, %v8282, %v8291
      %v8294 = vshrl.u32 %v7883, 16
      %v8296 = vrot.slane %v8294, 2
      %v8297 = vshll.u32 %v7883, 16
      %v8299 = vrot.slane %v8297, 3
      %v8300 = vor.u32 %v8296, %v8299
      %v8301 = vsel %vm4475, %v8291, %v8300
      %v8303 = vshrl.u32 %v7884, 16
      %v8305 = vrot.slane %v8303, 2
      %v8306 = vshll.u32 %v7884, 16
      %v8308 = vrot.slane %v8306, 3
      %v8309 = vor.u32 %v8305, %v8308
      %v8310 = vsel %vm4475, %v8300, %v8309
      %v8312 = vshrl.u32 %v7885, 16
      %v8314 = vrot.slane %v8312, 2
      %v8315 = vshll.u32 %v7885, 16
      %v8317 = vrot.slane %v8315, 3
      %v8318 = vor.u32 %v8314, %v8317
      %v8319 = vsel %vm4475, %v8309, %v8318
      %v8321 = vshrl.u32 %v7886, 16
      %v8323 = vrot.slane %v8321, 2
      %v8324 = vshll.u32 %v7886, 16
      %v8326 = vrot.slane %v8324, 3
      %v8327 = vor.u32 %v8323, %v8326
      %v8328 = vsel %vm4475, %v8318, %v8327
      %v8330 = vshrl.u32 %v7887, 16
      %v8332 = vrot.slane %v8330, 2
      %v8333 = vshll.u32 %v7887, 16
      %v8335 = vrot.slane %v8333, 3
      %v8336 = vor.u32 %v8332, %v8335
      %v8337 = vsel %vm4475, %v8327, %v8336
      %v8339 = vshrl.u32 %v8194, 16
      %v8341 = vrot.slane %v8339, 2
      %v8342 = vshll.u32 %v8194, 16
      %v8344 = vrot.slane %v8342, 3
      %v8345 = vor.u32 %v8341, %v8344
      %v8346 = vsel %vm4475, %v8336, %v8345
      %v8351 = vunpack.c.l.b16 %v8188
      %v8352 = vunpack.c.l.b16 %v8189
      %v8353 = vunpack.c.l.b16 %v8190
      %v8354 = vunpack.c.l.b16 %v8191
      %v8355 = vpack.c.b16 %v8352, %v8351
      %v8356 = vpack.c.b16 %v8354, %v8353
      %v8360 = vsel %vm859, %v8211, 0
      %v8363 = vsel %vm859, %v8220, 0
      %v8366 = vsel %vm859, %v8229, 0
      %v8369 = vsel %vm859, %v8238, 0
      %v8372 = vsel %vm859, %v8247, 0
      %v8375 = vsel %vm859, %v8256, 0
      %v8378 = vsel %vm859, %v8265, 0
      %v8381 = vsel %vm859, %v8274, 0
      %v8384 = vsel %vm859, %v8283, 0
      %v8387 = vsel %vm859, %v8292, 0
      %v8390 = vsel %vm859, %v8301, 0
      %v8393 = vsel %vm859, %v8310, 0
      %v8396 = vsel %vm859, %v8319, 0
      %v8399 = vsel %vm859, %v8328, 0
      %v8402 = vsel %vm859, %v8337, 0
      %v8405 = vsel %vm859, %v8346, 0
      %v8408 = vsel %vm859, %v8345, 0
      %8410 = vmatprep.subr.bf16.mxu0 0
      %8411 = vmatpush1.bf16.msra.mxu0 %v8355
      %8412 = vmatprep.subr.bf16.mxu0 0
      %8413 = vmatpush1.bf16.msra.mxu0 %v8356
      %8414 = vmatprep.subr.bf16.mxu0 0
      %8415 = vmatpush1.bf16.msra.mxu0 0
      %8416 = vmatprep.subr.bf16.mxu0 0
      %8417 = vmatpush1.bf16.msra.mxu0 0
      %8418 = vmatprep.subr.bf16.mxu0 0
      %8419 = vmatpush1.bf16.msra.mxu0 0
      %8420 = vmatprep.subr.bf16.mxu0 0
      %8421 = vmatpush1.bf16.msra.mxu0 0
      %8422 = vmatprep.subr.bf16.mxu0 0
      %8423 = vmatpush1.bf16.msra.mxu0 0
      %8424 = vmatprep.subr.bf16.mxu0 0
      %8425 = vmatpush1.bf16.msra.mxu0 0
      %8426 = vmatprep.subr.bf16.mxu0 0
      %8427 = vmatpush1.bf16.msra.mxu0 0
      %8428 = vmatprep.subr.bf16.mxu0 0
      %8429 = vmatpush1.bf16.msra.mxu0 0
      %8430 = vmatprep.subr.bf16.mxu0 0
      %8431 = vmatpush1.bf16.msra.mxu0 0
      %8432 = vmatprep.subr.bf16.mxu0 0
      %8433 = vmatpush1.bf16.msra.mxu0 0
      %8434 = vmatprep.subr.bf16.mxu0 0
      %8435 = vmatpush1.bf16.msra.mxu0 0
      %8436 = vmatprep.subr.bf16.mxu0 0
      %8437 = vmatpush1.bf16.msra.mxu0 0
      %8438 = vmatprep.subr.bf16.mxu0 0
      %8439 = vmatpush1.bf16.msra.mxu0 0
      %8440 = vmatprep.subr.bf16.mxu0 0
      %8441 = vmatpush1.bf16.msra.mxu0 0
      %8442 = vmatprep.mubr.bf16.mxu0 0
      %8443 = vmatmul.mubr.bf16.gmra.mrb[0].mxu0 %v8360
      %v8444 = vpop.f32.mrb[0].mxu0
      %v8445 = vadd.f32 0.0, %v8444
      %v8446 = vpop.f32.mrb[0].mxu0
      %v8447 = vpop.f32.mrb[0].mxu0
      %v8448 = vadd.f32 0.0, %v8447
      %v8449 = vpop.f32.mrb[0].mxu0
      %8450 = vmatprep.mubr.bf16.mxu0 0
      %8451 = vmatmul.mubr.bf16.gmra.mrb[0].mxu0 %v8363
      %v8452 = vpop.f32.mrb[0].mxu0
      %v8453 = vadd.f32 0.0, %v8452
      %v8454 = vpop.f32.mrb[0].mxu0
      %v8455 = vpop.f32.mrb[0].mxu0
      %v8456 = vadd.f32 0.0, %v8455
      %v8457 = vpop.f32.mrb[0].mxu0
      %8458 = vmatprep.mubr.bf16.mxu0 0
      %8459 = vmatmul.mubr.bf16.gmra.mrb[0].mxu0 %v8366
      %v8460 = vpop.f32.mrb[0].mxu0
      %v8461 = vadd.f32 0.0, %v8460
      %v8462 = vpop.f32.mrb[0].mxu0
      %v8463 = vpop.f32.mrb[0].mxu0
      %v8464 = vadd.f32 0.0, %v8463
      %v8465 = vpop.f32.mrb[0].mxu0
      %8466 = vmatprep.mubr.bf16.mxu0 0
      %8467 = vmatmul.mubr.bf16.gmra.mrb[0].mxu0 %v8369
      %v8468 = vpop.f32.mrb[0].mxu0
      %v8469 = vadd.f32 0.0, %v8468
      %v8470 = vpop.f32.mrb[0].mxu0
      %v8471 = vpop.f32.mrb[0].mxu0
      %v8472 = vadd.f32 0.0, %v8471
      %v8473 = vpop.f32.mrb[0].mxu0
      %8474 = vmatprep.mubr.bf16.mxu0 0
      %8475 = vmatmul.mubr.bf16.gmra.mrb[0].mxu0 %v8372
      %v8476 = vpop.f32.mrb[0].mxu0
      %v8477 = vadd.f32 0.0, %v8476
      %v8478 = vpop.f32.mrb[0].mxu0
      %v8479 = vpop.f32.mrb[0].mxu0
      %v8480 = vadd.f32 0.0, %v8479
      %v8481 = vpop.f32.mrb[0].mxu0
      %8482 = vmatprep.mubr.bf16.mxu0 0
      %8483 = vmatmul.mubr.bf16.gmra.mrb[0].mxu0 %v8375
      %v8484 = vpop.f32.mrb[0].mxu0
      %v8485 = vadd.f32 0.0, %v8484
      %v8486 = vpop.f32.mrb[0].mxu0
      %v8487 = vpop.f32.mrb[0].mxu0
      %v8488 = vadd.f32 0.0, %v8487
      %v8489 = vpop.f32.mrb[0].mxu0
      %8490 = vmatprep.mubr.bf16.mxu0 0
      %8491 = vmatmul.mubr.bf16.gmra.mrb[0].mxu0 %v8378
      %v8492 = vpop.f32.mrb[0].mxu0
      %v8493 = vadd.f32 0.0, %v8492
      %v8494 = vpop.f32.mrb[0].mxu0
      %v8495 = vpop.f32.mrb[0].mxu0
      %v8496 = vadd.f32 0.0, %v8495
      %v8497 = vpop.f32.mrb[0].mxu0
      %8498 = vmatprep.mubr.bf16.mxu0 0
      %8499 = vmatmul.mubr.bf16.gmra.mrb[0].mxu0 %v8381
      %v8500 = vpop.f32.mrb[0].mxu0
      %v8501 = vadd.f32 0.0, %v8500
      %v8502 = vpop.f32.mrb[0].mxu0
      %v8503 = vpop.f32.mrb[0].mxu0
      %v8504 = vadd.f32 0.0, %v8503
      %v8505 = vpop.f32.mrb[0].mxu0
      %8506 = vmatprep.mubr.bf16.mxu0 0
      %8507 = vmatmul.mubr.bf16.gmra.mrb[0].mxu0 %v8384
      %v8508 = vpop.f32.mrb[0].mxu0
      %v8509 = vadd.f32 0.0, %v8508
      %v8510 = vpop.f32.mrb[0].mxu0
      %v8511 = vpop.f32.mrb[0].mxu0
      %v8512 = vadd.f32 0.0, %v8511
      %v8513 = vpop.f32.mrb[0].mxu0
      %8514 = vmatprep.mubr.bf16.mxu0 0
      %8515 = vmatmul.mubr.bf16.gmra.mrb[0].mxu0 %v8387
      %v8516 = vpop.f32.mrb[0].mxu0
      %v8517 = vadd.f32 0.0, %v8516
      %v8518 = vpop.f32.mrb[0].mxu0
      %v8519 = vpop.f32.mrb[0].mxu0
      %v8520 = vadd.f32 0.0, %v8519
      %v8521 = vpop.f32.mrb[0].mxu0
      %8522 = vmatprep.mubr.bf16.mxu0 0
      %8523 = vmatmul.mubr.bf16.gmra.mrb[0].mxu0 %v8390
      %v8524 = vpop.f32.mrb[0].mxu0
      %v8525 = vadd.f32 0.0, %v8524
      %v8526 = vpop.f32.mrb[0].mxu0
      %v8527 = vpop.f32.mrb[0].mxu0
      %v8528 = vadd.f32 0.0, %v8527
      %v8529 = vpop.f32.mrb[0].mxu0
      %8530 = vmatprep.mubr.bf16.mxu0 0
      %8531 = vmatmul.mubr.bf16.gmra.mrb[0].mxu0 %v8393
      %v8532 = vpop.f32.mrb[0].mxu0
      %v8533 = vadd.f32 0.0, %v8532
      %v8534 = vpop.f32.mrb[0].mxu0
      %v8535 = vpop.f32.mrb[0].mxu0
      %v8536 = vadd.f32 0.0, %v8535
      %v8537 = vpop.f32.mrb[0].mxu0
      %8538 = vmatprep.mubr.bf16.mxu0 0
      %8539 = vmatmul.mubr.bf16.gmra.mrb[0].mxu0 %v8396
      %v8540 = vpop.f32.mrb[0].mxu0
      %v8541 = vadd.f32 0.0, %v8540
      %v8542 = vpop.f32.mrb[0].mxu0
      %v8543 = vpop.f32.mrb[0].mxu0
      %v8544 = vadd.f32 0.0, %v8543
      %v8545 = vpop.f32.mrb[0].mxu0
      %8546 = vmatprep.mubr.bf16.mxu0 0
      %8547 = vmatmul.mubr.bf16.gmra.mrb[0].mxu0 %v8399
      %v8548 = vpop.f32.mrb[0].mxu0
      %v8549 = vadd.f32 0.0, %v8548
      %v8550 = vpop.f32.mrb[0].mxu0
      %v8551 = vpop.f32.mrb[0].mxu0
      %v8552 = vadd.f32 0.0, %v8551
      %v8553 = vpop.f32.mrb[0].mxu0
      %8554 = vmatprep.mubr.bf16.mxu0 0
      %8555 = vmatmul.mubr.bf16.gmra.mrb[0].mxu0 %v8402
      %v8556 = vpop.f32.mrb[0].mxu0
      %v8557 = vadd.f32 0.0, %v8556
      %v8558 = vpop.f32.mrb[0].mxu0
      %v8559 = vpop.f32.mrb[0].mxu0
      %v8560 = vadd.f32 0.0, %v8559
      %v8561 = vpop.f32.mrb[0].mxu0
      %8562 = vmatprep.mubr.bf16.mxu0 0
      %8563 = vmatmul.mubr.bf16.gmra.mrb[0].mxu0 %v8405
      %v8564 = vpop.f32.mrb[0].mxu0
      %v8565 = vadd.f32 0.0, %v8564
      %v8566 = vpop.f32.mrb[0].mxu0
      %v8567 = vpop.f32.mrb[0].mxu0
      %v8568 = vadd.f32 0.0, %v8567
      %v8569 = vpop.f32.mrb[0].mxu0
      %8570 = vmatprep.mubr.bf16.mxu0 0
      %8571 = vmatmul.mubr.bf16.gmra.mrb[0].mxu0 %v8408
      %v8572 = vpop.f32.mrb[0].mxu0
      %v8573 = vadd.f32 0.0, %v8572
      %v8574 = vpop.f32.mrb[0].mxu0
      %v8575 = vpop.f32.mrb[0].mxu0
      %v8576 = vpop.f32.mrb[0].mxu0
      %8577 = vdwg.mxu0
      %v8578 = vadd.f32 %v8153, %v8445
      %v8579 = vadd.f32 %v8154, %v8448
      %v8580 = vadd.f32 %v8155, %v8453
      %v8581 = vadd.f32 %v8156, %v8456
      %v8582 = vadd.f32 %v8157, %v8461
      %v8583 = vadd.f32 %v8158, %v8464
      %v8584 = vadd.f32 %v8159, %v8469
      %v8585 = vadd.f32 %v8160, %v8472
      %v8586 = vadd.f32 %v8161, %v8477
      %v8587 = vadd.f32 %v8162, %v8480
      %v8588 = vadd.f32 %v8163, %v8485
      %v8589 = vadd.f32 %v8164, %v8488
      %v8590 = vadd.f32 %v8165, %v8493
      %v8591 = vadd.f32 %v8166, %v8496
      %v8592 = vadd.f32 %v8167, %v8501
      %v8593 = vadd.f32 %v8168, %v8504
      %v8594 = vadd.f32 %v8169, %v8509
      %v8595 = vadd.f32 %v8170, %v8512
      %v8596 = vadd.f32 %v8171, %v8517
      %v8597 = vadd.f32 %v8172, %v8520
      %v8598 = vadd.f32 %v8173, %v8525
      %v8599 = vadd.f32 %v8174, %v8528
      %v8600 = vadd.f32 %v8175, %v8533
      %v8601 = vadd.f32 %v8176, %v8536
      %v8602 = vadd.f32 %v8177, %v8541
      %v8603 = vadd.f32 %v8178, %v8544
      %v8604 = vadd.f32 %v8179, %v8549
      %v8605 = vadd.f32 %v8180, %v8552
      %v8606 = vadd.f32 %v8181, %v8557
      %v8607 = vadd.f32 %v8182, %v8560
      %v8608 = vadd.f32 %v8183, %v8565
      %v8609 = vadd.f32 %v8184, %v8568
      %v8610 = vadd.f32 %v8185, %v8573
      %v8611 = vld [vmem:[#allocation4 + $0x28] sm:$0x8]
      %s8612 = scalar_lea.vmem %s4, 272
      %v8613 = vld [vmem:[%s8612] sm:$0xf]
      %v8614 = vld [vmem:[%s8612 + $0x4] sm:$0xf]
      %v8615 = vld [vmem:[%s8612 + $0x8] sm:$0xf]
      %v8616 = vld [vmem:[%s8612 + $0xc] sm:$0xf]
      %v8618 = vunpack.c.l.b16 %v8611
      %v8619 = vpack.c.b16 %v7839, %v8618
      %v8620 = vrot.slane %v8619, 3
      %v8621 = vrot.slane %v7873, 3
      %v8622 = vsel %vm4901, %v8620, %v8621
      %v8623 = vrot.slane %v7874, 3
      %v8624 = vsel %vm4901, %v8621, %v8623
      %v8625 = vrot.slane %v7875, 3
      %v8626 = vsel %vm4901, %v8623, %v8625
      %v8627 = vrot.slane %v7876, 3
      %v8628 = vsel %vm4901, %v8625, %v8627
      %v8629 = vrot.slane %v7877, 3
      %v8630 = vsel %vm4901, %v8627, %v8629
      %v8631 = vrot.slane %v7878, 3
      %v8632 = vsel %vm4901, %v8629, %v8631
      %v8633 = vrot.slane %v7879, 3
      %v8634 = vsel %vm4901, %v8631, %v8633
      %v8635 = vrot.slane %v7880, 3
      %v8636 = vsel %vm4901, %v8633, %v8635
      %v8637 = vrot.slane %v7881, 3
      %v8638 = vsel %vm4901, %v8635, %v8637
      %v8639 = vrot.slane %v7882, 3
      %v8640 = vsel %vm4901, %v8637, %v8639
      %v8641 = vrot.slane %v7883, 3
      %v8642 = vsel %vm4901, %v8639, %v8641
      %v8643 = vrot.slane %v7884, 3
      %v8644 = vsel %vm4901, %v8641, %v8643
      %v8645 = vrot.slane %v7885, 3
      %v8646 = vsel %vm4901, %v8643, %v8645
      %v8647 = vrot.slane %v7886, 3
      %v8648 = vsel %vm4901, %v8645, %v8647
      %v8649 = vrot.slane %v7887, 3
      %v8650 = vsel %vm4901, %v8647, %v8649
      %v8651 = vrot.slane %v8194, 3
      %v8652 = vsel %vm4901, %v8649, %v8651
      %v8657 = vunpack.c.l.b16 %v8613
      %v8658 = vunpack.c.l.b16 %v8614
      %v8659 = vunpack.c.l.b16 %v8615
      %v8660 = vunpack.c.l.b16 %v8616
      %v8661 = vpack.c.b16 %v8658, %v8657
      %v8662 = vpack.c.b16 %v8660, %v8659
      %v8666 = vsel %vm859, %v8622, 0
      %v8669 = vsel %vm859, %v8624, 0
      %v8672 = vsel %vm859, %v8626, 0
      %v8675 = vsel %vm859, %v8628, 0
      %v8678 = vsel %vm859, %v8630, 0
      %v8681 = vsel %vm859, %v8632, 0
      %v8684 = vsel %vm859, %v8634, 0
      %v8687 = vsel %vm859, %v8636, 0
      %v8690 = vsel %vm859, %v8638, 0
      %v8693 = vsel %vm859, %v8640, 0
      %v8696 = vsel %vm859, %v8642, 0
      %v8699 = vsel %vm859, %v8644, 0
      %v8702 = vsel %vm859, %v8646, 0
      %v8705 = vsel %vm859, %v8648, 0
      %v8708 = vsel %vm859, %v8650, 0
      %v8711 = vsel %vm859, %v8652, 0
      %v8714 = vsel %vm859, %v8651, 0
      %8716 = vmatprep.subr.bf16.mxu0 0
      %8717 = vmatpush1.bf16.msra.mxu0 %v8661
      %8718 = vmatprep.subr.bf16.mxu0 0
      %8719 = vmatpush1.bf16.msra.mxu0 %v8662
      %8720 = vmatprep.subr.bf16.mxu0 0
      %8721 = vmatpush1.bf16.msra.mxu0 0
      %8722 = vmatprep.subr.bf16.mxu0 0
      %8723 = vmatpush1.bf16.msra.mxu0 0
      %8724 = vmatprep.subr.bf16.mxu0 0
      %8725 = vmatpush1.bf16.msra.mxu0 0
      %8726 = vmatprep.subr.bf16.mxu0 0
      %8727 = vmatpush1.bf16.msra.mxu0 0
      %8728 = vmatprep.subr.bf16.mxu0 0
      %8729 = vmatpush1.bf16.msra.mxu0 0
      %8730 = vmatprep.subr.bf16.mxu0 0
      %8731 = vmatpush1.bf16.msra.mxu0 0
      %8732 = vmatprep.subr.bf16.mxu0 0
      %8733 = vmatpush1.bf16.msra.mxu0 0
      %8734 = vmatprep.subr.bf16.mxu0 0
      %8735 = vmatpush1.bf16.msra.mxu0 0
      %8736 = vmatprep.subr.bf16.mxu0 0
      %8737 = vmatpush1.bf16.msra.mxu0 0
      %8738 = vmatprep.subr.bf16.mxu0 0
      %8739 = vmatpush1.bf16.msra.mxu0 0
      %8740 = vmatprep.subr.bf16.mxu0 0
      %8741 = vmatpush1.bf16.msra.mxu0 0
      %8742 = vmatprep.subr.bf16.mxu0 0
      %8743 = vmatpush1.bf16.msra.mxu0 0
      %8744 = vmatprep.subr.bf16.mxu0 0
      %8745 = vmatpush1.bf16.msra.mxu0 0
      %8746 = vmatprep.subr.bf16.mxu0 0
      %8747 = vmatpush1.bf16.msra.mxu0 0
      %8748 = vmatprep.mubr.bf16.mxu0 0
      %8749 = vmatmul.mubr.bf16.gmra.mrb[0].mxu0 %v8666
      %v8750 = vpop.f32.mrb[0].mxu0
      %v8751 = vadd.f32 0.0, %v8750
      %v8752 = vpop.f32.mrb[0].mxu0
      %v8753 = vpop.f32.mrb[0].mxu0
      %v8754 = vadd.f32 0.0, %v8753
      %v8755 = vpop.f32.mrb[0].mxu0
      %8756 = vmatprep.mubr.bf16.mxu0 0
      %8757 = vmatmul.mubr.bf16.gmra.mrb[0].mxu0 %v8669
      %v8758 = vpop.f32.mrb[0].mxu0
      %v8759 = vadd.f32 0.0, %v8758
      %v8760 = vpop.f32.mrb[0].mxu0
      %v8761 = vpop.f32.mrb[0].mxu0
      %v8762 = vadd.f32 0.0, %v8761
      %v8763 = vpop.f32.mrb[0].mxu0
      %8764 = vmatprep.mubr.bf16.mxu0 0
      %8765 = vmatmul.mubr.bf16.gmra.mrb[0].mxu0 %v8672
      %v8766 = vpop.f32.mrb[0].mxu0
      %v8767 = vadd.f32 0.0, %v8766
      %v8768 = vpop.f32.mrb[0].mxu0
      %v8769 = vpop.f32.mrb[0].mxu0
      %v8770 = vadd.f32 0.0, %v8769
      %v8771 = vpop.f32.mrb[0].mxu0
      %8772 = vmatprep.mubr.bf16.mxu0 0
      %8773 = vmatmul.mubr.bf16.gmra.mrb[0].mxu0 %v8675
      %v8774 = vpop.f32.mrb[0].mxu0
      %v8775 = vadd.f32 0.0, %v8774
      %v8776 = vpop.f32.mrb[0].mxu0
      %v8777 = vpop.f32.mrb[0].mxu0
      %v8778 = vadd.f32 0.0, %v8777
      %v8779 = vpop.f32.mrb[0].mxu0
      %8780 = vmatprep.mubr.bf16.mxu0 0
      %8781 = vmatmul.mubr.bf16.gmra.mrb[0].mxu0 %v8678
      %v8782 = vpop.f32.mrb[0].mxu0
      %v8783 = vadd.f32 0.0, %v8782
      %v8784 = vpop.f32.mrb[0].mxu0
      %v8785 = vpop.f32.mrb[0].mxu0
      %v8786 = vadd.f32 0.0, %v8785
      %v8787 = vpop.f32.mrb[0].mxu0
      %8788 = vmatprep.mubr.bf16.mxu0 0
      %8789 = vmatmul.mubr.bf16.gmra.mrb[0].mxu0 %v8681
      %v8790 = vpop.f32.mrb[0].mxu0
      %v8791 = vadd.f32 0.0, %v8790
      %v8792 = vpop.f32.mrb[0].mxu0
      %v8793 = vpop.f32.mrb[0].mxu0
      %v8794 = vadd.f32 0.0, %v8793
      %v8795 = vpop.f32.mrb[0].mxu0
      %8796 = vmatprep.mubr.bf16.mxu0 0
      %8797 = vmatmul.mubr.bf16.gmra.mrb[0].mxu0 %v8684
      %v8798 = vpop.f32.mrb[0].mxu0
      %v8799 = vadd.f32 0.0, %v8798
      %v8800 = vpop.f32.mrb[0].mxu0
      %v8801 = vpop.f32.mrb[0].mxu0
      %v8802 = vadd.f32 0.0, %v8801
      %v8803 = vpop.f32.mrb[0].mxu0
      %8804 = vmatprep.mubr.bf16.mxu0 0
      %8805 = vmatmul.mubr.bf16.gmra.mrb[0].mxu0 %v8687
      %v8806 = vpop.f32.mrb[0].mxu0
      %v8807 = vadd.f32 0.0, %v8806
      %v8808 = vpop.f32.mrb[0].mxu0
      %v8809 = vpop.f32.mrb[0].mxu0
      %v8810 = vadd.f32 0.0, %v8809
      %v8811 = vpop.f32.mrb[0].mxu0
      %8812 = vmatprep.mubr.bf16.mxu0 0
      %8813 = vmatmul.mubr.bf16.gmra.mrb[0].mxu0 %v8690
      %v8814 = vpop.f32.mrb[0].mxu0
      %v8815 = vadd.f32 0.0, %v8814
      %v8816 = vpop.f32.mrb[0].mxu0
      %v8817 = vpop.f32.mrb[0].mxu0
      %v8818 = vadd.f32 0.0, %v8817
      %v8819 = vpop.f32.mrb[0].mxu0
      %8820 = vmatprep.mubr.bf16.mxu0 0
      %8821 = vmatmul.mubr.bf16.gmra.mrb[0].mxu0 %v8693
      %v8822 = vpop.f32.mrb[0].mxu0
      %v8823 = vadd.f32 0.0, %v8822
      %v8824 = vpop.f32.mrb[0].mxu0
      %v8825 = vpop.f32.mrb[0].mxu0
      %v8826 = vadd.f32 0.0, %v8825
      %v8827 = vpop.f32.mrb[0].mxu0
      %8828 = vmatprep.mubr.bf16.mxu0 0
      %8829 = vmatmul.mubr.bf16.gmra.mrb[0].mxu0 %v8696
      %v8830 = vpop.f32.mrb[0].mxu0
      %v8831 = vadd.f32 0.0, %v8830
      %v8832 = vpop.f32.mrb[0].mxu0
      %v8833 = vpop.f32.mrb[0].mxu0
      %v8834 = vadd.f32 0.0, %v8833
      %v8835 = vpop.f32.mrb[0].mxu0
      %8836 = vmatprep.mubr.bf16.mxu0 0
      %8837 = vmatmul.mubr.bf16.gmra.mrb[0].mxu0 %v8699
      %v8838 = vpop.f32.mrb[0].mxu0
      %v8839 = vadd.f32 0.0, %v8838
      %v8840 = vpop.f32.mrb[0].mxu0
      %v8841 = vpop.f32.mrb[0].mxu0
      %v8842 = vadd.f32 0.0, %v8841
      %v8843 = vpop.f32.mrb[0].mxu0
      %8844 = vmatprep.mubr.bf16.mxu0 0
      %8845 = vmatmul.mubr.bf16.gmra.mrb[0].mxu0 %v8702
      %v8846 = vpop.f32.mrb[0].mxu0
      %v8847 = vadd.f32 0.0, %v8846
      %v8848 = vpop.f32.mrb[0].mxu0
      %v8849 = vpop.f32.mrb[0].mxu0
      %v8850 = vadd.f32 0.0, %v8849
      %v8851 = vpop.f32.mrb[0].mxu0
      %8852 = vmatprep.mubr.bf16.mxu0 0
      %8853 = vmatmul.mubr.bf16.gmra.mrb[0].mxu0 %v8705
      %v8854 = vpop.f32.mrb[0].mxu0
      %v8855 = vadd.f32 0.0, %v8854
      %v8856 = vpop.f32.mrb[0].mxu0
      %v8857 = vpop.f32.mrb[0].mxu0
      %v8858 = vadd.f32 0.0, %v8857
      %v8859 = vpop.f32.mrb[0].mxu0
      %8860 = vmatprep.mubr.bf16.mxu0 0
      %8861 = vmatmul.mubr.bf16.gmra.mrb[0].mxu0 %v8708
      %v8862 = vpop.f32.mrb[0].mxu0
      %v8863 = vadd.f32 0.0, %v8862
      %v8864 = vpop.f32.mrb[0].mxu0
      %v8865 = vpop.f32.mrb[0].mxu0
      %v8866 = vadd.f32 0.0, %v8865
      %v8867 = vpop.f32.mrb[0].mxu0
      %8868 = vmatprep.mubr.bf16.mxu0 0
      %8869 = vmatmul.mubr.bf16.gmra.mrb[0].mxu0 %v8711
      %v8870 = vpop.f32.mrb[0].mxu0
      %v8871 = vadd.f32 0.0, %v8870
      %v8872 = vpop.f32.mrb[0].mxu0
      %v8873 = vpop.f32.mrb[0].mxu0
      %v8874 = vadd.f32 0.0, %v8873
      %v8875 = vpop.f32.mrb[0].mxu0
      %8876 = vmatprep.mubr.bf16.mxu0 0
      %8877 = vmatmul.mubr.bf16.gmra.mrb[0].mxu0 %v8714
      %v8878 = vpop.f32.mrb[0].mxu0
      %v8879 = vadd.f32 0.0, %v8878
      %v8880 = vpop.f32.mrb[0].mxu0
      %v8881 = vpop.f32.mrb[0].mxu0
      %v8882 = vpop.f32.mrb[0].mxu0
      %8883 = vdwg.mxu0
      %v8884 = vadd.f32 %v8578, %v8751
      %v8885 = vadd.f32 %v8579, %v8754
      %v8886 = vadd.f32 %v8580, %v8759
      %v8887 = vadd.f32 %v8581, %v8762
      %v8888 = vadd.f32 %v8582, %v8767
      %v8889 = vadd.f32 %v8583, %v8770
      %v8890 = vadd.f32 %v8584, %v8775
      %v8891 = vadd.f32 %v8585, %v8778
      %v8892 = vadd.f32 %v8586, %v8783
      %v8893 = vadd.f32 %v8587, %v8786
      %v8894 = vadd.f32 %v8588, %v8791
      %v8895 = vadd.f32 %v8589, %v8794
      %v8896 = vadd.f32 %v8590, %v8799
      %v8897 = vadd.f32 %v8591, %v8802
      %v8898 = vadd.f32 %v8592, %v8807
      %v8899 = vadd.f32 %v8593, %v8810
      %v8900 = vadd.f32 %v8594, %v8815
      %v8901 = vadd.f32 %v8595, %v8818
      %v8902 = vadd.f32 %v8596, %v8823
      %v8903 = vadd.f32 %v8597, %v8826
      %v8904 = vadd.f32 %v8598, %v8831
      %v8905 = vadd.f32 %v8599, %v8834
      %v8906 = vadd.f32 %v8600, %v8839
      %v8907 = vadd.f32 %v8601, %v8842
      %v8908 = vadd.f32 %v8602, %v8847
      %v8909 = vadd.f32 %v8603, %v8850
      %v8910 = vadd.f32 %v8604, %v8855
      %v8911 = vadd.f32 %v8605, %v8858
      %v8912 = vadd.f32 %v8606, %v8863
      %v8913 = vadd.f32 %v8607, %v8866
      %v8914 = vadd.f32 %v8608, %v8871
      %v8915 = vadd.f32 %v8609, %v8874
      %v8916 = vadd.f32 %v8610, %v8879
      %v8917 = vld [vmem:[#allocation4 + $0xac] sm:$0x7]
      %s8918 = scalar_lea.vmem %s4, 288
      %v8919 = vld [vmem:[%s8918] sm:$0xf]
      %v8920 = vld [vmem:[%s8918 + $0x4] sm:$0xf]
      %v8921 = vld [vmem:[%s8918 + $0x8] sm:$0xf]
      %v8922 = vld [vmem:[%s8918 + $0xc] sm:$0xf]
      %v8924 = vunpack.c.l.b16 %v8917
      %v8925 = vpack.c.b16 %v8924, %v7870
      %v8927 = vshrl.u32 %v8619, 16
      %v8929 = vrot.slane %v8927, 3
      %v8930 = vshll.u32 %v8619, 16
      %v8932 = vrot.slane %v8930, 4
      %v8933 = vor.u32 %v8929, %v8932
      %v8934 = vrot.slane %v8204, 3
      %v8935 = vrot.slane %v8207, 4
      %v8936 = vor.u32 %v8934, %v8935
      %v8937 = vsel %vm5208, %v8933, %v8936
      %v8938 = vrot.slane %v8213, 3
      %v8939 = vrot.slane %v8216, 4
      %v8940 = vor.u32 %v8938, %v8939
      %v8941 = vsel %vm5208, %v8936, %v8940
      %v8942 = vrot.slane %v8222, 3
      %v8943 = vrot.slane %v8225, 4
      %v8944 = vor.u32 %v8942, %v8943
      %v8945 = vsel %vm5208, %v8940, %v8944
      %v8946 = vrot.slane %v8231, 3
      %v8947 = vrot.slane %v8234, 4
      %v8948 = vor.u32 %v8946, %v8947
      %v8949 = vsel %vm5208, %v8944, %v8948
      %v8950 = vrot.slane %v8240, 3
      %v8951 = vrot.slane %v8243, 4
      %v8952 = vor.u32 %v8950, %v8951
      %v8953 = vsel %vm5208, %v8948, %v8952
      %v8954 = vrot.slane %v8249, 3
      %v8955 = vrot.slane %v8252, 4
      %v8956 = vor.u32 %v8954, %v8955
      %v8957 = vsel %vm5208, %v8952, %v8956
      %v8958 = vrot.slane %v8258, 3
      %v8959 = vrot.slane %v8261, 4
      %v8960 = vor.u32 %v8958, %v8959
      %v8961 = vsel %vm5208, %v8956, %v8960
      %v8962 = vrot.slane %v8267, 3
      %v8963 = vrot.slane %v8270, 4
      %v8964 = vor.u32 %v8962, %v8963
      %v8965 = vsel %vm5208, %v8960, %v8964
      %v8966 = vrot.slane %v8276, 3
      %v8967 = vrot.slane %v8279, 4
      %v8968 = vor.u32 %v8966, %v8967
      %v8969 = vsel %vm5208, %v8964, %v8968
      %v8970 = vrot.slane %v8285, 3
      %v8971 = vrot.slane %v8288, 4
      %v8972 = vor.u32 %v8970, %v8971
      %v8973 = vsel %vm5208, %v8968, %v8972
      %v8974 = vrot.slane %v8294, 3
      %v8975 = vrot.slane %v8297, 4
      %v8976 = vor.u32 %v8974, %v8975
      %v8977 = vsel %vm5208, %v8972, %v8976
      %v8978 = vrot.slane %v8303, 3
      %v8979 = vrot.slane %v8306, 4
      %v8980 = vor.u32 %v8978, %v8979
      %v8981 = vsel %vm5208, %v8976, %v8980
      %v8982 = vrot.slane %v8312, 3
      %v8983 = vrot.slane %v8315, 4
      %v8984 = vor.u32 %v8982, %v8983
      %v8985 = vsel %vm5208, %v8980, %v8984
      %v8986 = vrot.slane %v8321, 3
      %v8987 = vrot.slane %v8324, 4
      %v8988 = vor.u32 %v8986, %v8987
      %v8989 = vsel %vm5208, %v8984, %v8988
      %v8990 = vrot.slane %v8330, 3
      %v8991 = vrot.slane %v8333, 4
      %v8992 = vor.u32 %v8990, %v8991
      %v8993 = vsel %vm5208, %v8988, %v8992
      %v8995 = vshrl.u32 %v8925, 16
      %v8997 = vrot.slane %v8995, 3
      %v8998 = vshll.u32 %v8925, 16
      %v9000 = vrot.slane %v8998, 4
      %v9001 = vor.u32 %v8997, %v9000
      %v9002 = vsel %vm5208, %v8992, %v9001
      %v9007 = vunpack.c.l.b16 %v8919
      %v9008 = vunpack.c.l.b16 %v8920
      %v9009 = vunpack.c.l.b16 %v8921
      %v9010 = vunpack.c.l.b16 %v8922
      %v9011 = vpack.c.b16 %v9008, %v9007
      %v9012 = vpack.c.b16 %v9010, %v9009
      %v9016 = vsel %vm859, %v8937, 0
      %v9019 = vsel %vm859, %v8941, 0
      %v9022 = vsel %vm859, %v8945, 0
      %v9025 = vsel %vm859, %v8949, 0
      %v9028 = vsel %vm859, %v8953, 0
      %v9031 = vsel %vm859, %v8957, 0
      %v9034 = vsel %vm859, %v8961, 0
      %v9037 = vsel %vm859, %v8965, 0
      %v9040 = vsel %vm859, %v8969, 0
      %v9043 = vsel %vm859, %v8973, 0
      %v9046 = vsel %vm859, %v8977, 0
      %v9049 = vsel %vm859, %v8981, 0
      %v9052 = vsel %vm859, %v8985, 0
      %v9055 = vsel %vm859, %v8989, 0
      %v9058 = vsel %vm859, %v8993, 0
      %v9061 = vsel %vm859, %v9002, 0
      %v9064 = vsel %vm859, %v9001, 0
      %9066 = vmatprep.subr.bf16.mxu0 0
      %9067 = vmatpush1.bf16.msra.mxu0 %v9011
      %9068 = vmatprep.subr.bf16.mxu0 0
      %9069 = vmatpush1.bf16.msra.mxu0 %v9012
      %9070 = vmatprep.subr.bf16.mxu0 0
      %9071 = vmatpush1.bf16.msra.mxu0 0
      %9072 = vmatprep.subr.bf16.mxu0 0
      %9073 = vmatpush1.bf16.msra.mxu0 0
      %9074 = vmatprep.subr.bf16.mxu0 0
      %9075 = vmatpush1.bf16.msra.mxu0 0
      %9076 = vmatprep.subr.bf16.mxu0 0
      %9077 = vmatpush1.bf16.msra.mxu0 0
      %9078 = vmatprep.subr.bf16.mxu0 0
      %9079 = vmatpush1.bf16.msra.mxu0 0
      %9080 = vmatprep.subr.bf16.mxu0 0
      %9081 = vmatpush1.bf16.msra.mxu0 0
      %9082 = vmatprep.subr.bf16.mxu0 0
      %9083 = vmatpush1.bf16.msra.mxu0 0
      %9084 = vmatprep.subr.bf16.mxu0 0
      %9085 = vmatpush1.bf16.msra.mxu0 0
      %9086 = vmatprep.subr.bf16.mxu0 0
      %9087 = vmatpush1.bf16.msra.mxu0 0
      %9088 = vmatprep.subr.bf16.mxu0 0
      %9089 = vmatpush1.bf16.msra.mxu0 0
      %9090 = vmatprep.subr.bf16.mxu0 0
      %9091 = vmatpush1.bf16.msra.mxu0 0
      %9092 = vmatprep.subr.bf16.mxu0 0
      %9093 = vmatpush1.bf16.msra.mxu0 0
      %9094 = vmatprep.subr.bf16.mxu0 0
      %9095 = vmatpush1.bf16.msra.mxu0 0
      %9096 = vmatprep.subr.bf16.mxu0 0
      %9097 = vmatpush1.bf16.msra.mxu0 0
      %9098 = vmatprep.mubr.bf16.mxu0 0
      %9099 = vmatmul.mubr.bf16.gmra.mrb[0].mxu0 %v9016
      %v9100 = vpop.f32.mrb[0].mxu0
      %v9101 = vadd.f32 0.0, %v9100
      %v9102 = vpop.f32.mrb[0].mxu0
      %v9103 = vpop.f32.mrb[0].mxu0
      %v9104 = vadd.f32 0.0, %v9103
      %v9105 = vpop.f32.mrb[0].mxu0
      %9106 = vmatprep.mubr.bf16.mxu0 0
      %9107 = vmatmul.mubr.bf16.gmra.mrb[0].mxu0 %v9019
      %v9108 = vpop.f32.mrb[0].mxu0
      %v9109 = vadd.f32 0.0, %v9108
      %v9110 = vpop.f32.mrb[0].mxu0
      %v9111 = vpop.f32.mrb[0].mxu0
      %v9112 = vadd.f32 0.0, %v9111
      %v9113 = vpop.f32.mrb[0].mxu0
      %9114 = vmatprep.mubr.bf16.mxu0 0
      %9115 = vmatmul.mubr.bf16.gmra.mrb[0].mxu0 %v9022
      %v9116 = vpop.f32.mrb[0].mxu0
      %v9117 = vadd.f32 0.0, %v9116
      %v9118 = vpop.f32.mrb[0].mxu0
      %v9119 = vpop.f32.mrb[0].mxu0
      %v9120 = vadd.f32 0.0, %v9119
      %v9121 = vpop.f32.mrb[0].mxu0
      %9122 = vmatprep.mubr.bf16.mxu0 0
      %9123 = vmatmul.mubr.bf16.gmra.mrb[0].mxu0 %v9025
      %v9124 = vpop.f32.mrb[0].mxu0
      %v9125 = vadd.f32 0.0, %v9124
      %v9126 = vpop.f32.mrb[0].mxu0
      %v9127 = vpop.f32.mrb[0].mxu0
      %v9128 = vadd.f32 0.0, %v9127
      %v9129 = vpop.f32.mrb[0].mxu0
      %9130 = vmatprep.mubr.bf16.mxu0 0
      %9131 = vmatmul.mubr.bf16.gmra.mrb[0].mxu0 %v9028
      %v9132 = vpop.f32.mrb[0].mxu0
      %v9133 = vadd.f32 0.0, %v9132
      %v9134 = vpop.f32.mrb[0].mxu0
      %v9135 = vpop.f32.mrb[0].mxu0
      %v9136 = vadd.f32 0.0, %v9135
      %v9137 = vpop.f32.mrb[0].mxu0
      %9138 = vmatprep.mubr.bf16.mxu0 0
      %9139 = vmatmul.mubr.bf16.gmra.mrb[0].mxu0 %v9031
      %v9140 = vpop.f32.mrb[0].mxu0
      %v9141 = vadd.f32 0.0, %v9140
      %v9142 = vpop.f32.mrb[0].mxu0
      %v9143 = vpop.f32.mrb[0].mxu0
      %v9144 = vadd.f32 0.0, %v9143
      %v9145 = vpop.f32.mrb[0].mxu0
      %9146 = vmatprep.mubr.bf16.mxu0 0
      %9147 = vmatmul.mubr.bf16.gmra.mrb[0].mxu0 %v9034
      %v9148 = vpop.f32.mrb[0].mxu0
      %v9149 = vadd.f32 0.0, %v9148
      %v9150 = vpop.f32.mrb[0].mxu0
      %v9151 = vpop.f32.mrb[0].mxu0
      %v9152 = vadd.f32 0.0, %v9151
      %v9153 = vpop.f32.mrb[0].mxu0
      %9154 = vmatprep.mubr.bf16.mxu0 0
      %9155 = vmatmul.mubr.bf16.gmra.mrb[0].mxu0 %v9037
      %v9156 = vpop.f32.mrb[0].mxu0
      %v9157 = vadd.f32 0.0, %v9156
      %v9158 = vpop.f32.mrb[0].mxu0
      %v9159 = vpop.f32.mrb[0].mxu0
      %v9160 = vadd.f32 0.0, %v9159
      %v9161 = vpop.f32.mrb[0].mxu0
      %9162 = vmatprep.mubr.bf16.mxu0 0
      %9163 = vmatmul.mubr.bf16.gmra.mrb[0].mxu0 %v9040
      %v9164 = vpop.f32.mrb[0].mxu0
      %v9165 = vadd.f32 0.0, %v9164
      %v9166 = vpop.f32.mrb[0].mxu0
      %v9167 = vpop.f32.mrb[0].mxu0
      %v9168 = vadd.f32 0.0, %v9167
      %v9169 = vpop.f32.mrb[0].mxu0
      %9170 = vmatprep.mubr.bf16.mxu0 0
      %9171 = vmatmul.mubr.bf16.gmra.mrb[0].mxu0 %v9043
      %v9172 = vpop.f32.mrb[0].mxu0
      %v9173 = vadd.f32 0.0, %v9172
      %v9174 = vpop.f32.mrb[0].mxu0
      %v9175 = vpop.f32.mrb[0].mxu0
      %v9176 = vadd.f32 0.0, %v9175
      %v9177 = vpop.f32.mrb[0].mxu0
      %9178 = vmatprep.mubr.bf16.mxu0 0
      %9179 = vmatmul.mubr.bf16.gmra.mrb[0].mxu0 %v9046
      %v9180 = vpop.f32.mrb[0].mxu0
      %v9181 = vadd.f32 0.0, %v9180
      %v9182 = vpop.f32.mrb[0].mxu0
      %v9183 = vpop.f32.mrb[0].mxu0
      %v9184 = vadd.f32 0.0, %v9183
      %v9185 = vpop.f32.mrb[0].mxu0
      %9186 = vmatprep.mubr.bf16.mxu0 0
      %9187 = vmatmul.mubr.bf16.gmra.mrb[0].mxu0 %v9049
      %v9188 = vpop.f32.mrb[0].mxu0
      %v9189 = vadd.f32 0.0, %v9188
      %v9190 = vpop.f32.mrb[0].mxu0
      %v9191 = vpop.f32.mrb[0].mxu0
      %v9192 = vadd.f32 0.0, %v9191
      %v9193 = vpop.f32.mrb[0].mxu0
      %9194 = vmatprep.mubr.bf16.mxu0 0
      %9195 = vmatmul.mubr.bf16.gmra.mrb[0].mxu0 %v9052
      %v9196 = vpop.f32.mrb[0].mxu0
      %v9197 = vadd.f32 0.0, %v9196
      %v9198 = vpop.f32.mrb[0].mxu0
      %v9199 = vpop.f32.mrb[0].mxu0
      %v9200 = vadd.f32 0.0, %v9199
      %v9201 = vpop.f32.mrb[0].mxu0
      %9202 = vmatprep.mubr.bf16.mxu0 0
      %9203 = vmatmul.mubr.bf16.gmra.mrb[0].mxu0 %v9055
      %v9204 = vpop.f32.mrb[0].mxu0
      %v9205 = vadd.f32 0.0, %v9204
      %v9206 = vpop.f32.mrb[0].mxu0
      %v9207 = vpop.f32.mrb[0].mxu0
      %v9208 = vadd.f32 0.0, %v9207
      %v9209 = vpop.f32.mrb[0].mxu0
      %9210 = vmatprep.mubr.bf16.mxu0 0
      %9211 = vmatmul.mubr.bf16.gmra.mrb[0].mxu0 %v9058
      %v9212 = vpop.f32.mrb[0].mxu0
      %v9213 = vadd.f32 0.0, %v9212
      %v9214 = vpop.f32.mrb[0].mxu0
      %v9215 = vpop.f32.mrb[0].mxu0
      %v9216 = vadd.f32 0.0, %v9215
      %v9217 = vpop.f32.mrb[0].mxu0
      %9218 = vmatprep.mubr.bf16.mxu0 0
      %9219 = vmatmul.mubr.bf16.gmra.mrb[0].mxu0 %v9061
      %v9220 = vpop.f32.mrb[0].mxu0
      %v9221 = vadd.f32 0.0, %v9220
      %v9222 = vpop.f32.mrb[0].mxu0
      %v9223 = vpop.f32.mrb[0].mxu0
      %v9224 = vadd.f32 0.0, %v9223
      %v9225 = vpop.f32.mrb[0].mxu0
      %9226 = vmatprep.mubr.bf16.mxu0 0
      %9227 = vmatmul.mubr.bf16.gmra.mrb[0].mxu0 %v9064
      %v9228 = vpop.f32.mrb[0].mxu0
      %v9229 = vadd.f32 0.0, %v9228
      %v9230 = vpop.f32.mrb[0].mxu0
      %v9231 = vpop.f32.mrb[0].mxu0
      %v9232 = vpop.f32.mrb[0].mxu0
      %9233 = vdwg.mxu0
      %v9234 = vadd.f32 %v8884, %v9101
      %v9235 = vadd.f32 %v8885, %v9104
      %v9236 = vadd.f32 %v8886, %v9109
      %v9237 = vadd.f32 %v8887, %v9112
      %v9238 = vadd.f32 %v8888, %v9117
      %v9239 = vadd.f32 %v8889, %v9120
      %v9240 = vadd.f32 %v8890, %v9125
      %v9241 = vadd.f32 %v8891, %v9128
      %v9242 = vadd.f32 %v8892, %v9133
      %v9243 = vadd.f32 %v8893, %v9136
      %v9244 = vadd.f32 %v8894, %v9141
      %v9245 = vadd.f32 %v8895, %v9144
      %v9246 = vadd.f32 %v8896, %v9149
      %v9247 = vadd.f32 %v8897, %v9152
      %v9248 = vadd.f32 %v8898, %v9157
      %v9249 = vadd.f32 %v8899, %v9160
      %v9250 = vadd.f32 %v8900, %v9165
      %v9251 = vadd.f32 %v8901, %v9168
      %v9252 = vadd.f32 %v8902, %v9173
      %v9253 = vadd.f32 %v8903, %v9176
      %v9254 = vadd.f32 %v8904, %v9181
      %v9255 = vadd.f32 %v8905, %v9184
      %v9256 = vadd.f32 %v8906, %v9189
      %v9257 = vadd.f32 %v8907, %v9192
      %v9258 = vadd.f32 %v8908, %v9197
      %v9259 = vadd.f32 %v8909, %v9200
      %v9260 = vadd.f32 %v8910, %v9205
      %v9261 = vadd.f32 %v8911, %v9208
      %v9262 = vadd.f32 %v8912, %v9213
      %v9263 = vadd.f32 %v8913, %v9216
      %v9264 = vadd.f32 %v8914, %v9221
      %v9265 = vadd.f32 %v8915, %v9224
      %v9266 = vadd.f32 %v8916, %v9229
      %s9267 = scalar_lea.vmem %s4, 304
      %v9268 = vld [vmem:[%s9267] sm:$0xf]
      %v9269 = vld [vmem:[%s9267 + $0x4] sm:$0xf]
      %v9270 = vld [vmem:[%s9267 + $0x8] sm:$0xf]
      %v9271 = vld [vmem:[%s9267 + $0xc] sm:$0xf]
      %v9272 = vpack.c.b16 %v7840, %v7839
      %v9273 = vpack.c.b16 %v7842, %v7841
      %v9274 = vpack.c.b16 %v7844, %v7843
      %v9275 = vpack.c.b16 %v7846, %v7845
      %v9276 = vpack.c.b16 %v7848, %v7847
      %v9277 = vpack.c.b16 %v7850, %v7849
      %v9278 = vpack.c.b16 %v7852, %v7851
      %v9279 = vpack.c.b16 %v7854, %v7853
      %v9280 = vpack.c.b16 %v7856, %v7855
      %v9281 = vpack.c.b16 %v7858, %v7857
      %v9282 = vpack.c.b16 %v7860, %v7859
      %v9283 = vpack.c.b16 %v7862, %v7861
      %v9284 = vpack.c.b16 %v7864, %v7863
      %v9285 = vpack.c.b16 %v7866, %v7865
      %v9286 = vpack.c.b16 %v7868, %v7867
      %v9287 = vpack.c.b16 %v7870, %v7869
      %v9288 = vpack.c.b16 %v8924, %v8924
      %v9293 = vunpack.c.l.b16 %v9268
      %v9294 = vunpack.c.l.b16 %v9269
      %v9295 = vunpack.c.l.b16 %v9270
      %v9296 = vunpack.c.l.b16 %v9271
      %v9297 = vpack.c.b16 %v9294, %v9293
      %v9298 = vpack.c.b16 %v9296, %v9295
      %v9302 = vsel %vm859, %v9272, 0
      %v9305 = vsel %vm859, %v9273, 0
      %v9308 = vsel %vm859, %v9274, 0
      %v9311 = vsel %vm859, %v9275, 0
      %v9314 = vsel %vm859, %v9276, 0
      %v9317 = vsel %vm859, %v9277, 0
      %v9320 = vsel %vm859, %v9278, 0
      %v9323 = vsel %vm859, %v9279, 0
      %v9326 = vsel %vm859, %v9280, 0
      %v9329 = vsel %vm859, %v9281, 0
      %v9332 = vsel %vm859, %v9282, 0
      %v9335 = vsel %vm859, %v9283, 0
      %v9338 = vsel %vm859, %v9284, 0
      %v9341 = vsel %vm859, %v9285, 0
      %v9344 = vsel %vm859, %v9286, 0
      %v9347 = vsel %vm859, %v9287, 0
      %v9350 = vsel %vm859, %v9288, 0
      %9352 = vmatprep.subr.bf16.mxu0 0
      %9353 = vmatpush1.bf16.msra.mxu0 %v9297
      %9354 = vmatprep.subr.bf16.mxu0 0
      %9355 = vmatpush1.bf16.msra.mxu0 %v9298
      %9356 = vmatprep.subr.bf16.mxu0 0
      %9357 = vmatpush1.bf16.msra.mxu0 0
      %9358 = vmatprep.subr.bf16.mxu0 0
      %9359 = vmatpush1.bf16.msra.mxu0 0
      %9360 = vmatprep.subr.bf16.mxu0 0
      %9361 = vmatpush1.bf16.msra.mxu0 0
      %9362 = vmatprep.subr.bf16.mxu0 0
      %9363 = vmatpush1.bf16.msra.mxu0 0
      %9364 = vmatprep.subr.bf16.mxu0 0
      %9365 = vmatpush1.bf16.msra.mxu0 0
      %9366 = vmatprep.subr.bf16.mxu0 0
      %9367 = vmatpush1.bf16.msra.mxu0 0
      %9368 = vmatprep.subr.bf16.mxu0 0
      %9369 = vmatpush1.bf16.msra.mxu0 0
      %9370 = vmatprep.subr.bf16.mxu0 0
      %9371 = vmatpush1.bf16.msra.mxu0 0
      %9372 = vmatprep.subr.bf16.mxu0 0
      %9373 = vmatpush1.bf16.msra.mxu0 0
      %9374 = vmatprep.subr.bf16.mxu0 0
      %9375 = vmatpush1.bf16.msra.mxu0 0
      %9376 = vmatprep.subr.bf16.mxu0 0
      %9377 = vmatpush1.bf16.msra.mxu0 0
      %9378 = vmatprep.subr.bf16.mxu0 0
      %9379 = vmatpush1.bf16.msra.mxu0 0
      %9380 = vmatprep.subr.bf16.mxu0 0
      %9381 = vmatpush1.bf16.msra.mxu0 0
      %9382 = vmatprep.subr.bf16.mxu0 0
      %9383 = vmatpush1.bf16.msra.mxu0 0
      %9384 = vmatprep.mubr.bf16.mxu0 0
      %9385 = vmatmul.mubr.bf16.gmra.mrb[0].mxu0 %v9302
      %v9386 = vpop.f32.mrb[0].mxu0
      %v9387 = vadd.f32 0.0, %v9386
      %v9388 = vpop.f32.mrb[0].mxu0
      %v9389 = vpop.f32.mrb[0].mxu0
      %v9390 = vadd.f32 0.0, %v9389
      %v9391 = vpop.f32.mrb[0].mxu0
      %9392 = vmatprep.mubr.bf16.mxu0 0
      %9393 = vmatmul.mubr.bf16.gmra.mrb[0].mxu0 %v9305
      %v9394 = vpop.f32.mrb[0].mxu0
      %v9395 = vadd.f32 0.0, %v9394
      %v9396 = vpop.f32.mrb[0].mxu0
      %v9397 = vpop.f32.mrb[0].mxu0
      %v9398 = vadd.f32 0.0, %v9397
      %v9399 = vpop.f32.mrb[0].mxu0
      %9400 = vmatprep.mubr.bf16.mxu0 0
      %9401 = vmatmul.mubr.bf16.gmra.mrb[0].mxu0 %v9308
      %v9402 = vpop.f32.mrb[0].mxu0
      %v9403 = vadd.f32 0.0, %v9402
      %v9404 = vpop.f32.mrb[0].mxu0
      %v9405 = vpop.f32.mrb[0].mxu0
      %v9406 = vadd.f32 0.0, %v9405
      %v9407 = vpop.f32.mrb[0].mxu0
      %9408 = vmatprep.mubr.bf16.mxu0 0
      %9409 = vmatmul.mubr.bf16.gmra.mrb[0].mxu0 %v9311
      %v9410 = vpop.f32.mrb[0].mxu0
      %v9411 = vadd.f32 0.0, %v9410
      %v9412 = vpop.f32.mrb[0].mxu0
      %v9413 = vpop.f32.mrb[0].mxu0
      %v9414 = vadd.f32 0.0, %v9413
      %v9415 = vpop.f32.mrb[0].mxu0
      %9416 = vmatprep.mubr.bf16.mxu0 0
      %9417 = vmatmul.mubr.bf16.gmra.mrb[0].mxu0 %v9314
      %v9418 = vpop.f32.mrb[0].mxu0
      %v9419 = vadd.f32 0.0, %v9418
      %v9420 = vpop.f32.mrb[0].mxu0
      %v9421 = vpop.f32.mrb[0].mxu0
      %v9422 = vadd.f32 0.0, %v9421
      %v9423 = vpop.f32.mrb[0].mxu0
      %9424 = vmatprep.mubr.bf16.mxu0 0
      %9425 = vmatmul.mubr.bf16.gmra.mrb[0].mxu0 %v9317
      %v9426 = vpop.f32.mrb[0].mxu0
      %v9427 = vadd.f32 0.0, %v9426
      %v9428 = vpop.f32.mrb[0].mxu0
      %v9429 = vpop.f32.mrb[0].mxu0
      %v9430 = vadd.f32 0.0, %v9429
      %v9431 = vpop.f32.mrb[0].mxu0
      %9432 = vmatprep.mubr.bf16.mxu0 0
      %9433 = vmatmul.mubr.bf16.gmra.mrb[0].mxu0 %v9320
      %v9434 = vpop.f32.mrb[0].mxu0
      %v9435 = vadd.f32 0.0, %v9434
      %v9436 = vpop.f32.mrb[0].mxu0
      %v9437 = vpop.f32.mrb[0].mxu0
      %v9438 = vadd.f32 0.0, %v9437
      %v9439 = vpop.f32.mrb[0].mxu0
      %9440 = vmatprep.mubr.bf16.mxu0 0
      %9441 = vmatmul.mubr.bf16.gmra.mrb[0].mxu0 %v9323
      %v9442 = vpop.f32.mrb[0].mxu0
      %v9443 = vadd.f32 0.0, %v9442
      %v9444 = vpop.f32.mrb[0].mxu0
      %v9445 = vpop.f32.mrb[0].mxu0
      %v9446 = vadd.f32 0.0, %v9445
      %v9447 = vpop.f32.mrb[0].mxu0
      %9448 = vmatprep.mubr.bf16.mxu0 0
      %9449 = vmatmul.mubr.bf16.gmra.mrb[0].mxu0 %v9326
      %v9450 = vpop.f32.mrb[0].mxu0
      %v9451 = vadd.f32 0.0, %v9450
      %v9452 = vpop.f32.mrb[0].mxu0
      %v9453 = vpop.f32.mrb[0].mxu0
      %v9454 = vadd.f32 0.0, %v9453
      %v9455 = vpop.f32.mrb[0].mxu0
      %9456 = vmatprep.mubr.bf16.mxu0 0
      %9457 = vmatmul.mubr.bf16.gmra.mrb[0].mxu0 %v9329
      %v9458 = vpop.f32.mrb[0].mxu0
      %v9459 = vadd.f32 0.0, %v9458
      %v9460 = vpop.f32.mrb[0].mxu0
      %v9461 = vpop.f32.mrb[0].mxu0
      %v9462 = vadd.f32 0.0, %v9461
      %v9463 = vpop.f32.mrb[0].mxu0
      %9464 = vmatprep.mubr.bf16.mxu0 0
      %9465 = vmatmul.mubr.bf16.gmra.mrb[0].mxu0 %v9332
      %v9466 = vpop.f32.mrb[0].mxu0
      %v9467 = vadd.f32 0.0, %v9466
      %v9468 = vpop.f32.mrb[0].mxu0
      %v9469 = vpop.f32.mrb[0].mxu0
      %v9470 = vadd.f32 0.0, %v9469
      %v9471 = vpop.f32.mrb[0].mxu0
      %9472 = vmatprep.mubr.bf16.mxu0 0
      %9473 = vmatmul.mubr.bf16.gmra.mrb[0].mxu0 %v9335
      %v9474 = vpop.f32.mrb[0].mxu0
      %v9475 = vadd.f32 0.0, %v9474
      %v9476 = vpop.f32.mrb[0].mxu0
      %v9477 = vpop.f32.mrb[0].mxu0
      %v9478 = vadd.f32 0.0, %v9477
      %v9479 = vpop.f32.mrb[0].mxu0
      %9480 = vmatprep.mubr.bf16.mxu0 0
      %9481 = vmatmul.mubr.bf16.gmra.mrb[0].mxu0 %v9338
      %v9482 = vpop.f32.mrb[0].mxu0
      %v9483 = vadd.f32 0.0, %v9482
      %v9484 = vpop.f32.mrb[0].mxu0
      %v9485 = vpop.f32.mrb[0].mxu0
      %v9486 = vadd.f32 0.0, %v9485
      %v9487 = vpop.f32.mrb[0].mxu0
      %9488 = vmatprep.mubr.bf16.mxu0 0
      %9489 = vmatmul.mubr.bf16.gmra.mrb[0].mxu0 %v9341
      %v9490 = vpop.f32.mrb[0].mxu0
      %v9491 = vadd.f32 0.0, %v9490
      %v9492 = vpop.f32.mrb[0].mxu0
      %v9493 = vpop.f32.mrb[0].mxu0
      %v9494 = vadd.f32 0.0, %v9493
      %v9495 = vpop.f32.mrb[0].mxu0
      %9496 = vmatprep.mubr.bf16.mxu0 0
      %9497 = vmatmul.mubr.bf16.gmra.mrb[0].mxu0 %v9344
      %v9498 = vpop.f32.mrb[0].mxu0
      %v9499 = vadd.f32 0.0, %v9498
      %v9500 = vpop.f32.mrb[0].mxu0
      %v9501 = vpop.f32.mrb[0].mxu0
      %v9502 = vadd.f32 0.0, %v9501
      %v9503 = vpop.f32.mrb[0].mxu0
      %9504 = vmatprep.mubr.bf16.mxu0 0
      %9505 = vmatmul.mubr.bf16.gmra.mrb[0].mxu0 %v9347
      %v9506 = vpop.f32.mrb[0].mxu0
      %v9507 = vadd.f32 0.0, %v9506
      %v9508 = vpop.f32.mrb[0].mxu0
      %v9509 = vpop.f32.mrb[0].mxu0
      %v9510 = vadd.f32 0.0, %v9509
      %v9511 = vpop.f32.mrb[0].mxu0
      %9512 = vmatprep.mubr.bf16.mxu0 0
      %9513 = vmatmul.mubr.bf16.gmra.mrb[0].mxu0 %v9350
      %v9514 = vpop.f32.mrb[0].mxu0
      %v9515 = vadd.f32 0.0, %v9514
      %v9516 = vpop.f32.mrb[0].mxu0
      %v9517 = vpop.f32.mrb[0].mxu0
      %v9518 = vpop.f32.mrb[0].mxu0
      %9519 = vdwg.mxu0
      %v9520 = vadd.f32 %v9234, %v9387
      %v9521 = vadd.f32 %v9235, %v9390
      %v9522 = vadd.f32 %v9236, %v9395
      %v9523 = vadd.f32 %v9237, %v9398
      %v9524 = vadd.f32 %v9238, %v9403
      %v9525 = vadd.f32 %v9239, %v9406
      %v9526 = vadd.f32 %v9240, %v9411
      %v9527 = vadd.f32 %v9241, %v9414
      %v9528 = vadd.f32 %v9242, %v9419
      %v9529 = vadd.f32 %v9243, %v9422
      %v9530 = vadd.f32 %v9244, %v9427
      %v9531 = vadd.f32 %v9245, %v9430
      %v9532 = vadd.f32 %v9246, %v9435
      %v9533 = vadd.f32 %v9247, %v9438
      %v9534 = vadd.f32 %v9248, %v9443
      %v9535 = vadd.f32 %v9249, %v9446
      %v9536 = vadd.f32 %v9250, %v9451
      %v9537 = vadd.f32 %v9251, %v9454
      %v9538 = vadd.f32 %v9252, %v9459
      %v9539 = vadd.f32 %v9253, %v9462
      %v9540 = vadd.f32 %v9254, %v9467
      %v9541 = vadd.f32 %v9255, %v9470
      %v9542 = vadd.f32 %v9256, %v9475
      %v9543 = vadd.f32 %v9257, %v9478
      %v9544 = vadd.f32 %v9258, %v9483
      %v9545 = vadd.f32 %v9259, %v9486
      %v9546 = vadd.f32 %v9260, %v9491
      %v9547 = vadd.f32 %v9261, %v9494
      %v9548 = vadd.f32 %v9262, %v9499
      %v9549 = vadd.f32 %v9263, %v9502
      %v9550 = vadd.f32 %v9264, %v9507
      %v9551 = vadd.f32 %v9265, %v9510
      %v9552 = vadd.f32 %v9266, %v9515
      %v9553 = vld [vmem:[#allocation4 + $0x38] sm:$0xf]
      %v9554 = vld [vmem:[#allocation4 + $0x3c] sm:$0xf]
      %v9555 = vld [vmem:[#allocation4 + $0x40] sm:$0xf]
      %v9556 = vld [vmem:[#allocation4 + $0x44] sm:$0xf]
      %v9557 = vld [vmem:[#allocation4 + $0x48] sm:$0xf]
      %v9558 = vld [vmem:[#allocation4 + $0x4c] sm:$0xf]
      %v9559 = vld [vmem:[#allocation4 + $0x50] sm:$0xf]
      %v9560 = vld [vmem:[#allocation4 + $0x54] sm:$0xf]
      %v9561 = vld [vmem:[#allocation4 + $0x58] sm:$0xf]
      %v9562 = vld [vmem:[#allocation4 + $0x5c] sm:$0xf]
      %v9563 = vld [vmem:[#allocation4 + $0x60] sm:$0xf]
      %v9564 = vld [vmem:[#allocation4 + $0x64] sm:$0xf]
      %v9565 = vld [vmem:[#allocation4 + $0x68] sm:$0xf]
      %v9566 = vld [vmem:[#allocation4 + $0x6c] sm:$0xf]
      %v9567 = vld [vmem:[#allocation4 + $0x70] sm:$0xf]
      %v9568 = vld [vmem:[#allocation4 + $0x74] sm:$0xf]
      %v9569 = vld [vmem:[#allocation4 + $0x78] sm:$0xf]
      %v9570 = vld [vmem:[#allocation4 + $0x7c] sm:$0xf]
      %v9571 = vld [vmem:[#allocation4 + $0x80] sm:$0xf]
      %v9572 = vld [vmem:[#allocation4 + $0x84] sm:$0xf]
      %v9573 = vld [vmem:[#allocation4 + $0x88] sm:$0xf]
      %v9574 = vld [vmem:[#allocation4 + $0x8c] sm:$0xf]
      %v9575 = vld [vmem:[#allocation4 + $0x90] sm:$0xf]
      %v9576 = vld [vmem:[#allocation4 + $0x94] sm:$0xf]
      %v9577 = vld [vmem:[#allocation4 + $0x98] sm:$0xf]
      %v9578 = vld [vmem:[#allocation4 + $0x9c] sm:$0xf]
      %v9579 = vld [vmem:[#allocation4 + $0xa0] sm:$0xf]
      %v9580 = vld [vmem:[#allocation4 + $0xa4] sm:$0xf]
      %v9581 = vld [vmem:[#allocation4 + $0xa8] sm:$0xf]
      %v9582 = vld [vmem:[#allocation4 + $0xac] sm:$0xf]
      %v9583 = vld [vmem:[#allocation4 + $0xb0] sm:$0xf]
      %v9584 = vld [vmem:[#allocation4 + $0xb4] sm:$0xf]
      %v9585 = vld [vmem:[#allocation4 + $0xb8] sm:$0x7]
      %s9586 = scalar_lea.vmem %s4, 320
      %v9587 = vld [vmem:[%s9586] sm:$0xf]
      %v9588 = vld [vmem:[%s9586 + $0x4] sm:$0xf]
      %v9589 = vld [vmem:[%s9586 + $0x8] sm:$0xf]
      %v9590 = vld [vmem:[%s9586 + $0xc] sm:$0xf]
      %v9624 = vunpack.c.l.b16 %v9553
      %v9625 = vunpack.c.l.b16 %v9554
      %v9626 = vunpack.c.l.b16 %v9555
      %v9627 = vunpack.c.l.b16 %v9556
      %v9628 = vunpack.c.l.b16 %v9557
      %v9629 = vunpack.c.l.b16 %v9558
      %v9630 = vunpack.c.l.b16 %v9559
      %v9631 = vunpack.c.l.b16 %v9560
      %v9632 = vunpack.c.l.b16 %v9561
      %v9633 = vunpack.c.l.b16 %v9562
      %v9634 = vunpack.c.l.b16 %v9563
      %v9635 = vunpack.c.l.b16 %v9564
      %v9636 = vunpack.c.l.b16 %v9565
      %v9637 = vunpack.c.l.b16 %v9566
      %v9638 = vunpack.c.l.b16 %v9567
      %v9639 = vunpack.c.l.b16 %v9568
      %v9640 = vunpack.c.l.b16 %v9569
      %v9641 = vunpack.c.l.b16 %v9570
      %v9642 = vunpack.c.l.b16 %v9571
      %v9643 = vunpack.c.l.b16 %v9572
      %v9644 = vunpack.c.l.b16 %v9573
      %v9645 = vunpack.c.l.b16 %v9574
      %v9646 = vunpack.c.l.b16 %v9575
      %v9647 = vunpack.c.l.b16 %v9576
      %v9648 = vunpack.c.l.b16 %v9577
      %v9649 = vunpack.c.l.b16 %v9578
      %v9650 = vunpack.c.l.b16 %v9579
      %v9651 = vunpack.c.l.b16 %v9580
      %v9652 = vunpack.c.l.b16 %v9581
      %v9653 = vunpack.c.l.b16 %v9582
      %v9654 = vunpack.c.l.b16 %v9583
      %v9655 = vunpack.c.l.b16 %v9584
      %v9656 = vunpack.c.l.b16 %v9585
      %v9657 = vpack.c.b16 %v9625, %v9624
      %v9658 = vpack.c.b16 %v9627, %v9626
      %v9659 = vpack.c.b16 %v9629, %v9628
      %v9660 = vpack.c.b16 %v9631, %v9630
      %v9661 = vpack.c.b16 %v9633, %v9632
      %v9662 = vpack.c.b16 %v9635, %v9634
      %v9663 = vpack.c.b16 %v9637, %v9636
      %v9664 = vpack.c.b16 %v9639, %v9638
      %v9665 = vpack.c.b16 %v9641, %v9640
      %v9666 = vpack.c.b16 %v9643, %v9642
      %v9667 = vpack.c.b16 %v9645, %v9644
      %v9668 = vpack.c.b16 %v9647, %v9646
      %v9669 = vpack.c.b16 %v9649, %v9648
      %v9670 = vpack.c.b16 %v9651, %v9650
      %v9671 = vpack.c.b16 %v9653, %v9652
      %v9672 = vpack.c.b16 %v9655, %v9654
      %v9673 = vpack.c.b16 %v9656, %v9656
      %v9678 = vunpack.c.l.b16 %v9587
      %v9679 = vunpack.c.l.b16 %v9588
      %v9680 = vunpack.c.l.b16 %v9589
      %v9681 = vunpack.c.l.b16 %v9590
      %v9682 = vpack.c.b16 %v9679, %v9678
      %v9683 = vpack.c.b16 %v9681, %v9680
      %v9687 = vsel %vm859, %v9657, 0
      %v9690 = vsel %vm859, %v9658, 0
      %v9693 = vsel %vm859, %v9659, 0
      %v9696 = vsel %vm859, %v9660, 0
      %v9699 = vsel %vm859, %v9661, 0
      %v9702 = vsel %vm859, %v9662, 0
      %v9705 = vsel %vm859, %v9663, 0
      %v9708 = vsel %vm859, %v9664, 0
      %v9711 = vsel %vm859, %v9665, 0
      %v9714 = vsel %vm859, %v9666, 0
      %v9717 = vsel %vm859, %v9667, 0
      %v9720 = vsel %vm859, %v9668, 0
      %v9723 = vsel %vm859, %v9669, 0
      %v9726 = vsel %vm859, %v9670, 0
      %v9729 = vsel %vm859, %v9671, 0
      %v9732 = vsel %vm859, %v9672, 0
      %v9735 = vsel %vm859, %v9673, 0
      %9737 = vmatprep.subr.bf16.mxu0 0
      %9738 = vmatpush1.bf16.msra.mxu0 %v9682
      %9739 = vmatprep.subr.bf16.mxu0 0
      %9740 = vmatpush1.bf16.msra.mxu0 %v9683
      %9741 = vmatprep.subr.bf16.mxu0 0
      %9742 = vmatpush1.bf16.msra.mxu0 0
      %9743 = vmatprep.subr.bf16.mxu0 0
      %9744 = vmatpush1.bf16.msra.mxu0 0
      %9745 = vmatprep.subr.bf16.mxu0 0
      %9746 = vmatpush1.bf16.msra.mxu0 0
      %9747 = vmatprep.subr.bf16.mxu0 0
      %9748 = vmatpush1.bf16.msra.mxu0 0
      %9749 = vmatprep.subr.bf16.mxu0 0
      %9750 = vmatpush1.bf16.msra.mxu0 0
      %9751 = vmatprep.subr.bf16.mxu0 0
      %9752 = vmatpush1.bf16.msra.mxu0 0
      %9753 = vmatprep.subr.bf16.mxu0 0
      %9754 = vmatpush1.bf16.msra.mxu0 0
      %9755 = vmatprep.subr.bf16.mxu0 0
      %9756 = vmatpush1.bf16.msra.mxu0 0
      %9757 = vmatprep.subr.bf16.mxu0 0
      %9758 = vmatpush1.bf16.msra.mxu0 0
      %9759 = vmatprep.subr.bf16.mxu0 0
      %9760 = vmatpush1.bf16.msra.mxu0 0
      %9761 = vmatprep.subr.bf16.mxu0 0
      %9762 = vmatpush1.bf16.msra.mxu0 0
      %9763 = vmatprep.subr.bf16.mxu0 0
      %9764 = vmatpush1.bf16.msra.mxu0 0
      %9765 = vmatprep.subr.bf16.mxu0 0
      %9766 = vmatpush1.bf16.msra.mxu0 0
      %9767 = vmatprep.subr.bf16.mxu0 0
      %9768 = vmatpush1.bf16.msra.mxu0 0
      %9769 = vmatprep.mubr.bf16.mxu0 0
      %9770 = vmatmul.mubr.bf16.gmra.mrb[0].mxu0 %v9687
      %v9771 = vpop.f32.mrb[0].mxu0
      %v9772 = vadd.f32 0.0, %v9771
      %v9773 = vpop.f32.mrb[0].mxu0
      %v9774 = vpop.f32.mrb[0].mxu0
      %v9775 = vadd.f32 0.0, %v9774
      %v9776 = vpop.f32.mrb[0].mxu0
      %9777 = vmatprep.mubr.bf16.mxu0 0
      %9778 = vmatmul.mubr.bf16.gmra.mrb[0].mxu0 %v9690
      %v9779 = vpop.f32.mrb[0].mxu0
      %v9780 = vadd.f32 0.0, %v9779
      %v9781 = vpop.f32.mrb[0].mxu0
      %v9782 = vpop.f32.mrb[0].mxu0
      %v9783 = vadd.f32 0.0, %v9782
      %v9784 = vpop.f32.mrb[0].mxu0
      %9785 = vmatprep.mubr.bf16.mxu0 0
      %9786 = vmatmul.mubr.bf16.gmra.mrb[0].mxu0 %v9693
      %v9787 = vpop.f32.mrb[0].mxu0
      %v9788 = vadd.f32 0.0, %v9787
      %v9789 = vpop.f32.mrb[0].mxu0
      %v9790 = vpop.f32.mrb[0].mxu0
      %v9791 = vadd.f32 0.0, %v9790
      %v9792 = vpop.f32.mrb[0].mxu0
      %9793 = vmatprep.mubr.bf16.mxu0 0
      %9794 = vmatmul.mubr.bf16.gmra.mrb[0].mxu0 %v9696
      %v9795 = vpop.f32.mrb[0].mxu0
      %v9796 = vadd.f32 0.0, %v9795
      %v9797 = vpop.f32.mrb[0].mxu0
      %v9798 = vpop.f32.mrb[0].mxu0
      %v9799 = vadd.f32 0.0, %v9798
      %v9800 = vpop.f32.mrb[0].mxu0
      %9801 = vmatprep.mubr.bf16.mxu0 0
      %9802 = vmatmul.mubr.bf16.gmra.mrb[0].mxu0 %v9699
      %v9803 = vpop.f32.mrb[0].mxu0
      %v9804 = vadd.f32 0.0, %v9803
      %v9805 = vpop.f32.mrb[0].mxu0
      %v9806 = vpop.f32.mrb[0].mxu0
      %v9807 = vadd.f32 0.0, %v9806
      %v9808 = vpop.f32.mrb[0].mxu0
      %9809 = vmatprep.mubr.bf16.mxu0 0
      %9810 = vmatmul.mubr.bf16.gmra.mrb[0].mxu0 %v9702
      %v9811 = vpop.f32.mrb[0].mxu0
      %v9812 = vadd.f32 0.0, %v9811
      %v9813 = vpop.f32.mrb[0].mxu0
      %v9814 = vpop.f32.mrb[0].mxu0
      %v9815 = vadd.f32 0.0, %v9814
      %v9816 = vpop.f32.mrb[0].mxu0
      %9817 = vmatprep.mubr.bf16.mxu0 0
      %9818 = vmatmul.mubr.bf16.gmra.mrb[0].mxu0 %v9705
      %v9819 = vpop.f32.mrb[0].mxu0
      %v9820 = vadd.f32 0.0, %v9819
      %v9821 = vpop.f32.mrb[0].mxu0
      %v9822 = vpop.f32.mrb[0].mxu0
      %v9823 = vadd.f32 0.0, %v9822
      %v9824 = vpop.f32.mrb[0].mxu0
      %9825 = vmatprep.mubr.bf16.mxu0 0
      %9826 = vmatmul.mubr.bf16.gmra.mrb[0].mxu0 %v9708
      %v9827 = vpop.f32.mrb[0].mxu0
      %v9828 = vadd.f32 0.0, %v9827
      %v9829 = vpop.f32.mrb[0].mxu0
      %v9830 = vpop.f32.mrb[0].mxu0
      %v9831 = vadd.f32 0.0, %v9830
      %v9832 = vpop.f32.mrb[0].mxu0
      %9833 = vmatprep.mubr.bf16.mxu0 0
      %9834 = vmatmul.mubr.bf16.gmra.mrb[0].mxu0 %v9711
      %v9835 = vpop.f32.mrb[0].mxu0
      %v9836 = vadd.f32 0.0, %v9835
      %v9837 = vpop.f32.mrb[0].mxu0
      %v9838 = vpop.f32.mrb[0].mxu0
      %v9839 = vadd.f32 0.0, %v9838
      %v9840 = vpop.f32.mrb[0].mxu0
      %9841 = vmatprep.mubr.bf16.mxu0 0
      %9842 = vmatmul.mubr.bf16.gmra.mrb[0].mxu0 %v9714
      %v9843 = vpop.f32.mrb[0].mxu0
      %v9844 = vadd.f32 0.0, %v9843
      %v9845 = vpop.f32.mrb[0].mxu0
      %v9846 = vpop.f32.mrb[0].mxu0
      %v9847 = vadd.f32 0.0, %v9846
      %v9848 = vpop.f32.mrb[0].mxu0
      %9849 = vmatprep.mubr.bf16.mxu0 0
      %9850 = vmatmul.mubr.bf16.gmra.mrb[0].mxu0 %v9717
      %v9851 = vpop.f32.mrb[0].mxu0
      %v9852 = vadd.f32 0.0, %v9851
      %v9853 = vpop.f32.mrb[0].mxu0
      %v9854 = vpop.f32.mrb[0].mxu0
      %v9855 = vadd.f32 0.0, %v9854
      %v9856 = vpop.f32.mrb[0].mxu0
      %9857 = vmatprep.mubr.bf16.mxu0 0
      %9858 = vmatmul.mubr.bf16.gmra.mrb[0].mxu0 %v9720
      %v9859 = vpop.f32.mrb[0].mxu0
      %v9860 = vadd.f32 0.0, %v9859
      %v9861 = vpop.f32.mrb[0].mxu0
      %v9862 = vpop.f32.mrb[0].mxu0
      %v9863 = vadd.f32 0.0, %v9862
      %v9864 = vpop.f32.mrb[0].mxu0
      %9865 = vmatprep.mubr.bf16.mxu0 0
      %9866 = vmatmul.mubr.bf16.gmra.mrb[0].mxu0 %v9723
      %v9867 = vpop.f32.mrb[0].mxu0
      %v9868 = vadd.f32 0.0, %v9867
      %v9869 = vpop.f32.mrb[0].mxu0
      %v9870 = vpop.f32.mrb[0].mxu0
      %v9871 = vadd.f32 0.0, %v9870
      %v9872 = vpop.f32.mrb[0].mxu0
      %9873 = vmatprep.mubr.bf16.mxu0 0
      %9874 = vmatmul.mubr.bf16.gmra.mrb[0].mxu0 %v9726
      %v9875 = vpop.f32.mrb[0].mxu0
      %v9876 = vadd.f32 0.0, %v9875
      %v9877 = vpop.f32.mrb[0].mxu0
      %v9878 = vpop.f32.mrb[0].mxu0
      %v9879 = vadd.f32 0.0, %v9878
      %v9880 = vpop.f32.mrb[0].mxu0
      %9881 = vmatprep.mubr.bf16.mxu0 0
      %9882 = vmatmul.mubr.bf16.gmra.mrb[0].mxu0 %v9729
      %v9883 = vpop.f32.mrb[0].mxu0
      %v9884 = vadd.f32 0.0, %v9883
      %v9885 = vpop.f32.mrb[0].mxu0
      %v9886 = vpop.f32.mrb[0].mxu0
      %v9887 = vadd.f32 0.0, %v9886
      %v9888 = vpop.f32.mrb[0].mxu0
      %9889 = vmatprep.mubr.bf16.mxu0 0
      %9890 = vmatmul.mubr.bf16.gmra.mrb[0].mxu0 %v9732
      %v9891 = vpop.f32.mrb[0].mxu0
      %v9892 = vadd.f32 0.0, %v9891
      %v9893 = vpop.f32.mrb[0].mxu0
      %v9894 = vpop.f32.mrb[0].mxu0
      %v9895 = vadd.f32 0.0, %v9894
      %v9896 = vpop.f32.mrb[0].mxu0
      %9897 = vmatprep.mubr.bf16.mxu0 0
      %9898 = vmatmul.mubr.bf16.gmra.mrb[0].mxu0 %v9735
      %v9899 = vpop.f32.mrb[0].mxu0
      %v9900 = vadd.f32 0.0, %v9899
      %v9901 = vpop.f32.mrb[0].mxu0
      %v9902 = vpop.f32.mrb[0].mxu0
      %v9903 = vpop.f32.mrb[0].mxu0
      %9904 = vdwg.mxu0
      %v9905 = vadd.f32 %v9520, %v9772
      %v9906 = vadd.f32 %v9521, %v9775
      %v9907 = vadd.f32 %v9522, %v9780
      %v9908 = vadd.f32 %v9523, %v9783
      %v9909 = vadd.f32 %v9524, %v9788
      %v9910 = vadd.f32 %v9525, %v9791
      %v9911 = vadd.f32 %v9526, %v9796
      %v9912 = vadd.f32 %v9527, %v9799
      %v9913 = vadd.f32 %v9528, %v9804
      %v9914 = vadd.f32 %v9529, %v9807
      %v9915 = vadd.f32 %v9530, %v9812
      %v9916 = vadd.f32 %v9531, %v9815
      %v9917 = vadd.f32 %v9532, %v9820
      %v9918 = vadd.f32 %v9533, %v9823
      %v9919 = vadd.f32 %v9534, %v9828
      %v9920 = vadd.f32 %v9535, %v9831
      %v9921 = vadd.f32 %v9536, %v9836
      %v9922 = vadd.f32 %v9537, %v9839
      %v9923 = vadd.f32 %v9538, %v9844
      %v9924 = vadd.f32 %v9539, %v9847
      %v9925 = vadd.f32 %v9540, %v9852
      %v9926 = vadd.f32 %v9541, %v9855
      %v9927 = vadd.f32 %v9542, %v9860
      %v9928 = vadd.f32 %v9543, %v9863
      %v9929 = vadd.f32 %v9544, %v9868
      %v9930 = vadd.f32 %v9545, %v9871
      %v9931 = vadd.f32 %v9546, %v9876
      %v9932 = vadd.f32 %v9547, %v9879
      %v9933 = vadd.f32 %v9548, %v9884
      %v9934 = vadd.f32 %v9549, %v9887
      %v9935 = vadd.f32 %v9550, %v9892
      %v9936 = vadd.f32 %v9551, %v9895
      %v9937 = vadd.f32 %v9552, %v9900
      %v9938 = vld [vmem:[#allocation4 + $0xb8] sm:$0xf]
      %s9939 = scalar_lea.vmem %s4, 336
      %v9940 = vld [vmem:[%s9939] sm:$0xf]
      %v9941 = vld [vmem:[%s9939 + $0x4] sm:$0xf]
      %v9942 = vld [vmem:[%s9939 + $0x8] sm:$0xf]
      %v9943 = vld [vmem:[%s9939 + $0xc] sm:$0xf]
      %v9945 = vunpack.c.l.b16 %v9938
      %v9946 = vpack.c.b16 %v9945, %v9945
      %v9947 = vshrl.u32 %v9657, 16
      %v9949 = vshll.u32 %v9657, 16
      %v9951 = vrot.slane %v9949, 1
      %v9952 = vor.u32 %v9947, %v9951
      %v9953 = vshll.u32 %v9658, 16
      %v9955 = vrot.slane %v9953, 1
      %v9956 = vsel %vm2506, %v9952, %v9955
      %v9957 = vshrl.u32 %v9658, 16
      %v9959 = vor.u32 %v9957, %v9955
      %v9960 = vshll.u32 %v9659, 16
      %v9962 = vrot.slane %v9960, 1
      %v9963 = vsel %vm2506, %v9959, %v9962
      %v9964 = vshrl.u32 %v9659, 16
      %v9966 = vor.u32 %v9964, %v9962
      %v9967 = vshll.u32 %v9660, 16
      %v9969 = vrot.slane %v9967, 1
      %v9970 = vsel %vm2506, %v9966, %v9969
      %v9971 = vshrl.u32 %v9660, 16
      %v9973 = vor.u32 %v9971, %v9969
      %v9974 = vshll.u32 %v9661, 16
      %v9976 = vrot.slane %v9974, 1
      %v9977 = vsel %vm2506, %v9973, %v9976
      %v9978 = vshrl.u32 %v9661, 16
      %v9980 = vor.u32 %v9978, %v9976
      %v9981 = vshll.u32 %v9662, 16
      %v9983 = vrot.slane %v9981, 1
      %v9984 = vsel %vm2506, %v9980, %v9983
      %v9985 = vshrl.u32 %v9662, 16
      %v9987 = vor.u32 %v9985, %v9983
      %v9988 = vshll.u32 %v9663, 16
      %v9990 = vrot.slane %v9988, 1
      %v9991 = vsel %vm2506, %v9987, %v9990
      %v9992 = vshrl.u32 %v9663, 16
      %v9994 = vor.u32 %v9992, %v9990
      %v9995 = vshll.u32 %v9664, 16
      %v9997 = vrot.slane %v9995, 1
      %v9998 = vsel %vm2506, %v9994, %v9997
      %v9999 = vshrl.u32 %v9664, 16
      %v10001 = vor.u32 %v9999, %v9997
      %v10002 = vshll.u32 %v9665, 16
      %v10004 = vrot.slane %v10002, 1
      %v10005 = vsel %vm2506, %v10001, %v10004
      %v10006 = vshrl.u32 %v9665, 16
      %v10008 = vor.u32 %v10006, %v10004
      %v10009 = vshll.u32 %v9666, 16
      %v10011 = vrot.slane %v10009, 1
      %v10012 = vsel %vm2506, %v10008, %v10011
      %v10013 = vshrl.u32 %v9666, 16
      %v10015 = vor.u32 %v10013, %v10011
      %v10016 = vshll.u32 %v9667, 16
      %v10018 = vrot.slane %v10016, 1
      %v10019 = vsel %vm2506, %v10015, %v10018
      %v10020 = vshrl.u32 %v9667, 16
      %v10022 = vor.u32 %v10020, %v10018
      %v10023 = vshll.u32 %v9668, 16
      %v10025 = vrot.slane %v10023, 1
      %v10026 = vsel %vm2506, %v10022, %v10025
      %v10027 = vshrl.u32 %v9668, 16
      %v10029 = vor.u32 %v10027, %v10025
      %v10030 = vshll.u32 %v9669, 16
      %v10032 = vrot.slane %v10030, 1
      %v10033 = vsel %vm2506, %v10029, %v10032
      %v10034 = vshrl.u32 %v9669, 16
      %v10036 = vor.u32 %v10034, %v10032
      %v10037 = vshll.u32 %v9670, 16
      %v10039 = vrot.slane %v10037, 1
      %v10040 = vsel %vm2506, %v10036, %v10039
      %v10041 = vshrl.u32 %v9670, 16
      %v10043 = vor.u32 %v10041, %v10039
      %v10044 = vshll.u32 %v9671, 16
      %v10046 = vrot.slane %v10044, 1
      %v10047 = vsel %vm2506, %v10043, %v10046
      %v10048 = vshrl.u32 %v9671, 16
      %v10050 = vor.u32 %v10048, %v10046
      %v10051 = vshll.u32 %v9672, 16
      %v10053 = vrot.slane %v10051, 1
      %v10054 = vsel %vm2506, %v10050, %v10053
      %v10055 = vshrl.u32 %v9672, 16
      %v10057 = vor.u32 %v10055, %v10053
      %v10059 = vshll.u32 %v9946, 16
      %v10061 = vrot.slane %v10059, 1
      %v10062 = vsel %vm2506, %v10057, %v10061
      %v10063 = vshrl.u32 %v9946, 16
      %v10065 = vor.u32 %v10063, %v10061
      %v10070 = vunpack.c.l.b16 %v9940
      %v10071 = vunpack.c.l.b16 %v9941
      %v10072 = vunpack.c.l.b16 %v9942
      %v10073 = vunpack.c.l.b16 %v9943
      %v10074 = vpack.c.b16 %v10071, %v10070
      %v10075 = vpack.c.b16 %v10073, %v10072
      %v10079 = vsel %vm859, %v9956, 0
      %v10082 = vsel %vm859, %v9963, 0
      %v10085 = vsel %vm859, %v9970, 0
      %v10088 = vsel %vm859, %v9977, 0
      %v10091 = vsel %vm859, %v9984, 0
      %v10094 = vsel %vm859, %v9991, 0
      %v10097 = vsel %vm859, %v9998, 0
      %v10100 = vsel %vm859, %v10005, 0
      %v10103 = vsel %vm859, %v10012, 0
      %v10106 = vsel %vm859, %v10019, 0
      %v10109 = vsel %vm859, %v10026, 0
      %v10112 = vsel %vm859, %v10033, 0
      %v10115 = vsel %vm859, %v10040, 0
      %v10118 = vsel %vm859, %v10047, 0
      %v10121 = vsel %vm859, %v10054, 0
      %v10124 = vsel %vm859, %v10062, 0
      %v10127 = vsel %vm859, %v10065, 0
      %10129 = vmatprep.subr.bf16.mxu0 0
      %10130 = vmatpush1.bf16.msra.mxu0 %v10074
      %10131 = vmatprep.subr.bf16.mxu0 0
      %10132 = vmatpush1.bf16.msra.mxu0 %v10075
      %10133 = vmatprep.subr.bf16.mxu0 0
      %10134 = vmatpush1.bf16.msra.mxu0 0
      %10135 = vmatprep.subr.bf16.mxu0 0
      %10136 = vmatpush1.bf16.msra.mxu0 0
      %10137 = vmatprep.subr.bf16.mxu0 0
      %10138 = vmatpush1.bf16.msra.mxu0 0
      %10139 = vmatprep.subr.bf16.mxu0 0
      %10140 = vmatpush1.bf16.msra.mxu0 0
      %10141 = vmatprep.subr.bf16.mxu0 0
      %10142 = vmatpush1.bf16.msra.mxu0 0
      %10143 = vmatprep.subr.bf16.mxu0 0
      %10144 = vmatpush1.bf16.msra.mxu0 0
      %10145 = vmatprep.subr.bf16.mxu0 0
      %10146 = vmatpush1.bf16.msra.mxu0 0
      %10147 = vmatprep.subr.bf16.mxu0 0
      %10148 = vmatpush1.bf16.msra.mxu0 0
      %10149 = vmatprep.subr.bf16.mxu0 0
      %10150 = vmatpush1.bf16.msra.mxu0 0
      %10151 = vmatprep.subr.bf16.mxu0 0
      %10152 = vmatpush1.bf16.msra.mxu0 0
      %10153 = vmatprep.subr.bf16.mxu0 0
      %10154 = vmatpush1.bf16.msra.mxu0 0
      %10155 = vmatprep.subr.bf16.mxu0 0
      %10156 = vmatpush1.bf16.msra.mxu0 0
      %10157 = vmatprep.subr.bf16.mxu0 0
      %10158 = vmatpush1.bf16.msra.mxu0 0
      %10159 = vmatprep.subr.bf16.mxu0 0
      %10160 = vmatpush1.bf16.msra.mxu0 0
      %10161 = vmatprep.mubr.bf16.mxu0 0
      %10162 = vmatmul.mubr.bf16.gmra.mrb[0].mxu0 %v10079
      %v10163 = vpop.f32.mrb[0].mxu0
      %v10164 = vadd.f32 0.0, %v10163
      %v10165 = vpop.f32.mrb[0].mxu0
      %v10166 = vpop.f32.mrb[0].mxu0
      %v10167 = vadd.f32 0.0, %v10166
      %v10168 = vpop.f32.mrb[0].mxu0
      %10169 = vmatprep.mubr.bf16.mxu0 0
      %10170 = vmatmul.mubr.bf16.gmra.mrb[0].mxu0 %v10082
      %v10171 = vpop.f32.mrb[0].mxu0
      %v10172 = vadd.f32 0.0, %v10171
      %v10173 = vpop.f32.mrb[0].mxu0
      %v10174 = vpop.f32.mrb[0].mxu0
      %v10175 = vadd.f32 0.0, %v10174
      %v10176 = vpop.f32.mrb[0].mxu0
      %10177 = vmatprep.mubr.bf16.mxu0 0
      %10178 = vmatmul.mubr.bf16.gmra.mrb[0].mxu0 %v10085
      %v10179 = vpop.f32.mrb[0].mxu0
      %v10180 = vadd.f32 0.0, %v10179
      %v10181 = vpop.f32.mrb[0].mxu0
      %v10182 = vpop.f32.mrb[0].mxu0
      %v10183 = vadd.f32 0.0, %v10182
      %v10184 = vpop.f32.mrb[0].mxu0
      %10185 = vmatprep.mubr.bf16.mxu0 0
      %10186 = vmatmul.mubr.bf16.gmra.mrb[0].mxu0 %v10088
      %v10187 = vpop.f32.mrb[0].mxu0
      %v10188 = vadd.f32 0.0, %v10187
      %v10189 = vpop.f32.mrb[0].mxu0
      %v10190 = vpop.f32.mrb[0].mxu0
      %v10191 = vadd.f32 0.0, %v10190
      %v10192 = vpop.f32.mrb[0].mxu0
      %10193 = vmatprep.mubr.bf16.mxu0 0
      %10194 = vmatmul.mubr.bf16.gmra.mrb[0].mxu0 %v10091
      %v10195 = vpop.f32.mrb[0].mxu0
      %v10196 = vadd.f32 0.0, %v10195
      %v10197 = vpop.f32.mrb[0].mxu0
      %v10198 = vpop.f32.mrb[0].mxu0
      %v10199 = vadd.f32 0.0, %v10198
      %v10200 = vpop.f32.mrb[0].mxu0
      %10201 = vmatprep.mubr.bf16.mxu0 0
      %10202 = vmatmul.mubr.bf16.gmra.mrb[0].mxu0 %v10094
      %v10203 = vpop.f32.mrb[0].mxu0
      %v10204 = vadd.f32 0.0, %v10203
      %v10205 = vpop.f32.mrb[0].mxu0
      %v10206 = vpop.f32.mrb[0].mxu0
      %v10207 = vadd.f32 0.0, %v10206
      %v10208 = vpop.f32.mrb[0].mxu0
      %10209 = vmatprep.mubr.bf16.mxu0 0
      %10210 = vmatmul.mubr.bf16.gmra.mrb[0].mxu0 %v10097
      %v10211 = vpop.f32.mrb[0].mxu0
      %v10212 = vadd.f32 0.0, %v10211
      %v10213 = vpop.f32.mrb[0].mxu0
      %v10214 = vpop.f32.mrb[0].mxu0
      %v10215 = vadd.f32 0.0, %v10214
      %v10216 = vpop.f32.mrb[0].mxu0
      %10217 = vmatprep.mubr.bf16.mxu0 0
      %10218 = vmatmul.mubr.bf16.gmra.mrb[0].mxu0 %v10100
      %v10219 = vpop.f32.mrb[0].mxu0
      %v10220 = vadd.f32 0.0, %v10219
      %v10221 = vpop.f32.mrb[0].mxu0
      %v10222 = vpop.f32.mrb[0].mxu0
      %v10223 = vadd.f32 0.0, %v10222
      %v10224 = vpop.f32.mrb[0].mxu0
      %10225 = vmatprep.mubr.bf16.mxu0 0
      %10226 = vmatmul.mubr.bf16.gmra.mrb[0].mxu0 %v10103
      %v10227 = vpop.f32.mrb[0].mxu0
      %v10228 = vadd.f32 0.0, %v10227
      %v10229 = vpop.f32.mrb[0].mxu0
      %v10230 = vpop.f32.mrb[0].mxu0
      %v10231 = vadd.f32 0.0, %v10230
      %v10232 = vpop.f32.mrb[0].mxu0
      %10233 = vmatprep.mubr.bf16.mxu0 0
      %10234 = vmatmul.mubr.bf16.gmra.mrb[0].mxu0 %v10106
      %v10235 = vpop.f32.mrb[0].mxu0
      %v10236 = vadd.f32 0.0, %v10235
      %v10237 = vpop.f32.mrb[0].mxu0
      %v10238 = vpop.f32.mrb[0].mxu0
      %v10239 = vadd.f32 0.0, %v10238
      %v10240 = vpop.f32.mrb[0].mxu0
      %10241 = vmatprep.mubr.bf16.mxu0 0
      %10242 = vmatmul.mubr.bf16.gmra.mrb[0].mxu0 %v10109
      %v10243 = vpop.f32.mrb[0].mxu0
      %v10244 = vadd.f32 0.0, %v10243
      %v10245 = vpop.f32.mrb[0].mxu0
      %v10246 = vpop.f32.mrb[0].mxu0
      %v10247 = vadd.f32 0.0, %v10246
      %v10248 = vpop.f32.mrb[0].mxu0
      %10249 = vmatprep.mubr.bf16.mxu0 0
      %10250 = vmatmul.mubr.bf16.gmra.mrb[0].mxu0 %v10112
      %v10251 = vpop.f32.mrb[0].mxu0
      %v10252 = vadd.f32 0.0, %v10251
      %v10253 = vpop.f32.mrb[0].mxu0
      %v10254 = vpop.f32.mrb[0].mxu0
      %v10255 = vadd.f32 0.0, %v10254
      %v10256 = vpop.f32.mrb[0].mxu0
      %10257 = vmatprep.mubr.bf16.mxu0 0
      %10258 = vmatmul.mubr.bf16.gmra.mrb[0].mxu0 %v10115
      %v10259 = vpop.f32.mrb[0].mxu0
      %v10260 = vadd.f32 0.0, %v10259
      %v10261 = vpop.f32.mrb[0].mxu0
      %v10262 = vpop.f32.mrb[0].mxu0
      %v10263 = vadd.f32 0.0, %v10262
      %v10264 = vpop.f32.mrb[0].mxu0
      %10265 = vmatprep.mubr.bf16.mxu0 0
      %10266 = vmatmul.mubr.bf16.gmra.mrb[0].mxu0 %v10118
      %v10267 = vpop.f32.mrb[0].mxu0
      %v10268 = vadd.f32 0.0, %v10267
      %v10269 = vpop.f32.mrb[0].mxu0
      %v10270 = vpop.f32.mrb[0].mxu0
      %v10271 = vadd.f32 0.0, %v10270
      %v10272 = vpop.f32.mrb[0].mxu0
      %10273 = vmatprep.mubr.bf16.mxu0 0
      %10274 = vmatmul.mubr.bf16.gmra.mrb[0].mxu0 %v10121
      %v10275 = vpop.f32.mrb[0].mxu0
      %v10276 = vadd.f32 0.0, %v10275
      %v10277 = vpop.f32.mrb[0].mxu0
      %v10278 = vpop.f32.mrb[0].mxu0
      %v10279 = vadd.f32 0.0, %v10278
      %v10280 = vpop.f32.mrb[0].mxu0
      %10281 = vmatprep.mubr.bf16.mxu0 0
      %10282 = vmatmul.mubr.bf16.gmra.mrb[0].mxu0 %v10124
      %v10283 = vpop.f32.mrb[0].mxu0
      %v10284 = vadd.f32 0.0, %v10283
      %v10285 = vpop.f32.mrb[0].mxu0
      %v10286 = vpop.f32.mrb[0].mxu0
      %v10287 = vadd.f32 0.0, %v10286
      %v10288 = vpop.f32.mrb[0].mxu0
      %10289 = vmatprep.mubr.bf16.mxu0 0
      %10290 = vmatmul.mubr.bf16.gmra.mrb[0].mxu0 %v10127
      %v10291 = vpop.f32.mrb[0].mxu0
      %v10292 = vadd.f32 0.0, %v10291
      %v10293 = vpop.f32.mrb[0].mxu0
      %v10294 = vpop.f32.mrb[0].mxu0
      %v10295 = vpop.f32.mrb[0].mxu0
      %10296 = vdwg.mxu0
      %v10297 = vadd.f32 %v9905, %v10164
      %v10298 = vadd.f32 %v9906, %v10167
      %v10299 = vadd.f32 %v9907, %v10172
      %v10300 = vadd.f32 %v9908, %v10175
      %v10301 = vadd.f32 %v9909, %v10180
      %v10302 = vadd.f32 %v9910, %v10183
      %v10303 = vadd.f32 %v9911, %v10188
      %v10304 = vadd.f32 %v9912, %v10191
      %v10305 = vadd.f32 %v9913, %v10196
      %v10306 = vadd.f32 %v9914, %v10199
      %v10307 = vadd.f32 %v9915, %v10204
      %v10308 = vadd.f32 %v9916, %v10207
      %v10309 = vadd.f32 %v9917, %v10212
      %v10310 = vadd.f32 %v9918, %v10215
      %v10311 = vadd.f32 %v9919, %v10220
      %v10312 = vadd.f32 %v9920, %v10223
      %v10313 = vadd.f32 %v9921, %v10228
      %v10314 = vadd.f32 %v9922, %v10231
      %v10315 = vadd.f32 %v9923, %v10236
      %v10316 = vadd.f32 %v9924, %v10239
      %v10317 = vadd.f32 %v9925, %v10244
      %v10318 = vadd.f32 %v9926, %v10247
      %v10319 = vadd.f32 %v9927, %v10252
      %v10320 = vadd.f32 %v9928, %v10255
      %v10321 = vadd.f32 %v9929, %v10260
      %v10322 = vadd.f32 %v9930, %v10263
      %v10323 = vadd.f32 %v9931, %v10268
      %v10324 = vadd.f32 %v9932, %v10271
      %v10325 = vadd.f32 %v9933, %v10276
      %v10326 = vadd.f32 %v9934, %v10279
      %v10327 = vadd.f32 %v9935, %v10284
      %v10328 = vadd.f32 %v9936, %v10287
      %v10329 = vadd.f32 %v9937, %v10292
      %v10330 = vld [vmem:[#allocation4 + $0x38] sm:$0xe]
      %s10331 = scalar_lea.vmem %s4, 352
      %v10332 = vld [vmem:[%s10331] sm:$0xf]
      %v10333 = vld [vmem:[%s10331 + $0x4] sm:$0xf]
      %v10334 = vld [vmem:[%s10331 + $0x8] sm:$0xf]
      %v10335 = vld [vmem:[%s10331 + $0xc] sm:$0xf]
      %v10337 = vunpack.c.l.b16 %v10330
      %v10338 = vpack.c.b16 %v9625, %v10337
      %v10339 = vrot.slane %v10338, 1
      %v10340 = vrot.slane %v9658, 1
      %v10341 = vsel %vm2899, %v10339, %v10340
      %v10342 = vrot.slane %v9659, 1
      %v10343 = vsel %vm2899, %v10340, %v10342
      %v10344 = vrot.slane %v9660, 1
      %v10345 = vsel %vm2899, %v10342, %v10344
      %v10346 = vrot.slane %v9661, 1
      %v10347 = vsel %vm2899, %v10344, %v10346
      %v10348 = vrot.slane %v9662, 1
      %v10349 = vsel %vm2899, %v10346, %v10348
      %v10350 = vrot.slane %v9663, 1
      %v10351 = vsel %vm2899, %v10348, %v10350
      %v10352 = vrot.slane %v9664, 1
      %v10353 = vsel %vm2899, %v10350, %v10352
      %v10354 = vrot.slane %v9665, 1
      %v10355 = vsel %vm2899, %v10352, %v10354
      %v10356 = vrot.slane %v9666, 1
      %v10357 = vsel %vm2899, %v10354, %v10356
      %v10358 = vrot.slane %v9667, 1
      %v10359 = vsel %vm2899, %v10356, %v10358
      %v10360 = vrot.slane %v9668, 1
      %v10361 = vsel %vm2899, %v10358, %v10360
      %v10362 = vrot.slane %v9669, 1
      %v10363 = vsel %vm2899, %v10360, %v10362
      %v10364 = vrot.slane %v9670, 1
      %v10365 = vsel %vm2899, %v10362, %v10364
      %v10366 = vrot.slane %v9671, 1
      %v10367 = vsel %vm2899, %v10364, %v10366
      %v10368 = vrot.slane %v9672, 1
      %v10369 = vsel %vm2899, %v10366, %v10368
      %v10370 = vrot.slane %v9946, 1
      %v10371 = vsel %vm2899, %v10368, %v10370
      %v10376 = vunpack.c.l.b16 %v10332
      %v10377 = vunpack.c.l.b16 %v10333
      %v10378 = vunpack.c.l.b16 %v10334
      %v10379 = vunpack.c.l.b16 %v10335
      %v10380 = vpack.c.b16 %v10377, %v10376
      %v10381 = vpack.c.b16 %v10379, %v10378
      %v10385 = vsel %vm859, %v10341, 0
      %v10388 = vsel %vm859, %v10343, 0
      %v10391 = vsel %vm859, %v10345, 0
      %v10394 = vsel %vm859, %v10347, 0
      %v10397 = vsel %vm859, %v10349, 0
      %v10400 = vsel %vm859, %v10351, 0
      %v10403 = vsel %vm859, %v10353, 0
      %v10406 = vsel %vm859, %v10355, 0
      %v10409 = vsel %vm859, %v10357, 0
      %v10412 = vsel %vm859, %v10359, 0
      %v10415 = vsel %vm859, %v10361, 0
      %v10418 = vsel %vm859, %v10363, 0
      %v10421 = vsel %vm859, %v10365, 0
      %v10424 = vsel %vm859, %v10367, 0
      %v10427 = vsel %vm859, %v10369, 0
      %v10430 = vsel %vm859, %v10371, 0
      %v10433 = vsel %vm859, %v10370, 0
      %10435 = vmatprep.subr.bf16.mxu0 0
      %10436 = vmatpush1.bf16.msra.mxu0 %v10380
      %10437 = vmatprep.subr.bf16.mxu0 0
      %10438 = vmatpush1.bf16.msra.mxu0 %v10381
      %10439 = vmatprep.subr.bf16.mxu0 0
      %10440 = vmatpush1.bf16.msra.mxu0 0
      %10441 = vmatprep.subr.bf16.mxu0 0
      %10442 = vmatpush1.bf16.msra.mxu0 0
      %10443 = vmatprep.subr.bf16.mxu0 0
      %10444 = vmatpush1.bf16.msra.mxu0 0
      %10445 = vmatprep.subr.bf16.mxu0 0
      %10446 = vmatpush1.bf16.msra.mxu0 0
      %10447 = vmatprep.subr.bf16.mxu0 0
      %10448 = vmatpush1.bf16.msra.mxu0 0
      %10449 = vmatprep.subr.bf16.mxu0 0
      %10450 = vmatpush1.bf16.msra.mxu0 0
      %10451 = vmatprep.subr.bf16.mxu0 0
      %10452 = vmatpush1.bf16.msra.mxu0 0
      %10453 = vmatprep.subr.bf16.mxu0 0
      %10454 = vmatpush1.bf16.msra.mxu0 0
      %10455 = vmatprep.subr.bf16.mxu0 0
      %10456 = vmatpush1.bf16.msra.mxu0 0
      %10457 = vmatprep.subr.bf16.mxu0 0
      %10458 = vmatpush1.bf16.msra.mxu0 0
      %10459 = vmatprep.subr.bf16.mxu0 0
      %10460 = vmatpush1.bf16.msra.mxu0 0
      %10461 = vmatprep.subr.bf16.mxu0 0
      %10462 = vmatpush1.bf16.msra.mxu0 0
      %10463 = vmatprep.subr.bf16.mxu0 0
      %10464 = vmatpush1.bf16.msra.mxu0 0
      %10465 = vmatprep.subr.bf16.mxu0 0
      %10466 = vmatpush1.bf16.msra.mxu0 0
      %10467 = vmatprep.mubr.bf16.mxu0 0
      %10468 = vmatmul.mubr.bf16.gmra.mrb[0].mxu0 %v10385
      %v10469 = vpop.f32.mrb[0].mxu0
      %v10470 = vadd.f32 0.0, %v10469
      %v10471 = vpop.f32.mrb[0].mxu0
      %v10472 = vpop.f32.mrb[0].mxu0
      %v10473 = vadd.f32 0.0, %v10472
      %v10474 = vpop.f32.mrb[0].mxu0
      %10475 = vmatprep.mubr.bf16.mxu0 0
      %10476 = vmatmul.mubr.bf16.gmra.mrb[0].mxu0 %v10388
      %v10477 = vpop.f32.mrb[0].mxu0
      %v10478 = vadd.f32 0.0, %v10477
      %v10479 = vpop.f32.mrb[0].mxu0
      %v10480 = vpop.f32.mrb[0].mxu0
      %v10481 = vadd.f32 0.0, %v10480
      %v10482 = vpop.f32.mrb[0].mxu0
      %10483 = vmatprep.mubr.bf16.mxu0 0
      %10484 = vmatmul.mubr.bf16.gmra.mrb[0].mxu0 %v10391
      %v10485 = vpop.f32.mrb[0].mxu0
      %v10486 = vadd.f32 0.0, %v10485
      %v10487 = vpop.f32.mrb[0].mxu0
      %v10488 = vpop.f32.mrb[0].mxu0
      %v10489 = vadd.f32 0.0, %v10488
      %v10490 = vpop.f32.mrb[0].mxu0
      %10491 = vmatprep.mubr.bf16.mxu0 0
      %10492 = vmatmul.mubr.bf16.gmra.mrb[0].mxu0 %v10394
      %v10493 = vpop.f32.mrb[0].mxu0
      %v10494 = vadd.f32 0.0, %v10493
      %v10495 = vpop.f32.mrb[0].mxu0
      %v10496 = vpop.f32.mrb[0].mxu0
      %v10497 = vadd.f32 0.0, %v10496
      %v10498 = vpop.f32.mrb[0].mxu0
      %10499 = vmatprep.mubr.bf16.mxu0 0
      %10500 = vmatmul.mubr.bf16.gmra.mrb[0].mxu0 %v10397
      %v10501 = vpop.f32.mrb[0].mxu0
      %v10502 = vadd.f32 0.0, %v10501
      %v10503 = vpop.f32.mrb[0].mxu0
      %v10504 = vpop.f32.mrb[0].mxu0
      %v10505 = vadd.f32 0.0, %v10504
      %v10506 = vpop.f32.mrb[0].mxu0
      %10507 = vmatprep.mubr.bf16.mxu0 0
      %10508 = vmatmul.mubr.bf16.gmra.mrb[0].mxu0 %v10400
      %v10509 = vpop.f32.mrb[0].mxu0
      %v10510 = vadd.f32 0.0, %v10509
      %v10511 = vpop.f32.mrb[0].mxu0
      %v10512 = vpop.f32.mrb[0].mxu0
      %v10513 = vadd.f32 0.0, %v10512
      %v10514 = vpop.f32.mrb[0].mxu0
      %10515 = vmatprep.mubr.bf16.mxu0 0
      %10516 = vmatmul.mubr.bf16.gmra.mrb[0].mxu0 %v10403
      %v10517 = vpop.f32.mrb[0].mxu0
      %v10518 = vadd.f32 0.0, %v10517
      %v10519 = vpop.f32.mrb[0].mxu0
      %v10520 = vpop.f32.mrb[0].mxu0
      %v10521 = vadd.f32 0.0, %v10520
      %v10522 = vpop.f32.mrb[0].mxu0
      %10523 = vmatprep.mubr.bf16.mxu0 0
      %10524 = vmatmul.mubr.bf16.gmra.mrb[0].mxu0 %v10406
      %v10525 = vpop.f32.mrb[0].mxu0
      %v10526 = vadd.f32 0.0, %v10525
      %v10527 = vpop.f32.mrb[0].mxu0
      %v10528 = vpop.f32.mrb[0].mxu0
      %v10529 = vadd.f32 0.0, %v10528
      %v10530 = vpop.f32.mrb[0].mxu0
      %10531 = vmatprep.mubr.bf16.mxu0 0
      %10532 = vmatmul.mubr.bf16.gmra.mrb[0].mxu0 %v10409
      %v10533 = vpop.f32.mrb[0].mxu0
      %v10534 = vadd.f32 0.0, %v10533
      %v10535 = vpop.f32.mrb[0].mxu0
      %v10536 = vpop.f32.mrb[0].mxu0
      %v10537 = vadd.f32 0.0, %v10536
      %v10538 = vpop.f32.mrb[0].mxu0
      %10539 = vmatprep.mubr.bf16.mxu0 0
      %10540 = vmatmul.mubr.bf16.gmra.mrb[0].mxu0 %v10412
      %v10541 = vpop.f32.mrb[0].mxu0
      %v10542 = vadd.f32 0.0, %v10541
      %v10543 = vpop.f32.mrb[0].mxu0
      %v10544 = vpop.f32.mrb[0].mxu0
      %v10545 = vadd.f32 0.0, %v10544
      %v10546 = vpop.f32.mrb[0].mxu0
      %10547 = vmatprep.mubr.bf16.mxu0 0
      %10548 = vmatmul.mubr.bf16.gmra.mrb[0].mxu0 %v10415
      %v10549 = vpop.f32.mrb[0].mxu0
      %v10550 = vadd.f32 0.0, %v10549
      %v10551 = vpop.f32.mrb[0].mxu0
      %v10552 = vpop.f32.mrb[0].mxu0
      %v10553 = vadd.f32 0.0, %v10552
      %v10554 = vpop.f32.mrb[0].mxu0
      %10555 = vmatprep.mubr.bf16.mxu0 0
      %10556 = vmatmul.mubr.bf16.gmra.mrb[0].mxu0 %v10418
      %v10557 = vpop.f32.mrb[0].mxu0
      %v10558 = vadd.f32 0.0, %v10557
      %v10559 = vpop.f32.mrb[0].mxu0
      %v10560 = vpop.f32.mrb[0].mxu0
      %v10561 = vadd.f32 0.0, %v10560
      %v10562 = vpop.f32.mrb[0].mxu0
      %10563 = vmatprep.mubr.bf16.mxu0 0
      %10564 = vmatmul.mubr.bf16.gmra.mrb[0].mxu0 %v10421
      %v10565 = vpop.f32.mrb[0].mxu0
      %v10566 = vadd.f32 0.0, %v10565
      %v10567 = vpop.f32.mrb[0].mxu0
      %v10568 = vpop.f32.mrb[0].mxu0
      %v10569 = vadd.f32 0.0, %v10568
      %v10570 = vpop.f32.mrb[0].mxu0
      %10571 = vmatprep.mubr.bf16.mxu0 0
      %10572 = vmatmul.mubr.bf16.gmra.mrb[0].mxu0 %v10424
      %v10573 = vpop.f32.mrb[0].mxu0
      %v10574 = vadd.f32 0.0, %v10573
      %v10575 = vpop.f32.mrb[0].mxu0
      %v10576 = vpop.f32.mrb[0].mxu0
      %v10577 = vadd.f32 0.0, %v10576
      %v10578 = vpop.f32.mrb[0].mxu0
      %10579 = vmatprep.mubr.bf16.mxu0 0
      %10580 = vmatmul.mubr.bf16.gmra.mrb[0].mxu0 %v10427
      %v10581 = vpop.f32.mrb[0].mxu0
      %v10582 = vadd.f32 0.0, %v10581
      %v10583 = vpop.f32.mrb[0].mxu0
      %v10584 = vpop.f32.mrb[0].mxu0
      %v10585 = vadd.f32 0.0, %v10584
      %v10586 = vpop.f32.mrb[0].mxu0
      %10587 = vmatprep.mubr.bf16.mxu0 0
      %10588 = vmatmul.mubr.bf16.gmra.mrb[0].mxu0 %v10430
      %v10589 = vpop.f32.mrb[0].mxu0
      %v10590 = vadd.f32 0.0, %v10589
      %v10591 = vpop.f32.mrb[0].mxu0
      %v10592 = vpop.f32.mrb[0].mxu0
      %v10593 = vadd.f32 0.0, %v10592
      %v10594 = vpop.f32.mrb[0].mxu0
      %10595 = vmatprep.mubr.bf16.mxu0 0
      %10596 = vmatmul.mubr.bf16.gmra.mrb[0].mxu0 %v10433
      %v10597 = vpop.f32.mrb[0].mxu0
      %v10598 = vadd.f32 0.0, %v10597
      %v10599 = vpop.f32.mrb[0].mxu0
      %v10600 = vpop.f32.mrb[0].mxu0
      %v10601 = vpop.f32.mrb[0].mxu0
      %10602 = vdwg.mxu0
      %v10603 = vadd.f32 %v10297, %v10470
      %v10604 = vadd.f32 %v10298, %v10473
      %v10605 = vadd.f32 %v10299, %v10478
      %v10606 = vadd.f32 %v10300, %v10481
      %v10607 = vadd.f32 %v10301, %v10486
      %v10608 = vadd.f32 %v10302, %v10489
      %v10609 = vadd.f32 %v10303, %v10494
      %v10610 = vadd.f32 %v10304, %v10497
      %v10611 = vadd.f32 %v10305, %v10502
      %v10612 = vadd.f32 %v10306, %v10505
      %v10613 = vadd.f32 %v10307, %v10510
      %v10614 = vadd.f32 %v10308, %v10513
      %v10615 = vadd.f32 %v10309, %v10518
      %v10616 = vadd.f32 %v10310, %v10521
      %v10617 = vadd.f32 %v10311, %v10526
      %v10618 = vadd.f32 %v10312, %v10529
      %v10619 = vadd.f32 %v10313, %v10534
      %v10620 = vadd.f32 %v10314, %v10537
      %v10621 = vadd.f32 %v10315, %v10542
      %v10622 = vadd.f32 %v10316, %v10545
      %v10623 = vadd.f32 %v10317, %v10550
      %v10624 = vadd.f32 %v10318, %v10553
      %v10625 = vadd.f32 %v10319, %v10558
      %v10626 = vadd.f32 %v10320, %v10561
      %v10627 = vadd.f32 %v10321, %v10566
      %v10628 = vadd.f32 %v10322, %v10569
      %v10629 = vadd.f32 %v10323, %v10574
      %v10630 = vadd.f32 %v10324, %v10577
      %v10631 = vadd.f32 %v10325, %v10582
      %v10632 = vadd.f32 %v10326, %v10585
      %v10633 = vadd.f32 %v10327, %v10590
      %v10634 = vadd.f32 %v10328, %v10593
      %v10635 = vadd.f32 %v10329, %v10598
      %v10636 = vld [vmem:[#allocation4 + $0x38] sm:$0xe]
      %v10637 = vld [vmem:[#allocation4 + $0x3c] sm:$0xf]
      %v10638 = vld [vmem:[#allocation4 + $0x40] sm:$0xf]
      %v10639 = vld [vmem:[#allocation4 + $0x44] sm:$0xf]
      %v10640 = vld [vmem:[#allocation4 + $0x48] sm:$0xf]
      %v10641 = vld [vmem:[#allocation4 + $0x4c] sm:$0xf]
      %v10642 = vld [vmem:[#allocation4 + $0x50] sm:$0xf]
      %v10643 = vld [vmem:[#allocation4 + $0x54] sm:$0xf]
      %v10644 = vld [vmem:[#allocation4 + $0x58] sm:$0xf]
      %v10645 = vld [vmem:[#allocation4 + $0x5c] sm:$0xf]
      %v10646 = vld [vmem:[#allocation4 + $0x60] sm:$0xf]
      %v10647 = vld [vmem:[#allocation4 + $0x64] sm:$0xf]
      %v10648 = vld [vmem:[#allocation4 + $0x68] sm:$0xf]
      %v10649 = vld [vmem:[#allocation4 + $0x6c] sm:$0xf]
      %v10650 = vld [vmem:[#allocation4 + $0x70] sm:$0xf]
      %v10651 = vld [vmem:[#allocation4 + $0x74] sm:$0xf]
      %v10652 = vld [vmem:[#allocation4 + $0x78] sm:$0xf]
      %v10653 = vld [vmem:[#allocation4 + $0x7c] sm:$0xf]
      %v10654 = vld [vmem:[#allocation4 + $0x80] sm:$0xf]
      %v10655 = vld [vmem:[#allocation4 + $0x84] sm:$0xf]
      %v10656 = vld [vmem:[#allocation4 + $0x88] sm:$0xf]
      %v10657 = vld [vmem:[#allocation4 + $0x8c] sm:$0xf]
      %v10658 = vld [vmem:[#allocation4 + $0x90] sm:$0xf]
      %v10659 = vld [vmem:[#allocation4 + $0x94] sm:$0xf]
      %v10660 = vld [vmem:[#allocation4 + $0x98] sm:$0xf]
      %v10661 = vld [vmem:[#allocation4 + $0x9c] sm:$0xf]
      %v10662 = vld [vmem:[#allocation4 + $0xa0] sm:$0xf]
      %v10663 = vld [vmem:[#allocation4 + $0xa4] sm:$0xf]
      %v10664 = vld [vmem:[#allocation4 + $0xa8] sm:$0xf]
      %v10665 = vld [vmem:[#allocation4 + $0xac] sm:$0xf]
      %v10666 = vld [vmem:[#allocation4 + $0xb0] sm:$0xf]
      %v10667 = vld [vmem:[#allocation4 + $0xb4] sm:$0xf]
      %v10668 = vld [vmem:[#allocation4 + $0xb8] sm:$0xf]
      %v10669 = vld [vmem:[#allocation4 + $0xbc] sm:$0x1]
      %s10670 = scalar_lea.vmem %s4, 368
      %v10671 = vld [vmem:[%s10670] sm:$0xf]
      %v10672 = vld [vmem:[%s10670 + $0x4] sm:$0xf]
      %v10673 = vld [vmem:[%s10670 + $0x8] sm:$0xf]
      %v10674 = vld [vmem:[%s10670 + $0xc] sm:$0xf]
      %v10709 = vunpack.c.l.b16 %v10636
      %v10710 = vunpack.c.l.b16 %v10637
      %v10711 = vunpack.c.l.b16 %v10638
      %v10712 = vunpack.c.l.b16 %v10639
      %v10713 = vunpack.c.l.b16 %v10640
      %v10714 = vunpack.c.l.b16 %v10641
      %v10715 = vunpack.c.l.b16 %v10642
      %v10716 = vunpack.c.l.b16 %v10643
      %v10717 = vunpack.c.l.b16 %v10644
      %v10718 = vunpack.c.l.b16 %v10645
      %v10719 = vunpack.c.l.b16 %v10646
      %v10720 = vunpack.c.l.b16 %v10647
      %v10721 = vunpack.c.l.b16 %v10648
      %v10722 = vunpack.c.l.b16 %v10649
      %v10723 = vunpack.c.l.b16 %v10650
      %v10724 = vunpack.c.l.b16 %v10651
      %v10725 = vunpack.c.l.b16 %v10652
      %v10726 = vunpack.c.l.b16 %v10653
      %v10727 = vunpack.c.l.b16 %v10654
      %v10728 = vunpack.c.l.b16 %v10655
      %v10729 = vunpack.c.l.b16 %v10656
      %v10730 = vunpack.c.l.b16 %v10657
      %v10731 = vunpack.c.l.b16 %v10658
      %v10732 = vunpack.c.l.b16 %v10659
      %v10733 = vunpack.c.l.b16 %v10660
      %v10734 = vunpack.c.l.b16 %v10661
      %v10735 = vunpack.c.l.b16 %v10662
      %v10736 = vunpack.c.l.b16 %v10663
      %v10737 = vunpack.c.l.b16 %v10664
      %v10738 = vunpack.c.l.b16 %v10665
      %v10739 = vunpack.c.l.b16 %v10666
      %v10740 = vunpack.c.l.b16 %v10667
      %v10741 = vunpack.c.l.b16 %v10668
      %v10742 = vunpack.c.l.b16 %v10669
      %v10743 = vpack.c.b16 %v10710, %v10709
      %v10744 = vpack.c.b16 %v10712, %v10711
      %v10745 = vpack.c.b16 %v10714, %v10713
      %v10746 = vpack.c.b16 %v10716, %v10715
      %v10747 = vpack.c.b16 %v10718, %v10717
      %v10748 = vpack.c.b16 %v10720, %v10719
      %v10749 = vpack.c.b16 %v10722, %v10721
      %v10750 = vpack.c.b16 %v10724, %v10723
      %v10751 = vpack.c.b16 %v10726, %v10725
      %v10752 = vpack.c.b16 %v10728, %v10727
      %v10753 = vpack.c.b16 %v10730, %v10729
      %v10754 = vpack.c.b16 %v10732, %v10731
      %v10755 = vpack.c.b16 %v10734, %v10733
      %v10756 = vpack.c.b16 %v10736, %v10735
      %v10757 = vpack.c.b16 %v10738, %v10737
      %v10758 = vpack.c.b16 %v10740, %v10739
      %v10759 = vpack.c.b16 %v10742, %v10741
      %v10761 = vshrl.u32 %v10743, 16
      %v10763 = vrot.slane %v10761, 1
      %v10764 = vshll.u32 %v10743, 16
      %v10766 = vrot.slane %v10764, 2
      %v10767 = vor.u32 %v10763, %v10766
      %v10769 = vshrl.u32 %v10744, 16
      %v10771 = vrot.slane %v10769, 1
      %v10772 = vshll.u32 %v10744, 16
      %v10774 = vrot.slane %v10772, 2
      %v10775 = vor.u32 %v10771, %v10774
      %v10776 = vsel %vm3321, %v10767, %v10775
      %v10778 = vshrl.u32 %v10745, 16
      %v10780 = vrot.slane %v10778, 1
      %v10781 = vshll.u32 %v10745, 16
      %v10783 = vrot.slane %v10781, 2
      %v10784 = vor.u32 %v10780, %v10783
      %v10785 = vsel %vm3321, %v10775, %v10784
      %v10787 = vshrl.u32 %v10746, 16
      %v10789 = vrot.slane %v10787, 1
      %v10790 = vshll.u32 %v10746, 16
      %v10792 = vrot.slane %v10790, 2
      %v10793 = vor.u32 %v10789, %v10792
      %v10794 = vsel %vm3321, %v10784, %v10793
      %v10796 = vshrl.u32 %v10747, 16
      %v10798 = vrot.slane %v10796, 1
      %v10799 = vshll.u32 %v10747, 16
      %v10801 = vrot.slane %v10799, 2
      %v10802 = vor.u32 %v10798, %v10801
      %v10803 = vsel %vm3321, %v10793, %v10802
      %v10805 = vshrl.u32 %v10748, 16
      %v10807 = vrot.slane %v10805, 1
      %v10808 = vshll.u32 %v10748, 16
      %v10810 = vrot.slane %v10808, 2
      %v10811 = vor.u32 %v10807, %v10810
      %v10812 = vsel %vm3321, %v10802, %v10811
      %v10814 = vshrl.u32 %v10749, 16
      %v10816 = vrot.slane %v10814, 1
      %v10817 = vshll.u32 %v10749, 16
      %v10819 = vrot.slane %v10817, 2
      %v10820 = vor.u32 %v10816, %v10819
      %v10821 = vsel %vm3321, %v10811, %v10820
      %v10823 = vshrl.u32 %v10750, 16
      %v10825 = vrot.slane %v10823, 1
      %v10826 = vshll.u32 %v10750, 16
      %v10828 = vrot.slane %v10826, 2
      %v10829 = vor.u32 %v10825, %v10828
      %v10830 = vsel %vm3321, %v10820, %v10829
      %v10832 = vshrl.u32 %v10751, 16
      %v10834 = vrot.slane %v10832, 1
      %v10835 = vshll.u32 %v10751, 16
      %v10837 = vrot.slane %v10835, 2
      %v10838 = vor.u32 %v10834, %v10837
      %v10839 = vsel %vm3321, %v10829, %v10838
      %v10841 = vshrl.u32 %v10752, 16
      %v10843 = vrot.slane %v10841, 1
      %v10844 = vshll.u32 %v10752, 16
      %v10846 = vrot.slane %v10844, 2
      %v10847 = vor.u32 %v10843, %v10846
      %v10848 = vsel %vm3321, %v10838, %v10847
      %v10850 = vshrl.u32 %v10753, 16
      %v10852 = vrot.slane %v10850, 1
      %v10853 = vshll.u32 %v10753, 16
      %v10855 = vrot.slane %v10853, 2
      %v10856 = vor.u32 %v10852, %v10855
      %v10857 = vsel %vm3321, %v10847, %v10856
      %v10859 = vshrl.u32 %v10754, 16
      %v10861 = vrot.slane %v10859, 1
      %v10862 = vshll.u32 %v10754, 16
      %v10864 = vrot.slane %v10862, 2
      %v10865 = vor.u32 %v10861, %v10864
      %v10866 = vsel %vm3321, %v10856, %v10865
      %v10868 = vshrl.u32 %v10755, 16
      %v10870 = vrot.slane %v10868, 1
      %v10871 = vshll.u32 %v10755, 16
      %v10873 = vrot.slane %v10871, 2
      %v10874 = vor.u32 %v10870, %v10873
      %v10875 = vsel %vm3321, %v10865, %v10874
      %v10877 = vshrl.u32 %v10756, 16
      %v10879 = vrot.slane %v10877, 1
      %v10880 = vshll.u32 %v10756, 16
      %v10882 = vrot.slane %v10880, 2
      %v10883 = vor.u32 %v10879, %v10882
      %v10884 = vsel %vm3321, %v10874, %v10883
      %v10886 = vshrl.u32 %v10757, 16
      %v10888 = vrot.slane %v10886, 1
      %v10889 = vshll.u32 %v10757, 16
      %v10891 = vrot.slane %v10889, 2
      %v10892 = vor.u32 %v10888, %v10891
      %v10893 = vsel %vm3321, %v10883, %v10892
      %v10895 = vshrl.u32 %v10758, 16
      %v10897 = vrot.slane %v10895, 1
      %v10898 = vshll.u32 %v10758, 16
      %v10900 = vrot.slane %v10898, 2
      %v10901 = vor.u32 %v10897, %v10900
      %v10902 = vsel %vm3321, %v10892, %v10901
      %v10904 = vshrl.u32 %v10759, 16
      %v10906 = vrot.slane %v10904, 1
      %v10907 = vshll.u32 %v10759, 16
      %v10909 = vrot.slane %v10907, 2
      %v10910 = vor.u32 %v10906, %v10909
      %v10911 = vsel %vm3321, %v10901, %v10910
      %v10916 = vunpack.c.l.b16 %v10671
      %v10917 = vunpack.c.l.b16 %v10672
      %v10918 = vunpack.c.l.b16 %v10673
      %v10919 = vunpack.c.l.b16 %v10674
      %v10920 = vpack.c.b16 %v10917, %v10916
      %v10921 = vpack.c.b16 %v10919, %v10918
      %v10925 = vsel %vm859, %v10776, 0
      %v10928 = vsel %vm859, %v10785, 0
      %v10931 = vsel %vm859, %v10794, 0
      %v10934 = vsel %vm859, %v10803, 0
      %v10937 = vsel %vm859, %v10812, 0
      %v10940 = vsel %vm859, %v10821, 0
      %v10943 = vsel %vm859, %v10830, 0
      %v10946 = vsel %vm859, %v10839, 0
      %v10949 = vsel %vm859, %v10848, 0
      %v10952 = vsel %vm859, %v10857, 0
      %v10955 = vsel %vm859, %v10866, 0
      %v10958 = vsel %vm859, %v10875, 0
      %v10961 = vsel %vm859, %v10884, 0
      %v10964 = vsel %vm859, %v10893, 0
      %v10967 = vsel %vm859, %v10902, 0
      %v10970 = vsel %vm859, %v10911, 0
      %v10973 = vsel %vm859, %v10910, 0
      %10975 = vmatprep.subr.bf16.mxu0 0
      %10976 = vmatpush1.bf16.msra.mxu0 %v10920
      %10977 = vmatprep.subr.bf16.mxu0 0
      %10978 = vmatpush1.bf16.msra.mxu0 %v10921
      %10979 = vmatprep.subr.bf16.mxu0 0
      %10980 = vmatpush1.bf16.msra.mxu0 0
      %10981 = vmatprep.subr.bf16.mxu0 0
      %10982 = vmatpush1.bf16.msra.mxu0 0
      %10983 = vmatprep.subr.bf16.mxu0 0
      %10984 = vmatpush1.bf16.msra.mxu0 0
      %10985 = vmatprep.subr.bf16.mxu0 0
      %10986 = vmatpush1.bf16.msra.mxu0 0
      %10987 = vmatprep.subr.bf16.mxu0 0
      %10988 = vmatpush1.bf16.msra.mxu0 0
      %10989 = vmatprep.subr.bf16.mxu0 0
      %10990 = vmatpush1.bf16.msra.mxu0 0
      %10991 = vmatprep.subr.bf16.mxu0 0
      %10992 = vmatpush1.bf16.msra.mxu0 0
      %10993 = vmatprep.subr.bf16.mxu0 0
      %10994 = vmatpush1.bf16.msra.mxu0 0
      %10995 = vmatprep.subr.bf16.mxu0 0
      %10996 = vmatpush1.bf16.msra.mxu0 0
      %10997 = vmatprep.subr.bf16.mxu0 0
      %10998 = vmatpush1.bf16.msra.mxu0 0
      %10999 = vmatprep.subr.bf16.mxu0 0
      %11000 = vmatpush1.bf16.msra.mxu0 0
      %11001 = vmatprep.subr.bf16.mxu0 0
      %11002 = vmatpush1.bf16.msra.mxu0 0
      %11003 = vmatprep.subr.bf16.mxu0 0
      %11004 = vmatpush1.bf16.msra.mxu0 0
      %11005 = vmatprep.subr.bf16.mxu0 0
      %11006 = vmatpush1.bf16.msra.mxu0 0
      %11007 = vmatprep.mubr.bf16.mxu0 0
      %11008 = vmatmul.mubr.bf16.gmra.mrb[0].mxu0 %v10925
      %v11009 = vpop.f32.mrb[0].mxu0
      %v11010 = vadd.f32 0.0, %v11009
      %v11011 = vpop.f32.mrb[0].mxu0
      %v11012 = vpop.f32.mrb[0].mxu0
      %v11013 = vadd.f32 0.0, %v11012
      %v11014 = vpop.f32.mrb[0].mxu0
      %11015 = vmatprep.mubr.bf16.mxu0 0
      %11016 = vmatmul.mubr.bf16.gmra.mrb[0].mxu0 %v10928
      %v11017 = vpop.f32.mrb[0].mxu0
      %v11018 = vadd.f32 0.0, %v11017
      %v11019 = vpop.f32.mrb[0].mxu0
      %v11020 = vpop.f32.mrb[0].mxu0
      %v11021 = vadd.f32 0.0, %v11020
      %v11022 = vpop.f32.mrb[0].mxu0
      %11023 = vmatprep.mubr.bf16.mxu0 0
      %11024 = vmatmul.mubr.bf16.gmra.mrb[0].mxu0 %v10931
      %v11025 = vpop.f32.mrb[0].mxu0
      %v11026 = vadd.f32 0.0, %v11025
      %v11027 = vpop.f32.mrb[0].mxu0
      %v11028 = vpop.f32.mrb[0].mxu0
      %v11029 = vadd.f32 0.0, %v11028
      %v11030 = vpop.f32.mrb[0].mxu0
      %11031 = vmatprep.mubr.bf16.mxu0 0
      %11032 = vmatmul.mubr.bf16.gmra.mrb[0].mxu0 %v10934
      %v11033 = vpop.f32.mrb[0].mxu0
      %v11034 = vadd.f32 0.0, %v11033
      %v11035 = vpop.f32.mrb[0].mxu0
      %v11036 = vpop.f32.mrb[0].mxu0
      %v11037 = vadd.f32 0.0, %v11036
      %v11038 = vpop.f32.mrb[0].mxu0
      %11039 = vmatprep.mubr.bf16.mxu0 0
      %11040 = vmatmul.mubr.bf16.gmra.mrb[0].mxu0 %v10937
      %v11041 = vpop.f32.mrb[0].mxu0
      %v11042 = vadd.f32 0.0, %v11041
      %v11043 = vpop.f32.mrb[0].mxu0
      %v11044 = vpop.f32.mrb[0].mxu0
      %v11045 = vadd.f32 0.0, %v11044
      %v11046 = vpop.f32.mrb[0].mxu0
      %11047 = vmatprep.mubr.bf16.mxu0 0
      %11048 = vmatmul.mubr.bf16.gmra.mrb[0].mxu0 %v10940
      %v11049 = vpop.f32.mrb[0].mxu0
      %v11050 = vadd.f32 0.0, %v11049
      %v11051 = vpop.f32.mrb[0].mxu0
      %v11052 = vpop.f32.mrb[0].mxu0
      %v11053 = vadd.f32 0.0, %v11052
      %v11054 = vpop.f32.mrb[0].mxu0
      %11055 = vmatprep.mubr.bf16.mxu0 0
      %11056 = vmatmul.mubr.bf16.gmra.mrb[0].mxu0 %v10943
      %v11057 = vpop.f32.mrb[0].mxu0
      %v11058 = vadd.f32 0.0, %v11057
      %v11059 = vpop.f32.mrb[0].mxu0
      %v11060 = vpop.f32.mrb[0].mxu0
      %v11061 = vadd.f32 0.0, %v11060
      %v11062 = vpop.f32.mrb[0].mxu0
      %11063 = vmatprep.mubr.bf16.mxu0 0
      %11064 = vmatmul.mubr.bf16.gmra.mrb[0].mxu0 %v10946
      %v11065 = vpop.f32.mrb[0].mxu0
      %v11066 = vadd.f32 0.0, %v11065
      %v11067 = vpop.f32.mrb[0].mxu0
      %v11068 = vpop.f32.mrb[0].mxu0
      %v11069 = vadd.f32 0.0, %v11068
      %v11070 = vpop.f32.mrb[0].mxu0
      %11071 = vmatprep.mubr.bf16.mxu0 0
      %11072 = vmatmul.mubr.bf16.gmra.mrb[0].mxu0 %v10949
      %v11073 = vpop.f32.mrb[0].mxu0
      %v11074 = vadd.f32 0.0, %v11073
      %v11075 = vpop.f32.mrb[0].mxu0
      %v11076 = vpop.f32.mrb[0].mxu0
      %v11077 = vadd.f32 0.0, %v11076
      %v11078 = vpop.f32.mrb[0].mxu0
      %11079 = vmatprep.mubr.bf16.mxu0 0
      %11080 = vmatmul.mubr.bf16.gmra.mrb[0].mxu0 %v10952
      %v11081 = vpop.f32.mrb[0].mxu0
      %v11082 = vadd.f32 0.0, %v11081
      %v11083 = vpop.f32.mrb[0].mxu0
      %v11084 = vpop.f32.mrb[0].mxu0
      %v11085 = vadd.f32 0.0, %v11084
      %v11086 = vpop.f32.mrb[0].mxu0
      %11087 = vmatprep.mubr.bf16.mxu0 0
      %11088 = vmatmul.mubr.bf16.gmra.mrb[0].mxu0 %v10955
      %v11089 = vpop.f32.mrb[0].mxu0
      %v11090 = vadd.f32 0.0, %v11089
      %v11091 = vpop.f32.mrb[0].mxu0
      %v11092 = vpop.f32.mrb[0].mxu0
      %v11093 = vadd.f32 0.0, %v11092
      %v11094 = vpop.f32.mrb[0].mxu0
      %11095 = vmatprep.mubr.bf16.mxu0 0
      %11096 = vmatmul.mubr.bf16.gmra.mrb[0].mxu0 %v10958
      %v11097 = vpop.f32.mrb[0].mxu0
      %v11098 = vadd.f32 0.0, %v11097
      %v11099 = vpop.f32.mrb[0].mxu0
      %v11100 = vpop.f32.mrb[0].mxu0
      %v11101 = vadd.f32 0.0, %v11100
      %v11102 = vpop.f32.mrb[0].mxu0
      %11103 = vmatprep.mubr.bf16.mxu0 0
      %11104 = vmatmul.mubr.bf16.gmra.mrb[0].mxu0 %v10961
      %v11105 = vpop.f32.mrb[0].mxu0
      %v11106 = vadd.f32 0.0, %v11105
      %v11107 = vpop.f32.mrb[0].mxu0
      %v11108 = vpop.f32.mrb[0].mxu0
      %v11109 = vadd.f32 0.0, %v11108
      %v11110 = vpop.f32.mrb[0].mxu0
      %11111 = vmatprep.mubr.bf16.mxu0 0
      %11112 = vmatmul.mubr.bf16.gmra.mrb[0].mxu0 %v10964
      %v11113 = vpop.f32.mrb[0].mxu0
      %v11114 = vadd.f32 0.0, %v11113
      %v11115 = vpop.f32.mrb[0].mxu0
      %v11116 = vpop.f32.mrb[0].mxu0
      %v11117 = vadd.f32 0.0, %v11116
      %v11118 = vpop.f32.mrb[0].mxu0
      %11119 = vmatprep.mubr.bf16.mxu0 0
      %11120 = vmatmul.mubr.bf16.gmra.mrb[0].mxu0 %v10967
      %v11121 = vpop.f32.mrb[0].mxu0
      %v11122 = vadd.f32 0.0, %v11121
      %v11123 = vpop.f32.mrb[0].mxu0
      %v11124 = vpop.f32.mrb[0].mxu0
      %v11125 = vadd.f32 0.0, %v11124
      %v11126 = vpop.f32.mrb[0].mxu0
      %11127 = vmatprep.mubr.bf16.mxu0 0
      %11128 = vmatmul.mubr.bf16.gmra.mrb[0].mxu0 %v10970
      %v11129 = vpop.f32.mrb[0].mxu0
      %v11130 = vadd.f32 0.0, %v11129
      %v11131 = vpop.f32.mrb[0].mxu0
      %v11132 = vpop.f32.mrb[0].mxu0
      %v11133 = vadd.f32 0.0, %v11132
      %v11134 = vpop.f32.mrb[0].mxu0
      %11135 = vmatprep.mubr.bf16.mxu0 0
      %11136 = vmatmul.mubr.bf16.gmra.mrb[0].mxu0 %v10973
      %v11137 = vpop.f32.mrb[0].mxu0
      %v11138 = vadd.f32 0.0, %v11137
      %v11139 = vpop.f32.mrb[0].mxu0
      %v11140 = vpop.f32.mrb[0].mxu0
      %v11141 = vpop.f32.mrb[0].mxu0
      %11142 = vdwg.mxu0
      %v11143 = vadd.f32 %v10603, %v11010
      %v11144 = vadd.f32 %v10604, %v11013
      %v11145 = vadd.f32 %v10605, %v11018
      %v11146 = vadd.f32 %v10606, %v11021
      %v11147 = vadd.f32 %v10607, %v11026
      %v11148 = vadd.f32 %v10608, %v11029
      %v11149 = vadd.f32 %v10609, %v11034
      %v11150 = vadd.f32 %v10610, %v11037
      %v11151 = vadd.f32 %v10611, %v11042
      %v11152 = vadd.f32 %v10612, %v11045
      %v11153 = vadd.f32 %v10613, %v11050
      %v11154 = vadd.f32 %v10614, %v11053
      %v11155 = vadd.f32 %v10615, %v11058
      %v11156 = vadd.f32 %v10616, %v11061
      %v11157 = vadd.f32 %v10617, %v11066
      %v11158 = vadd.f32 %v10618, %v11069
      %v11159 = vadd.f32 %v10619, %v11074
      %v11160 = vadd.f32 %v10620, %v11077
      %v11161 = vadd.f32 %v10621, %v11082
      %v11162 = vadd.f32 %v10622, %v11085
      %v11163 = vadd.f32 %v10623, %v11090
      %v11164 = vadd.f32 %v10624, %v11093
      %v11165 = vadd.f32 %v10625, %v11098
      %v11166 = vadd.f32 %v10626, %v11101
      %v11167 = vadd.f32 %v10627, %v11106
      %v11168 = vadd.f32 %v10628, %v11109
      %v11169 = vadd.f32 %v10629, %v11114
      %v11170 = vadd.f32 %v10630, %v11117
      %v11171 = vadd.f32 %v10631, %v11122
      %v11172 = vadd.f32 %v10632, %v11125
      %v11173 = vadd.f32 %v10633, %v11130
      %v11174 = vadd.f32 %v10634, %v11133
      %v11175 = vadd.f32 %v10635, %v11138
      %v11176 = vld [vmem:[#allocation4 + $0x38] sm:$0xc]
      %s11177 = scalar_lea.vmem %s4, 384
      %v11178 = vld [vmem:[%s11177] sm:$0xf]
      %v11179 = vld [vmem:[%s11177 + $0x4] sm:$0xf]
      %v11180 = vld [vmem:[%s11177 + $0x8] sm:$0xf]
      %v11181 = vld [vmem:[%s11177 + $0xc] sm:$0xf]
      %v11183 = vunpack.c.l.b16 %v11176
      %v11184 = vpack.c.b16 %v10710, %v11183
      %v11185 = vrot.slane %v11184, 2
      %v11186 = vrot.slane %v10744, 2
      %v11187 = vsel %vm3747, %v11185, %v11186
      %v11188 = vrot.slane %v10745, 2
      %v11189 = vsel %vm3747, %v11186, %v11188
      %v11190 = vrot.slane %v10746, 2
      %v11191 = vsel %vm3747, %v11188, %v11190
      %v11192 = vrot.slane %v10747, 2
      %v11193 = vsel %vm3747, %v11190, %v11192
      %v11194 = vrot.slane %v10748, 2
      %v11195 = vsel %vm3747, %v11192, %v11194
      %v11196 = vrot.slane %v10749, 2
      %v11197 = vsel %vm3747, %v11194, %v11196
      %v11198 = vrot.slane %v10750, 2
      %v11199 = vsel %vm3747, %v11196, %v11198
      %v11200 = vrot.slane %v10751, 2
      %v11201 = vsel %vm3747, %v11198, %v11200
      %v11202 = vrot.slane %v10752, 2
      %v11203 = vsel %vm3747, %v11200, %v11202
      %v11204 = vrot.slane %v10753, 2
      %v11205 = vsel %vm3747, %v11202, %v11204
      %v11206 = vrot.slane %v10754, 2
      %v11207 = vsel %vm3747, %v11204, %v11206
      %v11208 = vrot.slane %v10755, 2
      %v11209 = vsel %vm3747, %v11206, %v11208
      %v11210 = vrot.slane %v10756, 2
      %v11211 = vsel %vm3747, %v11208, %v11210
      %v11212 = vrot.slane %v10757, 2
      %v11213 = vsel %vm3747, %v11210, %v11212
      %v11214 = vrot.slane %v10758, 2
      %v11215 = vsel %vm3747, %v11212, %v11214
      %v11216 = vrot.slane %v10759, 2
      %v11217 = vsel %vm3747, %v11214, %v11216
      %v11222 = vunpack.c.l.b16 %v11178
      %v11223 = vunpack.c.l.b16 %v11179
      %v11224 = vunpack.c.l.b16 %v11180
      %v11225 = vunpack.c.l.b16 %v11181
      %v11226 = vpack.c.b16 %v11223, %v11222
      %v11227 = vpack.c.b16 %v11225, %v11224
      %v11231 = vsel %vm859, %v11187, 0
      %v11234 = vsel %vm859, %v11189, 0
      %v11237 = vsel %vm859, %v11191, 0
      %v11240 = vsel %vm859, %v11193, 0
      %v11243 = vsel %vm859, %v11195, 0
      %v11246 = vsel %vm859, %v11197, 0
      %v11249 = vsel %vm859, %v11199, 0
      %v11252 = vsel %vm859, %v11201, 0
      %v11255 = vsel %vm859, %v11203, 0
      %v11258 = vsel %vm859, %v11205, 0
      %v11261 = vsel %vm859, %v11207, 0
      %v11264 = vsel %vm859, %v11209, 0
      %v11267 = vsel %vm859, %v11211, 0
      %v11270 = vsel %vm859, %v11213, 0
      %v11273 = vsel %vm859, %v11215, 0
      %v11276 = vsel %vm859, %v11217, 0
      %v11279 = vsel %vm859, %v11216, 0
      %11281 = vmatprep.subr.bf16.mxu0 0
      %11282 = vmatpush1.bf16.msra.mxu0 %v11226
      %11283 = vmatprep.subr.bf16.mxu0 0
      %11284 = vmatpush1.bf16.msra.mxu0 %v11227
      %11285 = vmatprep.subr.bf16.mxu0 0
      %11286 = vmatpush1.bf16.msra.mxu0 0
      %11287 = vmatprep.subr.bf16.mxu0 0
      %11288 = vmatpush1.bf16.msra.mxu0 0
      %11289 = vmatprep.subr.bf16.mxu0 0
      %11290 = vmatpush1.bf16.msra.mxu0 0
      %11291 = vmatprep.subr.bf16.mxu0 0
      %11292 = vmatpush1.bf16.msra.mxu0 0
      %11293 = vmatprep.subr.bf16.mxu0 0
      %11294 = vmatpush1.bf16.msra.mxu0 0
      %11295 = vmatprep.subr.bf16.mxu0 0
      %11296 = vmatpush1.bf16.msra.mxu0 0
      %11297 = vmatprep.subr.bf16.mxu0 0
      %11298 = vmatpush1.bf16.msra.mxu0 0
      %11299 = vmatprep.subr.bf16.mxu0 0
      %11300 = vmatpush1.bf16.msra.mxu0 0
      %11301 = vmatprep.subr.bf16.mxu0 0
      %11302 = vmatpush1.bf16.msra.mxu0 0
      %11303 = vmatprep.subr.bf16.mxu0 0
      %11304 = vmatpush1.bf16.msra.mxu0 0
      %11305 = vmatprep.subr.bf16.mxu0 0
      %11306 = vmatpush1.bf16.msra.mxu0 0
      %11307 = vmatprep.subr.bf16.mxu0 0
      %11308 = vmatpush1.bf16.msra.mxu0 0
      %11309 = vmatprep.subr.bf16.mxu0 0
      %11310 = vmatpush1.bf16.msra.mxu0 0
      %11311 = vmatprep.subr.bf16.mxu0 0
      %11312 = vmatpush1.bf16.msra.mxu0 0
      %11313 = vmatprep.mubr.bf16.mxu0 0
      %11314 = vmatmul.mubr.bf16.gmra.mrb[0].mxu0 %v11231
      %v11315 = vpop.f32.mrb[0].mxu0
      %v11316 = vadd.f32 0.0, %v11315
      %v11317 = vpop.f32.mrb[0].mxu0
      %v11318 = vpop.f32.mrb[0].mxu0
      %v11319 = vadd.f32 0.0, %v11318
      %v11320 = vpop.f32.mrb[0].mxu0
      %11321 = vmatprep.mubr.bf16.mxu0 0
      %11322 = vmatmul.mubr.bf16.gmra.mrb[0].mxu0 %v11234
      %v11323 = vpop.f32.mrb[0].mxu0
      %v11324 = vadd.f32 0.0, %v11323
      %v11325 = vpop.f32.mrb[0].mxu0
      %v11326 = vpop.f32.mrb[0].mxu0
      %v11327 = vadd.f32 0.0, %v11326
      %v11328 = vpop.f32.mrb[0].mxu0
      %11329 = vmatprep.mubr.bf16.mxu0 0
      %11330 = vmatmul.mubr.bf16.gmra.mrb[0].mxu0 %v11237
      %v11331 = vpop.f32.mrb[0].mxu0
      %v11332 = vadd.f32 0.0, %v11331
      %v11333 = vpop.f32.mrb[0].mxu0
      %v11334 = vpop.f32.mrb[0].mxu0
      %v11335 = vadd.f32 0.0, %v11334
      %v11336 = vpop.f32.mrb[0].mxu0
      %11337 = vmatprep.mubr.bf16.mxu0 0
      %11338 = vmatmul.mubr.bf16.gmra.mrb[0].mxu0 %v11240
      %v11339 = vpop.f32.mrb[0].mxu0
      %v11340 = vadd.f32 0.0, %v11339
      %v11341 = vpop.f32.mrb[0].mxu0
      %v11342 = vpop.f32.mrb[0].mxu0
      %v11343 = vadd.f32 0.0, %v11342
      %v11344 = vpop.f32.mrb[0].mxu0
      %11345 = vmatprep.mubr.bf16.mxu0 0
      %11346 = vmatmul.mubr.bf16.gmra.mrb[0].mxu0 %v11243
      %v11347 = vpop.f32.mrb[0].mxu0
      %v11348 = vadd.f32 0.0, %v11347
      %v11349 = vpop.f32.mrb[0].mxu0
      %v11350 = vpop.f32.mrb[0].mxu0
      %v11351 = vadd.f32 0.0, %v11350
      %v11352 = vpop.f32.mrb[0].mxu0
      %11353 = vmatprep.mubr.bf16.mxu0 0
      %11354 = vmatmul.mubr.bf16.gmra.mrb[0].mxu0 %v11246
      %v11355 = vpop.f32.mrb[0].mxu0
      %v11356 = vadd.f32 0.0, %v11355
      %v11357 = vpop.f32.mrb[0].mxu0
      %v11358 = vpop.f32.mrb[0].mxu0
      %v11359 = vadd.f32 0.0, %v11358
      %v11360 = vpop.f32.mrb[0].mxu0
      %11361 = vmatprep.mubr.bf16.mxu0 0
      %11362 = vmatmul.mubr.bf16.gmra.mrb[0].mxu0 %v11249
      %v11363 = vpop.f32.mrb[0].mxu0
      %v11364 = vadd.f32 0.0, %v11363
      %v11365 = vpop.f32.mrb[0].mxu0
      %v11366 = vpop.f32.mrb[0].mxu0
      %v11367 = vadd.f32 0.0, %v11366
      %v11368 = vpop.f32.mrb[0].mxu0
      %11369 = vmatprep.mubr.bf16.mxu0 0
      %11370 = vmatmul.mubr.bf16.gmra.mrb[0].mxu0 %v11252
      %v11371 = vpop.f32.mrb[0].mxu0
      %v11372 = vadd.f32 0.0, %v11371
      %v11373 = vpop.f32.mrb[0].mxu0
      %v11374 = vpop.f32.mrb[0].mxu0
      %v11375 = vadd.f32 0.0, %v11374
      %v11376 = vpop.f32.mrb[0].mxu0
      %11377 = vmatprep.mubr.bf16.mxu0 0
      %11378 = vmatmul.mubr.bf16.gmra.mrb[0].mxu0 %v11255
      %v11379 = vpop.f32.mrb[0].mxu0
      %v11380 = vadd.f32 0.0, %v11379
      %v11381 = vpop.f32.mrb[0].mxu0
      %v11382 = vpop.f32.mrb[0].mxu0
      %v11383 = vadd.f32 0.0, %v11382
      %v11384 = vpop.f32.mrb[0].mxu0
      %11385 = vmatprep.mubr.bf16.mxu0 0
      %11386 = vmatmul.mubr.bf16.gmra.mrb[0].mxu0 %v11258
      %v11387 = vpop.f32.mrb[0].mxu0
      %v11388 = vadd.f32 0.0, %v11387
      %v11389 = vpop.f32.mrb[0].mxu0
      %v11390 = vpop.f32.mrb[0].mxu0
      %v11391 = vadd.f32 0.0, %v11390
      %v11392 = vpop.f32.mrb[0].mxu0
      %11393 = vmatprep.mubr.bf16.mxu0 0
      %11394 = vmatmul.mubr.bf16.gmra.mrb[0].mxu0 %v11261
      %v11395 = vpop.f32.mrb[0].mxu0
      %v11396 = vadd.f32 0.0, %v11395
      %v11397 = vpop.f32.mrb[0].mxu0
      %v11398 = vpop.f32.mrb[0].mxu0
      %v11399 = vadd.f32 0.0, %v11398
      %v11400 = vpop.f32.mrb[0].mxu0
      %11401 = vmatprep.mubr.bf16.mxu0 0
      %11402 = vmatmul.mubr.bf16.gmra.mrb[0].mxu0 %v11264
      %v11403 = vpop.f32.mrb[0].mxu0
      %v11404 = vadd.f32 0.0, %v11403
      %v11405 = vpop.f32.mrb[0].mxu0
      %v11406 = vpop.f32.mrb[0].mxu0
      %v11407 = vadd.f32 0.0, %v11406
      %v11408 = vpop.f32.mrb[0].mxu0
      %11409 = vmatprep.mubr.bf16.mxu0 0
      %11410 = vmatmul.mubr.bf16.gmra.mrb[0].mxu0 %v11267
      %v11411 = vpop.f32.mrb[0].mxu0
      %v11412 = vadd.f32 0.0, %v11411
      %v11413 = vpop.f32.mrb[0].mxu0
      %v11414 = vpop.f32.mrb[0].mxu0
      %v11415 = vadd.f32 0.0, %v11414
      %v11416 = vpop.f32.mrb[0].mxu0
      %11417 = vmatprep.mubr.bf16.mxu0 0
      %11418 = vmatmul.mubr.bf16.gmra.mrb[0].mxu0 %v11270
      %v11419 = vpop.f32.mrb[0].mxu0
      %v11420 = vadd.f32 0.0, %v11419
      %v11421 = vpop.f32.mrb[0].mxu0
      %v11422 = vpop.f32.mrb[0].mxu0
      %v11423 = vadd.f32 0.0, %v11422
      %v11424 = vpop.f32.mrb[0].mxu0
      %11425 = vmatprep.mubr.bf16.mxu0 0
      %11426 = vmatmul.mubr.bf16.gmra.mrb[0].mxu0 %v11273
      %v11427 = vpop.f32.mrb[0].mxu0
      %v11428 = vadd.f32 0.0, %v11427
      %v11429 = vpop.f32.mrb[0].mxu0
      %v11430 = vpop.f32.mrb[0].mxu0
      %v11431 = vadd.f32 0.0, %v11430
      %v11432 = vpop.f32.mrb[0].mxu0
      %11433 = vmatprep.mubr.bf16.mxu0 0
      %11434 = vmatmul.mubr.bf16.gmra.mrb[0].mxu0 %v11276
      %v11435 = vpop.f32.mrb[0].mxu0
      %v11436 = vadd.f32 0.0, %v11435
      %v11437 = vpop.f32.mrb[0].mxu0
      %v11438 = vpop.f32.mrb[0].mxu0
      %v11439 = vadd.f32 0.0, %v11438
      %v11440 = vpop.f32.mrb[0].mxu0
      %11441 = vmatprep.mubr.bf16.mxu0 0
      %11442 = vmatmul.mubr.bf16.gmra.mrb[0].mxu0 %v11279
      %v11443 = vpop.f32.mrb[0].mxu0
      %v11444 = vadd.f32 0.0, %v11443
      %v11445 = vpop.f32.mrb[0].mxu0
      %v11446 = vpop.f32.mrb[0].mxu0
      %v11447 = vpop.f32.mrb[0].mxu0
      %11448 = vdwg.mxu0
      %v11449 = vadd.f32 %v11143, %v11316
      %v11450 = vadd.f32 %v11144, %v11319
      %v11451 = vadd.f32 %v11145, %v11324
      %v11452 = vadd.f32 %v11146, %v11327
      %v11453 = vadd.f32 %v11147, %v11332
      %v11454 = vadd.f32 %v11148, %v11335
      %v11455 = vadd.f32 %v11149, %v11340
      %v11456 = vadd.f32 %v11150, %v11343
      %v11457 = vadd.f32 %v11151, %v11348
      %v11458 = vadd.f32 %v11152, %v11351
      %v11459 = vadd.f32 %v11153, %v11356
      %v11460 = vadd.f32 %v11154, %v11359
      %v11461 = vadd.f32 %v11155, %v11364
      %v11462 = vadd.f32 %v11156, %v11367
      %v11463 = vadd.f32 %v11157, %v11372
      %v11464 = vadd.f32 %v11158, %v11375
      %v11465 = vadd.f32 %v11159, %v11380
      %v11466 = vadd.f32 %v11160, %v11383
      %v11467 = vadd.f32 %v11161, %v11388
      %v11468 = vadd.f32 %v11162, %v11391
      %v11469 = vadd.f32 %v11163, %v11396
      %v11470 = vadd.f32 %v11164, %v11399
      %v11471 = vadd.f32 %v11165, %v11404
      %v11472 = vadd.f32 %v11166, %v11407
      %v11473 = vadd.f32 %v11167, %v11412
      %v11474 = vadd.f32 %v11168, %v11415
      %v11475 = vadd.f32 %v11169, %v11420
      %v11476 = vadd.f32 %v11170, %v11423
      %v11477 = vadd.f32 %v11171, %v11428
      %v11478 = vadd.f32 %v11172, %v11431
      %v11479 = vadd.f32 %v11173, %v11436
      %v11480 = vadd.f32 %v11174, %v11439
      %v11481 = vadd.f32 %v11175, %v11444
      %v11482 = vmax.f32 %v11449, 0.0
      %v11483 = vmax.f32 %v11450, 0.0
      %v11484 = vmax.f32 %v11451, 0.0
      %v11485 = vmax.f32 %v11452, 0.0
      %v11486 = vmax.f32 %v11453, 0.0
      %v11487 = vmax.f32 %v11454, 0.0
      %v11488 = vmax.f32 %v11455, 0.0
      %v11489 = vmax.f32 %v11456, 0.0
      %v11490 = vmax.f32 %v11457, 0.0
      %v11491 = vmax.f32 %v11458, 0.0
      %v11492 = vmax.f32 %v11459, 0.0
      %v11493 = vmax.f32 %v11460, 0.0
      %v11494 = vmax.f32 %v11461, 0.0
      %v11495 = vmax.f32 %v11462, 0.0
      %v11496 = vmax.f32 %v11463, 0.0
      %v11497 = vmax.f32 %v11464, 0.0
      %v11498 = vmax.f32 %v11465, 0.0
      %v11499 = vmax.f32 %v11466, 0.0
      %v11500 = vmax.f32 %v11467, 0.0
      %v11501 = vmax.f32 %v11468, 0.0
      %v11502 = vmax.f32 %v11469, 0.0
      %v11503 = vmax.f32 %v11470, 0.0
      %v11504 = vmax.f32 %v11471, 0.0
      %v11505 = vmax.f32 %v11472, 0.0
      %v11506 = vmax.f32 %v11473, 0.0
      %v11507 = vmax.f32 %v11474, 0.0
      %v11508 = vmax.f32 %v11475, 0.0
      %v11509 = vmax.f32 %v11476, 0.0
      %v11510 = vmax.f32 %v11477, 0.0
      %v11511 = vmax.f32 %v11478, 0.0
      %v11512 = vmax.f32 %v11479, 0.0
      %v11513 = vmax.f32 %v11480, 0.0
      %v11514 = vmax.f32 %v11481, 0.0
      %11515 = vst.msk [vmem:[#allocation5] sm:$0xff] %vm859, %v11482
      %11516 = vst.msk [vmem:[#allocation5 + $0x8] sm:$0xff] %vm859, %v11483
      %11517 = vst.msk [vmem:[#allocation5 + $0x10] sm:$0xff] %vm859, %v11484
      %11518 = vst.msk [vmem:[#allocation5 + $0x18] sm:$0xff] %vm859, %v11485
      %11519 = vst.msk [vmem:[#allocation5 + $0x20] sm:$0xff] %vm859, %v11486
      %11520 = vst.msk [vmem:[#allocation5 + $0x28] sm:$0xff] %vm859, %v11487
      %11521 = vst.msk [vmem:[#allocation5 + $0x30] sm:$0xff] %vm859, %v11488
      %11522 = vst.msk [vmem:[#allocation5 + $0x38] sm:$0xff] %vm859, %v11489
      %11523 = vst.msk [vmem:[#allocation5 + $0x40] sm:$0xff] %vm859, %v11490
      %11524 = vst.msk [vmem:[#allocation5 + $0x48] sm:$0xff] %vm859, %v11491
      %11525 = vst.msk [vmem:[#allocation5 + $0x50] sm:$0xff] %vm859, %v11492
      %11526 = vst.msk [vmem:[#allocation5 + $0x58] sm:$0xff] %vm859, %v11493
      %11527 = vst.msk [vmem:[#allocation5 + $0x60] sm:$0xff] %vm859, %v11494
      %11528 = vst.msk [vmem:[#allocation5 + $0x68] sm:$0xff] %vm859, %v11495
      %11529 = vst.msk [vmem:[#allocation5 + $0x70] sm:$0xff] %vm859, %v11496
      %11530 = vst.msk [vmem:[#allocation5 + $0x78] sm:$0xff] %vm859, %v11497
      %11531 = vst.msk [vmem:[#allocation5 + $0x80] sm:$0xff] %vm859, %v11498
      %11532 = vst.msk [vmem:[#allocation5 + $0x88] sm:$0xff] %vm859, %v11499
      %11533 = vst.msk [vmem:[#allocation5 + $0x90] sm:$0xff] %vm859, %v11500
      %11534 = vst.msk [vmem:[#allocation5 + $0x98] sm:$0xff] %vm859, %v11501
      %11535 = vst.msk [vmem:[#allocation5 + $0xa0] sm:$0xff] %vm859, %v11502
      %11536 = vst.msk [vmem:[#allocation5 + $0xa8] sm:$0xff] %vm859, %v11503
      %11537 = vst.msk [vmem:[#allocation5 + $0xb0] sm:$0xff] %vm859, %v11504
      %11538 = vst.msk [vmem:[#allocation5 + $0xb8] sm:$0xff] %vm859, %v11505
      %11539 = vst.msk [vmem:[#allocation5 + $0xc0] sm:$0xff] %vm859, %v11506
      %11540 = vst.msk [vmem:[#allocation5 + $0xc8] sm:$0xff] %vm859, %v11507
      %11541 = vst.msk [vmem:[#allocation5 + $0xd0] sm:$0xff] %vm859, %v11508
      %11542 = vst.msk [vmem:[#allocation5 + $0xd8] sm:$0xff] %vm859, %v11509
      %11543 = vst.msk [vmem:[#allocation5 + $0xe0] sm:$0xff] %vm859, %v11510
      %11544 = vst.msk [vmem:[#allocation5 + $0xe8] sm:$0xff] %vm859, %v11511
      %11545 = vst.msk [vmem:[#allocation5 + $0xf0] sm:$0xff] %vm859, %v11512
      %11546 = vst.msk [vmem:[#allocation5 + $0xf8] sm:$0xff] %vm859, %v11513
      %vm11547 = vcmask 259072
      %11548 = vst.msk [vmem:[#allocation5 + $0x100] sm:$0x3f] %vm11547, %v11514
      %v11549 = vld [vmem:[#allocation5] sm:$0xff]
      %v11550 = vld [vmem:[#allocation5 + $0x8] sm:$0x1]
      %v11551 = vld [vmem:[#allocation5 + $0x1] sm:$0xff]
      %v11552 = vld [vmem:[#allocation5 + $0x9] sm:$0x1]
      %v11553 = vmax.f32 %v11549, %v11551
      %v11554 = vmax.f32 %v11550, %v11552
      %v11555 = vld [vmem:[#allocation5 + $0x1c] sm:$0xff]
      %v11556 = vld [vmem:[#allocation5 + $0x24] sm:$0x1]
      %v11557 = vld [vmem:[#allocation5 + $0x1d] sm:$0xff]
      %v11558 = vld [vmem:[#allocation5 + $0x25] sm:$0x1]
      %v11559 = vmax.f32 %v11555, %v11557
      %v11560 = vmax.f32 %v11556, %v11558
      %v11561 = vmax.f32 %v11553, %v11559
      %v11562 = vmax.f32 %v11554, %v11560
      %11563 = vst.msk [vmem:[%s275] sm:$0xff] %vm859, %v11561
      %11564 = vst.msk [vmem:[%s275 + $0x8] sm:$0x1] %vm2104, %v11562
      %v11565 = vld [vmem:[#allocation5 + $0x38] sm:$0xff]
      %v11566 = vld [vmem:[#allocation5 + $0x40] sm:$0x1]
      %v11567 = vld [vmem:[#allocation5 + $0x39] sm:$0xff]
      %v11568 = vld [vmem:[#allocation5 + $0x41] sm:$0x1]
      %v11569 = vmax.f32 %v11565, %v11567
      %v11570 = vmax.f32 %v11566, %v11568
      %v11571 = vld [vmem:[#allocation5 + $0x54] sm:$0xff]
      %v11572 = vld [vmem:[#allocation5 + $0x5c] sm:$0x1]
      %v11573 = vld [vmem:[#allocation5 + $0x55] sm:$0xff]
      %v11574 = vld [vmem:[#allocation5 + $0x5d] sm:$0x1]
      %v11575 = vmax.f32 %v11571, %v11573
      %v11576 = vmax.f32 %v11572, %v11574
      %v11577 = vmax.f32 %v11569, %v11575
      %v11578 = vmax.f32 %v11570, %v11576
      %s11579 = scalar_lea.vmem %s275, 16
      %11580 = vst.msk [vmem:[%s11579] sm:$0xff] %vm859, %v11577
      %11581 = vst.msk [vmem:[%s11579 + $0x8] sm:$0x1] %vm2104, %v11578
      %v11582 = vld [vmem:[#allocation5 + $0x70] sm:$0xff]
      %v11583 = vld [vmem:[#allocation5 + $0x78] sm:$0x1]
      %v11584 = vld [vmem:[#allocation5 + $0x71] sm:$0xff]
      %v11585 = vld [vmem:[#allocation5 + $0x79] sm:$0x1]
      %v11586 = vmax.f32 %v11582, %v11584
      %v11587 = vmax.f32 %v11583, %v11585
      %v11588 = vld [vmem:[#allocation5 + $0x8c] sm:$0xff]
      %v11589 = vld [vmem:[#allocation5 + $0x94] sm:$0x1]
      %v11590 = vld [vmem:[#allocation5 + $0x8d] sm:$0xff]
      %v11591 = vld [vmem:[#allocation5 + $0x95] sm:$0x1]
      %v11592 = vmax.f32 %v11588, %v11590
      %v11593 = vmax.f32 %v11589, %v11591
      %v11594 = vmax.f32 %v11586, %v11592
      %v11595 = vmax.f32 %v11587, %v11593
      %s11596 = scalar_lea.vmem %s275, 32
      %11597 = vst.msk [vmem:[%s11596] sm:$0xff] %vm859, %v11594
      %11598 = vst.msk [vmem:[%s11596 + $0x8] sm:$0x1] %vm2104, %v11595
      %v11599 = vld [vmem:[#allocation5 + $0xa8] sm:$0xff]
      %v11600 = vld [vmem:[#allocation5 + $0xb0] sm:$0x1]
      %v11601 = vld [vmem:[#allocation5 + $0xa9] sm:$0xff]
      %v11602 = vld [vmem:[#allocation5 + $0xb1] sm:$0x1]
      %v11603 = vmax.f32 %v11599, %v11601
      %v11604 = vmax.f32 %v11600, %v11602
      %v11605 = vld [vmem:[#allocation5 + $0xc4] sm:$0xff]
      %v11606 = vld [vmem:[#allocation5 + $0xcc] sm:$0x1]
      %v11607 = vld [vmem:[#allocation5 + $0xc5] sm:$0xff]
      %v11608 = vld [vmem:[#allocation5 + $0xcd] sm:$0x1]
      %v11609 = vmax.f32 %v11605, %v11607
      %v11610 = vmax.f32 %v11606, %v11608
      %v11611 = vmax.f32 %v11603, %v11609
      %v11612 = vmax.f32 %v11604, %v11610
      %s11613 = scalar_lea.vmem %s275, 48
      %11614 = vst.msk [vmem:[%s11613] sm:$0xff] %vm859, %v11611
      %11615 = vst.msk [vmem:[%s11613 + $0x8] sm:$0x1] %vm2104, %v11612
      %v11616 = vld [vmem:[#allocation5 + $0xe0] sm:$0xff]
      %v11617 = vld [vmem:[#allocation5 + $0xe8] sm:$0x1]
      %v11618 = vld [vmem:[#allocation5 + $0xe1] sm:$0xff]
      %v11619 = vld [vmem:[#allocation5 + $0xe9] sm:$0x1]
      %v11620 = vmax.f32 %v11616, %v11618
      %v11621 = vmax.f32 %v11617, %v11619
      %v11622 = vld [vmem:[#allocation5 + $0xfc] sm:$0xff]
      %v11623 = vld [vmem:[#allocation5 + $0x104] sm:$0x1]
      %v11624 = vld [vmem:[#allocation5 + $0xfd] sm:$0xff]
      %v11625 = vld [vmem:[#allocation5 + $0x105] sm:$0x1]
      %v11626 = vmax.f32 %v11622, %v11624
      %v11627 = vmax.f32 %v11623, %v11625
      %v11628 = vmax.f32 %v11620, %v11626
      %v11629 = vmax.f32 %v11621, %v11627
      %s11630 = scalar_lea.vmem %s275, 64
      %11631 = vst.msk [vmem:[%s11630] sm:$0xff] %vm859, %v11628
      %11632 = vst.msk [vmem:[%s11630 + $0x8] sm:$0x1] %vm2104, %v11629
      %p11633 = scmp.lt.s32.totalorder %s17, 1
      %s11634 = scalar_select %p11633, %s17, 1
      %s11635 = smul.addr %s11634, 10
      %s11636 = smul.addr %s11635, 8
      %s11637 = scalar_lea.vmem %s6, %s11636
      // Predicated region
      $region45: #{digits_encoder_forward.1} parent=43 // pred_check
        %p11638 = pneg %p171
      $region46: #{digits_encoder_forward.1} parent=43 // pred_check_branch
        %11640 = sbr.rel (%p11638) target = $region48
      $region47: #{digits_encoder_forward.1} parent=43 // pred_region
        _
      $region48: #{digits_encoder_forward.1} parent=43 // pred_fallthru
        _
    $region44: #{digits_encoder_forward.1} parent=5 // pred_fallthru
      _
    %p11641 = scmp.le.s32.totalorder 2, %s12
    // Predicated region
    $region49: #{digits_encoder_forward.1} parent=5 // pred_check
      %p11642 = pneg %p11641
    $region50: #{digits_encoder_forward.1} parent=5 // pred_check_branch
      %11644 = sbr.rel (%p11642) target = $region52
    $region51: #{digits_encoder_forward.1} parent=5 // pred_region
      %s11645 = ssub.s32 %s12, 2
      // Predicated region
      $region53: #{digits_encoder_forward.1} parent=51 // pred_check
        %p11646 = pneg %p177
      $region54: #{digits_encoder_forward.1} parent=51 // pred_check_branch
        %11648 = sbr.rel (%p11646) target = $region56
      $region55: #{digits_encoder_forward.1} parent=51 // pred_region
        %p11649 = scmp.lt.s32.totalorder %s18, 1
        %s11650 = scalar_select %p11649, %s18, 1
        %s11651 = smul.addr %s11650, 10
        %s11652 = smul.addr %s11651, 8
        %s11653 = scalar_lea.vmem %s6, %s11652
      $region56: #{digits_encoder_forward.1} parent=51 // pred_fallthru
        _
    $region52: #{digits_encoder_forward.1} parent=5 // pred_fallthru
      _
  $region6: #{digits_encoder_forward.1} parent=0 // loop_footer
    %s16 = sadd.s32 1, %s12
  $region7: #{digits_encoder_forward.1} parent=0 // loop_footer_branch
    %11 = sbr.rel target = $region3
  $region8: #{digits_encoder_forward.1} parent=0 // loop_exit
    _

</llo_original>
